<compile_context>
chip_gen: v6e
topology: v6e:2x2x1
jax: 0.10.0
libtpu: 0.0.40
codegen_flags: <defaults>
</compile_context>

<pallas_src>
import math
from functools import partial

import jax
import jax.numpy as jnp
from jax.experimental import pallas as pl
from jax.experimental.pallas import tpu as pltpu


# ----------------------------- Pallas kernels -----------------------------

def _mm_bias_lrelu_kernel(x_ref, w_ref, b_ref, o_ref):
    # y = LeakyReLU_0.2(x @ w + b); bf16 x bf16 -> f32 accumulate, f32 epilogue.
    acc = jnp.dot(x_ref[...], w_ref[...], preferred_element_type=jnp.float32)
    acc = acc + b_ref[...]
    o_ref[...] = jnp.where(acc >= 0.0, acc, 0.2 * acc).astype(o_ref.dtype)


def _mm_bias_kernel(x_ref, w_ref, b_ref, o_ref):
    # y = x @ w + b   (ConvTranspose phase path, no activation)
    acc = jnp.dot(x_ref[...], w_ref[...], preferred_element_type=jnp.float32)
    o_ref[...] = (acc + b_ref[...]).astype(o_ref.dtype)


def _mm_res_lrelu_kernel(x_ref, w_ref, b_ref, beta_ref, res_ref, o_ref):
    # ResConv: y = LeakyReLU_0.2((x @ w + b) * beta + residual)
    acc = jnp.dot(x_ref[...], w_ref[...], preferred_element_type=jnp.float32)
    acc = (acc + b_ref[...]) * beta_ref[...] + res_ref[...].astype(jnp.float32)
    o_ref[...] = jnp.where(acc >= 0.0, acc, 0.2 * acc).astype(o_ref.dtype)


def _merge_kernel(w0_ref, w1_ref, m_ref, o_ref):
    # channels on sublanes (3 / 1 rows), pixels on lanes; mask broadcast inside the kernel.
    m = jax.nn.sigmoid(m_ref[...])
    o_ref[...] = w0_ref[...] * m + w1_ref[...] * (1.0 - m)


# ----------------------------- matmul wrappers (tiled over M) -----------------------------

_TM = 512          # im2col rows per grid step (fits scoped VMEM on v5e/v6e/v7x with K<=1728)
_TN_MERGE = 2048   # pixels per merge tile (lane axis)


def _round_up(x, m):
    return ((x + m - 1) // m) * m


def _row_tiling(m):
    tm = min(_TM, _round_up(m, 16))   # multiple of 16 -> bf16 sublane-pack friendly
    mp = _round_up(m, tm)
    return tm, mp


def _pad_rows_to(x, mp):
    m = x.shape[0]
    if mp == m:
        return x
    return jnp.pad(x, ((0, mp - m), (0, 0)))


def _mosaic_params():
    return pltpu.CompilerParams(
        dimension_semantics=("parallel",),        # megacore sharding on v7x, harmless elsewhere
        vmem_limit_bytes=32 * 1024 * 1024,        # explicit scoped-VMEM budget, safe on all gens
    )


def _mm_cost(mp, k, n, x_dt, out_dt):
    return pl.CostEstimate(
        flops=2 * mp * k * n,
        transcendentals=0,
        bytes_accessed=mp * k * jnp.dtype(x_dt).itemsize
        + k * n * 2 + n * 4
        + mp * n * jnp.dtype(out_dt).itemsize,
    )


def pallas_mm_bias_lrelu(x, w, b, out_dtype):
    M, K = x.shape
    N = w.shape[1]
    tm, mp = _row_tiling(M)
    xp = _pad_rows_to(x, mp)
    out = pl.pallas_call(
        _mm_bias_lrelu_kernel,
        out_shape=jax.ShapeDtypeStruct((mp, N), out_dtype),
        grid=(mp // tm,),
        in_specs=[pl.BlockSpec((tm, K), lambda i: (i, 0)),   # activations stream
                  pl.BlockSpec((K, N), lambda i: (0, 0)),    # weights resident in VMEM
                  pl.BlockSpec((1, N), lambda i: (0, 0))],   # bias resident
        out_specs=pl.BlockSpec((tm, N), lambda i: (i, 0)),
        compiler_params=_mosaic_params(),
        cost_estimate=_mm_cost(mp, K, N, x.dtype, out_dtype),
    )(xp, w, b)
    return out[:M] if mp != M else out


def pallas_mm_bias(x, w, b, out_dtype):
    M, K = x.shape
    N = w.shape[1]
    tm, mp = _row_tiling(M)
    xp = _pad_rows_to(x, mp)
    out = pl.pallas_call(
        _mm_bias_kernel,
        out_shape=jax.ShapeDtypeStruct((mp, N), out_dtype),
        grid=(mp // tm,),
        in_specs=[pl.BlockSpec((tm, K), lambda i: (i, 0)),
                  pl.BlockSpec((K, N), lambda i: (0, 0)),
                  pl.BlockSpec((1, N), lambda i: (0, 0))],
        out_specs=pl.BlockSpec((tm, N), lambda i: (i, 0)),
        compiler_params=_mosaic_params(),
        cost_estimate=_mm_cost(mp, K, N, x.dtype, out_dtype),
    )(xp, w, b)
    return out[:M] if mp != M else out


def pallas_mm_res_lrelu(x, w, b, beta, res, out_dtype):
    M, K = x.shape
    N = w.shape[1]
    tm, mp = _row_tiling(M)
    xp = _pad_rows_to(x, mp)
    rp = _pad_rows_to(res, mp)
    out = pl.pallas_call(
        _mm_res_lrelu_kernel,
        out_shape=jax.ShapeDtypeStruct((mp, N), out_dtype),
        grid=(mp // tm,),
        in_specs=[pl.BlockSpec((tm, K), lambda i: (i, 0)),
                  pl.BlockSpec((K, N), lambda i: (0, 0)),
                  pl.BlockSpec((1, N), lambda i: (0, 0)),
                  pl.BlockSpec((1, N), lambda i: (0, 0)),
                  pl.BlockSpec((tm, N), lambda i: (i, 0))],
        out_specs=pl.BlockSpec((tm, N), lambda i: (i, 0)),
        compiler_params=_mosaic_params(),
        cost_estimate=_mm_cost(mp, K, N, x.dtype, out_dtype),
    )(xp, w, b, beta, rp)
    return out[:M] if mp != M else out


def pallas_merge(w0, w1, mask):
    """sigmoid(mask)-weighted blend, channel-major layout: (3, Npix)/(1, Npix) lane-dense slabs."""
    B, H, W, C = w0.shape
    M = B * H * W
    tn = min(_TN_MERGE, _round_up(M, 128))
    mp = _round_up(M, tn)

    def to_cm(a, c):
        a = a.reshape(M, c).T                     # (c, Npix): pixels on the lane axis
        if mp != M:
            a = jnp.pad(a, ((0, 0), (0, mp - M)))
        return a

    w0t, w1t, mt = to_cm(w0, C), to_cm(w1, C), to_cm(mask, 1)
    out = pl.pallas_call(
        _merge_kernel,
        out_shape=jax.ShapeDtypeStruct((C, mp), jnp.float32),
        grid=(mp // tn,),
        in_specs=[pl.BlockSpec((C, tn), lambda i: (0, i)),
                  pl.BlockSpec((C, tn), lambda i: (0, i)),
                  pl.BlockSpec((1, tn), lambda i: (0, i))],
        out_specs=pl.BlockSpec((C, tn), lambda i: (0, i)),
        compiler_params=_mosaic_params(),
    )(w0t, w1t, mt)
    if mp != M:
        out = out[:, :M]
    return out.T.reshape(B, H, W, C)


# ----------------------------- conv building blocks (layout glue in plain JAX) -----------------------------

def _im2col(x, ksz, stride, pad):
    """x: (B,H,W,C) NHWC -> patches (B*Ho*Wo, ksz*ksz*C), tap-major / channel-minor (bf16 in)."""
    B, H, W, C = x.shape
    Ho = (H + 2 * pad - ksz) // stride + 1
    Wo = (W + 2 * pad - ksz) // stride + 1
    xp = jnp.pad(x, ((0, 0), (pad, pad), (pad, pad), (0, 0)))
    cols = []
    for kh in range(ksz):
        for kw in range(ksz):
            cols.append(xp[:, kh:kh + (Ho - 1) * stride + 1:stride,
                           kw:kw + (Wo - 1) * stride + 1:stride, :])
    patches = jnp.concatenate(cols, axis=-1)
    return patches.reshape(B * Ho * Wo, ksz * ksz * C), (B, Ho, Wo)


def conv3x3_lrelu(x, w, b, stride):
    patches, (B, Ho, Wo) = _im2col(x.astype(jnp.bfloat16), 3, stride, 1)
    y = pallas_mm_bias_lrelu(patches, w, b, jnp.bfloat16)
    return y.reshape(B, Ho, Wo, w.shape[1])


def resconv3x3(x, w, b, beta):
    B, H, W, C = x.shape
    xb = x.astype(jnp.bfloat16)
    patches, _ = _im2col(xb, 3, 1, 1)
    res = xb.reshape(B * H * W, C)
    y = pallas_mm_res_lrelu(patches, w, b, beta, res, jnp.bfloat16)
    return y.reshape(B, H, W, C)


# ConvTranspose2d(C, 24, 4, 2, 1) as 4 output-phase 2x2 sub-convolutions (no zero-dilation).
# For output row oy = 2*qy + ry the contributing kernel rows are _KTAP[ry] at padded-input
# rows qy+ry+{0,1}; same along columns.
_KTAP = ((3, 1), (2, 0))   # _KTAP[phase r][window offset d] -> transpose-conv kernel index


def conv_transpose4x4_s2(x, phase_ws, b):
    B, H, W, C = x.shape
    N = phase_ws[0].shape[1]
    xb = x.astype(jnp.bfloat16)
    xp = jnp.pad(xb, ((0, 0), (1, 1), (1, 1), (0, 0)))
    phase_out = []
    for ry in range(2):
        for rx in range(2):
            cols = []
            for dy in range(2):
                for dx in range(2):
                    cols.append(xp[:, ry + dy:ry + dy + H, rx + dx:rx + dx + W, :])
            patches = jnp.concatenate(cols, axis=-1).reshape(B * H * W, 4 * C)
            o = pallas_mm_bias(patches, phase_ws[ry * 2 + rx], b, jnp.float32)
            phase_out.append(o.reshape(B, H, W, N))
    o = jnp.stack(phase_out, axis=3)                 # (B,H,W,phase=ry*2+rx,N)
    o = o.reshape(B, H, W, 2, 2, N)
    o = jnp.transpose(o, (0, 1, 3, 2, 4, 5))         # (B,H,ry,W,rx,N)
    return o.reshape(B, 2 * H, 2 * W, N)


def pixel_shuffle_nhwc(x, r):
    # out[b, h*r+i, w*r+j, c] = in[b, h, w, c*r*r + i*r + j]   (matches torch PixelShuffle)
    B, H, W, C = x.shape
    c = C // (r * r)
    x = x.reshape(B, H, W, c, r, r)
    x = jnp.transpose(x, (0, 1, 4, 2, 5, 3))
    return x.reshape(B, H * r, W * r, c)


# ----------------------------- resize / warp (plain JAX glue) -----------------------------

def resize_bilinear(x, out_h, out_w):
    """F.interpolate(mode='bilinear', align_corners=False) semantics; x NHWC."""
    B, H, W, C = x.shape
    if out_h == H and out_w == W:
        return x

    def coords(out_size, in_size):
        ratio = in_size / out_size
        src = (jnp.arange(out_size, dtype=jnp.float32) + 0.5) * ratio - 0.5
        src = jnp.maximum(src, 0.0)
        i0f = jnp.floor(src)
        lam = src - i0f
        i0 = jnp.minimum(i0f.astype(jnp.int32), in_size - 1)
        i1 = jnp.minimum(i0 + 1, in_size - 1)
        return i0, i1, lam

    y0, y1, ly = coords(out_h, H)
    x0, x1, lx = coords(out_w, W)
    r0 = x[:, y0, :, :]
    r1 = x[:, y1, :, :]
    rows = r0 * (1.0 - ly)[None, :, None, None] + r1 * ly[None, :, None, None]
    c0 = rows[:, :, x0, :]
    c1 = rows[:, :, x1, :]
    return c0 * (1.0 - lx)[None, None, :, None] + c1 * lx[None, None, :, None]


def warp_nhwc(img, flow):
    """RIFE backward warp == grid_sample(bilinear, padding='border', align_corners=True).
    img: (B,H,W,C), flow: (B,H,W,2) with flow[...,0]=dx (width), flow[...,1]=dy (height)."""
    # TODO(synk): data-dependent gather (grid_sample) stays in plain JAX; no clean Pallas equivalent.
    B, H, W, C = img.shape
    xs = jnp.arange(W, dtype=jnp.float32)
    ys = jnp.arange(H, dtype=jnp.float32)
    gx = jnp.clip(xs[None, None, :] + flow[..., 0], 0.0, W - 1.0)
    gy = jnp.clip(ys[None, :, None] + flow[..., 1], 0.0, H - 1.0)
    x0 = jnp.floor(gx)
    y0 = jnp.floor(gy)
    x1 = jnp.minimum(x0 + 1.0, W - 1.0)
    y1 = jnp.minimum(y0 + 1.0, H - 1.0)
    wx = (gx - x0)[..., None]
    wy = (gy - y0)[..., None]
    x0i, x1i = x0.astype(jnp.int32), x1.astype(jnp.int32)
    y0i, y1i = y0.astype(jnp.int32), y1.astype(jnp.int32)

    def gather(im, yi, xi):
        return im[yi, xi]

    g = jax.vmap(gather)
    v00 = g(img, y0i, x0i)
    v01 = g(img, y0i, x1i)
    v10 = g(img, y1i, x0i)
    v11 = g(img, y1i, x1i)
    top = v00 * (1.0 - wx) + v01 * wx
    bot = v10 * (1.0 - wx) + v11 * wx
    return top * (1.0 - wy) + bot * wy


# ----------------------------- parameters (deterministic synthetic init) -----------------------------

def _init_conv(key, cin, cout, ksz):
    kw, kb = jax.random.split(key)
    fan = cin * ksz * ksz
    # weight stored directly in im2col matrix layout: (ksz*ksz*cin, cout), tap-major, bf16 for the MXU.
    w = (jax.random.normal(kw, (ksz * ksz * cin, cout), jnp.float32)
         / math.sqrt(fan)).astype(jnp.bfloat16)
    b = jax.random.normal(kb, (1, cout), jnp.float32) * 0.01
    return w, b


def _init_deconv_phases(key, cin, cout):
    # Native ConvTranspose2d-equivalent weight (ky,kx,cin,cout), re-packed into 4 phase matmul
    # weights. NOTE: loading a real PyTorch checkpoint requires w_native[ky,kx,ci,co] =
    # torch_weight[ci,co,ky,kx]; the phase extraction below then reproduces ConvTranspose2d exactly.
    kw, kb = jax.random.split(key)
    fan = cin * 4 * 4
    wt = jax.random.normal(kw, (4, 4, cin, cout), jnp.float32) / math.sqrt(fan)
    b = jax.random.normal(kb, (1, cout), jnp.float32) * 0.01
    phase_ws = []
    for ry in range(2):
        for rx in range(2):
            blocks = [wt[_KTAP[ry][dy], _KTAP[rx][dx]] for dy in range(2) for dx in range(2)]
            phase_ws.append(jnp.concatenate(blocks, axis=0).astype(jnp.bfloat16))  # (4*cin, cout)
    return phase_ws, b


def make_ifblock_params(key, in_planes, c):
    ks = jax.random.split(key, 11)
    p = {}
    p["c0"] = [_init_conv(ks[0], in_planes, c // 2, 3),
               _init_conv(ks[1], c // 2, c, 3)]
    res = []
    for i in range(8):
        w, b = _init_conv(ks[2 + i], c, c, 3)
        res.append((w, b, jnp.ones((1, c), jnp.float32)))   # beta init = ones (f32 epilogue)
    p["res"] = res
    p["last"] = _init_deconv_phases(ks[10], c, 4 * 6)        # ConvTranspose2d(c, 24, 4, 2, 1)
    return p


def make_ifnet_params(key):
    ks = jax.random.split(key, 4)
    cfg = [(7, 192), (12, 128), (12, 96), (12, 64)]
    return [make_ifblock_params(k, ip, c) for k, (ip, c) in zip(ks, cfg)]


# ----------------------------- IFBlock / IFNet forward -----------------------------

def if_block_forward(p, x, flow, scale):
    B, H, W, _ = x.shape
    Hs = int(math.floor(H / scale))
    Ws = int(math.floor(W / scale))
    xs = resize_bilinear(x, Hs, Ws)
    if flow is not None:
        fs = resize_bilinear(flow, Hs, Ws) * (1.0 / scale)
        xs = jnp.concatenate([xs, fs], axis=-1)
    (w0, b0), (w1, b1) = p["c0"]
    f = conv3x3_lrelu(xs, w0, b0, stride=2)
    f = conv3x3_lrelu(f, w1, b1, stride=2)
    for (w, b, beta) in p["res"]:
        f = resconv3x3(f, w, b, beta)
    phase_ws, bl = p["last"]
    t = conv_transpose4x4_s2(f, phase_ws, bl)
    t = pixel_shuffle_nhwc(t, 2)
    Ht = int(math.floor(t.shape[1] * scale))
    Wt = int(math.floor(t.shape[2] * scale))
    t = resize_bilinear(t, Ht, Wt)
    flow_out = t[..., :4] * scale
    mask_out = t[..., 4:5]
    return flow_out, mask_out


def ifnet_forward(params, img0, img1, timestep, scale_list=(8.0, 4.0, 2.0, 1.0)):
    """img0, img1: (B,3,H,W); timestep: (B,1,H,W)  — NCHW like the PyTorch module.
    Returns the merged frame, NCHW (B,3,H,W)."""
    to_nhwc = lambda a: jnp.transpose(a, (0, 2, 3, 1))
    i0, i1, ts = to_nhwc(img0), to_nhwc(img1), to_nhwc(timestep)
    flow = None
    mask = None
    w0, w1 = i0, i1
    for i in range(4):
        if flow is None:
            x = jnp.concatenate([i0[..., :3], i1[..., :3], ts], axis=-1)
            flow, mask = if_block_forward(params[i], x, None, scale_list[i])
        else:
            x = jnp.concatenate([w0[..., :3], w1[..., :3], ts, mask], axis=-1)
            f0, m0 = if_block_forward(params[i], x, flow, scale_list[i])
            flow = flow + f0
            mask = mask + m0
        w0 = warp_nhwc(i0, flow[..., 0:2])
        w1 = warp_nhwc(i1, flow[..., 2:4])
    out = pallas_merge(w0, w1, mask)   # sigmoid(mask) blend, lane-dense Pallas kernel
    return jnp.transpose(out, (0, 3, 1, 2))


# ----------------------------- main -----------------------------

if __name__ == "__main__":
    key = jax.random.PRNGKey(0)
    k0, k1, kp = jax.random.split(key, 3)
    # H, W must be divisible by 32 (scale 8 + two stride-2 convs), as in RIFE padding.
    B, C, H, W = 2, 3, 32, 32
    img0 = jax.random.uniform(k0, (B, C, H, W), jnp.float32)
    img1 = jax.random.uniform(k1, (B, C, H, W), jnp.float32)
    timestep = jnp.full((B, 1, H, W), 0.5, jnp.float32)

    params = make_ifnet_params(kp)

    fwd = jax.jit(partial(ifnet_forward, scale_list=(8.0, 4.0, 2.0, 1.0)))
    out = fwd(params, img0, img1, timestep)
    jax.block_until_ready(out)
    assert out.shape == (B, C, H, W) and out.dtype == jnp.float32
    assert bool(jnp.all(jnp.isfinite(out)))
    print("KERNEL_OK")
</pallas_src>

<mosaic_0001>
module attributes {stable_mosaic.version = 11 : i64} {
  func.func @_mm_bias_lrelu_kernel(%arg0: i32, %arg1: memref<16x63xbf16, #tpu.memory_space<vmem>>, %arg2: memref<63x96xbf16, #tpu.memory_space<vmem>>, %arg3: memref<1x96xf32, #tpu.memory_space<vmem>>, %arg4: memref<16x96xbf16, #tpu.memory_space<vmem>>) attributes {dimension_semantics = [#tpu.dimension_semantics<parallel>], iteration_bounds = array<i64: 1>, scalar_prefetch = 0 : i64, scratch_operands = 0 : i64, tpu.core_type = #tpu.core_type<tc>, window_params = [{transform_indices = @transform_0, window_bounds = array<i64: 16, 63>}, {pipeline_mode = #tpu.pipeline_mode<synchronous>, transform_indices = @transform_1, window_bounds = array<i64: 63, 96>}, {pipeline_mode = #tpu.pipeline_mode<synchronous>, transform_indices = @transform_2, window_bounds = array<i64: 1, 96>}, {transform_indices = @transform_3, window_bounds = array<i64: 16, 96>}]} {
    %c0 = arith.constant 0 : index
    %c0_0 = arith.constant 0 : index
    %0 = vector.load %arg1[%c0, %c0_0] : memref<16x63xbf16, #tpu.memory_space<vmem>>, vector<16x63xbf16>
    %c0_1 = arith.constant 0 : index
    %c0_2 = arith.constant 0 : index
    %1 = vector.load %arg2[%c0_1, %c0_2] : memref<63x96xbf16, #tpu.memory_space<vmem>>, vector<63x96xbf16>
    %cst = arith.constant dense<0.000000e+00> : vector<16x96xf32>
    %2 = tpu.matmul %0, %1, %cst {dimension_numbers = #tpu.dot_dimension_numbers<[1], [0], [0], [1], [0, 0, 1, 1], [], []>} : vector<16x63xbf16>, vector<63x96xbf16>, vector<16x96xf32> -> vector<16x96xf32>
    %c0_3 = arith.constant 0 : index
    %c0_4 = arith.constant 0 : index
    %3 = vector.load %arg3[%c0_3, %c0_4] : memref<1x96xf32, #tpu.memory_space<vmem>>, vector<1x96xf32>
    %4 = vector.broadcast %3 : vector<1x96xf32> to vector<16x96xf32>
    %5 = arith.addf %2, %4 : vector<16x96xf32>
    %cst_5 = arith.constant 0.000000e+00 : f32
    %6 = vector.broadcast %cst_5 : f32 to vector<16x96xf32>
    %7 = arith.cmpf oge, %5, %6 : vector<16x96xf32>
    %cst_6 = arith.constant 2.000000e-01 : f32
    %8 = vector.broadcast %cst_6 : f32 to vector<16x96xf32>
    %9 = arith.mulf %8, %5 : vector<16x96xf32>
    %10 = arith.select %7, %5, %9 : vector<16x96xi1>, vector<16x96xf32>
    %11 = arith.truncf %10 : vector<16x96xf32> to vector<16x96xbf16>
    %c0_7 = arith.constant 0 : index
    %c0_8 = arith.constant 0 : index
    %12 = vector.load %arg4[%c0_7, %c0_8] : memref<16x96xbf16, #tpu.memory_space<vmem>>, vector<16x96xbf16>
    tpu.vector_store %arg4[%c0_7, %c0_8], %11 {strides = array<i32>} : memref<16x96xbf16, #tpu.memory_space<vmem>>, vector<16x96xbf16>,
    return
  }
  func.func @transform_0(%arg0: i32) -> (i32, i32) {
    %c0_i32 = arith.constant 0 : i32
    %c0_i32_0 = arith.constant 0 : i32
    return %arg0, %c0_i32 : i32, i32
  }
  func.func @transform_1(%arg0: i32) -> (i32, i32) {
    %c0_i32 = arith.constant 0 : i32
    %c0_i32_0 = arith.constant 0 : i32
    %c0_i32_1 = arith.constant 0 : i32
    return %c0_i32, %c0_i32_0 : i32, i32
  }
  func.func @transform_2(%arg0: i32) -> (i32, i32) {
    %c0_i32 = arith.constant 0 : i32
    %c0_i32_0 = arith.constant 0 : i32
    %c0_i32_1 = arith.constant 0 : i32
    return %c0_i32, %c0_i32_0 : i32, i32
  }
  func.func @transform_3(%arg0: i32) -> (i32, i32) {
    %c0_i32 = arith.constant 0 : i32
    %c0_i32_0 = arith.constant 0 : i32
    return %arg0, %c0_i32 : i32, i32
  }
}

module attributes {stable_mosaic.version = 11 : i64} {
  func.func @_mm_bias_lrelu_kernel(%arg0: i32, %arg1: memref<16x864xbf16, #tpu.memory_space<vmem>>, %arg2: memref<864x192xbf16, #tpu.memory_space<vmem>>, %arg3: memref<1x192xf32, #tpu.memory_space<vmem>>, %arg4: memref<16x192xbf16, #tpu.memory_space<vmem>>) attributes {dimension_semantics = [#tpu.dimension_semantics<parallel>], iteration_bounds = array<i64: 1>, scalar_prefetch = 0 : i64, scratch_operands = 0 : i64, tpu.core_type = #tpu.core_type<tc>, window_params = [{transform_indices = @transform_0, window_bounds = array<i64: 16, 864>}, {pipeline_mode = #tpu.pipeline_mode<synchronous>, transform_indices = @transform_1, window_bounds = array<i64: 864, 192>}, {pipeline_mode = #tpu.pipeline_mode<synchronous>, transform_indices = @transform_2, window_bounds = array<i64: 1, 192>}, {transform_indices = @transform_3, window_bounds = array<i64: 16, 192>}]} {
    %c0 = arith.constant 0 : index
    %c0_0 = arith.constant 0 : index
    %0 = vector.load %arg1[%c0, %c0_0] : memref<16x864xbf16, #tpu.memory_space<vmem>>, vector<16x864xbf16>
    %c0_1 = arith.constant 0 : index
    %c0_2 = arith.constant 0 : index
    %1 = vector.load %arg2[%c0_1, %c0_2] : memref<864x192xbf16, #tpu.memory_space<vmem>>, vector<864x192xbf16>
    %cst = arith.constant dense<0.000000e+00> : vector<16x192xf32>
    %2 = tpu.matmul %0, %1, %cst {dimension_numbers = #tpu.dot_dimension_numbers<[1], [0], [0], [1], [0, 0, 1, 1], [], []>} : vector<16x864xbf16>, vector<864x192xbf16>, vector<16x192xf32> -> vector<16x192xf32>
    %c0_3 = arith.constant 0 : index
    %c0_4 = arith.constant 0 : index
    %3 = vector.load %arg3[%c0_3, %c0_4] : memref<1x192xf32, #tpu.memory_space<vmem>>, vector<1x192xf32>
    %4 = vector.broadcast %3 : vector<1x192xf32> to vector<16x192xf32>
    %5 = arith.addf %2, %4 : vector<16x192xf32>
    %cst_5 = arith.constant 0.000000e+00 : f32
    %6 = vector.broadcast %cst_5 : f32 to vector<16x192xf32>
    %7 = arith.cmpf oge, %5, %6 : vector<16x192xf32>
    %cst_6 = arith.constant 2.000000e-01 : f32
    %8 = vector.broadcast %cst_6 : f32 to vector<16x192xf32>
    %9 = arith.mulf %8, %5 : vector<16x192xf32>
    %10 = arith.select %7, %5, %9 : vector<16x192xi1>, vector<16x192xf32>
    %11 = arith.truncf %10 : vector<16x192xf32> to vector<16x192xbf16>
    %c0_7 = arith.constant 0 : index
    %c0_8 = arith.constant 0 : index
    %12 = vector.load %arg4[%c0_7, %c0_8] : memref<16x192xbf16, #tpu.memory_space<vmem>>, vector<16x192xbf16>
    tpu.vector_store %arg4[%c0_7, %c0_8], %11 {strides = array<i32>} : memref<16x192xbf16, #tpu.memory_space<vmem>>, vector<16x192xbf16>,
    return
  }
  func.func @transform_0(%arg0: i32) -> (i32, i32) {
    %c0_i32 = arith.constant 0 : i32
    %c0_i32_0 = arith.constant 0 : i32
    return %arg0, %c0_i32 : i32, i32
  }
  func.func @transform_1(%arg0: i32) -> (i32, i32) {
    %c0_i32 = arith.constant 0 : i32
    %c0_i32_0 = arith.constant 0 : i32
    %c0_i32_1 = arith.constant 0 : i32
    return %c0_i32, %c0_i32_0 : i32, i32
  }
  func.func @transform_2(%arg0: i32) -> (i32, i32) {
    %c0_i32 = arith.constant 0 : i32
    %c0_i32_0 = arith.constant 0 : i32
    %c0_i32_1 = arith.constant 0 : i32
    return %c0_i32, %c0_i32_0 : i32, i32
  }
  func.func @transform_3(%arg0: i32) -> (i32, i32) {
    %c0_i32 = arith.constant 0 : i32
    %c0_i32_0 = arith.constant 0 : i32
    return %arg0, %c0_i32 : i32, i32
  }
}

module attributes {stable_mosaic.version = 11 : i64} {
  func.func @_mm_res_lrelu_kernel(%arg0: i32, %arg1: memref<16x1728xbf16, #tpu.memory_space<vmem>>, %arg2: memref<1728x192xbf16, #tpu.memory_space<vmem>>, %arg3: memref<1x192xf32, #tpu.memory_space<vmem>>, %arg4: memref<1x192xf32, #tpu.memory_space<vmem>>, %arg5: memref<16x192xbf16, #tpu.memory_space<vmem>>, %arg6: memref<16x192xbf16, #tpu.memory_space<vmem>>) attributes {dimension_semantics = [#tpu.dimension_semantics<parallel>], iteration_bounds = array<i64: 1>, scalar_prefetch = 0 : i64, scratch_operands = 0 : i64, tpu.core_type = #tpu.core_type<tc>, window_params = [{transform_indices = @transform_0, window_bounds = array<i64: 16, 1728>}, {pipeline_mode = #tpu.pipeline_mode<synchronous>, transform_indices = @transform_1, window_bounds = array<i64: 1728, 192>}, {pipeline_mode = #tpu.pipeline_mode<synchronous>, transform_indices = @transform_2, window_bounds = array<i64: 1, 192>}, {pipeline_mode = #tpu.pipeline_mode<synchronous>, transform_indices = @transform_3, window_bounds = array<i64: 1, 192>}, {transform_indices = @transform_4, window_bounds = array<i64: 16, 192>}, {transform_indices = @transform_5, window_bounds = array<i64: 16, 192>}]} {
    %c0 = arith.constant 0 : index
    %c0_0 = arith.constant 0 : index
    %0 = vector.load %arg1[%c0, %c0_0] : memref<16x1728xbf16, #tpu.memory_space<vmem>>, vector<16x1728xbf16>
    %c0_1 = arith.constant 0 : index
    %c0_2 = arith.constant 0 : index
    %1 = vector.load %arg2[%c0_1, %c0_2] : memref<1728x192xbf16, #tpu.memory_space<vmem>>, vector<1728x192xbf16>
    %cst = arith.constant dense<0.000000e+00> : vector<16x192xf32>
    %2 = tpu.matmul %0, %1, %cst {dimension_numbers = #tpu.dot_dimension_numbers<[1], [0], [0], [1], [0, 0, 1, 1], [], []>} : vector<16x1728xbf16>, vector<1728x192xbf16>, vector<16x192xf32> -> vector<16x192xf32>
    %c0_3 = arith.constant 0 : index
    %c0_4 = arith.constant 0 : index
    %3 = vector.load %arg3[%c0_3, %c0_4] : memref<1x192xf32, #tpu.memory_space<vmem>>, vector<1x192xf32>
    %4 = vector.broadcast %3 : vector<1x192xf32> to vector<16x192xf32>
    %5 = arith.addf %2, %4 : vector<16x192xf32>
    %c0_5 = arith.constant 0 : index
    %c0_6 = arith.constant 0 : index
    %6 = vector.load %arg4[%c0_5, %c0_6] : memref<1x192xf32, #tpu.memory_space<vmem>>, vector<1x192xf32>
    %7 = vector.broadcast %6 : vector<1x192xf32> to vector<16x192xf32>
    %8 = arith.mulf %5, %7 : vector<16x192xf32>
    %c0_7 = arith.constant 0 : index
    %c0_8 = arith.constant 0 : index
    %9 = vector.load %arg5[%c0_7, %c0_8] : memref<16x192xbf16, #tpu.memory_space<vmem>>, vector<16x192xbf16>
    %10 = arith.extf %9 : vector<16x192xbf16> to vector<16x192xf32>
    %11 = arith.addf %8, %10 : vector<16x192xf32>
    %cst_9 = arith.constant 0.000000e+00 : f32
    %12 = vector.broadcast %cst_9 : f32 to vector<16x192xf32>
    %13 = arith.cmpf oge, %11, %12 : vector<16x192xf32>
    %cst_10 = arith.constant 2.000000e-01 : f32
    %14 = vector.broadcast %cst_10 : f32 to vector<16x192xf32>
    %15 = arith.mulf %14, %11 : vector<16x192xf32>
    %16 = arith.select %13, %11, %15 : vector<16x192xi1>, vector<16x192xf32>
    %17 = arith.truncf %16 : vector<16x192xf32> to vector<16x192xbf16>
    %c0_11 = arith.constant 0 : index
    %c0_12 = arith.constant 0 : index
    %18 = vector.load %arg6[%c0_11, %c0_12] : memref<16x192xbf16, #tpu.memory_space<vmem>>, vector<16x192xbf16>
    tpu.vector_store %arg6[%c0_11, %c0_12], %17 {strides = array<i32>} : memref<16x192xbf16, #tpu.memory_space<vmem>>, vector<16x192xbf16>,
    return
  }
  func.func @transform_0(%arg0: i32) -> (i32, i32) {
    %c0_i32 = arith.constant 0 : i32
    %c0_i32_0 = arith.constant 0 : i32
    return %arg0, %c0_i32 : i32, i32
  }
  func.func @transform_1(%arg0: i32) -> (i32, i32) {
    %c0_i32 = arith.constant 0 : i32
    %c0_i32_0 = arith.constant 0 : i32
    %c0_i32_1 = arith.constant 0 : i32
    return %c0_i32, %c0_i32_0 : i32, i32
  }
  func.func @transform_2(%arg0: i32) -> (i32, i32) {
    %c0_i32 = arith.constant 0 : i32
    %c0_i32_0 = arith.constant 0 : i32
    %c0_i32_1 = arith.constant 0 : i32
    return %c0_i32, %c0_i32_0 : i32, i32
  }
  func.func @transform_3(%arg0: i32) -> (i32, i32) {
    %c0_i32 = arith.constant 0 : i32
    %c0_i32_0 = arith.constant 0 : i32
    %c0_i32_1 = arith.constant 0 : i32
    return %c0_i32, %c0_i32_0 : i32, i32
  }
  func.func @transform_4(%arg0: i32) -> (i32, i32) {
    %c0_i32 = arith.constant 0 : i32
    %c0_i32_0 = arith.constant 0 : i32
    return %arg0, %c0_i32 : i32, i32
  }
  func.func @transform_5(%arg0: i32) -> (i32, i32) {
    %c0_i32 = arith.constant 0 : i32
    %c0_i32_0 = arith.constant 0 : i32
    return %arg0, %c0_i32 : i32, i32
  }
}

module attributes {stable_mosaic.version = 11 : i64} {
  func.func @_mm_bias_kernel(%arg0: i32, %arg1: memref<16x768xbf16, #tpu.memory_space<vmem>>, %arg2: memref<768x24xbf16, #tpu.memory_space<vmem>>, %arg3: memref<1x24xf32, #tpu.memory_space<vmem>>, %arg4: memref<16x24xf32, #tpu.memory_space<vmem>>) attributes {dimension_semantics = [#tpu.dimension_semantics<parallel>], iteration_bounds = array<i64: 1>, scalar_prefetch = 0 : i64, scratch_operands = 0 : i64, tpu.core_type = #tpu.core_type<tc>, window_params = [{transform_indices = @transform_0, window_bounds = array<i64: 16, 768>}, {pipeline_mode = #tpu.pipeline_mode<synchronous>, transform_indices = @transform_1, window_bounds = array<i64: 768, 24>}, {pipeline_mode = #tpu.pipeline_mode<synchronous>, transform_indices = @transform_2, window_bounds = array<i64: 1, 24>}, {transform_indices = @transform_3, window_bounds = array<i64: 16, 24>}]} {
    %c0 = arith.constant 0 : index
    %c0_0 = arith.constant 0 : index
    %0 = vector.load %arg1[%c0, %c0_0] : memref<16x768xbf16, #tpu.memory_space<vmem>>, vector<16x768xbf16>
    %c0_1 = arith.constant 0 : index
    %c0_2 = arith.constant 0 : index
    %1 = vector.load %arg2[%c0_1, %c0_2] : memref<768x24xbf16, #tpu.memory_space<vmem>>, vector<768x24xbf16>
    %cst = arith.constant dense<0.000000e+00> : vector<16x24xf32>
    %2 = tpu.matmul %0, %1, %cst {dimension_numbers = #tpu.dot_dimension_numbers<[1], [0], [0], [1], [0, 0, 1, 1], [], []>} : vector<16x768xbf16>, vector<768x24xbf16>, vector<16x24xf32> -> vector<16x24xf32>
    %c0_3 = arith.constant 0 : index
    %c0_4 = arith.constant 0 : index
    %3 = vector.load %arg3[%c0_3, %c0_4] : memref<1x24xf32, #tpu.memory_space<vmem>>, vector<1x24xf32>
    %4 = vector.broadcast %3 : vector<1x24xf32> to vector<16x24xf32>
    %5 = arith.addf %2, %4 : vector<16x24xf32>
    %c0_5 = arith.constant 0 : index
    %c0_6 = arith.constant 0 : index
    %6 = vector.load %arg4[%c0_5, %c0_6] : memref<16x24xf32, #tpu.memory_space<vmem>>, vector<16x24xf32>
    tpu.vector_store %arg4[%c0_5, %c0_6], %5 {strides = array<i32>} : memref<16x24xf32, #tpu.memory_space<vmem>>, vector<16x24xf32>,
    return
  }
  func.func @transform_0(%arg0: i32) -> (i32, i32) {
    %c0_i32 = arith.constant 0 : i32
    %c0_i32_0 = arith.constant 0 : i32
    return %arg0, %c0_i32 : i32, i32
  }
  func.func @transform_1(%arg0: i32) -> (i32, i32) {
    %c0_i32 = arith.constant 0 : i32
    %c0_i32_0 = arith.constant 0 : i32
    %c0_i32_1 = arith.constant 0 : i32
    return %c0_i32, %c0_i32_0 : i32, i32
  }
  func.func @transform_2(%arg0: i32) -> (i32, i32) {
    %c0_i32 = arith.constant 0 : i32
    %c0_i32_0 = arith.constant 0 : i32
    %c0_i32_1 = arith.constant 0 : i32
    return %c0_i32, %c0_i32_0 : i32, i32
  }
  func.func @transform_3(%arg0: i32) -> (i32, i32) {
    %c0_i32 = arith.constant 0 : i32
    %c0_i32_0 = arith.constant 0 : i32
    return %arg0, %c0_i32 : i32, i32
  }
}

module attributes {stable_mosaic.version = 11 : i64} {
  func.func @_mm_bias_lrelu_kernel(%arg0: i32, %arg1: memref<32x108xbf16, #tpu.memory_space<vmem>>, %arg2: memref<108x64xbf16, #tpu.memory_space<vmem>>, %arg3: memref<1x64xf32, #tpu.memory_space<vmem>>, %arg4: memref<32x64xbf16, #tpu.memory_space<vmem>>) attributes {dimension_semantics = [#tpu.dimension_semantics<parallel>], iteration_bounds = array<i64: 1>, scalar_prefetch = 0 : i64, scratch_operands = 0 : i64, tpu.core_type = #tpu.core_type<tc>, window_params = [{transform_indices = @transform_0, window_bounds = array<i64: 32, 108>}, {pipeline_mode = #tpu.pipeline_mode<synchronous>, transform_indices = @transform_1, window_bounds = array<i64: 108, 64>}, {pipeline_mode = #tpu.pipeline_mode<synchronous>, transform_indices = @transform_2, window_bounds = array<i64: 1, 64>}, {transform_indices = @transform_3, window_bounds = array<i64: 32, 64>}]} {
    %c0 = arith.constant 0 : index
    %c0_0 = arith.constant 0 : index
    %0 = vector.load %arg1[%c0, %c0_0] : memref<32x108xbf16, #tpu.memory_space<vmem>>, vector<32x108xbf16>
    %c0_1 = arith.constant 0 : index
    %c0_2 = arith.constant 0 : index
    %1 = vector.load %arg2[%c0_1, %c0_2] : memref<108x64xbf16, #tpu.memory_space<vmem>>, vector<108x64xbf16>
    %cst = arith.constant dense<0.000000e+00> : vector<32x64xf32>
    %2 = tpu.matmul %0, %1, %cst {dimension_numbers = #tpu.dot_dimension_numbers<[1], [0], [0], [1], [0, 0, 1, 1], [], []>} : vector<32x108xbf16>, vector<108x64xbf16>, vector<32x64xf32> -> vector<32x64xf32>
    %c0_3 = arith.constant 0 : index
    %c0_4 = arith.constant 0 : index
    %3 = vector.load %arg3[%c0_3, %c0_4] : memref<1x64xf32, #tpu.memory_space<vmem>>, vector<1x64xf32>
    %4 = vector.broadcast %3 : vector<1x64xf32> to vector<32x64xf32>
    %5 = arith.addf %2, %4 : vector<32x64xf32>
    %cst_5 = arith.constant 0.000000e+00 : f32
    %6 = vector.broadcast %cst_5 : f32 to vector<32x64xf32>
    %7 = arith.cmpf oge, %5, %6 : vector<32x64xf32>
    %cst_6 = arith.constant 2.000000e-01 : f32
    %8 = vector.broadcast %cst_6 : f32 to vector<32x64xf32>
    %9 = arith.mulf %8, %5 : vector<32x64xf32>
    %10 = arith.select %7, %5, %9 : vector<32x64xi1>, vector<32x64xf32>
    %11 = arith.truncf %10 : vector<32x64xf32> to vector<32x64xbf16>
    %c0_7 = arith.constant 0 : index
    %c0_8 = arith.constant 0 : index
    %12 = vector.load %arg4[%c0_7, %c0_8] : memref<32x64xbf16, #tpu.memory_space<vmem>>, vector<32x64xbf16>
    tpu.vector_store %arg4[%c0_7, %c0_8], %11 {strides = array<i32>} : memref<32x64xbf16, #tpu.memory_space<vmem>>, vector<32x64xbf16>,
    return
  }
  func.func @transform_0(%arg0: i32) -> (i32, i32) {
    %c0_i32 = arith.constant 0 : i32
    %c0_i32_0 = arith.constant 0 : i32
    return %arg0, %c0_i32 : i32, i32
  }
  func.func @transform_1(%arg0: i32) -> (i32, i32) {
    %c0_i32 = arith.constant 0 : i32
    %c0_i32_0 = arith.constant 0 : i32
    %c0_i32_1 = arith.constant 0 : i32
    return %c0_i32, %c0_i32_0 : i32, i32
  }
  func.func @transform_2(%arg0: i32) -> (i32, i32) {
    %c0_i32 = arith.constant 0 : i32
    %c0_i32_0 = arith.constant 0 : i32
    %c0_i32_1 = arith.constant 0 : i32
    return %c0_i32, %c0_i32_0 : i32, i32
  }
  func.func @transform_3(%arg0: i32) -> (i32, i32) {
    %c0_i32 = arith.constant 0 : i32
    %c0_i32_0 = arith.constant 0 : i32
    return %arg0, %c0_i32 : i32, i32
  }
}

module attributes {stable_mosaic.version = 11 : i64} {
  func.func @_mm_bias_lrelu_kernel(%arg0: i32, %arg1: memref<16x576xbf16, #tpu.memory_space<vmem>>, %arg2: memref<576x128xbf16, #tpu.memory_space<vmem>>, %arg3: memref<1x128xf32, #tpu.memory_space<vmem>>, %arg4: memref<16x128xbf16, #tpu.memory_space<vmem>>) attributes {dimension_semantics = [#tpu.dimension_semantics<parallel>], iteration_bounds = array<i64: 1>, scalar_prefetch = 0 : i64, scratch_operands = 0 : i64, tpu.core_type = #tpu.core_type<tc>, window_params = [{transform_indices = @transform_0, window_bounds = array<i64: 16, 576>}, {pipeline_mode = #tpu.pipeline_mode<synchronous>, transform_indices = @transform_1, window_bounds = array<i64: 576, 128>}, {pipeline_mode = #tpu.pipeline_mode<synchronous>, transform_indices = @transform_2, window_bounds = array<i64: 1, 128>}, {transform_indices = @transform_3, window_bounds = array<i64: 16, 128>}]} {
    %c0 = arith.constant 0 : index
    %c0_0 = arith.constant 0 : index
    %0 = vector.load %arg1[%c0, %c0_0] : memref<16x576xbf16, #tpu.memory_space<vmem>>, vector<16x576xbf16>
    %c0_1 = arith.constant 0 : index
    %c0_2 = arith.constant 0 : index
    %1 = vector.load %arg2[%c0_1, %c0_2] : memref<576x128xbf16, #tpu.memory_space<vmem>>, vector<576x128xbf16>
    %cst = arith.constant dense<0.000000e+00> : vector<16x128xf32>
    %2 = tpu.matmul %0, %1, %cst {dimension_numbers = #tpu.dot_dimension_numbers<[1], [0], [0], [1], [0, 0, 1, 1], [], []>} : vector<16x576xbf16>, vector<576x128xbf16>, vector<16x128xf32> -> vector<16x128xf32>
    %c0_3 = arith.constant 0 : index
    %c0_4 = arith.constant 0 : index
    %3 = vector.load %arg3[%c0_3, %c0_4] : memref<1x128xf32, #tpu.memory_space<vmem>>, vector<1x128xf32>
    %4 = vector.broadcast %3 : vector<1x128xf32> to vector<16x128xf32>
    %5 = arith.addf %2, %4 : vector<16x128xf32>
    %cst_5 = arith.constant 0.000000e+00 : f32
    %6 = vector.broadcast %cst_5 : f32 to vector<16x128xf32>
    %7 = arith.cmpf oge, %5, %6 : vector<16x128xf32>
    %cst_6 = arith.constant 2.000000e-01 : f32
    %8 = vector.broadcast %cst_6 : f32 to vector<16x128xf32>
    %9 = arith.mulf %8, %5 : vector<16x128xf32>
    %10 = arith.select %7, %5, %9 : vector<16x128xi1>, vector<16x128xf32>
    %11 = arith.truncf %10 : vector<16x128xf32> to vector<16x128xbf16>
    %c0_7 = arith.constant 0 : index
    %c0_8 = arith.constant 0 : index
    %12 = vector.load %arg4[%c0_7, %c0_8] : memref<16x128xbf16, #tpu.memory_space<vmem>>, vector<16x128xbf16>
    tpu.vector_store %arg4[%c0_7, %c0_8], %11 {strides = array<i32>} : memref<16x128xbf16, #tpu.memory_space<vmem>>, vector<16x128xbf16>,
    return
  }
  func.func @transform_0(%arg0: i32) -> (i32, i32) {
    %c0_i32 = arith.constant 0 : i32
    %c0_i32_0 = arith.constant 0 : i32
    return %arg0, %c0_i32 : i32, i32
  }
  func.func @transform_1(%arg0: i32) -> (i32, i32) {
    %c0_i32 = arith.constant 0 : i32
    %c0_i32_0 = arith.constant 0 : i32
    %c0_i32_1 = arith.constant 0 : i32
    return %c0_i32, %c0_i32_0 : i32, i32
  }
  func.func @transform_2(%arg0: i32) -> (i32, i32) {
    %c0_i32 = arith.constant 0 : i32
    %c0_i32_0 = arith.constant 0 : i32
    %c0_i32_1 = arith.constant 0 : i32
    return %c0_i32, %c0_i32_0 : i32, i32
  }
  func.func @transform_3(%arg0: i32) -> (i32, i32) {
    %c0_i32 = arith.constant 0 : i32
    %c0_i32_0 = arith.constant 0 : i32
    return %arg0, %c0_i32 : i32, i32
  }
}

module attributes {stable_mosaic.version = 11 : i64} {
  func.func @_mm_res_lrelu_kernel(%arg0: i32, %arg1: memref<16x1152xbf16, #tpu.memory_space<vmem>>, %arg2: memref<1152x128xbf16, #tpu.memory_space<vmem>>, %arg3: memref<1x128xf32, #tpu.memory_space<vmem>>, %arg4: memref<1x128xf32, #tpu.memory_space<vmem>>, %arg5: memref<16x128xbf16, #tpu.memory_space<vmem>>, %arg6: memref<16x128xbf16, #tpu.memory_space<vmem>>) attributes {dimension_semantics = [#tpu.dimension_semantics<parallel>], iteration_bounds = array<i64: 1>, scalar_prefetch = 0 : i64, scratch_operands = 0 : i64, tpu.core_type = #tpu.core_type<tc>, window_params = [{transform_indices = @transform_0, window_bounds = array<i64: 16, 1152>}, {pipeline_mode = #tpu.pipeline_mode<synchronous>, transform_indices = @transform_1, window_bounds = array<i64: 1152, 128>}, {pipeline_mode = #tpu.pipeline_mode<synchronous>, transform_indices = @transform_2, window_bounds = array<i64: 1, 128>}, {pipeline_mode = #tpu.pipeline_mode<synchronous>, transform_indices = @transform_3, window_bounds = array<i64: 1, 128>}, {transform_indices = @transform_4, window_bounds = array<i64: 16, 128>}, {transform_indices = @transform_5, window_bounds = array<i64: 16, 128>}]} {
    %c0 = arith.constant 0 : index
    %c0_0 = arith.constant 0 : index
    %0 = vector.load %arg1[%c0, %c0_0] : memref<16x1152xbf16, #tpu.memory_space<vmem>>, vector<16x1152xbf16>
    %c0_1 = arith.constant 0 : index
    %c0_2 = arith.constant 0 : index
    %1 = vector.load %arg2[%c0_1, %c0_2] : memref<1152x128xbf16, #tpu.memory_space<vmem>>, vector<1152x128xbf16>
    %cst = arith.constant dense<0.000000e+00> : vector<16x128xf32>
    %2 = tpu.matmul %0, %1, %cst {dimension_numbers = #tpu.dot_dimension_numbers<[1], [0], [0], [1], [0, 0, 1, 1], [], []>} : vector<16x1152xbf16>, vector<1152x128xbf16>, vector<16x128xf32> -> vector<16x128xf32>
    %c0_3 = arith.constant 0 : index
    %c0_4 = arith.constant 0 : index
    %3 = vector.load %arg3[%c0_3, %c0_4] : memref<1x128xf32, #tpu.memory_space<vmem>>, vector<1x128xf32>
    %4 = vector.broadcast %3 : vector<1x128xf32> to vector<16x128xf32>
    %5 = arith.addf %2, %4 : vector<16x128xf32>
    %c0_5 = arith.constant 0 : index
    %c0_6 = arith.constant 0 : index
    %6 = vector.load %arg4[%c0_5, %c0_6] : memref<1x128xf32, #tpu.memory_space<vmem>>, vector<1x128xf32>
    %7 = vector.broadcast %6 : vector<1x128xf32> to vector<16x128xf32>
    %8 = arith.mulf %5, %7 : vector<16x128xf32>
    %c0_7 = arith.constant 0 : index
    %c0_8 = arith.constant 0 : index
    %9 = vector.load %arg5[%c0_7, %c0_8] : memref<16x128xbf16, #tpu.memory_space<vmem>>, vector<16x128xbf16>
    %10 = arith.extf %9 : vector<16x128xbf16> to vector<16x128xf32>
    %11 = arith.addf %8, %10 : vector<16x128xf32>
    %cst_9 = arith.constant 0.000000e+00 : f32
    %12 = vector.broadcast %cst_9 : f32 to vector<16x128xf32>
    %13 = arith.cmpf oge, %11, %12 : vector<16x128xf32>
    %cst_10 = arith.constant 2.000000e-01 : f32
    %14 = vector.broadcast %cst_10 : f32 to vector<16x128xf32>
    %15 = arith.mulf %14, %11 : vector<16x128xf32>
    %16 = arith.select %13, %11, %15 : vector<16x128xi1>, vector<16x128xf32>
    %17 = arith.truncf %16 : vector<16x128xf32> to vector<16x128xbf16>
    %c0_11 = arith.constant 0 : index
    %c0_12 = arith.constant 0 : index
    %18 = vector.load %arg6[%c0_11, %c0_12] : memref<16x128xbf16, #tpu.memory_space<vmem>>, vector<16x128xbf16>
    tpu.vector_store %arg6[%c0_11, %c0_12], %17 {strides = array<i32>} : memref<16x128xbf16, #tpu.memory_space<vmem>>, vector<16x128xbf16>,
    return
  }
  func.func @transform_0(%arg0: i32) -> (i32, i32) {
    %c0_i32 = arith.constant 0 : i32
    %c0_i32_0 = arith.constant 0 : i32
    return %arg0, %c0_i32 : i32, i32
  }
  func.func @transform_1(%arg0: i32) -> (i32, i32) {
    %c0_i32 = arith.constant 0 : i32
    %c0_i32_0 = arith.constant 0 : i32
    %c0_i32_1 = arith.constant 0 : i32
    return %c0_i32, %c0_i32_0 : i32, i32
  }
  func.func @transform_2(%arg0: i32) -> (i32, i32) {
    %c0_i32 = arith.constant 0 : i32
    %c0_i32_0 = arith.constant 0 : i32
    %c0_i32_1 = arith.constant 0 : i32
    return %c0_i32, %c0_i32_0 : i32, i32
  }
  func.func @transform_3(%arg0: i32) -> (i32, i32) {
    %c0_i32 = arith.constant 0 : i32
    %c0_i32_0 = arith.constant 0 : i32
    %c0_i32_1 = arith.constant 0 : i32
    return %c0_i32, %c0_i32_0 : i32, i32
  }
  func.func @transform_4(%arg0: i32) -> (i32, i32) {
    %c0_i32 = arith.constant 0 : i32
    %c0_i32_0 = arith.constant 0 : i32
    return %arg0, %c0_i32 : i32, i32
  }
  func.func @transform_5(%arg0: i32) -> (i32, i32) {
    %c0_i32 = arith.constant 0 : i32
    %c0_i32_0 = arith.constant 0 : i32
    return %arg0, %c0_i32 : i32, i32
  }
}

module attributes {stable_mosaic.version = 11 : i64} {
  func.func @_mm_bias_kernel(%arg0: i32, %arg1: memref<16x512xbf16, #tpu.memory_space<vmem>>, %arg2: memref<512x24xbf16, #tpu.memory_space<vmem>>, %arg3: memref<1x24xf32, #tpu.memory_space<vmem>>, %arg4: memref<16x24xf32, #tpu.memory_space<vmem>>) attributes {dimension_semantics = [#tpu.dimension_semantics<parallel>], iteration_bounds = array<i64: 1>, scalar_prefetch = 0 : i64, scratch_operands = 0 : i64, tpu.core_type = #tpu.core_type<tc>, window_params = [{transform_indices = @transform_0, window_bounds = array<i64: 16, 512>}, {pipeline_mode = #tpu.pipeline_mode<synchronous>, transform_indices = @transform_1, window_bounds = array<i64: 512, 24>}, {pipeline_mode = #tpu.pipeline_mode<synchronous>, transform_indices = @transform_2, window_bounds = array<i64: 1, 24>}, {transform_indices = @transform_3, window_bounds = array<i64: 16, 24>}]} {
    %c0 = arith.constant 0 : index
    %c0_0 = arith.constant 0 : index
    %0 = vector.load %arg1[%c0, %c0_0] : memref<16x512xbf16, #tpu.memory_space<vmem>>, vector<16x512xbf16>
    %c0_1 = arith.constant 0 : index
    %c0_2 = arith.constant 0 : index
    %1 = vector.load %arg2[%c0_1, %c0_2] : memref<512x24xbf16, #tpu.memory_space<vmem>>, vector<512x24xbf16>
    %cst = arith.constant dense<0.000000e+00> : vector<16x24xf32>
    %2 = tpu.matmul %0, %1, %cst {dimension_numbers = #tpu.dot_dimension_numbers<[1], [0], [0], [1], [0, 0, 1, 1], [], []>} : vector<16x512xbf16>, vector<512x24xbf16>, vector<16x24xf32> -> vector<16x24xf32>
    %c0_3 = arith.constant 0 : index
    %c0_4 = arith.constant 0 : index
    %3 = vector.load %arg3[%c0_3, %c0_4] : memref<1x24xf32, #tpu.memory_space<vmem>>, vector<1x24xf32>
    %4 = vector.broadcast %3 : vector<1x24xf32> to vector<16x24xf32>
    %5 = arith.addf %2, %4 : vector<16x24xf32>
    %c0_5 = arith.constant 0 : index
    %c0_6 = arith.constant 0 : index
    %6 = vector.load %arg4[%c0_5, %c0_6] : memref<16x24xf32, #tpu.memory_space<vmem>>, vector<16x24xf32>
    tpu.vector_store %arg4[%c0_5, %c0_6], %5 {strides = array<i32>} : memref<16x24xf32, #tpu.memory_space<vmem>>, vector<16x24xf32>,
    return
  }
  func.func @transform_0(%arg0: i32) -> (i32, i32) {
    %c0_i32 = arith.constant 0 : i32
    %c0_i32_0 = arith.constant 0 : i32
    return %arg0, %c0_i32 : i32, i32
  }
  func.func @transform_1(%arg0: i32) -> (i32, i32) {
    %c0_i32 = arith.constant 0 : i32
    %c0_i32_0 = arith.constant 0 : i32
    %c0_i32_1 = arith.constant 0 : i32
    return %c0_i32, %c0_i32_0 : i32, i32
  }
  func.func @transform_2(%arg0: i32) -> (i32, i32) {
    %c0_i32 = arith.constant 0 : i32
    %c0_i32_0 = arith.constant 0 : i32
    %c0_i32_1 = arith.constant 0 : i32
    return %c0_i32, %c0_i32_0 : i32, i32
  }
  func.func @transform_3(%arg0: i32) -> (i32, i32) {
    %c0_i32 = arith.constant 0 : i32
    %c0_i32_0 = arith.constant 0 : i32
    return %arg0, %c0_i32 : i32, i32
  }
}

module attributes {stable_mosaic.version = 11 : i64} {
  func.func @_mm_bias_lrelu_kernel(%arg0: i32, %arg1: memref<128x108xbf16, #tpu.memory_space<vmem>>, %arg2: memref<108x48xbf16, #tpu.memory_space<vmem>>, %arg3: memref<1x48xf32, #tpu.memory_space<vmem>>, %arg4: memref<128x48xbf16, #tpu.memory_space<vmem>>) attributes {dimension_semantics = [#tpu.dimension_semantics<parallel>], iteration_bounds = array<i64: 1>, scalar_prefetch = 0 : i64, scratch_operands = 0 : i64, tpu.core_type = #tpu.core_type<tc>, window_params = [{transform_indices = @transform_0, window_bounds = array<i64: 128, 108>}, {pipeline_mode = #tpu.pipeline_mode<synchronous>, transform_indices = @transform_1, window_bounds = array<i64: 108, 48>}, {pipeline_mode = #tpu.pipeline_mode<synchronous>, transform_indices = @transform_2, window_bounds = array<i64: 1, 48>}, {transform_indices = @transform_3, window_bounds = array<i64: 128, 48>}]} {
    %c0 = arith.constant 0 : index
    %c0_0 = arith.constant 0 : index
    %0 = vector.load %arg1[%c0, %c0_0] : memref<128x108xbf16, #tpu.memory_space<vmem>>, vector<128x108xbf16>
    %c0_1 = arith.constant 0 : index
    %c0_2 = arith.constant 0 : index
    %1 = vector.load %arg2[%c0_1, %c0_2] : memref<108x48xbf16, #tpu.memory_space<vmem>>, vector<108x48xbf16>
    %cst = arith.constant dense<0.000000e+00> : vector<128x48xf32>
    %2 = tpu.matmul %0, %1, %cst {dimension_numbers = #tpu.dot_dimension_numbers<[1], [0], [0], [1], [0, 0, 1, 1], [], []>} : vector<128x108xbf16>, vector<108x48xbf16>, vector<128x48xf32> -> vector<128x48xf32>
    %c0_3 = arith.constant 0 : index
    %c0_4 = arith.constant 0 : index
    %3 = vector.load %arg3[%c0_3, %c0_4] : memref<1x48xf32, #tpu.memory_space<vmem>>, vector<1x48xf32>
    %4 = vector.broadcast %3 : vector<1x48xf32> to vector<128x48xf32>
    %5 = arith.addf %2, %4 : vector<128x48xf32>
    %cst_5 = arith.constant 0.000000e+00 : f32
    %6 = vector.broadcast %cst_5 : f32 to vector<128x48xf32>
    %7 = arith.cmpf oge, %5, %6 : vector<128x48xf32>
    %cst_6 = arith.constant 2.000000e-01 : f32
    %8 = vector.broadcast %cst_6 : f32 to vector<128x48xf32>
    %9 = arith.mulf %8, %5 : vector<128x48xf32>
    %10 = arith.select %7, %5, %9 : vector<128x48xi1>, vector<128x48xf32>
    %11 = arith.truncf %10 : vector<128x48xf32> to vector<128x48xbf16>
    %c0_7 = arith.constant 0 : index
    %c0_8 = arith.constant 0 : index
    %12 = vector.load %arg4[%c0_7, %c0_8] : memref<128x48xbf16, #tpu.memory_space<vmem>>, vector<128x48xbf16>
    tpu.vector_store %arg4[%c0_7, %c0_8], %11 {strides = array<i32>} : memref<128x48xbf16, #tpu.memory_space<vmem>>, vector<128x48xbf16>,
    return
  }
  func.func @transform_0(%arg0: i32) -> (i32, i32) {
    %c0_i32 = arith.constant 0 : i32
    %c0_i32_0 = arith.constant 0 : i32
    return %arg0, %c0_i32 : i32, i32
  }
  func.func @transform_1(%arg0: i32) -> (i32, i32) {
    %c0_i32 = arith.constant 0 : i32
    %c0_i32_0 = arith.constant 0 : i32
    %c0_i32_1 = arith.constant 0 : i32
    return %c0_i32, %c0_i32_0 : i32, i32
  }
  func.func @transform_2(%arg0: i32) -> (i32, i32) {
    %c0_i32 = arith.constant 0 : i32
    %c0_i32_0 = arith.constant 0 : i32
    %c0_i32_1 = arith.constant 0 : i32
    return %c0_i32, %c0_i32_0 : i32, i32
  }
  func.func @transform_3(%arg0: i32) -> (i32, i32) {
    %c0_i32 = arith.constant 0 : i32
    %c0_i32_0 = arith.constant 0 : i32
    return %arg0, %c0_i32 : i32, i32
  }
}

module attributes {stable_mosaic.version = 11 : i64} {
  func.func @_mm_bias_lrelu_kernel(%arg0: i32, %arg1: memref<32x432xbf16, #tpu.memory_space<vmem>>, %arg2: memref<432x96xbf16, #tpu.memory_space<vmem>>, %arg3: memref<1x96xf32, #tpu.memory_space<vmem>>, %arg4: memref<32x96xbf16, #tpu.memory_space<vmem>>) attributes {dimension_semantics = [#tpu.dimension_semantics<parallel>], iteration_bounds = array<i64: 1>, scalar_prefetch = 0 : i64, scratch_operands = 0 : i64, tpu.core_type = #tpu.core_type<tc>, window_params = [{transform_indices = @transform_0, window_bounds = array<i64: 32, 432>}, {pipeline_mode = #tpu.pipeline_mode<synchronous>, transform_indices = @transform_1, window_bounds = array<i64: 432, 96>}, {pipeline_mode = #tpu.pipeline_mode<synchronous>, transform_indices = @transform_2, window_bounds = array<i64: 1, 96>}, {transform_indices = @transform_3, window_bounds = array<i64: 32, 96>}]} {
    %c0 = arith.constant 0 : index
    %c0_0 = arith.constant 0 : index
    %0 = vector.load %arg1[%c0, %c0_0] : memref<32x432xbf16, #tpu.memory_space<vmem>>, vector<32x432xbf16>
    %c0_1 = arith.constant 0 : index
    %c0_2 = arith.constant 0 : index
    %1 = vector.load %arg2[%c0_1, %c0_2] : memref<432x96xbf16, #tpu.memory_space<vmem>>, vector<432x96xbf16>
    %cst = arith.constant dense<0.000000e+00> : vector<32x96xf32>
    %2 = tpu.matmul %0, %1, %cst {dimension_numbers = #tpu.dot_dimension_numbers<[1], [0], [0], [1], [0, 0, 1, 1], [], []>} : vector<32x432xbf16>, vector<432x96xbf16>, vector<32x96xf32> -> vector<32x96xf32>
    %c0_3 = arith.constant 0 : index
    %c0_4 = arith.constant 0 : index
    %3 = vector.load %arg3[%c0_3, %c0_4] : memref<1x96xf32, #tpu.memory_space<vmem>>, vector<1x96xf32>
    %4 = vector.broadcast %3 : vector<1x96xf32> to vector<32x96xf32>
    %5 = arith.addf %2, %4 : vector<32x96xf32>
    %cst_5 = arith.constant 0.000000e+00 : f32
    %6 = vector.broadcast %cst_5 : f32 to vector<32x96xf32>
    %7 = arith.cmpf oge, %5, %6 : vector<32x96xf32>
    %cst_6 = arith.constant 2.000000e-01 : f32
    %8 = vector.broadcast %cst_6 : f32 to vector<32x96xf32>
    %9 = arith.mulf %8, %5 : vector<32x96xf32>
    %10 = arith.select %7, %5, %9 : vector<32x96xi1>, vector<32x96xf32>
    %11 = arith.truncf %10 : vector<32x96xf32> to vector<32x96xbf16>
    %c0_7 = arith.constant 0 : index
    %c0_8 = arith.constant 0 : index
    %12 = vector.load %arg4[%c0_7, %c0_8] : memref<32x96xbf16, #tpu.memory_space<vmem>>, vector<32x96xbf16>
    tpu.vector_store %arg4[%c0_7, %c0_8], %11 {strides = array<i32>} : memref<32x96xbf16, #tpu.memory_space<vmem>>, vector<32x96xbf16>,
    return
  }
  func.func @transform_0(%arg0: i32) -> (i32, i32) {
    %c0_i32 = arith.constant 0 : i32
    %c0_i32_0 = arith.constant 0 : i32
    return %arg0, %c0_i32 : i32, i32
  }
  func.func @transform_1(%arg0: i32) -> (i32, i32) {
    %c0_i32 = arith.constant 0 : i32
    %c0_i32_0 = arith.constant 0 : i32
    %c0_i32_1 = arith.constant 0 : i32
    return %c0_i32, %c0_i32_0 : i32, i32
  }
  func.func @transform_2(%arg0: i32) -> (i32, i32) {
    %c0_i32 = arith.constant 0 : i32
    %c0_i32_0 = arith.constant 0 : i32
    %c0_i32_1 = arith.constant 0 : i32
    return %c0_i32, %c0_i32_0 : i32, i32
  }
  func.func @transform_3(%arg0: i32) -> (i32, i32) {
    %c0_i32 = arith.constant 0 : i32
    %c0_i32_0 = arith.constant 0 : i32
    return %arg0, %c0_i32 : i32, i32
  }
}

module attributes {stable_mosaic.version = 11 : i64} {
  func.func @_mm_res_lrelu_kernel(%arg0: i32, %arg1: memref<32x864xbf16, #tpu.memory_space<vmem>>, %arg2: memref<864x96xbf16, #tpu.memory_space<vmem>>, %arg3: memref<1x96xf32, #tpu.memory_space<vmem>>, %arg4: memref<1x96xf32, #tpu.memory_space<vmem>>, %arg5: memref<32x96xbf16, #tpu.memory_space<vmem>>, %arg6: memref<32x96xbf16, #tpu.memory_space<vmem>>) attributes {dimension_semantics = [#tpu.dimension_semantics<parallel>], iteration_bounds = array<i64: 1>, scalar_prefetch = 0 : i64, scratch_operands = 0 : i64, tpu.core_type = #tpu.core_type<tc>, window_params = [{transform_indices = @transform_0, window_bounds = array<i64: 32, 864>}, {pipeline_mode = #tpu.pipeline_mode<synchronous>, transform_indices = @transform_1, window_bounds = array<i64: 864, 96>}, {pipeline_mode = #tpu.pipeline_mode<synchronous>, transform_indices = @transform_2, window_bounds = array<i64: 1, 96>}, {pipeline_mode = #tpu.pipeline_mode<synchronous>, transform_indices = @transform_3, window_bounds = array<i64: 1, 96>}, {transform_indices = @transform_4, window_bounds = array<i64: 32, 96>}, {transform_indices = @transform_5, window_bounds = array<i64: 32, 96>}]} {
    %c0 = arith.constant 0 : index
    %c0_0 = arith.constant 0 : index
    %0 = vector.load %arg1[%c0, %c0_0] : memref<32x864xbf16, #tpu.memory_space<vmem>>, vector<32x864xbf16>
    %c0_1 = arith.constant 0 : index
    %c0_2 = arith.constant 0 : index
    %1 = vector.load %arg2[%c0_1, %c0_2] : memref<864x96xbf16, #tpu.memory_space<vmem>>, vector<864x96xbf16>
    %cst = arith.constant dense<0.000000e+00> : vector<32x96xf32>
    %2 = tpu.matmul %0, %1, %cst {dimension_numbers = #tpu.dot_dimension_numbers<[1], [0], [0], [1], [0, 0, 1, 1], [], []>} : vector<32x864xbf16>, vector<864x96xbf16>, vector<32x96xf32> -> vector<32x96xf32>
    %c0_3 = arith.constant 0 : index
    %c0_4 = arith.constant 0 : index
    %3 = vector.load %arg3[%c0_3, %c0_4] : memref<1x96xf32, #tpu.memory_space<vmem>>, vector<1x96xf32>
    %4 = vector.broadcast %3 : vector<1x96xf32> to vector<32x96xf32>
    %5 = arith.addf %2, %4 : vector<32x96xf32>
    %c0_5 = arith.constant 0 : index
    %c0_6 = arith.constant 0 : index
    %6 = vector.load %arg4[%c0_5, %c0_6] : memref<1x96xf32, #tpu.memory_space<vmem>>, vector<1x96xf32>
    %7 = vector.broadcast %6 : vector<1x96xf32> to vector<32x96xf32>
    %8 = arith.mulf %5, %7 : vector<32x96xf32>
    %c0_7 = arith.constant 0 : index
    %c0_8 = arith.constant 0 : index
    %9 = vector.load %arg5[%c0_7, %c0_8] : memref<32x96xbf16, #tpu.memory_space<vmem>>, vector<32x96xbf16>
    %10 = arith.extf %9 : vector<32x96xbf16> to vector<32x96xf32>
    %11 = arith.addf %8, %10 : vector<32x96xf32>
    %cst_9 = arith.constant 0.000000e+00 : f32
    %12 = vector.broadcast %cst_9 : f32 to vector<32x96xf32>
    %13 = arith.cmpf oge, %11, %12 : vector<32x96xf32>
    %cst_10 = arith.constant 2.000000e-01 : f32
    %14 = vector.broadcast %cst_10 : f32 to vector<32x96xf32>
    %15 = arith.mulf %14, %11 : vector<32x96xf32>
    %16 = arith.select %13, %11, %15 : vector<32x96xi1>, vector<32x96xf32>
    %17 = arith.truncf %16 : vector<32x96xf32> to vector<32x96xbf16>
    %c0_11 = arith.constant 0 : index
    %c0_12 = arith.constant 0 : index
    %18 = vector.load %arg6[%c0_11, %c0_12] : memref<32x96xbf16, #tpu.memory_space<vmem>>, vector<32x96xbf16>
    tpu.vector_store %arg6[%c0_11, %c0_12], %17 {strides = array<i32>} : memref<32x96xbf16, #tpu.memory_space<vmem>>, vector<32x96xbf16>,
    return
  }
  func.func @transform_0(%arg0: i32) -> (i32, i32) {
    %c0_i32 = arith.constant 0 : i32
    %c0_i32_0 = arith.constant 0 : i32
    return %arg0, %c0_i32 : i32, i32
  }
  func.func @transform_1(%arg0: i32) -> (i32, i32) {
    %c0_i32 = arith.constant 0 : i32
    %c0_i32_0 = arith.constant 0 : i32
    %c0_i32_1 = arith.constant 0 : i32
    return %c0_i32, %c0_i32_0 : i32, i32
  }
  func.func @transform_2(%arg0: i32) -> (i32, i32) {
    %c0_i32 = arith.constant 0 : i32
    %c0_i32_0 = arith.constant 0 : i32
    %c0_i32_1 = arith.constant 0 : i32
    return %c0_i32, %c0_i32_0 : i32, i32
  }
  func.func @transform_3(%arg0: i32) -> (i32, i32) {
    %c0_i32 = arith.constant 0 : i32
    %c0_i32_0 = arith.constant 0 : i32
    %c0_i32_1 = arith.constant 0 : i32
    return %c0_i32, %c0_i32_0 : i32, i32
  }
  func.func @transform_4(%arg0: i32) -> (i32, i32) {
    %c0_i32 = arith.constant 0 : i32
    %c0_i32_0 = arith.constant 0 : i32
    return %arg0, %c0_i32 : i32, i32
  }
  func.func @transform_5(%arg0: i32) -> (i32, i32) {
    %c0_i32 = arith.constant 0 : i32
    %c0_i32_0 = arith.constant 0 : i32
    return %arg0, %c0_i32 : i32, i32
  }
}

module attributes {stable_mosaic.version = 11 : i64} {
  func.func @_mm_bias_kernel(%arg0: i32, %arg1: memref<32x384xbf16, #tpu.memory_space<vmem>>, %arg2: memref<384x24xbf16, #tpu.memory_space<vmem>>, %arg3: memref<1x24xf32, #tpu.memory_space<vmem>>, %arg4: memref<32x24xf32, #tpu.memory_space<vmem>>) attributes {dimension_semantics = [#tpu.dimension_semantics<parallel>], iteration_bounds = array<i64: 1>, scalar_prefetch = 0 : i64, scratch_operands = 0 : i64, tpu.core_type = #tpu.core_type<tc>, window_params = [{transform_indices = @transform_0, window_bounds = array<i64: 32, 384>}, {pipeline_mode = #tpu.pipeline_mode<synchronous>, transform_indices = @transform_1, window_bounds = array<i64: 384, 24>}, {pipeline_mode = #tpu.pipeline_mode<synchronous>, transform_indices = @transform_2, window_bounds = array<i64: 1, 24>}, {transform_indices = @transform_3, window_bounds = array<i64: 32, 24>}]} {
    %c0 = arith.constant 0 : index
    %c0_0 = arith.constant 0 : index
    %0 = vector.load %arg1[%c0, %c0_0] : memref<32x384xbf16, #tpu.memory_space<vmem>>, vector<32x384xbf16>
    %c0_1 = arith.constant 0 : index
    %c0_2 = arith.constant 0 : index
    %1 = vector.load %arg2[%c0_1, %c0_2] : memref<384x24xbf16, #tpu.memory_space<vmem>>, vector<384x24xbf16>
    %cst = arith.constant dense<0.000000e+00> : vector<32x24xf32>
    %2 = tpu.matmul %0, %1, %cst {dimension_numbers = #tpu.dot_dimension_numbers<[1], [0], [0], [1], [0, 0, 1, 1], [], []>} : vector<32x384xbf16>, vector<384x24xbf16>, vector<32x24xf32> -> vector<32x24xf32>
    %c0_3 = arith.constant 0 : index
    %c0_4 = arith.constant 0 : index
    %3 = vector.load %arg3[%c0_3, %c0_4] : memref<1x24xf32, #tpu.memory_space<vmem>>, vector<1x24xf32>
    %4 = vector.broadcast %3 : vector<1x24xf32> to vector<32x24xf32>
    %5 = arith.addf %2, %4 : vector<32x24xf32>
    %c0_5 = arith.constant 0 : index
    %c0_6 = arith.constant 0 : index
    %6 = vector.load %arg4[%c0_5, %c0_6] : memref<32x24xf32, #tpu.memory_space<vmem>>, vector<32x24xf32>
    tpu.vector_store %arg4[%c0_5, %c0_6], %5 {strides = array<i32>} : memref<32x24xf32, #tpu.memory_space<vmem>>, vector<32x24xf32>,
    return
  }
  func.func @transform_0(%arg0: i32) -> (i32, i32) {
    %c0_i32 = arith.constant 0 : i32
    %c0_i32_0 = arith.constant 0 : i32
    return %arg0, %c0_i32 : i32, i32
  }
  func.func @transform_1(%arg0: i32) -> (i32, i32) {
    %c0_i32 = arith.constant 0 : i32
    %c0_i32_0 = arith.constant 0 : i32
    %c0_i32_1 = arith.constant 0 : i32
    return %c0_i32, %c0_i32_0 : i32, i32
  }
  func.func @transform_2(%arg0: i32) -> (i32, i32) {
    %c0_i32 = arith.constant 0 : i32
    %c0_i32_0 = arith.constant 0 : i32
    %c0_i32_1 = arith.constant 0 : i32
    return %c0_i32, %c0_i32_0 : i32, i32
  }
  func.func @transform_3(%arg0: i32) -> (i32, i32) {
    %c0_i32 = arith.constant 0 : i32
    %c0_i32_0 = arith.constant 0 : i32
    return %arg0, %c0_i32 : i32, i32
  }
}

module attributes {stable_mosaic.version = 11 : i64} {
  func.func @_mm_bias_lrelu_kernel(%arg0: i32, %arg1: memref<512x108xbf16, #tpu.memory_space<vmem>>, %arg2: memref<108x32xbf16, #tpu.memory_space<vmem>>, %arg3: memref<1x32xf32, #tpu.memory_space<vmem>>, %arg4: memref<512x32xbf16, #tpu.memory_space<vmem>>) attributes {dimension_semantics = [#tpu.dimension_semantics<parallel>], iteration_bounds = array<i64: 1>, scalar_prefetch = 0 : i64, scratch_operands = 0 : i64, tpu.core_type = #tpu.core_type<tc>, window_params = [{transform_indices = @transform_0, window_bounds = array<i64: 512, 108>}, {pipeline_mode = #tpu.pipeline_mode<synchronous>, transform_indices = @transform_1, window_bounds = array<i64: 108, 32>}, {pipeline_mode = #tpu.pipeline_mode<synchronous>, transform_indices = @transform_2, window_bounds = array<i64: 1, 32>}, {transform_indices = @transform_3, window_bounds = array<i64: 512, 32>}]} {
    %c0 = arith.constant 0 : index
    %c0_0 = arith.constant 0 : index
    %0 = vector.load %arg1[%c0, %c0_0] : memref<512x108xbf16, #tpu.memory_space<vmem>>, vector<512x108xbf16>
    %c0_1 = arith.constant 0 : index
    %c0_2 = arith.constant 0 : index
    %1 = vector.load %arg2[%c0_1, %c0_2] : memref<108x32xbf16, #tpu.memory_space<vmem>>, vector<108x32xbf16>
    %cst = arith.constant dense<0.000000e+00> : vector<512x32xf32>
    %2 = tpu.matmul %0, %1, %cst {dimension_numbers = #tpu.dot_dimension_numbers<[1], [0], [0], [1], [0, 0, 1, 1], [], []>} : vector<512x108xbf16>, vector<108x32xbf16>, vector<512x32xf32> -> vector<512x32xf32>
    %c0_3 = arith.constant 0 : index
    %c0_4 = arith.constant 0 : index
    %3 = vector.load %arg3[%c0_3, %c0_4] : memref<1x32xf32, #tpu.memory_space<vmem>>, vector<1x32xf32>
    %4 = vector.broadcast %3 : vector<1x32xf32> to vector<512x32xf32>
    %5 = arith.addf %2, %4 : vector<512x32xf32>
    %cst_5 = arith.constant 0.000000e+00 : f32
    %6 = vector.broadcast %cst_5 : f32 to vector<512x32xf32>
    %7 = arith.cmpf oge, %5, %6 : vector<512x32xf32>
    %cst_6 = arith.constant 2.000000e-01 : f32
    %8 = vector.broadcast %cst_6 : f32 to vector<512x32xf32>
    %9 = arith.mulf %8, %5 : vector<512x32xf32>
    %10 = arith.select %7, %5, %9 : vector<512x32xi1>, vector<512x32xf32>
    %11 = arith.truncf %10 : vector<512x32xf32> to vector<512x32xbf16>
    %c0_7 = arith.constant 0 : index
    %c0_8 = arith.constant 0 : index
    %12 = vector.load %arg4[%c0_7, %c0_8] : memref<512x32xbf16, #tpu.memory_space<vmem>>, vector<512x32xbf16>
    tpu.vector_store %arg4[%c0_7, %c0_8], %11 {strides = array<i32>} : memref<512x32xbf16, #tpu.memory_space<vmem>>, vector<512x32xbf16>,
    return
  }
  func.func @transform_0(%arg0: i32) -> (i32, i32) {
    %c0_i32 = arith.constant 0 : i32
    %c0_i32_0 = arith.constant 0 : i32
    return %arg0, %c0_i32 : i32, i32
  }
  func.func @transform_1(%arg0: i32) -> (i32, i32) {
    %c0_i32 = arith.constant 0 : i32
    %c0_i32_0 = arith.constant 0 : i32
    %c0_i32_1 = arith.constant 0 : i32
    return %c0_i32, %c0_i32_0 : i32, i32
  }
  func.func @transform_2(%arg0: i32) -> (i32, i32) {
    %c0_i32 = arith.constant 0 : i32
    %c0_i32_0 = arith.constant 0 : i32
    %c0_i32_1 = arith.constant 0 : i32
    return %c0_i32, %c0_i32_0 : i32, i32
  }
  func.func @transform_3(%arg0: i32) -> (i32, i32) {
    %c0_i32 = arith.constant 0 : i32
    %c0_i32_0 = arith.constant 0 : i32
    return %arg0, %c0_i32 : i32, i32
  }
}

module attributes {stable_mosaic.version = 11 : i64} {
  func.func @_mm_bias_lrelu_kernel(%arg0: i32, %arg1: memref<128x288xbf16, #tpu.memory_space<vmem>>, %arg2: memref<288x64xbf16, #tpu.memory_space<vmem>>, %arg3: memref<1x64xf32, #tpu.memory_space<vmem>>, %arg4: memref<128x64xbf16, #tpu.memory_space<vmem>>) attributes {dimension_semantics = [#tpu.dimension_semantics<parallel>], iteration_bounds = array<i64: 1>, scalar_prefetch = 0 : i64, scratch_operands = 0 : i64, tpu.core_type = #tpu.core_type<tc>, window_params = [{transform_indices = @transform_0, window_bounds = array<i64: 128, 288>}, {pipeline_mode = #tpu.pipeline_mode<synchronous>, transform_indices = @transform_1, window_bounds = array<i64: 288, 64>}, {pipeline_mode = #tpu.pipeline_mode<synchronous>, transform_indices = @transform_2, window_bounds = array<i64: 1, 64>}, {transform_indices = @transform_3, window_bounds = array<i64: 128, 64>}]} {
    %c0 = arith.constant 0 : index
    %c0_0 = arith.constant 0 : index
    %0 = vector.load %arg1[%c0, %c0_0] : memref<128x288xbf16, #tpu.memory_space<vmem>>, vector<128x288xbf16>
    %c0_1 = arith.constant 0 : index
    %c0_2 = arith.constant 0 : index
    %1 = vector.load %arg2[%c0_1, %c0_2] : memref<288x64xbf16, #tpu.memory_space<vmem>>, vector<288x64xbf16>
    %cst = arith.constant dense<0.000000e+00> : vector<128x64xf32>
    %2 = tpu.matmul %0, %1, %cst {dimension_numbers = #tpu.dot_dimension_numbers<[1], [0], [0], [1], [0, 0, 1, 1], [], []>} : vector<128x288xbf16>, vector<288x64xbf16>, vector<128x64xf32> -> vector<128x64xf32>
    %c0_3 = arith.constant 0 : index
    %c0_4 = arith.constant 0 : index
    %3 = vector.load %arg3[%c0_3, %c0_4] : memref<1x64xf32, #tpu.memory_space<vmem>>, vector<1x64xf32>
    %4 = vector.broadcast %3 : vector<1x64xf32> to vector<128x64xf32>
    %5 = arith.addf %2, %4 : vector<128x64xf32>
    %cst_5 = arith.constant 0.000000e+00 : f32
    %6 = vector.broadcast %cst_5 : f32 to vector<128x64xf32>
    %7 = arith.cmpf oge, %5, %6 : vector<128x64xf32>
    %cst_6 = arith.constant 2.000000e-01 : f32
    %8 = vector.broadcast %cst_6 : f32 to vector<128x64xf32>
    %9 = arith.mulf %8, %5 : vector<128x64xf32>
    %10 = arith.select %7, %5, %9 : vector<128x64xi1>, vector<128x64xf32>
    %11 = arith.truncf %10 : vector<128x64xf32> to vector<128x64xbf16>
    %c0_7 = arith.constant 0 : index
    %c0_8 = arith.constant 0 : index
    %12 = vector.load %arg4[%c0_7, %c0_8] : memref<128x64xbf16, #tpu.memory_space<vmem>>, vector<128x64xbf16>
    tpu.vector_store %arg4[%c0_7, %c0_8], %11 {strides = array<i32>} : memref<128x64xbf16, #tpu.memory_space<vmem>>, vector<128x64xbf16>,
    return
  }
  func.func @transform_0(%arg0: i32) -> (i32, i32) {
    %c0_i32 = arith.constant 0 : i32
    %c0_i32_0 = arith.constant 0 : i32
    return %arg0, %c0_i32 : i32, i32
  }
  func.func @transform_1(%arg0: i32) -> (i32, i32) {
    %c0_i32 = arith.constant 0 : i32
    %c0_i32_0 = arith.constant 0 : i32
    %c0_i32_1 = arith.constant 0 : i32
    return %c0_i32, %c0_i32_0 : i32, i32
  }
  func.func @transform_2(%arg0: i32) -> (i32, i32) {
    %c0_i32 = arith.constant 0 : i32
    %c0_i32_0 = arith.constant 0 : i32
    %c0_i32_1 = arith.constant 0 : i32
    return %c0_i32, %c0_i32_0 : i32, i32
  }
  func.func @transform_3(%arg0: i32) -> (i32, i32) {
    %c0_i32 = arith.constant 0 : i32
    %c0_i32_0 = arith.constant 0 : i32
    return %arg0, %c0_i32 : i32, i32
  }
}

module attributes {stable_mosaic.version = 11 : i64} {
  func.func @_mm_res_lrelu_kernel(%arg0: i32, %arg1: memref<128x576xbf16, #tpu.memory_space<vmem>>, %arg2: memref<576x64xbf16, #tpu.memory_space<vmem>>, %arg3: memref<1x64xf32, #tpu.memory_space<vmem>>, %arg4: memref<1x64xf32, #tpu.memory_space<vmem>>, %arg5: memref<128x64xbf16, #tpu.memory_space<vmem>>, %arg6: memref<128x64xbf16, #tpu.memory_space<vmem>>) attributes {dimension_semantics = [#tpu.dimension_semantics<parallel>], iteration_bounds = array<i64: 1>, scalar_prefetch = 0 : i64, scratch_operands = 0 : i64, tpu.core_type = #tpu.core_type<tc>, window_params = [{transform_indices = @transform_0, window_bounds = array<i64: 128, 576>}, {pipeline_mode = #tpu.pipeline_mode<synchronous>, transform_indices = @transform_1, window_bounds = array<i64: 576, 64>}, {pipeline_mode = #tpu.pipeline_mode<synchronous>, transform_indices = @transform_2, window_bounds = array<i64: 1, 64>}, {pipeline_mode = #tpu.pipeline_mode<synchronous>, transform_indices = @transform_3, window_bounds = array<i64: 1, 64>}, {transform_indices = @transform_4, window_bounds = array<i64: 128, 64>}, {transform_indices = @transform_5, window_bounds = array<i64: 128, 64>}]} {
    %c0 = arith.constant 0 : index
    %c0_0 = arith.constant 0 : index
    %0 = vector.load %arg1[%c0, %c0_0] : memref<128x576xbf16, #tpu.memory_space<vmem>>, vector<128x576xbf16>
    %c0_1 = arith.constant 0 : index
    %c0_2 = arith.constant 0 : index
    %1 = vector.load %arg2[%c0_1, %c0_2] : memref<576x64xbf16, #tpu.memory_space<vmem>>, vector<576x64xbf16>
    %cst = arith.constant dense<0.000000e+00> : vector<128x64xf32>
    %2 = tpu.matmul %0, %1, %cst {dimension_numbers = #tpu.dot_dimension_numbers<[1], [0], [0], [1], [0, 0, 1, 1], [], []>} : vector<128x576xbf16>, vector<576x64xbf16>, vector<128x64xf32> -> vector<128x64xf32>
    %c0_3 = arith.constant 0 : index
    %c0_4 = arith.constant 0 : index
    %3 = vector.load %arg3[%c0_3, %c0_4] : memref<1x64xf32, #tpu.memory_space<vmem>>, vector<1x64xf32>
    %4 = vector.broadcast %3 : vector<1x64xf32> to vector<128x64xf32>
    %5 = arith.addf %2, %4 : vector<128x64xf32>
    %c0_5 = arith.constant 0 : index
    %c0_6 = arith.constant 0 : index
    %6 = vector.load %arg4[%c0_5, %c0_6] : memref<1x64xf32, #tpu.memory_space<vmem>>, vector<1x64xf32>
    %7 = vector.broadcast %6 : vector<1x64xf32> to vector<128x64xf32>
    %8 = arith.mulf %5, %7 : vector<128x64xf32>
    %c0_7 = arith.constant 0 : index
    %c0_8 = arith.constant 0 : index
    %9 = vector.load %arg5[%c0_7, %c0_8] : memref<128x64xbf16, #tpu.memory_space<vmem>>, vector<128x64xbf16>
    %10 = arith.extf %9 : vector<128x64xbf16> to vector<128x64xf32>
    %11 = arith.addf %8, %10 : vector<128x64xf32>
    %cst_9 = arith.constant 0.000000e+00 : f32
    %12 = vector.broadcast %cst_9 : f32 to vector<128x64xf32>
    %13 = arith.cmpf oge, %11, %12 : vector<128x64xf32>
    %cst_10 = arith.constant 2.000000e-01 : f32
    %14 = vector.broadcast %cst_10 : f32 to vector<128x64xf32>
    %15 = arith.mulf %14, %11 : vector<128x64xf32>
    %16 = arith.select %13, %11, %15 : vector<128x64xi1>, vector<128x64xf32>
    %17 = arith.truncf %16 : vector<128x64xf32> to vector<128x64xbf16>
    %c0_11 = arith.constant 0 : index
    %c0_12 = arith.constant 0 : index
    %18 = vector.load %arg6[%c0_11, %c0_12] : memref<128x64xbf16, #tpu.memory_space<vmem>>, vector<128x64xbf16>
    tpu.vector_store %arg6[%c0_11, %c0_12], %17 {strides = array<i32>} : memref<128x64xbf16, #tpu.memory_space<vmem>>, vector<128x64xbf16>,
    return
  }
  func.func @transform_0(%arg0: i32) -> (i32, i32) {
    %c0_i32 = arith.constant 0 : i32
    %c0_i32_0 = arith.constant 0 : i32
    return %arg0, %c0_i32 : i32, i32
  }
  func.func @transform_1(%arg0: i32) -> (i32, i32) {
    %c0_i32 = arith.constant 0 : i32
    %c0_i32_0 = arith.constant 0 : i32
    %c0_i32_1 = arith.constant 0 : i32
    return %c0_i32, %c0_i32_0 : i32, i32
  }
  func.func @transform_2(%arg0: i32) -> (i32, i32) {
    %c0_i32 = arith.constant 0 : i32
    %c0_i32_0 = arith.constant 0 : i32
    %c0_i32_1 = arith.constant 0 : i32
    return %c0_i32, %c0_i32_0 : i32, i32
  }
  func.func @transform_3(%arg0: i32) -> (i32, i32) {
    %c0_i32 = arith.constant 0 : i32
    %c0_i32_0 = arith.constant 0 : i32
    %c0_i32_1 = arith.constant 0 : i32
    return %c0_i32, %c0_i32_0 : i32, i32
  }
  func.func @transform_4(%arg0: i32) -> (i32, i32) {
    %c0_i32 = arith.constant 0 : i32
    %c0_i32_0 = arith.constant 0 : i32
    return %arg0, %c0_i32 : i32, i32
  }
  func.func @transform_5(%arg0: i32) -> (i32, i32) {
    %c0_i32 = arith.constant 0 : i32
    %c0_i32_0 = arith.constant 0 : i32
    return %arg0, %c0_i32 : i32, i32
  }
}

module attributes {stable_mosaic.version = 11 : i64} {
  func.func @_mm_bias_kernel(%arg0: i32, %arg1: memref<128x256xbf16, #tpu.memory_space<vmem>>, %arg2: memref<256x24xbf16, #tpu.memory_space<vmem>>, %arg3: memref<1x24xf32, #tpu.memory_space<vmem>>, %arg4: memref<128x24xf32, #tpu.memory_space<vmem>>) attributes {dimension_semantics = [#tpu.dimension_semantics<parallel>], iteration_bounds = array<i64: 1>, scalar_prefetch = 0 : i64, scratch_operands = 0 : i64, tpu.core_type = #tpu.core_type<tc>, window_params = [{transform_indices = @transform_0, window_bounds = array<i64: 128, 256>}, {pipeline_mode = #tpu.pipeline_mode<synchronous>, transform_indices = @transform_1, window_bounds = array<i64: 256, 24>}, {pipeline_mode = #tpu.pipeline_mode<synchronous>, transform_indices = @transform_2, window_bounds = array<i64: 1, 24>}, {transform_indices = @transform_3, window_bounds = array<i64: 128, 24>}]} {
    %c0 = arith.constant 0 : index
    %c0_0 = arith.constant 0 : index
    %0 = vector.load %arg1[%c0, %c0_0] : memref<128x256xbf16, #tpu.memory_space<vmem>>, vector<128x256xbf16>
    %c0_1 = arith.constant 0 : index
    %c0_2 = arith.constant 0 : index
    %1 = vector.load %arg2[%c0_1, %c0_2] : memref<256x24xbf16, #tpu.memory_space<vmem>>, vector<256x24xbf16>
    %cst = arith.constant dense<0.000000e+00> : vector<128x24xf32>
    %2 = tpu.matmul %0, %1, %cst {dimension_numbers = #tpu.dot_dimension_numbers<[1], [0], [0], [1], [0, 0, 1, 1], [], []>} : vector<128x256xbf16>, vector<256x24xbf16>, vector<128x24xf32> -> vector<128x24xf32>
    %c0_3 = arith.constant 0 : index
    %c0_4 = arith.constant 0 : index
    %3 = vector.load %arg3[%c0_3, %c0_4] : memref<1x24xf32, #tpu.memory_space<vmem>>, vector<1x24xf32>
    %4 = vector.broadcast %3 : vector<1x24xf32> to vector<128x24xf32>
    %5 = arith.addf %2, %4 : vector<128x24xf32>
    %c0_5 = arith.constant 0 : index
    %c0_6 = arith.constant 0 : index
    %6 = vector.load %arg4[%c0_5, %c0_6] : memref<128x24xf32, #tpu.memory_space<vmem>>, vector<128x24xf32>
    tpu.vector_store %arg4[%c0_5, %c0_6], %5 {strides = array<i32>} : memref<128x24xf32, #tpu.memory_space<vmem>>, vector<128x24xf32>,
    return
  }
  func.func @transform_0(%arg0: i32) -> (i32, i32) {
    %c0_i32 = arith.constant 0 : i32
    %c0_i32_0 = arith.constant 0 : i32
    return %arg0, %c0_i32 : i32, i32
  }
  func.func @transform_1(%arg0: i32) -> (i32, i32) {
    %c0_i32 = arith.constant 0 : i32
    %c0_i32_0 = arith.constant 0 : i32
    %c0_i32_1 = arith.constant 0 : i32
    return %c0_i32, %c0_i32_0 : i32, i32
  }
  func.func @transform_2(%arg0: i32) -> (i32, i32) {
    %c0_i32 = arith.constant 0 : i32
    %c0_i32_0 = arith.constant 0 : i32
    %c0_i32_1 = arith.constant 0 : i32
    return %c0_i32, %c0_i32_0 : i32, i32
  }
  func.func @transform_3(%arg0: i32) -> (i32, i32) {
    %c0_i32 = arith.constant 0 : i32
    %c0_i32_0 = arith.constant 0 : i32
    return %arg0, %c0_i32 : i32, i32
  }
}

module attributes {stable_mosaic.version = 11 : i64} {
  func.func @_merge_kernel(%arg0: i32, %arg1: memref<3x2048xf32, #tpu.memory_space<vmem>>, %arg2: memref<3x2048xf32, #tpu.memory_space<vmem>>, %arg3: memref<1x2048xf32, #tpu.memory_space<vmem>>, %arg4: memref<3x2048xf32, #tpu.memory_space<vmem>>) attributes {dimension_semantics = [#tpu.dimension_semantics<parallel>], iteration_bounds = array<i64: 1>, scalar_prefetch = 0 : i64, scratch_operands = 0 : i64, tpu.core_type = #tpu.core_type<tc>, window_params = [{transform_indices = @transform_0, window_bounds = array<i64: 3, 2048>}, {transform_indices = @transform_1, window_bounds = array<i64: 3, 2048>}, {transform_indices = @transform_2, window_bounds = array<i64: 1, 2048>}, {transform_indices = @transform_3, window_bounds = array<i64: 3, 2048>}]} {
    %c0 = arith.constant 0 : index
    %c0_0 = arith.constant 0 : index
    %0 = vector.load %arg3[%c0, %c0_0] : memref<1x2048xf32, #tpu.memory_space<vmem>>, vector<1x2048xf32>
    %1 = arith.negf %0 : vector<1x2048xf32>
    %2 = math.exp %1 : vector<1x2048xf32>
    %cst = arith.constant 1.000000e+00 : f32
    %3 = vector.broadcast %cst : f32 to vector<1x2048xf32>
    %4 = arith.addf %3, %2 : vector<1x2048xf32>
    %5 = arith.divf %3, %4 : vector<1x2048xf32>
    %c0_1 = arith.constant 0 : index
    %c0_2 = arith.constant 0 : index
    %6 = vector.load %arg1[%c0_1, %c0_2] : memref<3x2048xf32, #tpu.memory_space<vmem>>, vector<3x2048xf32>
    %7 = vector.broadcast %5 : vector<1x2048xf32> to vector<3x2048xf32>
    %8 = arith.mulf %6, %7 : vector<3x2048xf32>
    %c0_3 = arith.constant 0 : index
    %c0_4 = arith.constant 0 : index
    %9 = vector.load %arg2[%c0_3, %c0_4] : memref<3x2048xf32, #tpu.memory_space<vmem>>, vector<3x2048xf32>
    %cst_5 = arith.constant 1.000000e+00 : f32
    %10 = vector.broadcast %cst_5 : f32 to vector<1x2048xf32>
    %11 = arith.subf %10, %5 : vector<1x2048xf32>
    %12 = vector.broadcast %11 : vector<1x2048xf32> to vector<3x2048xf32>
    %13 = arith.mulf %9, %12 : vector<3x2048xf32>
    %14 = arith.addf %8, %13 : vector<3x2048xf32>
    %c0_6 = arith.constant 0 : index
    %c0_7 = arith.constant 0 : index
    %15 = vector.load %arg4[%c0_6, %c0_7] : memref<3x2048xf32, #tpu.memory_space<vmem>>, vector<3x2048xf32>
    tpu.vector_store %arg4[%c0_6, %c0_7], %14 {strides = array<i32>} : memref<3x2048xf32, #tpu.memory_space<vmem>>, vector<3x2048xf32>,
    return
  }
  func.func @transform_0(%arg0: i32) -> (i32, i32) {
    %c0_i32 = arith.constant 0 : i32
    %c0_i32_0 = arith.constant 0 : i32
    return %c0_i32, %arg0 : i32, i32
  }
  func.func @transform_1(%arg0: i32) -> (i32, i32) {
    %c0_i32 = arith.constant 0 : i32
    %c0_i32_0 = arith.constant 0 : i32
    return %c0_i32, %arg0 : i32, i32
  }
  func.func @transform_2(%arg0: i32) -> (i32, i32) {
    %c0_i32 = arith.constant 0 : i32
    %c0_i32_0 = arith.constant 0 : i32
    return %c0_i32, %arg0 : i32, i32
  }
  func.func @transform_3(%arg0: i32) -> (i32, i32) {
    %c0_i32 = arith.constant 0 : i32
    %c0_i32_0 = arith.constant 0 : i32
    return %c0_i32, %arg0 : i32, i32
  }
}

</mosaic_0001>

<llo_original>
// kernel: ifnet_forward.57
$region0: #{ifnet_forward.57}
  #allocation0 [shape = 'u32[]', space=smem, size = 0x4, offset = 0x4, fixed_abs, tag = 'smem constant byte address 0x4 - core index']
  #allocation1 [shape = 'u32[144,128]{1,0:T(1,128)}', space=vmem, size = 0x12000, scoped, tag = 'internal scratch']
  %s0 = inlined_call_operand.vmem [shape: bf16[16,63], index: 0, kind: input, shape index: {}]
  %s1 = inlined_call_operand.hbm [shape: bf16[63,96], index: 1, kind: input, shape index: {}]
  %s2 = inlined_call_operand.hbm [shape: f32[1,96], index: 2, kind: input, shape index: {}]
  %s3 = inlined_call_operand.vmem [shape: bf16[16,96], index: 3, kind: output, shape index: {}]
  %s4 = sld [smem:[#allocation0]]
  $region30: #{ifnet_forward.57} parent=0
    _
  %s6 = ssub.s32 1, %s4
  %s7 = scalar_select 0, %s6, %s4
  $region1: #{ifnet_forward.57} parent=0
    #allocation2 [shape = 'u8[16384]{0}', space=vmem, size = 0x4000, scoped, tag = 'input window, operand 1, single buffered']
    #allocation3 [shape = 's32[1]{0}', space=sflag, size = 0x4, scoped, tag = 'scoped memory for ifnet_forward.57']
    #allocation4 [shape = 'u8[512]{0}', space=vmem, size = 0x400, scoped, tag = 'input window, operand 2, single buffered']
    #allocation5 [shape = 's32[1]{0}', space=sflag, size = 0x4, scoped, tag = 'scoped memory for ifnet_forward.57']
    %8 = vsyncpa [#allocation3], 0
    %9 = vsyncpa [#allocation5], 0
    // Predicated region
    $region2: #{ifnet_forward.57} parent=1 // pred_check
      _
    $region3: #{ifnet_forward.57} parent=1 // pred_check_branch
      %11 = sbr.rel (0) target = $region5
    $region4: #{ifnet_forward.57} parent=1 // pred_region
      _
    $region5: #{ifnet_forward.57} parent=1 // pred_fallthru
      _
    // Predicated region
    $region6: #{ifnet_forward.57} parent=1 // pred_check
      _
    $region7: #{ifnet_forward.57} parent=1 // pred_check_branch
      %13 = sbr.rel (0) target = $region9
    $region8: #{ifnet_forward.57} parent=1 // pred_region
      %s15 = ssub.s32 512, 512
      %16 = vsyncadd [#allocation3], %s15
      %s17 = sshll.u32 [#allocation2], 4
      %s18 = int_to_ptr.vmem [resolvable:$true] %s17
      %23 = dma.hbm_to_vmem [thread:$0]  %s1, 512, %s18, [#allocation3], 64, 64, 4
    $region9: #{ifnet_forward.57} parent=1 // pred_fallthru
      _
    // Predicated region
    $region10: #{ifnet_forward.57} parent=1 // pred_check
      _
    $region11: #{ifnet_forward.57} parent=1 // pred_check_branch
      %25 = sbr.rel (0) target = $region13
    $region12: #{ifnet_forward.57} parent=1 // pred_region
      %s27 = ssub.s32 16, 16
      %28 = vsyncadd [#allocation5], %s27
      %s30 = sshll.u32 [#allocation4], 4
      %s31 = int_to_ptr.vmem [resolvable:$true] %s30
      %33 = dma.hbm_to_vmem [thread:$0]  %s2, 16, %s31, [#allocation5]
    $region13: #{ifnet_forward.57} parent=1 // pred_fallthru
      _
    // Predicated region
    $region14: #{ifnet_forward.57} parent=1 // pred_check
      _
    $region15: #{ifnet_forward.57} parent=1 // pred_check_branch
      %35 = sbr.rel (0) target = $region17
    $region16: #{ifnet_forward.57} parent=1 // pred_region
      %36 = dma.done [#allocation3], 512
    $region17: #{ifnet_forward.57} parent=1 // pred_fallthru
      _
    // Predicated region
    $region18: #{ifnet_forward.57} parent=1 // pred_check
      _
    $region19: #{ifnet_forward.57} parent=1 // pred_check_branch
      %38 = sbr.rel (0) target = $region21
    $region20: #{ifnet_forward.57} parent=1 // pred_region
      %39 = dma.done [#allocation5], 16
    $region21: #{ifnet_forward.57} parent=1 // pred_fallthru
      _
    %v41 = vld [vmem:[%s0] sm:$0xf]
    %v42 = vld [vmem:[%s0 + $0x4] sm:$0xf]
    %v43 = vld [vmem:[#allocation2] sm:$0xf]
    %v44 = vld [vmem:[#allocation2 + $0x4] sm:$0xf]
    %v45 = vld [vmem:[#allocation2 + $0x8] sm:$0xf]
    %v46 = vld [vmem:[#allocation2 + $0xc] sm:$0xf]
    %v47 = vld [vmem:[#allocation2 + $0x10] sm:$0xf]
    %v48 = vld [vmem:[#allocation2 + $0x14] sm:$0xf]
    %v49 = vld [vmem:[#allocation2 + $0x18] sm:$0xf]
    %v50 = vld [vmem:[#allocation2 + $0x1c] sm:$0xf]
    %v51 = vld [vmem:[#allocation4] sm:$0x1]
    %v53 = vlaneseq
    %v54 = vshrl.u32 %v53, 7
    %v55 = vsub.s32 0, %v54
    %v56 = vrot.slane %v51, %v55
    %v60 = vunpack.c.l.b16 %v41
    %v61 = vunpack.c.l.b16 %v42
    %v62 = vpack.c.b16 %v61, %v60
    %v71 = vunpack.c.l.b16 %v43
    %v72 = vunpack.c.l.b16 %v44
    %v73 = vunpack.c.l.b16 %v45
    %v74 = vunpack.c.l.b16 %v46
    %v75 = vunpack.c.l.b16 %v47
    %v76 = vunpack.c.l.b16 %v48
    %v77 = vunpack.c.l.b16 %v49
    %v78 = vunpack.c.l.b16 %v50
    %v79 = vpack.c.b16 %v72, %v71
    %v80 = vpack.c.b16 %v74, %v73
    %v81 = vpack.c.b16 %v76, %v75
    %v82 = vpack.c.b16 %v78, %v77
    %vm86 = vcmask 515072
    %v88 = vsel %vm86, %v62, 0
    %vm90 = vcmask 1046528
    %vm91 = vcmask 1047552
    %v92 = vsel %vm90, 4294967295, 65535
    %v93 = vsel %vm91, %v92, 0
    %v95 = vand.u32 %v82, %v93
    %97 = vmatprep.subr.bf16.mxu0 0
    %98 = vmatpush1.bf16.msra.mxu0 0
    %99 = vmatprep.subr.bf16.mxu0 0
    %100 = vmatpush1.bf16.msra.mxu0 0
    %101 = vmatprep.subr.bf16.mxu0 0
    %102 = vmatpush1.bf16.msra.mxu0 0
    %103 = vmatprep.subr.bf16.mxu0 0
    %104 = vmatpush1.bf16.msra.mxu0 0
    %105 = vmatprep.subr.bf16.mxu0 0
    %106 = vmatpush1.bf16.msra.mxu0 %v95
    %107 = vmatprep.subr.bf16.mxu0 0
    %108 = vmatpush1.bf16.msra.mxu0 %v81
    %109 = vmatprep.subr.bf16.mxu0 0
    %110 = vmatpush1.bf16.msra.mxu0 %v80
    %111 = vmatprep.subr.bf16.mxu0 0
    %112 = vmatpush1.bf16.msra.mxu0 %v79
    %113 = vmatprep.subr.bf16.mxu0 0
    %114 = vmatpush2.bf16.msra.mxu0 0
    %115 = vmatprep.subr.bf16.mxu0 0
    %116 = vmatpush2.bf16.msra.mxu0 0
    %117 = vmatprep.subr.bf16.mxu0 0
    %118 = vmatpush2.bf16.msra.mxu0 0
    %119 = vmatprep.subr.bf16.mxu0 0
    %120 = vmatpush2.bf16.msra.mxu0 0
    %121 = vmatprep.subr.bf16.mxu0 0
    %122 = vmatpush2.bf16.msra.mxu0 0
    %123 = vmatprep.subr.bf16.mxu0 0
    %124 = vmatpush2.bf16.msra.mxu0 0
    %125 = vmatprep.subr.bf16.mxu0 0
    %126 = vmatpush2.bf16.msra.mxu0 0
    %127 = vmatprep.subr.bf16.mxu0 0
    %128 = vmatpush2.bf16.msra.mxu0 0
    %129 = vmatprep.mubr.bf16.mxu0 0
    %130 = vmatmul.mubr.bf16.gmra.mxu0 %v88
    %v131 = vpop.f32.mrf.mxu0
    %v132 = vadd.f32 %v56, %v131
    %v133 = vpop.f32.mrf.mxu0
    %v134 = vpop.f32.mrf.mxu0
    %v135 = vadd.f32 %v56, %v134
    %v136 = vpop.f32.mrf.mxu0
    %137 = vdwg.mxu0
    %vm138 = vcmp.ge.f32.partialorder %v132, 0.0
    %vm139 = vcmp.ge.f32.partialorder %v135, 0.0
    %v140 = vmul.f32 %v132, 0.2
    %v141 = vmul.f32 %v135, 0.2
    %v142 = vsel %vm138, %v132, %v140
    %v143 = vsel %vm139, %v135, %v141
    %v144 = vpack.c.bf16 %v143, %v142
    %v146 = vunpack.c.l.b16 %v144
    %v147 = vunpack.c.h.b16 %v144
    %v148 = vpack.c.b16 %v146, %v146
    %v149 = vpack.c.b16 %v147, %v147
    %vm152 = vcmask 781312
    %153 = vst.msk [vmem:[%s3] sm:$0xf] %vm152, %v148
    %154 = vst.msk [vmem:[%s3 + $0x4] sm:$0xf] %vm152, %v149
    // Predicated region
    $region22: #{ifnet_forward.57} parent=1 // pred_check
      _
    $region23: #{ifnet_forward.57} parent=1 // pred_check_branch
      %156 = sbr.rel (0) target = $region25
    $region24: #{ifnet_forward.57} parent=1 // pred_region
      _
    $region25: #{ifnet_forward.57} parent=1 // pred_fallthru
      _
    // Predicated region
    $region26: #{ifnet_forward.57} parent=1 // pred_check
      _
    $region27: #{ifnet_forward.57} parent=1 // pred_check_branch
      %158 = sbr.rel (0) target = $region29
    $region28: #{ifnet_forward.57} parent=1 // pred_region
      _
    $region29: #{ifnet_forward.57} parent=1 // pred_fallthru
      _
    %159 = vsyncpa [#allocation3], 1
    %160 = vsyncpa [#allocation5], 1

// kernel: ifnet_forward.58
$region0: #{ifnet_forward.58}
  #allocation0 [shape = 'u32[]', space=smem, size = 0x4, offset = 0x4, fixed_abs, tag = 'smem constant byte address 0x4 - core index']
  #allocation1 [shape = 'u32[144,128]{1,0:T(1,128)}', space=vmem, size = 0x12000, scoped, tag = 'internal scratch']
  %s0 = inlined_call_operand.vmem [shape: bf16[16,864], index: 0, kind: input, shape index: {}]
  %s1 = inlined_call_operand.vmem [shape: bf16[864,192], index: 1, kind: input, shape index: {}]
  %s2 = inlined_call_operand.hbm [shape: f32[1,192], index: 2, kind: input, shape index: {}]
  %s3 = inlined_call_operand.vmem [shape: bf16[16,192], index: 3, kind: output, shape index: {}]
  %s4 = sld [smem:[#allocation0]]
  $region26: #{ifnet_forward.58} parent=0
    _
  %s6 = ssub.s32 1, %s4
  %s7 = scalar_select 0, %s6, %s4
  $region1: #{ifnet_forward.58} parent=0
    #allocation2 [shape = 'u8[1024]{0}', space=vmem, size = 0x400, scoped, tag = 'input window, operand 2, single buffered']
    #allocation3 [shape = 's32[1]{0}', space=sflag, size = 0x4, scoped, tag = 'scoped memory for ifnet_forward.58']
    %8 = vsyncpa [#allocation3], 0
    // Predicated region
    $region2: #{ifnet_forward.58} parent=1 // pred_check
      _
    $region3: #{ifnet_forward.58} parent=1 // pred_check_branch
      %10 = sbr.rel (0) target = $region5
    $region4: #{ifnet_forward.58} parent=1 // pred_region
      _
    $region5: #{ifnet_forward.58} parent=1 // pred_fallthru
      _
    // Predicated region
    $region6: #{ifnet_forward.58} parent=1 // pred_check
      _
    $region7: #{ifnet_forward.58} parent=1 // pred_check_branch
      %12 = sbr.rel (0) target = $region9
    $region8: #{ifnet_forward.58} parent=1 // pred_region
      _
    $region9: #{ifnet_forward.58} parent=1 // pred_fallthru
      _
    // Predicated region
    $region10: #{ifnet_forward.58} parent=1 // pred_check
      _
    $region11: #{ifnet_forward.58} parent=1 // pred_check_branch
      %14 = sbr.rel (0) target = $region13
    $region12: #{ifnet_forward.58} parent=1 // pred_region
      %s16 = ssub.s32 32, 32
      %17 = vsyncadd [#allocation3], %s16
      %s19 = sshll.u32 [#allocation2], 4
      %s20 = int_to_ptr.vmem [resolvable:$true] %s19
      %22 = dma.hbm_to_vmem [thread:$0]  %s2, 32, %s20, [#allocation3]
    $region13: #{ifnet_forward.58} parent=1 // pred_fallthru
      _
    // Predicated region
    $region14: #{ifnet_forward.58} parent=1 // pred_check
      _
    $region15: #{ifnet_forward.58} parent=1 // pred_check_branch
      %24 = sbr.rel (0) target = $region17
    $region16: #{ifnet_forward.58} parent=1 // pred_region
      %25 = dma.done [#allocation3], 32
    $region17: #{ifnet_forward.58} parent=1 // pred_fallthru
      _
    %v27 = vld [vmem:[%s0] sm:$0xff]
    %v28 = vld [vmem:[%s0 + $0x8] sm:$0xff]
    %v29 = vld [vmem:[%s0 + $0x10] sm:$0xff]
    %v30 = vld [vmem:[%s0 + $0x18] sm:$0xf]
    %v31 = vld [vmem:[%s0 + $0x1c] sm:$0xff]
    %v32 = vld [vmem:[%s0 + $0x24] sm:$0xff]
    %v33 = vld [vmem:[%s0 + $0x2c] sm:$0xff]
    %v34 = vld [vmem:[%s0 + $0x34] sm:$0xf]
    %v35 = vld [vmem:[%s1] sm:$0xff]
    %v36 = vld [vmem:[%s1 + $0x8] sm:$0xff]
    %v37 = vld [vmem:[%s1 + $0x10] sm:$0xff]
    %v38 = vld [vmem:[%s1 + $0x18] sm:$0xff]
    %v39 = vld [vmem:[%s1 + $0x20] sm:$0xff]
    %v40 = vld [vmem:[%s1 + $0x28] sm:$0xff]
    %v41 = vld [vmem:[%s1 + $0x30] sm:$0xff]
    %v42 = vld [vmem:[%s1 + $0x38] sm:$0xff]
    %v43 = vld [vmem:[%s1 + $0x40] sm:$0xff]
    %v44 = vld [vmem:[%s1 + $0x48] sm:$0xff]
    %v45 = vld [vmem:[%s1 + $0x50] sm:$0xff]
    %v46 = vld [vmem:[%s1 + $0x58] sm:$0xff]
    %v47 = vld [vmem:[%s1 + $0x60] sm:$0xff]
    %v48 = vld [vmem:[%s1 + $0x68] sm:$0xff]
    %v49 = vld [vmem:[%s1 + $0x70] sm:$0xff]
    %v50 = vld [vmem:[%s1 + $0x78] sm:$0xff]
    %v51 = vld [vmem:[%s1 + $0x80] sm:$0xff]
    %v52 = vld [vmem:[%s1 + $0x88] sm:$0xff]
    %v53 = vld [vmem:[%s1 + $0x90] sm:$0xff]
    %v54 = vld [vmem:[%s1 + $0x98] sm:$0xff]
    %v55 = vld [vmem:[%s1 + $0xa0] sm:$0xff]
    %v56 = vld [vmem:[%s1 + $0xa8] sm:$0xff]
    %v57 = vld [vmem:[%s1 + $0xb0] sm:$0xff]
    %v58 = vld [vmem:[%s1 + $0xb8] sm:$0xff]
    %v59 = vld [vmem:[%s1 + $0xc0] sm:$0xff]
    %v60 = vld [vmem:[%s1 + $0xc8] sm:$0xff]
    %v61 = vld [vmem:[%s1 + $0xd0] sm:$0xff]
    %v62 = vld [vmem:[%s1 + $0xd8] sm:$0xff]
    %v63 = vld [vmem:[%s1 + $0xe0] sm:$0xff]
    %v64 = vld [vmem:[%s1 + $0xe8] sm:$0xff]
    %v65 = vld [vmem:[%s1 + $0xf0] sm:$0xff]
    %v66 = vld [vmem:[%s1 + $0xf8] sm:$0xff]
    %v67 = vld [vmem:[%s1 + $0x100] sm:$0xff]
    %v68 = vld [vmem:[%s1 + $0x108] sm:$0xff]
    %v69 = vld [vmem:[%s1 + $0x110] sm:$0xff]
    %v70 = vld [vmem:[%s1 + $0x118] sm:$0xff]
    %v71 = vld [vmem:[%s1 + $0x120] sm:$0xff]
    %v72 = vld [vmem:[%s1 + $0x128] sm:$0xff]
    %v73 = vld [vmem:[%s1 + $0x130] sm:$0xff]
    %v74 = vld [vmem:[%s1 + $0x138] sm:$0xff]
    %v75 = vld [vmem:[%s1 + $0x140] sm:$0xff]
    %v76 = vld [vmem:[%s1 + $0x148] sm:$0xff]
    %v77 = vld [vmem:[%s1 + $0x150] sm:$0xff]
    %v78 = vld [vmem:[%s1 + $0x158] sm:$0xff]
    %v79 = vld [vmem:[%s1 + $0x160] sm:$0xff]
    %v80 = vld [vmem:[%s1 + $0x168] sm:$0xff]
    %v81 = vld [vmem:[%s1 + $0x170] sm:$0xff]
    %v82 = vld [vmem:[%s1 + $0x178] sm:$0xff]
    %v83 = vld [vmem:[%s1 + $0x180] sm:$0xff]
    %v84 = vld [vmem:[%s1 + $0x188] sm:$0xff]
    %v85 = vld [vmem:[%s1 + $0x190] sm:$0xff]
    %v86 = vld [vmem:[%s1 + $0x198] sm:$0xff]
    %v87 = vld [vmem:[%s1 + $0x1a0] sm:$0xff]
    %v88 = vld [vmem:[%s1 + $0x1a8] sm:$0xff]
    %v89 = vld [vmem:[%s1 + $0x1b0] sm:$0xff]
    %v90 = vld [vmem:[%s1 + $0x1b8] sm:$0xff]
    %v91 = vld [vmem:[%s1 + $0x1c0] sm:$0xff]
    %v92 = vld [vmem:[%s1 + $0x1c8] sm:$0xff]
    %v93 = vld [vmem:[%s1 + $0x1d0] sm:$0xff]
    %v94 = vld [vmem:[%s1 + $0x1d8] sm:$0xff]
    %v95 = vld [vmem:[%s1 + $0x1e0] sm:$0xff]
    %v96 = vld [vmem:[%s1 + $0x1e8] sm:$0xff]
    %v97 = vld [vmem:[%s1 + $0x1f0] sm:$0xff]
    %v98 = vld [vmem:[%s1 + $0x1f8] sm:$0xff]
    %v99 = vld [vmem:[%s1 + $0x200] sm:$0xff]
    %v100 = vld [vmem:[%s1 + $0x208] sm:$0xff]
    %v101 = vld [vmem:[%s1 + $0x210] sm:$0xff]
    %v102 = vld [vmem:[%s1 + $0x218] sm:$0xff]
    %v103 = vld [vmem:[%s1 + $0x220] sm:$0xff]
    %v104 = vld [vmem:[%s1 + $0x228] sm:$0xff]
    %v105 = vld [vmem:[%s1 + $0x230] sm:$0xff]
    %v106 = vld [vmem:[%s1 + $0x238] sm:$0xff]
    %v107 = vld [vmem:[%s1 + $0x240] sm:$0xff]
    %v108 = vld [vmem:[%s1 + $0x248] sm:$0xff]
    %v109 = vld [vmem:[%s1 + $0x250] sm:$0xff]
    %v110 = vld [vmem:[%s1 + $0x258] sm:$0xff]
    %v111 = vld [vmem:[%s1 + $0x260] sm:$0xff]
    %v112 = vld [vmem:[%s1 + $0x268] sm:$0xff]
    %v113 = vld [vmem:[%s1 + $0x270] sm:$0xff]
    %v114 = vld [vmem:[%s1 + $0x278] sm:$0xff]
    %v115 = vld [vmem:[%s1 + $0x280] sm:$0xff]
    %v116 = vld [vmem:[%s1 + $0x288] sm:$0xff]
    %v117 = vld [vmem:[%s1 + $0x290] sm:$0xff]
    %v118 = vld [vmem:[%s1 + $0x298] sm:$0xff]
    %v119 = vld [vmem:[%s1 + $0x2a0] sm:$0xff]
    %v120 = vld [vmem:[%s1 + $0x2a8] sm:$0xff]
    %v121 = vld [vmem:[%s1 + $0x2b0] sm:$0xff]
    %v122 = vld [vmem:[%s1 + $0x2b8] sm:$0xff]
    %v123 = vld [vmem:[%s1 + $0x2c0] sm:$0xff]
    %v124 = vld [vmem:[%s1 + $0x2c8] sm:$0xff]
    %v125 = vld [vmem:[%s1 + $0x2d0] sm:$0xff]
    %v126 = vld [vmem:[%s1 + $0x2d8] sm:$0xff]
    %v127 = vld [vmem:[%s1 + $0x2e0] sm:$0xff]
    %v128 = vld [vmem:[%s1 + $0x2e8] sm:$0xff]
    %v129 = vld [vmem:[%s1 + $0x2f0] sm:$0xff]
    %v130 = vld [vmem:[%s1 + $0x2f8] sm:$0xff]
    %v131 = vld [vmem:[%s1 + $0x300] sm:$0xff]
    %v132 = vld [vmem:[%s1 + $0x308] sm:$0xff]
    %v133 = vld [vmem:[%s1 + $0x310] sm:$0xff]
    %v134 = vld [vmem:[%s1 + $0x318] sm:$0xff]
    %v135 = vld [vmem:[%s1 + $0x320] sm:$0xff]
    %v136 = vld [vmem:[%s1 + $0x328] sm:$0xff]
    %v137 = vld [vmem:[%s1 + $0x330] sm:$0xff]
    %v138 = vld [vmem:[%s1 + $0x338] sm:$0xff]
    %v139 = vld [vmem:[%s1 + $0x340] sm:$0xff]
    %v140 = vld [vmem:[%s1 + $0x348] sm:$0xff]
    %v141 = vld [vmem:[%s1 + $0x350] sm:$0xff]
    %v142 = vld [vmem:[%s1 + $0x358] sm:$0xff]
    %v143 = vld [vmem:[#allocation2] sm:$0x3]
    %v145 = vlaneseq
    %v146 = vshrl.u32 %v145, 7
    %v147 = vsub.s32 0, %v146
    %v148 = vrot.slane %v143, %v147
    %v149 = vlaneseq
    %v150 = vshrl.u32 %v149, 7
    %v151 = vsub.s32 1, %v150
    %v152 = vrot.slane %v143, %v151
    %v163 = vunpack.c.l.b16 %v27
    %v164 = vunpack.c.h.b16 %v27
    %v165 = vunpack.c.l.b16 %v28
    %v166 = vunpack.c.h.b16 %v28
    %v167 = vunpack.c.l.b16 %v29
    %v168 = vunpack.c.h.b16 %v29
    %v169 = vunpack.c.l.b16 %v30
    %v170 = vunpack.c.l.b16 %v31
    %v171 = vunpack.c.h.b16 %v31
    %v172 = vunpack.c.l.b16 %v32
    %v173 = vunpack.c.h.b16 %v32
    %v174 = vunpack.c.l.b16 %v33
    %v175 = vunpack.c.h.b16 %v33
    %v176 = vunpack.c.l.b16 %v34
    %v177 = vpack.c.b16 %v170, %v163
    %v178 = vpack.c.b16 %v171, %v164
    %v179 = vpack.c.b16 %v172, %v165
    %v180 = vpack.c.b16 %v173, %v166
    %v181 = vpack.c.b16 %v174, %v167
    %v182 = vpack.c.b16 %v175, %v168
    %v183 = vpack.c.b16 %v176, %v169
    %v298 = vunpack.c.l.b16 %v35
    %v299 = vunpack.c.h.b16 %v35
    %v300 = vunpack.c.l.b16 %v36
    %v301 = vunpack.c.h.b16 %v36
    %v302 = vunpack.c.l.b16 %v37
    %v303 = vunpack.c.h.b16 %v37
    %v304 = vunpack.c.l.b16 %v38
    %v305 = vunpack.c.h.b16 %v38
    %v306 = vunpack.c.l.b16 %v39
    %v307 = vunpack.c.h.b16 %v39
    %v308 = vunpack.c.l.b16 %v40
    %v309 = vunpack.c.h.b16 %v40
    %v310 = vunpack.c.l.b16 %v41
    %v311 = vunpack.c.h.b16 %v41
    %v312 = vunpack.c.l.b16 %v42
    %v313 = vunpack.c.h.b16 %v42
    %v314 = vunpack.c.l.b16 %v43
    %v315 = vunpack.c.h.b16 %v43
    %v316 = vunpack.c.l.b16 %v44
    %v317 = vunpack.c.h.b16 %v44
    %v318 = vunpack.c.l.b16 %v45
    %v319 = vunpack.c.h.b16 %v45
    %v320 = vunpack.c.l.b16 %v46
    %v321 = vunpack.c.h.b16 %v46
    %v322 = vunpack.c.l.b16 %v47
    %v323 = vunpack.c.h.b16 %v47
    %v324 = vunpack.c.l.b16 %v48
    %v325 = vunpack.c.h.b16 %v48
    %v326 = vunpack.c.l.b16 %v49
    %v327 = vunpack.c.h.b16 %v49
    %v328 = vunpack.c.l.b16 %v50
    %v329 = vunpack.c.h.b16 %v50
    %v330 = vunpack.c.l.b16 %v51
    %v331 = vunpack.c.h.b16 %v51
    %v332 = vunpack.c.l.b16 %v52
    %v333 = vunpack.c.h.b16 %v52
    %v334 = vunpack.c.l.b16 %v53
    %v335 = vunpack.c.h.b16 %v53
    %v336 = vunpack.c.l.b16 %v54
    %v337 = vunpack.c.h.b16 %v54
    %v338 = vunpack.c.l.b16 %v55
    %v339 = vunpack.c.h.b16 %v55
    %v340 = vunpack.c.l.b16 %v56
    %v341 = vunpack.c.h.b16 %v56
    %v342 = vunpack.c.l.b16 %v57
    %v343 = vunpack.c.h.b16 %v57
    %v344 = vunpack.c.l.b16 %v58
    %v345 = vunpack.c.h.b16 %v58
    %v346 = vunpack.c.l.b16 %v59
    %v347 = vunpack.c.h.b16 %v59
    %v348 = vunpack.c.l.b16 %v60
    %v349 = vunpack.c.h.b16 %v60
    %v350 = vunpack.c.l.b16 %v61
    %v351 = vunpack.c.h.b16 %v61
    %v352 = vunpack.c.l.b16 %v62
    %v353 = vunpack.c.h.b16 %v62
    %v354 = vunpack.c.l.b16 %v63
    %v355 = vunpack.c.h.b16 %v63
    %v356 = vunpack.c.l.b16 %v64
    %v357 = vunpack.c.h.b16 %v64
    %v358 = vunpack.c.l.b16 %v65
    %v359 = vunpack.c.h.b16 %v65
    %v360 = vunpack.c.l.b16 %v66
    %v361 = vunpack.c.h.b16 %v66
    %v362 = vunpack.c.l.b16 %v67
    %v363 = vunpack.c.h.b16 %v67
    %v364 = vunpack.c.l.b16 %v68
    %v365 = vunpack.c.h.b16 %v68
    %v366 = vunpack.c.l.b16 %v69
    %v367 = vunpack.c.h.b16 %v69
    %v368 = vunpack.c.l.b16 %v70
    %v369 = vunpack.c.h.b16 %v70
    %v370 = vunpack.c.l.b16 %v71
    %v371 = vunpack.c.h.b16 %v71
    %v372 = vunpack.c.l.b16 %v72
    %v373 = vunpack.c.h.b16 %v72
    %v374 = vunpack.c.l.b16 %v73
    %v375 = vunpack.c.h.b16 %v73
    %v376 = vunpack.c.l.b16 %v74
    %v377 = vunpack.c.h.b16 %v74
    %v378 = vunpack.c.l.b16 %v75
    %v379 = vunpack.c.h.b16 %v75
    %v380 = vunpack.c.l.b16 %v76
    %v381 = vunpack.c.h.b16 %v76
    %v382 = vunpack.c.l.b16 %v77
    %v383 = vunpack.c.h.b16 %v77
    %v384 = vunpack.c.l.b16 %v78
    %v385 = vunpack.c.h.b16 %v78
    %v386 = vunpack.c.l.b16 %v79
    %v387 = vunpack.c.h.b16 %v79
    %v388 = vunpack.c.l.b16 %v80
    %v389 = vunpack.c.h.b16 %v80
    %v390 = vunpack.c.l.b16 %v81
    %v391 = vunpack.c.h.b16 %v81
    %v392 = vunpack.c.l.b16 %v82
    %v393 = vunpack.c.h.b16 %v82
    %v394 = vunpack.c.l.b16 %v83
    %v395 = vunpack.c.h.b16 %v83
    %v396 = vunpack.c.l.b16 %v84
    %v397 = vunpack.c.h.b16 %v84
    %v398 = vunpack.c.l.b16 %v85
    %v399 = vunpack.c.h.b16 %v85
    %v400 = vunpack.c.l.b16 %v86
    %v401 = vunpack.c.h.b16 %v86
    %v402 = vunpack.c.l.b16 %v87
    %v403 = vunpack.c.h.b16 %v87
    %v404 = vunpack.c.l.b16 %v88
    %v405 = vunpack.c.h.b16 %v88
    %v406 = vunpack.c.l.b16 %v89
    %v407 = vunpack.c.h.b16 %v89
    %v408 = vunpack.c.l.b16 %v90
    %v409 = vunpack.c.h.b16 %v90
    %v410 = vunpack.c.l.b16 %v91
    %v411 = vunpack.c.h.b16 %v91
    %v412 = vunpack.c.l.b16 %v92
    %v413 = vunpack.c.h.b16 %v92
    %v414 = vunpack.c.l.b16 %v93
    %v415 = vunpack.c.h.b16 %v93
    %v416 = vunpack.c.l.b16 %v94
    %v417 = vunpack.c.h.b16 %v94
    %v418 = vunpack.c.l.b16 %v95
    %v419 = vunpack.c.h.b16 %v95
    %v420 = vunpack.c.l.b16 %v96
    %v421 = vunpack.c.h.b16 %v96
    %v422 = vunpack.c.l.b16 %v97
    %v423 = vunpack.c.h.b16 %v97
    %v424 = vunpack.c.l.b16 %v98
    %v425 = vunpack.c.h.b16 %v98
    %v426 = vunpack.c.l.b16 %v99
    %v427 = vunpack.c.h.b16 %v99
    %v428 = vunpack.c.l.b16 %v100
    %v429 = vunpack.c.h.b16 %v100
    %v430 = vunpack.c.l.b16 %v101
    %v431 = vunpack.c.h.b16 %v101
    %v432 = vunpack.c.l.b16 %v102
    %v433 = vunpack.c.h.b16 %v102
    %v434 = vunpack.c.l.b16 %v103
    %v435 = vunpack.c.h.b16 %v103
    %v436 = vunpack.c.l.b16 %v104
    %v437 = vunpack.c.h.b16 %v104
    %v438 = vunpack.c.l.b16 %v105
    %v439 = vunpack.c.h.b16 %v105
    %v440 = vunpack.c.l.b16 %v106
    %v441 = vunpack.c.h.b16 %v106
    %v442 = vunpack.c.l.b16 %v107
    %v443 = vunpack.c.h.b16 %v107
    %v444 = vunpack.c.l.b16 %v108
    %v445 = vunpack.c.h.b16 %v108
    %v446 = vunpack.c.l.b16 %v109
    %v447 = vunpack.c.h.b16 %v109
    %v448 = vunpack.c.l.b16 %v110
    %v449 = vunpack.c.h.b16 %v110
    %v450 = vunpack.c.l.b16 %v111
    %v451 = vunpack.c.h.b16 %v111
    %v452 = vunpack.c.l.b16 %v112
    %v453 = vunpack.c.h.b16 %v112
    %v454 = vunpack.c.l.b16 %v113
    %v455 = vunpack.c.h.b16 %v113
    %v456 = vunpack.c.l.b16 %v114
    %v457 = vunpack.c.h.b16 %v114
    %v458 = vunpack.c.l.b16 %v115
    %v459 = vunpack.c.h.b16 %v115
    %v460 = vunpack.c.l.b16 %v116
    %v461 = vunpack.c.h.b16 %v116
    %v462 = vunpack.c.l.b16 %v117
    %v463 = vunpack.c.h.b16 %v117
    %v464 = vunpack.c.l.b16 %v118
    %v465 = vunpack.c.h.b16 %v118
    %v466 = vunpack.c.l.b16 %v119
    %v467 = vunpack.c.h.b16 %v119
    %v468 = vunpack.c.l.b16 %v120
    %v469 = vunpack.c.h.b16 %v120
    %v470 = vunpack.c.l.b16 %v121
    %v471 = vunpack.c.h.b16 %v121
    %v472 = vunpack.c.l.b16 %v122
    %v473 = vunpack.c.h.b16 %v122
    %v474 = vunpack.c.l.b16 %v123
    %v475 = vunpack.c.h.b16 %v123
    %v476 = vunpack.c.l.b16 %v124
    %v477 = vunpack.c.h.b16 %v124
    %v478 = vunpack.c.l.b16 %v125
    %v479 = vunpack.c.h.b16 %v125
    %v480 = vunpack.c.l.b16 %v126
    %v481 = vunpack.c.h.b16 %v126
    %v482 = vunpack.c.l.b16 %v127
    %v483 = vunpack.c.h.b16 %v127
    %v484 = vunpack.c.l.b16 %v128
    %v485 = vunpack.c.h.b16 %v128
    %v486 = vunpack.c.l.b16 %v129
    %v487 = vunpack.c.h.b16 %v129
    %v488 = vunpack.c.l.b16 %v130
    %v489 = vunpack.c.h.b16 %v130
    %v490 = vunpack.c.l.b16 %v131
    %v491 = vunpack.c.h.b16 %v131
    %v492 = vunpack.c.l.b16 %v132
    %v493 = vunpack.c.h.b16 %v132
    %v494 = vunpack.c.l.b16 %v133
    %v495 = vunpack.c.h.b16 %v133
    %v496 = vunpack.c.l.b16 %v134
    %v497 = vunpack.c.h.b16 %v134
    %v498 = vunpack.c.l.b16 %v135
    %v499 = vunpack.c.h.b16 %v135
    %v500 = vunpack.c.l.b16 %v136
    %v501 = vunpack.c.h.b16 %v136
    %v502 = vunpack.c.l.b16 %v137
    %v503 = vunpack.c.h.b16 %v137
    %v504 = vunpack.c.l.b16 %v138
    %v505 = vunpack.c.h.b16 %v138
    %v506 = vunpack.c.l.b16 %v139
    %v507 = vunpack.c.h.b16 %v139
    %v508 = vunpack.c.l.b16 %v140
    %v509 = vunpack.c.h.b16 %v140
    %v510 = vunpack.c.l.b16 %v141
    %v511 = vunpack.c.h.b16 %v141
    %v512 = vunpack.c.l.b16 %v142
    %v513 = vunpack.c.h.b16 %v142
    %v514 = vpack.c.b16 %v300, %v298
    %v515 = vpack.c.b16 %v301, %v299
    %v516 = vpack.c.b16 %v304, %v302
    %v517 = vpack.c.b16 %v305, %v303
    %v518 = vpack.c.b16 %v308, %v306
    %v519 = vpack.c.b16 %v309, %v307
    %v520 = vpack.c.b16 %v312, %v310
    %v521 = vpack.c.b16 %v313, %v311
    %v522 = vpack.c.b16 %v316, %v314
    %v523 = vpack.c.b16 %v317, %v315
    %v524 = vpack.c.b16 %v320, %v318
    %v525 = vpack.c.b16 %v321, %v319
    %v526 = vpack.c.b16 %v324, %v322
    %v527 = vpack.c.b16 %v325, %v323
    %v528 = vpack.c.b16 %v328, %v326
    %v529 = vpack.c.b16 %v329, %v327
    %v530 = vpack.c.b16 %v332, %v330
    %v531 = vpack.c.b16 %v333, %v331
    %v532 = vpack.c.b16 %v336, %v334
    %v533 = vpack.c.b16 %v337, %v335
    %v534 = vpack.c.b16 %v340, %v338
    %v535 = vpack.c.b16 %v341, %v339
    %v536 = vpack.c.b16 %v344, %v342
    %v537 = vpack.c.b16 %v345, %v343
    %v538 = vpack.c.b16 %v348, %v346
    %v539 = vpack.c.b16 %v349, %v347
    %v540 = vpack.c.b16 %v352, %v350
    %v541 = vpack.c.b16 %v353, %v351
    %v542 = vpack.c.b16 %v356, %v354
    %v543 = vpack.c.b16 %v357, %v355
    %v544 = vpack.c.b16 %v360, %v358
    %v545 = vpack.c.b16 %v361, %v359
    %v546 = vpack.c.b16 %v364, %v362
    %v547 = vpack.c.b16 %v365, %v363
    %v548 = vpack.c.b16 %v368, %v366
    %v549 = vpack.c.b16 %v369, %v367
    %v550 = vpack.c.b16 %v372, %v370
    %v551 = vpack.c.b16 %v373, %v371
    %v552 = vpack.c.b16 %v376, %v374
    %v553 = vpack.c.b16 %v377, %v375
    %v554 = vpack.c.b16 %v380, %v378
    %v555 = vpack.c.b16 %v381, %v379
    %v556 = vpack.c.b16 %v384, %v382
    %v557 = vpack.c.b16 %v385, %v383
    %v558 = vpack.c.b16 %v388, %v386
    %v559 = vpack.c.b16 %v389, %v387
    %v560 = vpack.c.b16 %v392, %v390
    %v561 = vpack.c.b16 %v393, %v391
    %v562 = vpack.c.b16 %v396, %v394
    %v563 = vpack.c.b16 %v397, %v395
    %v564 = vpack.c.b16 %v400, %v398
    %v565 = vpack.c.b16 %v401, %v399
    %v566 = vpack.c.b16 %v404, %v402
    %v567 = vpack.c.b16 %v405, %v403
    %v568 = vpack.c.b16 %v408, %v406
    %v569 = vpack.c.b16 %v409, %v407
    %v570 = vpack.c.b16 %v412, %v410
    %v571 = vpack.c.b16 %v413, %v411
    %v572 = vpack.c.b16 %v416, %v414
    %v573 = vpack.c.b16 %v417, %v415
    %v574 = vpack.c.b16 %v420, %v418
    %v575 = vpack.c.b16 %v421, %v419
    %v576 = vpack.c.b16 %v424, %v422
    %v577 = vpack.c.b16 %v425, %v423
    %v578 = vpack.c.b16 %v428, %v426
    %v579 = vpack.c.b16 %v429, %v427
    %v580 = vpack.c.b16 %v432, %v430
    %v581 = vpack.c.b16 %v433, %v431
    %v582 = vpack.c.b16 %v436, %v434
    %v583 = vpack.c.b16 %v437, %v435
    %v584 = vpack.c.b16 %v440, %v438
    %v585 = vpack.c.b16 %v441, %v439
    %v586 = vpack.c.b16 %v444, %v442
    %v587 = vpack.c.b16 %v445, %v443
    %v588 = vpack.c.b16 %v448, %v446
    %v589 = vpack.c.b16 %v449, %v447
    %v590 = vpack.c.b16 %v452, %v450
    %v591 = vpack.c.b16 %v453, %v451
    %v592 = vpack.c.b16 %v456, %v454
    %v593 = vpack.c.b16 %v457, %v455
    %v594 = vpack.c.b16 %v460, %v458
    %v595 = vpack.c.b16 %v461, %v459
    %v596 = vpack.c.b16 %v464, %v462
    %v597 = vpack.c.b16 %v465, %v463
    %v598 = vpack.c.b16 %v468, %v466
    %v599 = vpack.c.b16 %v469, %v467
    %v600 = vpack.c.b16 %v472, %v470
    %v601 = vpack.c.b16 %v473, %v471
    %v602 = vpack.c.b16 %v476, %v474
    %v603 = vpack.c.b16 %v477, %v475
    %v604 = vpack.c.b16 %v480, %v478
    %v605 = vpack.c.b16 %v481, %v479
    %v606 = vpack.c.b16 %v484, %v482
    %v607 = vpack.c.b16 %v485, %v483
    %v608 = vpack.c.b16 %v488, %v486
    %v609 = vpack.c.b16 %v489, %v487
    %v610 = vpack.c.b16 %v492, %v490
    %v611 = vpack.c.b16 %v493, %v491
    %v612 = vpack.c.b16 %v496, %v494
    %v613 = vpack.c.b16 %v497, %v495
    %v614 = vpack.c.b16 %v500, %v498
    %v615 = vpack.c.b16 %v501, %v499
    %v616 = vpack.c.b16 %v504, %v502
    %v617 = vpack.c.b16 %v505, %v503
    %v618 = vpack.c.b16 %v508, %v506
    %v619 = vpack.c.b16 %v509, %v507
    %v620 = vpack.c.b16 %v512, %v510
    %v621 = vpack.c.b16 %v513, %v511
    %vm730 = vcmask 785408
    %v732 = vsel %vm730, %v183, 0
    %734 = vmatprep.subr.bf16.mxu0 %v529
    %735 = vmatpush1.bf16.msra.mxu0 %v528
    %736 = vmatprep.subr.bf16.mxu0 %v527
    %737 = vmatpush1.bf16.msra.mxu0 %v526
    %738 = vmatprep.subr.bf16.mxu0 %v525
    %739 = vmatpush1.bf16.msra.mxu0 %v524
    %740 = vmatprep.subr.bf16.mxu0 %v523
    %741 = vmatpush1.bf16.msra.mxu0 %v522
    %742 = vmatprep.subr.bf16.mxu0 %v521
    %743 = vmatpush1.bf16.msra.mxu0 %v520
    %744 = vmatprep.subr.bf16.mxu0 %v519
    %745 = vmatpush1.bf16.msra.mxu0 %v518
    %746 = vmatprep.subr.bf16.mxu0 %v517
    %747 = vmatpush1.bf16.msra.mxu0 %v516
    %748 = vmatprep.subr.bf16.mxu0 %v515
    %749 = vmatpush1.bf16.msra.mxu0 %v514
    %750 = vmatprep.subr.bf16.mxu0 %v545
    %751 = vmatpush2.bf16.msra.mxu0 %v544
    %752 = vmatprep.subr.bf16.mxu0 %v543
    %753 = vmatpush2.bf16.msra.mxu0 %v542
    %754 = vmatprep.subr.bf16.mxu0 %v541
    %755 = vmatpush2.bf16.msra.mxu0 %v540
    %756 = vmatprep.subr.bf16.mxu0 %v539
    %757 = vmatpush2.bf16.msra.mxu0 %v538
    %758 = vmatprep.subr.bf16.mxu0 %v537
    %759 = vmatpush2.bf16.msra.mxu0 %v536
    %760 = vmatprep.subr.bf16.mxu0 %v535
    %761 = vmatpush2.bf16.msra.mxu0 %v534
    %762 = vmatprep.subr.bf16.mxu0 %v533
    %763 = vmatpush2.bf16.msra.mxu0 %v532
    %764 = vmatprep.subr.bf16.mxu0 %v531
    %765 = vmatpush2.bf16.msra.mxu0 %v530
    %766 = vmatprep.mubr.bf16.mxu0 %v178
    %767 = vmatmul.mubr.bf16.gmra.mxu0 %v177
    %v768 = vpop.f32.mrf.mxu0
    %v769 = vadd.f32 %v148, %v768
    %v770 = vpop.f32.mrf.mxu0
    %v771 = vadd.f32 %v152, %v770
    %v772 = vpop.f32.mrf.mxu0
    %v773 = vadd.f32 %v148, %v772
    %v774 = vpop.f32.mrf.mxu0
    %v775 = vadd.f32 %v152, %v774
    %776 = vdwg.mxu0
    %777 = vmatprep.subr.bf16.mxu0 %v561
    %778 = vmatpush1.bf16.msra.mxu0 %v560
    %779 = vmatprep.subr.bf16.mxu0 %v559
    %780 = vmatpush1.bf16.msra.mxu0 %v558
    %781 = vmatprep.subr.bf16.mxu0 %v557
    %782 = vmatpush1.bf16.msra.mxu0 %v556
    %783 = vmatprep.subr.bf16.mxu0 %v555
    %784 = vmatpush1.bf16.msra.mxu0 %v554
    %785 = vmatprep.subr.bf16.mxu0 %v553
    %786 = vmatpush1.bf16.msra.mxu0 %v552
    %787 = vmatprep.subr.bf16.mxu0 %v551
    %788 = vmatpush1.bf16.msra.mxu0 %v550
    %789 = vmatprep.subr.bf16.mxu0 %v549
    %790 = vmatpush1.bf16.msra.mxu0 %v548
    %791 = vmatprep.subr.bf16.mxu0 %v547
    %792 = vmatpush1.bf16.msra.mxu0 %v546
    %793 = vmatprep.subr.bf16.mxu0 %v577
    %794 = vmatpush2.bf16.msra.mxu0 %v576
    %795 = vmatprep.subr.bf16.mxu0 %v575
    %796 = vmatpush2.bf16.msra.mxu0 %v574
    %797 = vmatprep.subr.bf16.mxu0 %v573
    %798 = vmatpush2.bf16.msra.mxu0 %v572
    %799 = vmatprep.subr.bf16.mxu0 %v571
    %800 = vmatpush2.bf16.msra.mxu0 %v570
    %801 = vmatprep.subr.bf16.mxu0 %v569
    %802 = vmatpush2.bf16.msra.mxu0 %v568
    %803 = vmatprep.subr.bf16.mxu0 %v567
    %804 = vmatpush2.bf16.msra.mxu0 %v566
    %805 = vmatprep.subr.bf16.mxu0 %v565
    %806 = vmatpush2.bf16.msra.mxu0 %v564
    %807 = vmatprep.subr.bf16.mxu0 %v563
    %808 = vmatpush2.bf16.msra.mxu0 %v562
    %809 = vmatprep.mubr.bf16.mxu0 %v180
    %810 = vmatmul.mubr.bf16.gmra.mxu0 %v179
    %v811 = vpop.f32.mrf.mxu0
    %v812 = vadd.f32 %v769, %v811
    %v813 = vpop.f32.mrf.mxu0
    %v814 = vadd.f32 %v771, %v813
    %v815 = vpop.f32.mrf.mxu0
    %v816 = vadd.f32 %v773, %v815
    %v817 = vpop.f32.mrf.mxu0
    %v818 = vadd.f32 %v775, %v817
    %819 = vdwg.mxu0
    %820 = vmatprep.subr.bf16.mxu0 %v593
    %821 = vmatpush1.bf16.msra.mxu0 %v592
    %822 = vmatprep.subr.bf16.mxu0 %v591
    %823 = vmatpush1.bf16.msra.mxu0 %v590
    %824 = vmatprep.subr.bf16.mxu0 %v589
    %825 = vmatpush1.bf16.msra.mxu0 %v588
    %826 = vmatprep.subr.bf16.mxu0 %v587
    %827 = vmatpush1.bf16.msra.mxu0 %v586
    %828 = vmatprep.subr.bf16.mxu0 %v585
    %829 = vmatpush1.bf16.msra.mxu0 %v584
    %830 = vmatprep.subr.bf16.mxu0 %v583
    %831 = vmatpush1.bf16.msra.mxu0 %v582
    %832 = vmatprep.subr.bf16.mxu0 %v581
    %833 = vmatpush1.bf16.msra.mxu0 %v580
    %834 = vmatprep.subr.bf16.mxu0 %v579
    %835 = vmatpush1.bf16.msra.mxu0 %v578
    %836 = vmatprep.subr.bf16.mxu0 %v609
    %837 = vmatpush2.bf16.msra.mxu0 %v608
    %838 = vmatprep.subr.bf16.mxu0 %v607
    %839 = vmatpush2.bf16.msra.mxu0 %v606
    %840 = vmatprep.subr.bf16.mxu0 %v605
    %841 = vmatpush2.bf16.msra.mxu0 %v604
    %842 = vmatprep.subr.bf16.mxu0 %v603
    %843 = vmatpush2.bf16.msra.mxu0 %v602
    %844 = vmatprep.subr.bf16.mxu0 %v601
    %845 = vmatpush2.bf16.msra.mxu0 %v600
    %846 = vmatprep.subr.bf16.mxu0 %v599
    %847 = vmatpush2.bf16.msra.mxu0 %v598
    %848 = vmatprep.subr.bf16.mxu0 %v597
    %849 = vmatpush2.bf16.msra.mxu0 %v596
    %850 = vmatprep.subr.bf16.mxu0 %v595
    %851 = vmatpush2.bf16.msra.mxu0 %v594
    %852 = vmatprep.mubr.bf16.mxu0 %v182
    %853 = vmatmul.mubr.bf16.gmra.mxu0 %v181
    %v854 = vpop.f32.mrf.mxu0
    %v855 = vadd.f32 %v812, %v854
    %v856 = vpop.f32.mrf.mxu0
    %v857 = vadd.f32 %v814, %v856
    %v858 = vpop.f32.mrf.mxu0
    %v859 = vadd.f32 %v816, %v858
    %v860 = vpop.f32.mrf.mxu0
    %v861 = vadd.f32 %v818, %v860
    %862 = vdwg.mxu0
    %863 = vmatprep.subr.bf16.mxu0 0
    %864 = vmatpush1.bf16.msra.mxu0 0
    %865 = vmatprep.subr.bf16.mxu0 0
    %866 = vmatpush1.bf16.msra.mxu0 0
    %867 = vmatprep.subr.bf16.mxu0 %v621
    %868 = vmatpush1.bf16.msra.mxu0 %v620
    %869 = vmatprep.subr.bf16.mxu0 %v619
    %870 = vmatpush1.bf16.msra.mxu0 %v618
    %871 = vmatprep.subr.bf16.mxu0 %v617
    %872 = vmatpush1.bf16.msra.mxu0 %v616
    %873 = vmatprep.subr.bf16.mxu0 %v615
    %874 = vmatpush1.bf16.msra.mxu0 %v614
    %875 = vmatprep.subr.bf16.mxu0 %v613
    %876 = vmatpush1.bf16.msra.mxu0 %v612
    %877 = vmatprep.subr.bf16.mxu0 %v611
    %878 = vmatpush1.bf16.msra.mxu0 %v610
    %879 = vmatprep.subr.bf16.mxu0 0
    %880 = vmatpush2.bf16.msra.mxu0 0
    %881 = vmatprep.subr.bf16.mxu0 0
    %882 = vmatpush2.bf16.msra.mxu0 0
    %883 = vmatprep.subr.bf16.mxu0 0
    %884 = vmatpush2.bf16.msra.mxu0 0
    %885 = vmatprep.subr.bf16.mxu0 0
    %886 = vmatpush2.bf16.msra.mxu0 0
    %887 = vmatprep.subr.bf16.mxu0 0
    %888 = vmatpush2.bf16.msra.mxu0 0
    %889 = vmatprep.subr.bf16.mxu0 0
    %890 = vmatpush2.bf16.msra.mxu0 0
    %891 = vmatprep.subr.bf16.mxu0 0
    %892 = vmatpush2.bf16.msra.mxu0 0
    %893 = vmatprep.subr.bf16.mxu0 0
    %894 = vmatpush2.bf16.msra.mxu0 0
    %895 = vmatprep.mubr.bf16.mxu0 0
    %896 = vmatmul.mubr.bf16.gmra.mxu0 %v732
    %v897 = vpop.f32.mrf.mxu0
    %v898 = vadd.f32 %v855, %v897
    %v899 = vpop.f32.mrf.mxu0
    %v900 = vadd.f32 %v857, %v899
    %v901 = vpop.f32.mrf.mxu0
    %v902 = vadd.f32 %v859, %v901
    %v903 = vpop.f32.mrf.mxu0
    %v904 = vadd.f32 %v861, %v903
    %905 = vdwg.mxu0
    %vm906 = vcmp.ge.f32.partialorder %v898, 0.0
    %vm907 = vcmp.ge.f32.partialorder %v900, 0.0
    %vm908 = vcmp.ge.f32.partialorder %v902, 0.0
    %vm909 = vcmp.ge.f32.partialorder %v904, 0.0
    %v910 = vmul.f32 %v898, 0.2
    %v911 = vmul.f32 %v900, 0.2
    %v912 = vmul.f32 %v902, 0.2
    %v913 = vmul.f32 %v904, 0.2
    %v914 = vsel %vm906, %v898, %v910
    %v915 = vsel %vm907, %v900, %v911
    %v916 = vsel %vm908, %v902, %v912
    %v917 = vsel %vm909, %v904, %v913
    %v918 = vpack.c.bf16 %v916, %v914
    %v919 = vpack.c.bf16 %v917, %v915
    %v922 = vunpack.c.l.b16 %v918
    %v923 = vunpack.c.l.b16 %v919
    %v924 = vunpack.c.h.b16 %v918
    %v925 = vunpack.c.h.b16 %v919
    %v926 = vpack.c.b16 %v923, %v922
    %v927 = vpack.c.b16 %v925, %v924
    %vm930 = vcmask 1043456
    %vm931 = vcmask 523268
    %vm932 = vmor %vm931, %vm930
    %933 = vst.msk [vmem:[%s3] sm:$0xff] %vm932, %v926
    %934 = vst.msk [vmem:[%s3 + $0x8] sm:$0xff] %vm932, %v927
    // Predicated region
    $region18: #{ifnet_forward.58} parent=1 // pred_check
      _
    $region19: #{ifnet_forward.58} parent=1 // pred_check_branch
      %936 = sbr.rel (0) target = $region21
    $region20: #{ifnet_forward.58} parent=1 // pred_region
      _
    $region21: #{ifnet_forward.58} parent=1 // pred_fallthru
      _
    // Predicated region
    $region22: #{ifnet_forward.58} parent=1 // pred_check
      _
    $region23: #{ifnet_forward.58} parent=1 // pred_check_branch
      %938 = sbr.rel (0) target = $region25
    $region24: #{ifnet_forward.58} parent=1 // pred_region
      _
    $region25: #{ifnet_forward.58} parent=1 // pred_fallthru
      _
    %939 = vsyncpa [#allocation3], 1

// kernel: ifnet_forward.70
$region0: #{ifnet_forward.70}
  #allocation0 [shape = 'u32[]', space=smem, size = 0x4, offset = 0x4, fixed_abs, tag = 'smem constant byte address 0x4 - core index']
  #allocation1 [shape = 'u32[144,128]{1,0:T(1,128)}', space=vmem, size = 0x12000, scoped, tag = 'internal scratch']
  %s0 = inlined_call_operand.vmem [shape: bf16[16,768], index: 0, kind: input, shape index: {}]
  %s1 = inlined_call_operand.vmem [shape: bf16[768,24], index: 1, kind: input, shape index: {}]
  %s2 = inlined_call_operand.vmem [shape: f32[1,24], index: 2, kind: input, shape index: {}]
  %s3 = inlined_call_operand.vmem [shape: f32[16,24], index: 3, kind: output, shape index: {}]
  %s4 = sld [smem:[#allocation0]]
  $region22: #{ifnet_forward.70} parent=0
    _
  %s6 = ssub.s32 1, %s4
  %s7 = scalar_select 0, %s6, %s4
  // Predicated region
  $region2: #{ifnet_forward.70} parent=0 // pred_check
    _
  $region3: #{ifnet_forward.70} parent=0 // pred_check_branch
    %9 = sbr.rel (0) target = $region5
  $region4: #{ifnet_forward.70} parent=0 // pred_region
    _
  $region5: #{ifnet_forward.70} parent=0 // pred_fallthru
    _
  // Predicated region
  $region6: #{ifnet_forward.70} parent=0 // pred_check
    _
  $region7: #{ifnet_forward.70} parent=0 // pred_check_branch
    %11 = sbr.rel (0) target = $region9
  $region8: #{ifnet_forward.70} parent=0 // pred_region
    _
  $region9: #{ifnet_forward.70} parent=0 // pred_fallthru
    _
  // Predicated region
  $region10: #{ifnet_forward.70} parent=0 // pred_check
    _
  $region11: #{ifnet_forward.70} parent=0 // pred_check_branch
    %13 = sbr.rel (0) target = $region13
  $region12: #{ifnet_forward.70} parent=0 // pred_region
    _
  $region13: #{ifnet_forward.70} parent=0 // pred_fallthru
    _
  %v15 = vld [vmem:[%s0] sm:$0xff]
  %v16 = vld [vmem:[%s0 + $0x8] sm:$0xff]
  %v17 = vld [vmem:[%s0 + $0x10] sm:$0xff]
  %v18 = vld [vmem:[%s0 + $0x18] sm:$0xff]
  %v19 = vld [vmem:[%s0 + $0x20] sm:$0xff]
  %v20 = vld [vmem:[%s0 + $0x28] sm:$0xff]
  %v21 = vld [vmem:[%s1] sm:$0xf]
  %v22 = vld [vmem:[%s1 + $0x4] sm:$0xf]
  %v23 = vld [vmem:[%s1 + $0x8] sm:$0xf]
  %v24 = vld [vmem:[%s1 + $0xc] sm:$0xf]
  %v25 = vld [vmem:[%s1 + $0x10] sm:$0xf]
  %v26 = vld [vmem:[%s1 + $0x14] sm:$0xf]
  %v27 = vld [vmem:[%s1 + $0x18] sm:$0xf]
  %v28 = vld [vmem:[%s1 + $0x1c] sm:$0xf]
  %v29 = vld [vmem:[%s1 + $0x20] sm:$0xf]
  %v30 = vld [vmem:[%s1 + $0x24] sm:$0xf]
  %v31 = vld [vmem:[%s1 + $0x28] sm:$0xf]
  %v32 = vld [vmem:[%s1 + $0x2c] sm:$0xf]
  %v33 = vld [vmem:[%s1 + $0x30] sm:$0xf]
  %v34 = vld [vmem:[%s1 + $0x34] sm:$0xf]
  %v35 = vld [vmem:[%s1 + $0x38] sm:$0xf]
  %v36 = vld [vmem:[%s1 + $0x3c] sm:$0xf]
  %v37 = vld [vmem:[%s1 + $0x40] sm:$0xf]
  %v38 = vld [vmem:[%s1 + $0x44] sm:$0xf]
  %v39 = vld [vmem:[%s1 + $0x48] sm:$0xf]
  %v40 = vld [vmem:[%s1 + $0x4c] sm:$0xf]
  %v41 = vld [vmem:[%s1 + $0x50] sm:$0xf]
  %v42 = vld [vmem:[%s1 + $0x54] sm:$0xf]
  %v43 = vld [vmem:[%s1 + $0x58] sm:$0xf]
  %v44 = vld [vmem:[%s1 + $0x5c] sm:$0xf]
  %v45 = vld [vmem:[%s1 + $0x60] sm:$0xf]
  %v46 = vld [vmem:[%s1 + $0x64] sm:$0xf]
  %v47 = vld [vmem:[%s1 + $0x68] sm:$0xf]
  %v48 = vld [vmem:[%s1 + $0x6c] sm:$0xf]
  %v49 = vld [vmem:[%s1 + $0x70] sm:$0xf]
  %v50 = vld [vmem:[%s1 + $0x74] sm:$0xf]
  %v51 = vld [vmem:[%s1 + $0x78] sm:$0xf]
  %v52 = vld [vmem:[%s1 + $0x7c] sm:$0xf]
  %v53 = vld [vmem:[%s1 + $0x80] sm:$0xf]
  %v54 = vld [vmem:[%s1 + $0x84] sm:$0xf]
  %v55 = vld [vmem:[%s1 + $0x88] sm:$0xf]
  %v56 = vld [vmem:[%s1 + $0x8c] sm:$0xf]
  %v57 = vld [vmem:[%s1 + $0x90] sm:$0xf]
  %v58 = vld [vmem:[%s1 + $0x94] sm:$0xf]
  %v59 = vld [vmem:[%s1 + $0x98] sm:$0xf]
  %v60 = vld [vmem:[%s1 + $0x9c] sm:$0xf]
  %v61 = vld [vmem:[%s1 + $0xa0] sm:$0xf]
  %v62 = vld [vmem:[%s1 + $0xa4] sm:$0xf]
  %v63 = vld [vmem:[%s1 + $0xa8] sm:$0xf]
  %v64 = vld [vmem:[%s1 + $0xac] sm:$0xf]
  %v65 = vld [vmem:[%s1 + $0xb0] sm:$0xf]
  %v66 = vld [vmem:[%s1 + $0xb4] sm:$0xf]
  %v67 = vld [vmem:[%s1 + $0xb8] sm:$0xf]
  %v68 = vld [vmem:[%s1 + $0xbc] sm:$0xf]
  %v69 = vld [vmem:[%s1 + $0xc0] sm:$0xf]
  %v70 = vld [vmem:[%s1 + $0xc4] sm:$0xf]
  %v71 = vld [vmem:[%s1 + $0xc8] sm:$0xf]
  %v72 = vld [vmem:[%s1 + $0xcc] sm:$0xf]
  %v73 = vld [vmem:[%s1 + $0xd0] sm:$0xf]
  %v74 = vld [vmem:[%s1 + $0xd4] sm:$0xf]
  %v75 = vld [vmem:[%s1 + $0xd8] sm:$0xf]
  %v76 = vld [vmem:[%s1 + $0xdc] sm:$0xf]
  %v77 = vld [vmem:[%s1 + $0xe0] sm:$0xf]
  %v78 = vld [vmem:[%s1 + $0xe4] sm:$0xf]
  %v79 = vld [vmem:[%s1 + $0xe8] sm:$0xf]
  %v80 = vld [vmem:[%s1 + $0xec] sm:$0xf]
  %v81 = vld [vmem:[%s1 + $0xf0] sm:$0xf]
  %v82 = vld [vmem:[%s1 + $0xf4] sm:$0xf]
  %v83 = vld [vmem:[%s1 + $0xf8] sm:$0xf]
  %v84 = vld [vmem:[%s1 + $0xfc] sm:$0xf]
  %v85 = vld [vmem:[%s1 + $0x100] sm:$0xf]
  %v86 = vld [vmem:[%s1 + $0x104] sm:$0xf]
  %v87 = vld [vmem:[%s1 + $0x108] sm:$0xf]
  %v88 = vld [vmem:[%s1 + $0x10c] sm:$0xf]
  %v89 = vld [vmem:[%s1 + $0x110] sm:$0xf]
  %v90 = vld [vmem:[%s1 + $0x114] sm:$0xf]
  %v91 = vld [vmem:[%s1 + $0x118] sm:$0xf]
  %v92 = vld [vmem:[%s1 + $0x11c] sm:$0xf]
  %v93 = vld [vmem:[%s1 + $0x120] sm:$0xf]
  %v94 = vld [vmem:[%s1 + $0x124] sm:$0xf]
  %v95 = vld [vmem:[%s1 + $0x128] sm:$0xf]
  %v96 = vld [vmem:[%s1 + $0x12c] sm:$0xf]
  %v97 = vld [vmem:[%s1 + $0x130] sm:$0xf]
  %v98 = vld [vmem:[%s1 + $0x134] sm:$0xf]
  %v99 = vld [vmem:[%s1 + $0x138] sm:$0xf]
  %v100 = vld [vmem:[%s1 + $0x13c] sm:$0xf]
  %v101 = vld [vmem:[%s1 + $0x140] sm:$0xf]
  %v102 = vld [vmem:[%s1 + $0x144] sm:$0xf]
  %v103 = vld [vmem:[%s1 + $0x148] sm:$0xf]
  %v104 = vld [vmem:[%s1 + $0x14c] sm:$0xf]
  %v105 = vld [vmem:[%s1 + $0x150] sm:$0xf]
  %v106 = vld [vmem:[%s1 + $0x154] sm:$0xf]
  %v107 = vld [vmem:[%s1 + $0x158] sm:$0xf]
  %v108 = vld [vmem:[%s1 + $0x15c] sm:$0xf]
  %v109 = vld [vmem:[%s1 + $0x160] sm:$0xf]
  %v110 = vld [vmem:[%s1 + $0x164] sm:$0xf]
  %v111 = vld [vmem:[%s1 + $0x168] sm:$0xf]
  %v112 = vld [vmem:[%s1 + $0x16c] sm:$0xf]
  %v113 = vld [vmem:[%s1 + $0x170] sm:$0xf]
  %v114 = vld [vmem:[%s1 + $0x174] sm:$0xf]
  %v115 = vld [vmem:[%s1 + $0x178] sm:$0xf]
  %v116 = vld [vmem:[%s1 + $0x17c] sm:$0xf]
  %v117 = vld [vmem:[%s2] sm:$0x1]
  %v119 = vlaneseq
  %v120 = vshrl.u32 %v119, 7
  %v121 = vsub.s32 0, %v120
  %v122 = vrot.slane %v117, %v121
  %v130 = vunpack.c.l.b16 %v15
  %v131 = vunpack.c.h.b16 %v15
  %v132 = vunpack.c.l.b16 %v16
  %v133 = vunpack.c.h.b16 %v16
  %v134 = vunpack.c.l.b16 %v17
  %v135 = vunpack.c.h.b16 %v17
  %v136 = vunpack.c.l.b16 %v18
  %v137 = vunpack.c.h.b16 %v18
  %v138 = vunpack.c.l.b16 %v19
  %v139 = vunpack.c.h.b16 %v19
  %v140 = vunpack.c.l.b16 %v20
  %v141 = vunpack.c.h.b16 %v20
  %v142 = vpack.c.b16 %v136, %v130
  %v143 = vpack.c.b16 %v137, %v131
  %v144 = vpack.c.b16 %v138, %v132
  %v145 = vpack.c.b16 %v139, %v133
  %v146 = vpack.c.b16 %v140, %v134
  %v147 = vpack.c.b16 %v141, %v135
  %v250 = vunpack.c.l.b16 %v21
  %v251 = vunpack.c.l.b16 %v22
  %v252 = vunpack.c.l.b16 %v23
  %v253 = vunpack.c.l.b16 %v24
  %v254 = vunpack.c.l.b16 %v25
  %v255 = vunpack.c.l.b16 %v26
  %v256 = vunpack.c.l.b16 %v27
  %v257 = vunpack.c.l.b16 %v28
  %v258 = vunpack.c.l.b16 %v29
  %v259 = vunpack.c.l.b16 %v30
  %v260 = vunpack.c.l.b16 %v31
  %v261 = vunpack.c.l.b16 %v32
  %v262 = vunpack.c.l.b16 %v33
  %v263 = vunpack.c.l.b16 %v34
  %v264 = vunpack.c.l.b16 %v35
  %v265 = vunpack.c.l.b16 %v36
  %v266 = vunpack.c.l.b16 %v37
  %v267 = vunpack.c.l.b16 %v38
  %v268 = vunpack.c.l.b16 %v39
  %v269 = vunpack.c.l.b16 %v40
  %v270 = vunpack.c.l.b16 %v41
  %v271 = vunpack.c.l.b16 %v42
  %v272 = vunpack.c.l.b16 %v43
  %v273 = vunpack.c.l.b16 %v44
  %v274 = vunpack.c.l.b16 %v45
  %v275 = vunpack.c.l.b16 %v46
  %v276 = vunpack.c.l.b16 %v47
  %v277 = vunpack.c.l.b16 %v48
  %v278 = vunpack.c.l.b16 %v49
  %v279 = vunpack.c.l.b16 %v50
  %v280 = vunpack.c.l.b16 %v51
  %v281 = vunpack.c.l.b16 %v52
  %v282 = vunpack.c.l.b16 %v53
  %v283 = vunpack.c.l.b16 %v54
  %v284 = vunpack.c.l.b16 %v55
  %v285 = vunpack.c.l.b16 %v56
  %v286 = vunpack.c.l.b16 %v57
  %v287 = vunpack.c.l.b16 %v58
  %v288 = vunpack.c.l.b16 %v59
  %v289 = vunpack.c.l.b16 %v60
  %v290 = vunpack.c.l.b16 %v61
  %v291 = vunpack.c.l.b16 %v62
  %v292 = vunpack.c.l.b16 %v63
  %v293 = vunpack.c.l.b16 %v64
  %v294 = vunpack.c.l.b16 %v65
  %v295 = vunpack.c.l.b16 %v66
  %v296 = vunpack.c.l.b16 %v67
  %v297 = vunpack.c.l.b16 %v68
  %v298 = vunpack.c.l.b16 %v69
  %v299 = vunpack.c.l.b16 %v70
  %v300 = vunpack.c.l.b16 %v71
  %v301 = vunpack.c.l.b16 %v72
  %v302 = vunpack.c.l.b16 %v73
  %v303 = vunpack.c.l.b16 %v74
  %v304 = vunpack.c.l.b16 %v75
  %v305 = vunpack.c.l.b16 %v76
  %v306 = vunpack.c.l.b16 %v77
  %v307 = vunpack.c.l.b16 %v78
  %v308 = vunpack.c.l.b16 %v79
  %v309 = vunpack.c.l.b16 %v80
  %v310 = vunpack.c.l.b16 %v81
  %v311 = vunpack.c.l.b16 %v82
  %v312 = vunpack.c.l.b16 %v83
  %v313 = vunpack.c.l.b16 %v84
  %v314 = vunpack.c.l.b16 %v85
  %v315 = vunpack.c.l.b16 %v86
  %v316 = vunpack.c.l.b16 %v87
  %v317 = vunpack.c.l.b16 %v88
  %v318 = vunpack.c.l.b16 %v89
  %v319 = vunpack.c.l.b16 %v90
  %v320 = vunpack.c.l.b16 %v91
  %v321 = vunpack.c.l.b16 %v92
  %v322 = vunpack.c.l.b16 %v93
  %v323 = vunpack.c.l.b16 %v94
  %v324 = vunpack.c.l.b16 %v95
  %v325 = vunpack.c.l.b16 %v96
  %v326 = vunpack.c.l.b16 %v97
  %v327 = vunpack.c.l.b16 %v98
  %v328 = vunpack.c.l.b16 %v99
  %v329 = vunpack.c.l.b16 %v100
  %v330 = vunpack.c.l.b16 %v101
  %v331 = vunpack.c.l.b16 %v102
  %v332 = vunpack.c.l.b16 %v103
  %v333 = vunpack.c.l.b16 %v104
  %v334 = vunpack.c.l.b16 %v105
  %v335 = vunpack.c.l.b16 %v106
  %v336 = vunpack.c.l.b16 %v107
  %v337 = vunpack.c.l.b16 %v108
  %v338 = vunpack.c.l.b16 %v109
  %v339 = vunpack.c.l.b16 %v110
  %v340 = vunpack.c.l.b16 %v111
  %v341 = vunpack.c.l.b16 %v112
  %v342 = vunpack.c.l.b16 %v113
  %v343 = vunpack.c.l.b16 %v114
  %v344 = vunpack.c.l.b16 %v115
  %v345 = vunpack.c.l.b16 %v116
  %v346 = vpack.c.b16 %v251, %v250
  %v347 = vpack.c.b16 %v253, %v252
  %v348 = vpack.c.b16 %v255, %v254
  %v349 = vpack.c.b16 %v257, %v256
  %v350 = vpack.c.b16 %v259, %v258
  %v351 = vpack.c.b16 %v261, %v260
  %v352 = vpack.c.b16 %v263, %v262
  %v353 = vpack.c.b16 %v265, %v264
  %v354 = vpack.c.b16 %v267, %v266
  %v355 = vpack.c.b16 %v269, %v268
  %v356 = vpack.c.b16 %v271, %v270
  %v357 = vpack.c.b16 %v273, %v272
  %v358 = vpack.c.b16 %v275, %v274
  %v359 = vpack.c.b16 %v277, %v276
  %v360 = vpack.c.b16 %v279, %v278
  %v361 = vpack.c.b16 %v281, %v280
  %v362 = vpack.c.b16 %v283, %v282
  %v363 = vpack.c.b16 %v285, %v284
  %v364 = vpack.c.b16 %v287, %v286
  %v365 = vpack.c.b16 %v289, %v288
  %v366 = vpack.c.b16 %v291, %v290
  %v367 = vpack.c.b16 %v293, %v292
  %v368 = vpack.c.b16 %v295, %v294
  %v369 = vpack.c.b16 %v297, %v296
  %v370 = vpack.c.b16 %v299, %v298
  %v371 = vpack.c.b16 %v301, %v300
  %v372 = vpack.c.b16 %v303, %v302
  %v373 = vpack.c.b16 %v305, %v304
  %v374 = vpack.c.b16 %v307, %v306
  %v375 = vpack.c.b16 %v309, %v308
  %v376 = vpack.c.b16 %v311, %v310
  %v377 = vpack.c.b16 %v313, %v312
  %v378 = vpack.c.b16 %v315, %v314
  %v379 = vpack.c.b16 %v317, %v316
  %v380 = vpack.c.b16 %v319, %v318
  %v381 = vpack.c.b16 %v321, %v320
  %v382 = vpack.c.b16 %v323, %v322
  %v383 = vpack.c.b16 %v325, %v324
  %v384 = vpack.c.b16 %v327, %v326
  %v385 = vpack.c.b16 %v329, %v328
  %v386 = vpack.c.b16 %v331, %v330
  %v387 = vpack.c.b16 %v333, %v332
  %v388 = vpack.c.b16 %v335, %v334
  %v389 = vpack.c.b16 %v337, %v336
  %v390 = vpack.c.b16 %v339, %v338
  %v391 = vpack.c.b16 %v341, %v340
  %v392 = vpack.c.b16 %v343, %v342
  %v393 = vpack.c.b16 %v345, %v344
  %442 = vmatprep.subr.bf16.mxu0 0
  %443 = vmatpush1.bf16.msra.mxu0 %v353
  %444 = vmatprep.subr.bf16.mxu0 0
  %445 = vmatpush1.bf16.msra.mxu0 %v352
  %446 = vmatprep.subr.bf16.mxu0 0
  %447 = vmatpush1.bf16.msra.mxu0 %v351
  %448 = vmatprep.subr.bf16.mxu0 0
  %449 = vmatpush1.bf16.msra.mxu0 %v350
  %450 = vmatprep.subr.bf16.mxu0 0
  %451 = vmatpush1.bf16.msra.mxu0 %v349
  %452 = vmatprep.subr.bf16.mxu0 0
  %453 = vmatpush1.bf16.msra.mxu0 %v348
  %454 = vmatprep.subr.bf16.mxu0 0
  %455 = vmatpush1.bf16.msra.mxu0 %v347
  %456 = vmatprep.subr.bf16.mxu0 0
  %457 = vmatpush1.bf16.msra.mxu0 %v346
  %458 = vmatprep.subr.bf16.mxu0 0
  %459 = vmatpush2.bf16.msra.mxu0 %v361
  %460 = vmatprep.subr.bf16.mxu0 0
  %461 = vmatpush2.bf16.msra.mxu0 %v360
  %462 = vmatprep.subr.bf16.mxu0 0
  %463 = vmatpush2.bf16.msra.mxu0 %v359
  %464 = vmatprep.subr.bf16.mxu0 0
  %465 = vmatpush2.bf16.msra.mxu0 %v358
  %466 = vmatprep.subr.bf16.mxu0 0
  %467 = vmatpush2.bf16.msra.mxu0 %v357
  %468 = vmatprep.subr.bf16.mxu0 0
  %469 = vmatpush2.bf16.msra.mxu0 %v356
  %470 = vmatprep.subr.bf16.mxu0 0
  %471 = vmatpush2.bf16.msra.mxu0 %v355
  %472 = vmatprep.subr.bf16.mxu0 0
  %473 = vmatpush2.bf16.msra.mxu0 %v354
  %474 = vmatprep.mubr.bf16.mxu0 %v143
  %475 = vmatmul.mubr.bf16.gmra.mxu0 %v142
  %v476 = vpop.f32.mrf.mxu0
  %v477 = vadd.f32 %v122, %v476
  %v478 = vpop.f32.mrf.mxu0
  %v479 = vpop.f32.mrf.mxu0
  %v480 = vadd.f32 %v122, %v479
  %v481 = vpop.f32.mrf.mxu0
  %482 = vdwg.mxu0
  %483 = vmatprep.subr.bf16.mxu0 0
  %484 = vmatpush1.bf16.msra.mxu0 %v369
  %485 = vmatprep.subr.bf16.mxu0 0
  %486 = vmatpush1.bf16.msra.mxu0 %v368
  %487 = vmatprep.subr.bf16.mxu0 0
  %488 = vmatpush1.bf16.msra.mxu0 %v367
  %489 = vmatprep.subr.bf16.mxu0 0
  %490 = vmatpush1.bf16.msra.mxu0 %v366
  %491 = vmatprep.subr.bf16.mxu0 0
  %492 = vmatpush1.bf16.msra.mxu0 %v365
  %493 = vmatprep.subr.bf16.mxu0 0
  %494 = vmatpush1.bf16.msra.mxu0 %v364
  %495 = vmatprep.subr.bf16.mxu0 0
  %496 = vmatpush1.bf16.msra.mxu0 %v363
  %497 = vmatprep.subr.bf16.mxu0 0
  %498 = vmatpush1.bf16.msra.mxu0 %v362
  %499 = vmatprep.subr.bf16.mxu0 0
  %500 = vmatpush2.bf16.msra.mxu0 %v377
  %501 = vmatprep.subr.bf16.mxu0 0
  %502 = vmatpush2.bf16.msra.mxu0 %v376
  %503 = vmatprep.subr.bf16.mxu0 0
  %504 = vmatpush2.bf16.msra.mxu0 %v375
  %505 = vmatprep.subr.bf16.mxu0 0
  %506 = vmatpush2.bf16.msra.mxu0 %v374
  %507 = vmatprep.subr.bf16.mxu0 0
  %508 = vmatpush2.bf16.msra.mxu0 %v373
  %509 = vmatprep.subr.bf16.mxu0 0
  %510 = vmatpush2.bf16.msra.mxu0 %v372
  %511 = vmatprep.subr.bf16.mxu0 0
  %512 = vmatpush2.bf16.msra.mxu0 %v371
  %513 = vmatprep.subr.bf16.mxu0 0
  %514 = vmatpush2.bf16.msra.mxu0 %v370
  %515 = vmatprep.mubr.bf16.mxu0 %v145
  %516 = vmatmul.mubr.bf16.gmra.mxu0 %v144
  %v517 = vpop.f32.mrf.mxu0
  %v518 = vadd.f32 %v477, %v517
  %v519 = vpop.f32.mrf.mxu0
  %v520 = vpop.f32.mrf.mxu0
  %v521 = vadd.f32 %v480, %v520
  %v522 = vpop.f32.mrf.mxu0
  %523 = vdwg.mxu0
  %524 = vmatprep.subr.bf16.mxu0 0
  %525 = vmatpush1.bf16.msra.mxu0 %v385
  %526 = vmatprep.subr.bf16.mxu0 0
  %527 = vmatpush1.bf16.msra.mxu0 %v384
  %528 = vmatprep.subr.bf16.mxu0 0
  %529 = vmatpush1.bf16.msra.mxu0 %v383
  %530 = vmatprep.subr.bf16.mxu0 0
  %531 = vmatpush1.bf16.msra.mxu0 %v382
  %532 = vmatprep.subr.bf16.mxu0 0
  %533 = vmatpush1.bf16.msra.mxu0 %v381
  %534 = vmatprep.subr.bf16.mxu0 0
  %535 = vmatpush1.bf16.msra.mxu0 %v380
  %536 = vmatprep.subr.bf16.mxu0 0
  %537 = vmatpush1.bf16.msra.mxu0 %v379
  %538 = vmatprep.subr.bf16.mxu0 0
  %539 = vmatpush1.bf16.msra.mxu0 %v378
  %540 = vmatprep.subr.bf16.mxu0 0
  %541 = vmatpush2.bf16.msra.mxu0 %v393
  %542 = vmatprep.subr.bf16.mxu0 0
  %543 = vmatpush2.bf16.msra.mxu0 %v392
  %544 = vmatprep.subr.bf16.mxu0 0
  %545 = vmatpush2.bf16.msra.mxu0 %v391
  %546 = vmatprep.subr.bf16.mxu0 0
  %547 = vmatpush2.bf16.msra.mxu0 %v390
  %548 = vmatprep.subr.bf16.mxu0 0
  %549 = vmatpush2.bf16.msra.mxu0 %v389
  %550 = vmatprep.subr.bf16.mxu0 0
  %551 = vmatpush2.bf16.msra.mxu0 %v388
  %552 = vmatprep.subr.bf16.mxu0 0
  %553 = vmatpush2.bf16.msra.mxu0 %v387
  %554 = vmatprep.subr.bf16.mxu0 0
  %555 = vmatpush2.bf16.msra.mxu0 %v386
  %556 = vmatprep.mubr.bf16.mxu0 %v147
  %557 = vmatmul.mubr.bf16.gmra.mxu0 %v146
  %v558 = vpop.f32.mrf.mxu0
  %v559 = vadd.f32 %v518, %v558
  %v560 = vpop.f32.mrf.mxu0
  %v561 = vpop.f32.mrf.mxu0
  %v562 = vadd.f32 %v521, %v561
  %v563 = vpop.f32.mrf.mxu0
  %564 = vdwg.mxu0
  %vm565 = vcmask 195584
  %566 = vst.msk [vmem:[%s3] sm:$0xff] %vm565, %v559
  %567 = vst.msk [vmem:[%s3 + $0x8] sm:$0xff] %vm565, %v562
  // Predicated region
  $region14: #{ifnet_forward.70} parent=0 // pred_check
    _
  $region15: #{ifnet_forward.70} parent=0 // pred_check_branch
    %569 = sbr.rel (0) target = $region17
  $region16: #{ifnet_forward.70} parent=0 // pred_region
    _
  $region17: #{ifnet_forward.70} parent=0 // pred_fallthru
    _
  // Predicated region
  $region18: #{ifnet_forward.70} parent=0 // pred_check
    _
  $region19: #{ifnet_forward.70} parent=0 // pred_check_branch
    %571 = sbr.rel (0) target = $region21
  $region20: #{ifnet_forward.70} parent=0 // pred_region
    _
  $region21: #{ifnet_forward.70} parent=0 // pred_fallthru
    _

// kernel: ifnet_forward.59
$region0: #{ifnet_forward.59}
  #allocation0 [shape = 'u32[]', space=smem, size = 0x4, offset = 0x4, fixed_abs, tag = 'smem constant byte address 0x4 - core index']
  #allocation1 [shape = 'u32[144,128]{1,0:T(1,128)}', space=vmem, size = 0x12000, scoped, tag = 'internal scratch']
  %s0 = inlined_call_operand.vmem [shape: bf16[16,1728], index: 0, kind: input, shape index: {}]
  %s1 = inlined_call_operand.vmem [shape: bf16[1728,192], index: 1, kind: input, shape index: {}]
  %s2 = inlined_call_operand.vmem [shape: f32[1,192], index: 2, kind: input, shape index: {}]
  %s3 = inlined_call_operand.vmem [shape: f32[1,192], index: 3, kind: input, shape index: {}]
  %s4 = inlined_call_operand.vmem [shape: bf16[16,192], index: 4, kind: input, shape index: {}]
  %s5 = inlined_call_operand.vmem [shape: bf16[16,192], index: 5, kind: output, shape index: {}]
  %s6 = sld [smem:[#allocation0]]
  $region30: #{ifnet_forward.59} parent=0
    _
  %s8 = ssub.s32 1, %s6
  %s9 = scalar_select 0, %s8, %s6
  // Predicated region
  $region2: #{ifnet_forward.59} parent=0 // pred_check
    _
  $region3: #{ifnet_forward.59} parent=0 // pred_check_branch
    %11 = sbr.rel (0) target = $region5
  $region4: #{ifnet_forward.59} parent=0 // pred_region
    _
  $region5: #{ifnet_forward.59} parent=0 // pred_fallthru
    _
  // Predicated region
  $region6: #{ifnet_forward.59} parent=0 // pred_check
    _
  $region7: #{ifnet_forward.59} parent=0 // pred_check_branch
    %13 = sbr.rel (0) target = $region9
  $region8: #{ifnet_forward.59} parent=0 // pred_region
    _
  $region9: #{ifnet_forward.59} parent=0 // pred_fallthru
    _
  // Predicated region
  $region10: #{ifnet_forward.59} parent=0 // pred_check
    _
  $region11: #{ifnet_forward.59} parent=0 // pred_check_branch
    %15 = sbr.rel (0) target = $region13
  $region12: #{ifnet_forward.59} parent=0 // pred_region
    _
  $region13: #{ifnet_forward.59} parent=0 // pred_fallthru
    _
  // Predicated region
  $region14: #{ifnet_forward.59} parent=0 // pred_check
    _
  $region15: #{ifnet_forward.59} parent=0 // pred_check_branch
    %17 = sbr.rel (0) target = $region17
  $region16: #{ifnet_forward.59} parent=0 // pred_region
    _
  $region17: #{ifnet_forward.59} parent=0 // pred_fallthru
    _
  // Predicated region
  $region18: #{ifnet_forward.59} parent=0 // pred_check
    _
  $region19: #{ifnet_forward.59} parent=0 // pred_check_branch
    %19 = sbr.rel (0) target = $region21
  $region20: #{ifnet_forward.59} parent=0 // pred_region
    _
  $region21: #{ifnet_forward.59} parent=0 // pred_fallthru
    _
  %v21 = vld [vmem:[%s0] sm:$0xff]
  %v22 = vld [vmem:[%s0 + $0x8] sm:$0xff]
  %v23 = vld [vmem:[%s0 + $0x10] sm:$0xff]
  %v24 = vld [vmem:[%s0 + $0x18] sm:$0xff]
  %v25 = vld [vmem:[%s0 + $0x20] sm:$0xff]
  %v26 = vld [vmem:[%s0 + $0x28] sm:$0xff]
  %v27 = vld [vmem:[%s0 + $0x30] sm:$0xff]
  %v28 = vld [vmem:[%s0 + $0x38] sm:$0xff]
  %v29 = vld [vmem:[%s0 + $0x40] sm:$0xff]
  %v30 = vld [vmem:[%s0 + $0x48] sm:$0xff]
  %v31 = vld [vmem:[%s0 + $0x50] sm:$0xff]
  %v32 = vld [vmem:[%s0 + $0x58] sm:$0xff]
  %v33 = vld [vmem:[%s0 + $0x60] sm:$0xff]
  %v34 = vld [vmem:[%s0 + $0x68] sm:$0xff]
  %v35 = vld [vmem:[%s1] sm:$0xff]
  %v36 = vld [vmem:[%s1 + $0x8] sm:$0xff]
  %v37 = vld [vmem:[%s1 + $0x10] sm:$0xff]
  %v38 = vld [vmem:[%s1 + $0x18] sm:$0xff]
  %v39 = vld [vmem:[%s1 + $0x20] sm:$0xff]
  %v40 = vld [vmem:[%s1 + $0x28] sm:$0xff]
  %v41 = vld [vmem:[%s1 + $0x30] sm:$0xff]
  %v42 = vld [vmem:[%s1 + $0x38] sm:$0xff]
  %v43 = vld [vmem:[%s1 + $0x40] sm:$0xff]
  %v44 = vld [vmem:[%s1 + $0x48] sm:$0xff]
  %v45 = vld [vmem:[%s1 + $0x50] sm:$0xff]
  %v46 = vld [vmem:[%s1 + $0x58] sm:$0xff]
  %v47 = vld [vmem:[%s1 + $0x60] sm:$0xff]
  %v48 = vld [vmem:[%s1 + $0x68] sm:$0xff]
  %v49 = vld [vmem:[%s1 + $0x70] sm:$0xff]
  %v50 = vld [vmem:[%s1 + $0x78] sm:$0xff]
  %v51 = vld [vmem:[%s1 + $0x80] sm:$0xff]
  %v52 = vld [vmem:[%s1 + $0x88] sm:$0xff]
  %v53 = vld [vmem:[%s1 + $0x90] sm:$0xff]
  %v54 = vld [vmem:[%s1 + $0x98] sm:$0xff]
  %v55 = vld [vmem:[%s1 + $0xa0] sm:$0xff]
  %v56 = vld [vmem:[%s1 + $0xa8] sm:$0xff]
  %v57 = vld [vmem:[%s1 + $0xb0] sm:$0xff]
  %v58 = vld [vmem:[%s1 + $0xb8] sm:$0xff]
  %v59 = vld [vmem:[%s1 + $0xc0] sm:$0xff]
  %v60 = vld [vmem:[%s1 + $0xc8] sm:$0xff]
  %v61 = vld [vmem:[%s1 + $0xd0] sm:$0xff]
  %v62 = vld [vmem:[%s1 + $0xd8] sm:$0xff]
  %v63 = vld [vmem:[%s1 + $0xe0] sm:$0xff]
  %v64 = vld [vmem:[%s1 + $0xe8] sm:$0xff]
  %v65 = vld [vmem:[%s1 + $0xf0] sm:$0xff]
  %v66 = vld [vmem:[%s1 + $0xf8] sm:$0xff]
  %v67 = vld [vmem:[%s1 + $0x100] sm:$0xff]
  %v68 = vld [vmem:[%s1 + $0x108] sm:$0xff]
  %v69 = vld [vmem:[%s1 + $0x110] sm:$0xff]
  %v70 = vld [vmem:[%s1 + $0x118] sm:$0xff]
  %v71 = vld [vmem:[%s1 + $0x120] sm:$0xff]
  %v72 = vld [vmem:[%s1 + $0x128] sm:$0xff]
  %v73 = vld [vmem:[%s1 + $0x130] sm:$0xff]
  %v74 = vld [vmem:[%s1 + $0x138] sm:$0xff]
  %v75 = vld [vmem:[%s1 + $0x140] sm:$0xff]
  %v76 = vld [vmem:[%s1 + $0x148] sm:$0xff]
  %v77 = vld [vmem:[%s1 + $0x150] sm:$0xff]
  %v78 = vld [vmem:[%s1 + $0x158] sm:$0xff]
  %v79 = vld [vmem:[%s1 + $0x160] sm:$0xff]
  %v80 = vld [vmem:[%s1 + $0x168] sm:$0xff]
  %v81 = vld [vmem:[%s1 + $0x170] sm:$0xff]
  %v82 = vld [vmem:[%s1 + $0x178] sm:$0xff]
  %v83 = vld [vmem:[%s1 + $0x180] sm:$0xff]
  %v84 = vld [vmem:[%s1 + $0x188] sm:$0xff]
  %v85 = vld [vmem:[%s1 + $0x190] sm:$0xff]
  %v86 = vld [vmem:[%s1 + $0x198] sm:$0xff]
  %v87 = vld [vmem:[%s1 + $0x1a0] sm:$0xff]
  %v88 = vld [vmem:[%s1 + $0x1a8] sm:$0xff]
  %v89 = vld [vmem:[%s1 + $0x1b0] sm:$0xff]
  %v90 = vld [vmem:[%s1 + $0x1b8] sm:$0xff]
  %v91 = vld [vmem:[%s1 + $0x1c0] sm:$0xff]
  %v92 = vld [vmem:[%s1 + $0x1c8] sm:$0xff]
  %v93 = vld [vmem:[%s1 + $0x1d0] sm:$0xff]
  %v94 = vld [vmem:[%s1 + $0x1d8] sm:$0xff]
  %v95 = vld [vmem:[%s1 + $0x1e0] sm:$0xff]
  %v96 = vld [vmem:[%s1 + $0x1e8] sm:$0xff]
  %v97 = vld [vmem:[%s1 + $0x1f0] sm:$0xff]
  %v98 = vld [vmem:[%s1 + $0x1f8] sm:$0xff]
  %v99 = vld [vmem:[%s1 + $0x200] sm:$0xff]
  %v100 = vld [vmem:[%s1 + $0x208] sm:$0xff]
  %v101 = vld [vmem:[%s1 + $0x210] sm:$0xff]
  %v102 = vld [vmem:[%s1 + $0x218] sm:$0xff]
  %v103 = vld [vmem:[%s1 + $0x220] sm:$0xff]
  %v104 = vld [vmem:[%s1 + $0x228] sm:$0xff]
  %v105 = vld [vmem:[%s1 + $0x230] sm:$0xff]
  %v106 = vld [vmem:[%s1 + $0x238] sm:$0xff]
  %v107 = vld [vmem:[%s1 + $0x240] sm:$0xff]
  %v108 = vld [vmem:[%s1 + $0x248] sm:$0xff]
  %v109 = vld [vmem:[%s1 + $0x250] sm:$0xff]
  %v110 = vld [vmem:[%s1 + $0x258] sm:$0xff]
  %v111 = vld [vmem:[%s1 + $0x260] sm:$0xff]
  %v112 = vld [vmem:[%s1 + $0x268] sm:$0xff]
  %v113 = vld [vmem:[%s1 + $0x270] sm:$0xff]
  %v114 = vld [vmem:[%s1 + $0x278] sm:$0xff]
  %v115 = vld [vmem:[%s1 + $0x280] sm:$0xff]
  %v116 = vld [vmem:[%s1 + $0x288] sm:$0xff]
  %v117 = vld [vmem:[%s1 + $0x290] sm:$0xff]
  %v118 = vld [vmem:[%s1 + $0x298] sm:$0xff]
  %v119 = vld [vmem:[%s1 + $0x2a0] sm:$0xff]
  %v120 = vld [vmem:[%s1 + $0x2a8] sm:$0xff]
  %v121 = vld [vmem:[%s1 + $0x2b0] sm:$0xff]
  %v122 = vld [vmem:[%s1 + $0x2b8] sm:$0xff]
  %v123 = vld [vmem:[%s1 + $0x2c0] sm:$0xff]
  %v124 = vld [vmem:[%s1 + $0x2c8] sm:$0xff]
  %v125 = vld [vmem:[%s1 + $0x2d0] sm:$0xff]
  %v126 = vld [vmem:[%s1 + $0x2d8] sm:$0xff]
  %v127 = vld [vmem:[%s1 + $0x2e0] sm:$0xff]
  %v128 = vld [vmem:[%s1 + $0x2e8] sm:$0xff]
  %v129 = vld [vmem:[%s1 + $0x2f0] sm:$0xff]
  %v130 = vld [vmem:[%s1 + $0x2f8] sm:$0xff]
  %v131 = vld [vmem:[%s1 + $0x300] sm:$0xff]
  %v132 = vld [vmem:[%s1 + $0x308] sm:$0xff]
  %v133 = vld [vmem:[%s1 + $0x310] sm:$0xff]
  %v134 = vld [vmem:[%s1 + $0x318] sm:$0xff]
  %v135 = vld [vmem:[%s1 + $0x320] sm:$0xff]
  %v136 = vld [vmem:[%s1 + $0x328] sm:$0xff]
  %v137 = vld [vmem:[%s1 + $0x330] sm:$0xff]
  %v138 = vld [vmem:[%s1 + $0x338] sm:$0xff]
  %v139 = vld [vmem:[%s1 + $0x340] sm:$0xff]
  %v140 = vld [vmem:[%s1 + $0x348] sm:$0xff]
  %v141 = vld [vmem:[%s1 + $0x350] sm:$0xff]
  %v142 = vld [vmem:[%s1 + $0x358] sm:$0xff]
  %v143 = vld [vmem:[%s1 + $0x360] sm:$0xff]
  %v144 = vld [vmem:[%s1 + $0x368] sm:$0xff]
  %v145 = vld [vmem:[%s1 + $0x370] sm:$0xff]
  %v146 = vld [vmem:[%s1 + $0x378] sm:$0xff]
  %v147 = vld [vmem:[%s1 + $0x380] sm:$0xff]
  %v148 = vld [vmem:[%s1 + $0x388] sm:$0xff]
  %v149 = vld [vmem:[%s1 + $0x390] sm:$0xff]
  %v150 = vld [vmem:[%s1 + $0x398] sm:$0xff]
  %v151 = vld [vmem:[%s1 + $0x3a0] sm:$0xff]
  %v152 = vld [vmem:[%s1 + $0x3a8] sm:$0xff]
  %v153 = vld [vmem:[%s1 + $0x3b0] sm:$0xff]
  %v154 = vld [vmem:[%s1 + $0x3b8] sm:$0xff]
  %v155 = vld [vmem:[%s1 + $0x3c0] sm:$0xff]
  %v156 = vld [vmem:[%s1 + $0x3c8] sm:$0xff]
  %v157 = vld [vmem:[%s1 + $0x3d0] sm:$0xff]
  %v158 = vld [vmem:[%s1 + $0x3d8] sm:$0xff]
  %v159 = vld [vmem:[%s1 + $0x3e0] sm:$0xff]
  %v160 = vld [vmem:[%s1 + $0x3e8] sm:$0xff]
  %v161 = vld [vmem:[%s1 + $0x3f0] sm:$0xff]
  %v162 = vld [vmem:[%s1 + $0x3f8] sm:$0xff]
  %v163 = vld [vmem:[%s1 + $0x400] sm:$0xff]
  %v164 = vld [vmem:[%s1 + $0x408] sm:$0xff]
  %v165 = vld [vmem:[%s1 + $0x410] sm:$0xff]
  %v166 = vld [vmem:[%s1 + $0x418] sm:$0xff]
  %v167 = vld [vmem:[%s1 + $0x420] sm:$0xff]
  %v168 = vld [vmem:[%s1 + $0x428] sm:$0xff]
  %v169 = vld [vmem:[%s1 + $0x430] sm:$0xff]
  %v170 = vld [vmem:[%s1 + $0x438] sm:$0xff]
  %v171 = vld [vmem:[%s1 + $0x440] sm:$0xff]
  %v172 = vld [vmem:[%s1 + $0x448] sm:$0xff]
  %v173 = vld [vmem:[%s1 + $0x450] sm:$0xff]
  %v174 = vld [vmem:[%s1 + $0x458] sm:$0xff]
  %v175 = vld [vmem:[%s1 + $0x460] sm:$0xff]
  %v176 = vld [vmem:[%s1 + $0x468] sm:$0xff]
  %v177 = vld [vmem:[%s1 + $0x470] sm:$0xff]
  %v178 = vld [vmem:[%s1 + $0x478] sm:$0xff]
  %v179 = vld [vmem:[%s1 + $0x480] sm:$0xff]
  %v180 = vld [vmem:[%s1 + $0x488] sm:$0xff]
  %v181 = vld [vmem:[%s1 + $0x490] sm:$0xff]
  %v182 = vld [vmem:[%s1 + $0x498] sm:$0xff]
  %v183 = vld [vmem:[%s1 + $0x4a0] sm:$0xff]
  %v184 = vld [vmem:[%s1 + $0x4a8] sm:$0xff]
  %v185 = vld [vmem:[%s1 + $0x4b0] sm:$0xff]
  %v186 = vld [vmem:[%s1 + $0x4b8] sm:$0xff]
  %v187 = vld [vmem:[%s1 + $0x4c0] sm:$0xff]
  %v188 = vld [vmem:[%s1 + $0x4c8] sm:$0xff]
  %v189 = vld [vmem:[%s1 + $0x4d0] sm:$0xff]
  %v190 = vld [vmem:[%s1 + $0x4d8] sm:$0xff]
  %v191 = vld [vmem:[%s1 + $0x4e0] sm:$0xff]
  %v192 = vld [vmem:[%s1 + $0x4e8] sm:$0xff]
  %v193 = vld [vmem:[%s1 + $0x4f0] sm:$0xff]
  %v194 = vld [vmem:[%s1 + $0x4f8] sm:$0xff]
  %v195 = vld [vmem:[%s1 + $0x500] sm:$0xff]
  %v196 = vld [vmem:[%s1 + $0x508] sm:$0xff]
  %v197 = vld [vmem:[%s1 + $0x510] sm:$0xff]
  %v198 = vld [vmem:[%s1 + $0x518] sm:$0xff]
  %v199 = vld [vmem:[%s1 + $0x520] sm:$0xff]
  %v200 = vld [vmem:[%s1 + $0x528] sm:$0xff]
  %v201 = vld [vmem:[%s1 + $0x530] sm:$0xff]
  %v202 = vld [vmem:[%s1 + $0x538] sm:$0xff]
  %v203 = vld [vmem:[%s1 + $0x540] sm:$0xff]
  %v204 = vld [vmem:[%s1 + $0x548] sm:$0xff]
  %v205 = vld [vmem:[%s1 + $0x550] sm:$0xff]
  %v206 = vld [vmem:[%s1 + $0x558] sm:$0xff]
  %v207 = vld [vmem:[%s1 + $0x560] sm:$0xff]
  %v208 = vld [vmem:[%s1 + $0x568] sm:$0xff]
  %v209 = vld [vmem:[%s1 + $0x570] sm:$0xff]
  %v210 = vld [vmem:[%s1 + $0x578] sm:$0xff]
  %v211 = vld [vmem:[%s1 + $0x580] sm:$0xff]
  %v212 = vld [vmem:[%s1 + $0x588] sm:$0xff]
  %v213 = vld [vmem:[%s1 + $0x590] sm:$0xff]
  %v214 = vld [vmem:[%s1 + $0x598] sm:$0xff]
  %v215 = vld [vmem:[%s1 + $0x5a0] sm:$0xff]
  %v216 = vld [vmem:[%s1 + $0x5a8] sm:$0xff]
  %v217 = vld [vmem:[%s1 + $0x5b0] sm:$0xff]
  %v218 = vld [vmem:[%s1 + $0x5b8] sm:$0xff]
  %v219 = vld [vmem:[%s1 + $0x5c0] sm:$0xff]
  %v220 = vld [vmem:[%s1 + $0x5c8] sm:$0xff]
  %v221 = vld [vmem:[%s1 + $0x5d0] sm:$0xff]
  %v222 = vld [vmem:[%s1 + $0x5d8] sm:$0xff]
  %v223 = vld [vmem:[%s1 + $0x5e0] sm:$0xff]
  %v224 = vld [vmem:[%s1 + $0x5e8] sm:$0xff]
  %v225 = vld [vmem:[%s1 + $0x5f0] sm:$0xff]
  %v226 = vld [vmem:[%s1 + $0x5f8] sm:$0xff]
  %v227 = vld [vmem:[%s1 + $0x600] sm:$0xff]
  %v228 = vld [vmem:[%s1 + $0x608] sm:$0xff]
  %v229 = vld [vmem:[%s1 + $0x610] sm:$0xff]
  %v230 = vld [vmem:[%s1 + $0x618] sm:$0xff]
  %v231 = vld [vmem:[%s1 + $0x620] sm:$0xff]
  %v232 = vld [vmem:[%s1 + $0x628] sm:$0xff]
  %v233 = vld [vmem:[%s1 + $0x630] sm:$0xff]
  %v234 = vld [vmem:[%s1 + $0x638] sm:$0xff]
  %v235 = vld [vmem:[%s1 + $0x640] sm:$0xff]
  %v236 = vld [vmem:[%s1 + $0x648] sm:$0xff]
  %v237 = vld [vmem:[%s1 + $0x650] sm:$0xff]
  %v238 = vld [vmem:[%s1 + $0x658] sm:$0xff]
  %v239 = vld [vmem:[%s1 + $0x660] sm:$0xff]
  %v240 = vld [vmem:[%s1 + $0x668] sm:$0xff]
  %v241 = vld [vmem:[%s1 + $0x670] sm:$0xff]
  %v242 = vld [vmem:[%s1 + $0x678] sm:$0xff]
  %v243 = vld [vmem:[%s1 + $0x680] sm:$0xff]
  %v244 = vld [vmem:[%s1 + $0x688] sm:$0xff]
  %v245 = vld [vmem:[%s1 + $0x690] sm:$0xff]
  %v246 = vld [vmem:[%s1 + $0x698] sm:$0xff]
  %v247 = vld [vmem:[%s1 + $0x6a0] sm:$0xff]
  %v248 = vld [vmem:[%s1 + $0x6a8] sm:$0xff]
  %v249 = vld [vmem:[%s1 + $0x6b0] sm:$0xff]
  %v250 = vld [vmem:[%s1 + $0x6b8] sm:$0xff]
  %v251 = vld [vmem:[%s2] sm:$0x3]
  %v253 = vlaneseq
  %v254 = vshrl.u32 %v253, 7
  %v255 = vsub.s32 0, %v254
  %v256 = vrot.slane %v251, %v255
  %v257 = vlaneseq
  %v258 = vshrl.u32 %v257, 7
  %v259 = vsub.s32 1, %v258
  %v260 = vrot.slane %v251, %v259
  %v277 = vunpack.c.l.b16 %v21
  %v278 = vunpack.c.h.b16 %v21
  %v279 = vunpack.c.l.b16 %v22
  %v280 = vunpack.c.h.b16 %v22
  %v281 = vunpack.c.l.b16 %v23
  %v282 = vunpack.c.h.b16 %v23
  %v283 = vunpack.c.l.b16 %v24
  %v284 = vunpack.c.h.b16 %v24
  %v285 = vunpack.c.l.b16 %v25
  %v286 = vunpack.c.h.b16 %v25
  %v287 = vunpack.c.l.b16 %v26
  %v288 = vunpack.c.h.b16 %v26
  %v289 = vunpack.c.l.b16 %v27
  %v290 = vunpack.c.h.b16 %v27
  %v291 = vunpack.c.l.b16 %v28
  %v292 = vunpack.c.h.b16 %v28
  %v293 = vunpack.c.l.b16 %v29
  %v294 = vunpack.c.h.b16 %v29
  %v295 = vunpack.c.l.b16 %v30
  %v296 = vunpack.c.h.b16 %v30
  %v297 = vunpack.c.l.b16 %v31
  %v298 = vunpack.c.h.b16 %v31
  %v299 = vunpack.c.l.b16 %v32
  %v300 = vunpack.c.h.b16 %v32
  %v301 = vunpack.c.l.b16 %v33
  %v302 = vunpack.c.h.b16 %v33
  %v303 = vunpack.c.l.b16 %v34
  %v304 = vunpack.c.h.b16 %v34
  %v305 = vpack.c.b16 %v291, %v277
  %v306 = vpack.c.b16 %v292, %v278
  %v307 = vpack.c.b16 %v293, %v279
  %v308 = vpack.c.b16 %v294, %v280
  %v309 = vpack.c.b16 %v295, %v281
  %v310 = vpack.c.b16 %v296, %v282
  %v311 = vpack.c.b16 %v297, %v283
  %v312 = vpack.c.b16 %v298, %v284
  %v313 = vpack.c.b16 %v299, %v285
  %v314 = vpack.c.b16 %v300, %v286
  %v315 = vpack.c.b16 %v301, %v287
  %v316 = vpack.c.b16 %v302, %v288
  %v317 = vpack.c.b16 %v303, %v289
  %v318 = vpack.c.b16 %v304, %v290
  %v548 = vunpack.c.l.b16 %v35
  %v549 = vunpack.c.h.b16 %v35
  %v550 = vunpack.c.l.b16 %v36
  %v551 = vunpack.c.h.b16 %v36
  %v552 = vunpack.c.l.b16 %v37
  %v553 = vunpack.c.h.b16 %v37
  %v554 = vunpack.c.l.b16 %v38
  %v555 = vunpack.c.h.b16 %v38
  %v556 = vunpack.c.l.b16 %v39
  %v557 = vunpack.c.h.b16 %v39
  %v558 = vunpack.c.l.b16 %v40
  %v559 = vunpack.c.h.b16 %v40
  %v560 = vunpack.c.l.b16 %v41
  %v561 = vunpack.c.h.b16 %v41
  %v562 = vunpack.c.l.b16 %v42
  %v563 = vunpack.c.h.b16 %v42
  %v564 = vunpack.c.l.b16 %v43
  %v565 = vunpack.c.h.b16 %v43
  %v566 = vunpack.c.l.b16 %v44
  %v567 = vunpack.c.h.b16 %v44
  %v568 = vunpack.c.l.b16 %v45
  %v569 = vunpack.c.h.b16 %v45
  %v570 = vunpack.c.l.b16 %v46
  %v571 = vunpack.c.h.b16 %v46
  %v572 = vunpack.c.l.b16 %v47
  %v573 = vunpack.c.h.b16 %v47
  %v574 = vunpack.c.l.b16 %v48
  %v575 = vunpack.c.h.b16 %v48
  %v576 = vunpack.c.l.b16 %v49
  %v577 = vunpack.c.h.b16 %v49
  %v578 = vunpack.c.l.b16 %v50
  %v579 = vunpack.c.h.b16 %v50
  %v580 = vunpack.c.l.b16 %v51
  %v581 = vunpack.c.h.b16 %v51
  %v582 = vunpack.c.l.b16 %v52
  %v583 = vunpack.c.h.b16 %v52
  %v584 = vunpack.c.l.b16 %v53
  %v585 = vunpack.c.h.b16 %v53
  %v586 = vunpack.c.l.b16 %v54
  %v587 = vunpack.c.h.b16 %v54
  %v588 = vunpack.c.l.b16 %v55
  %v589 = vunpack.c.h.b16 %v55
  %v590 = vunpack.c.l.b16 %v56
  %v591 = vunpack.c.h.b16 %v56
  %v592 = vunpack.c.l.b16 %v57
  %v593 = vunpack.c.h.b16 %v57
  %v594 = vunpack.c.l.b16 %v58
  %v595 = vunpack.c.h.b16 %v58
  %v596 = vunpack.c.l.b16 %v59
  %v597 = vunpack.c.h.b16 %v59
  %v598 = vunpack.c.l.b16 %v60
  %v599 = vunpack.c.h.b16 %v60
  %v600 = vunpack.c.l.b16 %v61
  %v601 = vunpack.c.h.b16 %v61
  %v602 = vunpack.c.l.b16 %v62
  %v603 = vunpack.c.h.b16 %v62
  %v604 = vunpack.c.l.b16 %v63
  %v605 = vunpack.c.h.b16 %v63
  %v606 = vunpack.c.l.b16 %v64
  %v607 = vunpack.c.h.b16 %v64
  %v608 = vunpack.c.l.b16 %v65
  %v609 = vunpack.c.h.b16 %v65
  %v610 = vunpack.c.l.b16 %v66
  %v611 = vunpack.c.h.b16 %v66
  %v612 = vunpack.c.l.b16 %v67
  %v613 = vunpack.c.h.b16 %v67
  %v614 = vunpack.c.l.b16 %v68
  %v615 = vunpack.c.h.b16 %v68
  %v616 = vunpack.c.l.b16 %v69
  %v617 = vunpack.c.h.b16 %v69
  %v618 = vunpack.c.l.b16 %v70
  %v619 = vunpack.c.h.b16 %v70
  %v620 = vunpack.c.l.b16 %v71
  %v621 = vunpack.c.h.b16 %v71
  %v622 = vunpack.c.l.b16 %v72
  %v623 = vunpack.c.h.b16 %v72
  %v624 = vunpack.c.l.b16 %v73
  %v625 = vunpack.c.h.b16 %v73
  %v626 = vunpack.c.l.b16 %v74
  %v627 = vunpack.c.h.b16 %v74
  %v628 = vunpack.c.l.b16 %v75
  %v629 = vunpack.c.h.b16 %v75
  %v630 = vunpack.c.l.b16 %v76
  %v631 = vunpack.c.h.b16 %v76
  %v632 = vunpack.c.l.b16 %v77
  %v633 = vunpack.c.h.b16 %v77
  %v634 = vunpack.c.l.b16 %v78
  %v635 = vunpack.c.h.b16 %v78
  %v636 = vunpack.c.l.b16 %v79
  %v637 = vunpack.c.h.b16 %v79
  %v638 = vunpack.c.l.b16 %v80
  %v639 = vunpack.c.h.b16 %v80
  %v640 = vunpack.c.l.b16 %v81
  %v641 = vunpack.c.h.b16 %v81
  %v642 = vunpack.c.l.b16 %v82
  %v643 = vunpack.c.h.b16 %v82
  %v644 = vunpack.c.l.b16 %v83
  %v645 = vunpack.c.h.b16 %v83
  %v646 = vunpack.c.l.b16 %v84
  %v647 = vunpack.c.h.b16 %v84
  %v648 = vunpack.c.l.b16 %v85
  %v649 = vunpack.c.h.b16 %v85
  %v650 = vunpack.c.l.b16 %v86
  %v651 = vunpack.c.h.b16 %v86
  %v652 = vunpack.c.l.b16 %v87
  %v653 = vunpack.c.h.b16 %v87
  %v654 = vunpack.c.l.b16 %v88
  %v655 = vunpack.c.h.b16 %v88
  %v656 = vunpack.c.l.b16 %v89
  %v657 = vunpack.c.h.b16 %v89
  %v658 = vunpack.c.l.b16 %v90
  %v659 = vunpack.c.h.b16 %v90
  %v660 = vunpack.c.l.b16 %v91
  %v661 = vunpack.c.h.b16 %v91
  %v662 = vunpack.c.l.b16 %v92
  %v663 = vunpack.c.h.b16 %v92
  %v664 = vunpack.c.l.b16 %v93
  %v665 = vunpack.c.h.b16 %v93
  %v666 = vunpack.c.l.b16 %v94
  %v667 = vunpack.c.h.b16 %v94
  %v668 = vunpack.c.l.b16 %v95
  %v669 = vunpack.c.h.b16 %v95
  %v670 = vunpack.c.l.b16 %v96
  %v671 = vunpack.c.h.b16 %v96
  %v672 = vunpack.c.l.b16 %v97
  %v673 = vunpack.c.h.b16 %v97
  %v674 = vunpack.c.l.b16 %v98
  %v675 = vunpack.c.h.b16 %v98
  %v676 = vunpack.c.l.b16 %v99
  %v677 = vunpack.c.h.b16 %v99
  %v678 = vunpack.c.l.b16 %v100
  %v679 = vunpack.c.h.b16 %v100
  %v680 = vunpack.c.l.b16 %v101
  %v681 = vunpack.c.h.b16 %v101
  %v682 = vunpack.c.l.b16 %v102
  %v683 = vunpack.c.h.b16 %v102
  %v684 = vunpack.c.l.b16 %v103
  %v685 = vunpack.c.h.b16 %v103
  %v686 = vunpack.c.l.b16 %v104
  %v687 = vunpack.c.h.b16 %v104
  %v688 = vunpack.c.l.b16 %v105
  %v689 = vunpack.c.h.b16 %v105
  %v690 = vunpack.c.l.b16 %v106
  %v691 = vunpack.c.h.b16 %v106
  %v692 = vunpack.c.l.b16 %v107
  %v693 = vunpack.c.h.b16 %v107
  %v694 = vunpack.c.l.b16 %v108
  %v695 = vunpack.c.h.b16 %v108
  %v696 = vunpack.c.l.b16 %v109
  %v697 = vunpack.c.h.b16 %v109
  %v698 = vunpack.c.l.b16 %v110
  %v699 = vunpack.c.h.b16 %v110
  %v700 = vunpack.c.l.b16 %v111
  %v701 = vunpack.c.h.b16 %v111
  %v702 = vunpack.c.l.b16 %v112
  %v703 = vunpack.c.h.b16 %v112
  %v704 = vunpack.c.l.b16 %v113
  %v705 = vunpack.c.h.b16 %v113
  %v706 = vunpack.c.l.b16 %v114
  %v707 = vunpack.c.h.b16 %v114
  %v708 = vunpack.c.l.b16 %v115
  %v709 = vunpack.c.h.b16 %v115
  %v710 = vunpack.c.l.b16 %v116
  %v711 = vunpack.c.h.b16 %v116
  %v712 = vunpack.c.l.b16 %v117
  %v713 = vunpack.c.h.b16 %v117
  %v714 = vunpack.c.l.b16 %v118
  %v715 = vunpack.c.h.b16 %v118
  %v716 = vunpack.c.l.b16 %v119
  %v717 = vunpack.c.h.b16 %v119
  %v718 = vunpack.c.l.b16 %v120
  %v719 = vunpack.c.h.b16 %v120
  %v720 = vunpack.c.l.b16 %v121
  %v721 = vunpack.c.h.b16 %v121
  %v722 = vunpack.c.l.b16 %v122
  %v723 = vunpack.c.h.b16 %v122
  %v724 = vunpack.c.l.b16 %v123
  %v725 = vunpack.c.h.b16 %v123
  %v726 = vunpack.c.l.b16 %v124
  %v727 = vunpack.c.h.b16 %v124
  %v728 = vunpack.c.l.b16 %v125
  %v729 = vunpack.c.h.b16 %v125
  %v730 = vunpack.c.l.b16 %v126
  %v731 = vunpack.c.h.b16 %v126
  %v732 = vunpack.c.l.b16 %v127
  %v733 = vunpack.c.h.b16 %v127
  %v734 = vunpack.c.l.b16 %v128
  %v735 = vunpack.c.h.b16 %v128
  %v736 = vunpack.c.l.b16 %v129
  %v737 = vunpack.c.h.b16 %v129
  %v738 = vunpack.c.l.b16 %v130
  %v739 = vunpack.c.h.b16 %v130
  %v740 = vunpack.c.l.b16 %v131
  %v741 = vunpack.c.h.b16 %v131
  %v742 = vunpack.c.l.b16 %v132
  %v743 = vunpack.c.h.b16 %v132
  %v744 = vunpack.c.l.b16 %v133
  %v745 = vunpack.c.h.b16 %v133
  %v746 = vunpack.c.l.b16 %v134
  %v747 = vunpack.c.h.b16 %v134
  %v748 = vunpack.c.l.b16 %v135
  %v749 = vunpack.c.h.b16 %v135
  %v750 = vunpack.c.l.b16 %v136
  %v751 = vunpack.c.h.b16 %v136
  %v752 = vunpack.c.l.b16 %v137
  %v753 = vunpack.c.h.b16 %v137
  %v754 = vunpack.c.l.b16 %v138
  %v755 = vunpack.c.h.b16 %v138
  %v756 = vunpack.c.l.b16 %v139
  %v757 = vunpack.c.h.b16 %v139
  %v758 = vunpack.c.l.b16 %v140
  %v759 = vunpack.c.h.b16 %v140
  %v760 = vunpack.c.l.b16 %v141
  %v761 = vunpack.c.h.b16 %v141
  %v762 = vunpack.c.l.b16 %v142
  %v763 = vunpack.c.h.b16 %v142
  %v764 = vunpack.c.l.b16 %v143
  %v765 = vunpack.c.h.b16 %v143
  %v766 = vunpack.c.l.b16 %v144
  %v767 = vunpack.c.h.b16 %v144
  %v768 = vunpack.c.l.b16 %v145
  %v769 = vunpack.c.h.b16 %v145
  %v770 = vunpack.c.l.b16 %v146
  %v771 = vunpack.c.h.b16 %v146
  %v772 = vunpack.c.l.b16 %v147
  %v773 = vunpack.c.h.b16 %v147
  %v774 = vunpack.c.l.b16 %v148
  %v775 = vunpack.c.h.b16 %v148
  %v776 = vunpack.c.l.b16 %v149
  %v777 = vunpack.c.h.b16 %v149
  %v778 = vunpack.c.l.b16 %v150
  %v779 = vunpack.c.h.b16 %v150
  %v780 = vunpack.c.l.b16 %v151
  %v781 = vunpack.c.h.b16 %v151
  %v782 = vunpack.c.l.b16 %v152
  %v783 = vunpack.c.h.b16 %v152
  %v784 = vunpack.c.l.b16 %v153
  %v785 = vunpack.c.h.b16 %v153
  %v786 = vunpack.c.l.b16 %v154
  %v787 = vunpack.c.h.b16 %v154
  %v788 = vunpack.c.l.b16 %v155
  %v789 = vunpack.c.h.b16 %v155
  %v790 = vunpack.c.l.b16 %v156
  %v791 = vunpack.c.h.b16 %v156
  %v792 = vunpack.c.l.b16 %v157
  %v793 = vunpack.c.h.b16 %v157
  %v794 = vunpack.c.l.b16 %v158
  %v795 = vunpack.c.h.b16 %v158
  %v796 = vunpack.c.l.b16 %v159
  %v797 = vunpack.c.h.b16 %v159
  %v798 = vunpack.c.l.b16 %v160
  %v799 = vunpack.c.h.b16 %v160
  %v800 = vunpack.c.l.b16 %v161
  %v801 = vunpack.c.h.b16 %v161
  %v802 = vunpack.c.l.b16 %v162
  %v803 = vunpack.c.h.b16 %v162
  %v804 = vunpack.c.l.b16 %v163
  %v805 = vunpack.c.h.b16 %v163
  %v806 = vunpack.c.l.b16 %v164
  %v807 = vunpack.c.h.b16 %v164
  %v808 = vunpack.c.l.b16 %v165
  %v809 = vunpack.c.h.b16 %v165
  %v810 = vunpack.c.l.b16 %v166
  %v811 = vunpack.c.h.b16 %v166
  %v812 = vunpack.c.l.b16 %v167
  %v813 = vunpack.c.h.b16 %v167
  %v814 = vunpack.c.l.b16 %v168
  %v815 = vunpack.c.h.b16 %v168
  %v816 = vunpack.c.l.b16 %v169
  %v817 = vunpack.c.h.b16 %v169
  %v818 = vunpack.c.l.b16 %v170
  %v819 = vunpack.c.h.b16 %v170
  %v820 = vunpack.c.l.b16 %v171
  %v821 = vunpack.c.h.b16 %v171
  %v822 = vunpack.c.l.b16 %v172
  %v823 = vunpack.c.h.b16 %v172
  %v824 = vunpack.c.l.b16 %v173
  %v825 = vunpack.c.h.b16 %v173
  %v826 = vunpack.c.l.b16 %v174
  %v827 = vunpack.c.h.b16 %v174
  %v828 = vunpack.c.l.b16 %v175
  %v829 = vunpack.c.h.b16 %v175
  %v830 = vunpack.c.l.b16 %v176
  %v831 = vunpack.c.h.b16 %v176
  %v832 = vunpack.c.l.b16 %v177
  %v833 = vunpack.c.h.b16 %v177
  %v834 = vunpack.c.l.b16 %v178
  %v835 = vunpack.c.h.b16 %v178
  %v836 = vunpack.c.l.b16 %v179
  %v837 = vunpack.c.h.b16 %v179
  %v838 = vunpack.c.l.b16 %v180
  %v839 = vunpack.c.h.b16 %v180
  %v840 = vunpack.c.l.b16 %v181
  %v841 = vunpack.c.h.b16 %v181
  %v842 = vunpack.c.l.b16 %v182
  %v843 = vunpack.c.h.b16 %v182
  %v844 = vunpack.c.l.b16 %v183
  %v845 = vunpack.c.h.b16 %v183
  %v846 = vunpack.c.l.b16 %v184
  %v847 = vunpack.c.h.b16 %v184
  %v848 = vunpack.c.l.b16 %v185
  %v849 = vunpack.c.h.b16 %v185
  %v850 = vunpack.c.l.b16 %v186
  %v851 = vunpack.c.h.b16 %v186
  %v852 = vunpack.c.l.b16 %v187
  %v853 = vunpack.c.h.b16 %v187
  %v854 = vunpack.c.l.b16 %v188
  %v855 = vunpack.c.h.b16 %v188
  %v856 = vunpack.c.l.b16 %v189
  %v857 = vunpack.c.h.b16 %v189
  %v858 = vunpack.c.l.b16 %v190
  %v859 = vunpack.c.h.b16 %v190
  %v860 = vunpack.c.l.b16 %v191
  %v861 = vunpack.c.h.b16 %v191
  %v862 = vunpack.c.l.b16 %v192
  %v863 = vunpack.c.h.b16 %v192
  %v864 = vunpack.c.l.b16 %v193
  %v865 = vunpack.c.h.b16 %v193
  %v866 = vunpack.c.l.b16 %v194
  %v867 = vunpack.c.h.b16 %v194
  %v868 = vunpack.c.l.b16 %v195
  %v869 = vunpack.c.h.b16 %v195
  %v870 = vunpack.c.l.b16 %v196
  %v871 = vunpack.c.h.b16 %v196
  %v872 = vunpack.c.l.b16 %v197
  %v873 = vunpack.c.h.b16 %v197
  %v874 = vunpack.c.l.b16 %v198
  %v875 = vunpack.c.h.b16 %v198
  %v876 = vunpack.c.l.b16 %v199
  %v877 = vunpack.c.h.b16 %v199
  %v878 = vunpack.c.l.b16 %v200
  %v879 = vunpack.c.h.b16 %v200
  %v880 = vunpack.c.l.b16 %v201
  %v881 = vunpack.c.h.b16 %v201
  %v882 = vunpack.c.l.b16 %v202
  %v883 = vunpack.c.h.b16 %v202
  %v884 = vunpack.c.l.b16 %v203
  %v885 = vunpack.c.h.b16 %v203
  %v886 = vunpack.c.l.b16 %v204
  %v887 = vunpack.c.h.b16 %v204
  %v888 = vunpack.c.l.b16 %v205
  %v889 = vunpack.c.h.b16 %v205
  %v890 = vunpack.c.l.b16 %v206
  %v891 = vunpack.c.h.b16 %v206
  %v892 = vunpack.c.l.b16 %v207
  %v893 = vunpack.c.h.b16 %v207
  %v894 = vunpack.c.l.b16 %v208
  %v895 = vunpack.c.h.b16 %v208
  %v896 = vunpack.c.l.b16 %v209
  %v897 = vunpack.c.h.b16 %v209
  %v898 = vunpack.c.l.b16 %v210
  %v899 = vunpack.c.h.b16 %v210
  %v900 = vunpack.c.l.b16 %v211
  %v901 = vunpack.c.h.b16 %v211
  %v902 = vunpack.c.l.b16 %v212
  %v903 = vunpack.c.h.b16 %v212
  %v904 = vunpack.c.l.b16 %v213
  %v905 = vunpack.c.h.b16 %v213
  %v906 = vunpack.c.l.b16 %v214
  %v907 = vunpack.c.h.b16 %v214
  %v908 = vunpack.c.l.b16 %v215
  %v909 = vunpack.c.h.b16 %v215
  %v910 = vunpack.c.l.b16 %v216
  %v911 = vunpack.c.h.b16 %v216
  %v912 = vunpack.c.l.b16 %v217
  %v913 = vunpack.c.h.b16 %v217
  %v914 = vunpack.c.l.b16 %v218
  %v915 = vunpack.c.h.b16 %v218
  %v916 = vunpack.c.l.b16 %v219
  %v917 = vunpack.c.h.b16 %v219
  %v918 = vunpack.c.l.b16 %v220
  %v919 = vunpack.c.h.b16 %v220
  %v920 = vunpack.c.l.b16 %v221
  %v921 = vunpack.c.h.b16 %v221
  %v922 = vunpack.c.l.b16 %v222
  %v923 = vunpack.c.h.b16 %v222
  %v924 = vunpack.c.l.b16 %v223
  %v925 = vunpack.c.h.b16 %v223
  %v926 = vunpack.c.l.b16 %v224
  %v927 = vunpack.c.h.b16 %v224
  %v928 = vunpack.c.l.b16 %v225
  %v929 = vunpack.c.h.b16 %v225
  %v930 = vunpack.c.l.b16 %v226
  %v931 = vunpack.c.h.b16 %v226
  %v932 = vunpack.c.l.b16 %v227
  %v933 = vunpack.c.h.b16 %v227
  %v934 = vunpack.c.l.b16 %v228
  %v935 = vunpack.c.h.b16 %v228
  %v936 = vunpack.c.l.b16 %v229
  %v937 = vunpack.c.h.b16 %v229
  %v938 = vunpack.c.l.b16 %v230
  %v939 = vunpack.c.h.b16 %v230
  %v940 = vunpack.c.l.b16 %v231
  %v941 = vunpack.c.h.b16 %v231
  %v942 = vunpack.c.l.b16 %v232
  %v943 = vunpack.c.h.b16 %v232
  %v944 = vunpack.c.l.b16 %v233
  %v945 = vunpack.c.h.b16 %v233
  %v946 = vunpack.c.l.b16 %v234
  %v947 = vunpack.c.h.b16 %v234
  %v948 = vunpack.c.l.b16 %v235
  %v949 = vunpack.c.h.b16 %v235
  %v950 = vunpack.c.l.b16 %v236
  %v951 = vunpack.c.h.b16 %v236
  %v952 = vunpack.c.l.b16 %v237
  %v953 = vunpack.c.h.b16 %v237
  %v954 = vunpack.c.l.b16 %v238
  %v955 = vunpack.c.h.b16 %v238
  %v956 = vunpack.c.l.b16 %v239
  %v957 = vunpack.c.h.b16 %v239
  %v958 = vunpack.c.l.b16 %v240
  %v959 = vunpack.c.h.b16 %v240
  %v960 = vunpack.c.l.b16 %v241
  %v961 = vunpack.c.h.b16 %v241
  %v962 = vunpack.c.l.b16 %v242
  %v963 = vunpack.c.h.b16 %v242
  %v964 = vunpack.c.l.b16 %v243
  %v965 = vunpack.c.h.b16 %v243
  %v966 = vunpack.c.l.b16 %v244
  %v967 = vunpack.c.h.b16 %v244
  %v968 = vunpack.c.l.b16 %v245
  %v969 = vunpack.c.h.b16 %v245
  %v970 = vunpack.c.l.b16 %v246
  %v971 = vunpack.c.h.b16 %v246
  %v972 = vunpack.c.l.b16 %v247
  %v973 = vunpack.c.h.b16 %v247
  %v974 = vunpack.c.l.b16 %v248
  %v975 = vunpack.c.h.b16 %v248
  %v976 = vunpack.c.l.b16 %v249
  %v977 = vunpack.c.h.b16 %v249
  %v978 = vunpack.c.l.b16 %v250
  %v979 = vunpack.c.h.b16 %v250
  %v980 = vpack.c.b16 %v550, %v548
  %v981 = vpack.c.b16 %v551, %v549
  %v982 = vpack.c.b16 %v554, %v552
  %v983 = vpack.c.b16 %v555, %v553
  %v984 = vpack.c.b16 %v558, %v556
  %v985 = vpack.c.b16 %v559, %v557
  %v986 = vpack.c.b16 %v562, %v560
  %v987 = vpack.c.b16 %v563, %v561
  %v988 = vpack.c.b16 %v566, %v564
  %v989 = vpack.c.b16 %v567, %v565
  %v990 = vpack.c.b16 %v570, %v568
  %v991 = vpack.c.b16 %v571, %v569
  %v992 = vpack.c.b16 %v574, %v572
  %v993 = vpack.c.b16 %v575, %v573
  %v994 = vpack.c.b16 %v578, %v576
  %v995 = vpack.c.b16 %v579, %v577
  %v996 = vpack.c.b16 %v582, %v580
  %v997 = vpack.c.b16 %v583, %v581
  %v998 = vpack.c.b16 %v586, %v584
  %v999 = vpack.c.b16 %v587, %v585
  %v1000 = vpack.c.b16 %v590, %v588
  %v1001 = vpack.c.b16 %v591, %v589
  %v1002 = vpack.c.b16 %v594, %v592
  %v1003 = vpack.c.b16 %v595, %v593
  %v1004 = vpack.c.b16 %v598, %v596
  %v1005 = vpack.c.b16 %v599, %v597
  %v1006 = vpack.c.b16 %v602, %v600
  %v1007 = vpack.c.b16 %v603, %v601
  %v1008 = vpack.c.b16 %v606, %v604
  %v1009 = vpack.c.b16 %v607, %v605
  %v1010 = vpack.c.b16 %v610, %v608
  %v1011 = vpack.c.b16 %v611, %v609
  %v1012 = vpack.c.b16 %v614, %v612
  %v1013 = vpack.c.b16 %v615, %v613
  %v1014 = vpack.c.b16 %v618, %v616
  %v1015 = vpack.c.b16 %v619, %v617
  %v1016 = vpack.c.b16 %v622, %v620
  %v1017 = vpack.c.b16 %v623, %v621
  %v1018 = vpack.c.b16 %v626, %v624
  %v1019 = vpack.c.b16 %v627, %v625
  %v1020 = vpack.c.b16 %v630, %v628
  %v1021 = vpack.c.b16 %v631, %v629
  %v1022 = vpack.c.b16 %v634, %v632
  %v1023 = vpack.c.b16 %v635, %v633
  %v1024 = vpack.c.b16 %v638, %v636
  %v1025 = vpack.c.b16 %v639, %v637
  %v1026 = vpack.c.b16 %v642, %v640
  %v1027 = vpack.c.b16 %v643, %v641
  %v1028 = vpack.c.b16 %v646, %v644
  %v1029 = vpack.c.b16 %v647, %v645
  %v1030 = vpack.c.b16 %v650, %v648
  %v1031 = vpack.c.b16 %v651, %v649
  %v1032 = vpack.c.b16 %v654, %v652
  %v1033 = vpack.c.b16 %v655, %v653
  %v1034 = vpack.c.b16 %v658, %v656
  %v1035 = vpack.c.b16 %v659, %v657
  %v1036 = vpack.c.b16 %v662, %v660
  %v1037 = vpack.c.b16 %v663, %v661
  %v1038 = vpack.c.b16 %v666, %v664
  %v1039 = vpack.c.b16 %v667, %v665
  %v1040 = vpack.c.b16 %v670, %v668
  %v1041 = vpack.c.b16 %v671, %v669
  %v1042 = vpack.c.b16 %v674, %v672
  %v1043 = vpack.c.b16 %v675, %v673
  %v1044 = vpack.c.b16 %v678, %v676
  %v1045 = vpack.c.b16 %v679, %v677
  %v1046 = vpack.c.b16 %v682, %v680
  %v1047 = vpack.c.b16 %v683, %v681
  %v1048 = vpack.c.b16 %v686, %v684
  %v1049 = vpack.c.b16 %v687, %v685
  %v1050 = vpack.c.b16 %v690, %v688
  %v1051 = vpack.c.b16 %v691, %v689
  %v1052 = vpack.c.b16 %v694, %v692
  %v1053 = vpack.c.b16 %v695, %v693
  %v1054 = vpack.c.b16 %v698, %v696
  %v1055 = vpack.c.b16 %v699, %v697
  %v1056 = vpack.c.b16 %v702, %v700
  %v1057 = vpack.c.b16 %v703, %v701
  %v1058 = vpack.c.b16 %v706, %v704
  %v1059 = vpack.c.b16 %v707, %v705
  %v1060 = vpack.c.b16 %v710, %v708
  %v1061 = vpack.c.b16 %v711, %v709
  %v1062 = vpack.c.b16 %v714, %v712
  %v1063 = vpack.c.b16 %v715, %v713
  %v1064 = vpack.c.b16 %v718, %v716
  %v1065 = vpack.c.b16 %v719, %v717
  %v1066 = vpack.c.b16 %v722, %v720
  %v1067 = vpack.c.b16 %v723, %v721
  %v1068 = vpack.c.b16 %v726, %v724
  %v1069 = vpack.c.b16 %v727, %v725
  %v1070 = vpack.c.b16 %v730, %v728
  %v1071 = vpack.c.b16 %v731, %v729
  %v1072 = vpack.c.b16 %v734, %v732
  %v1073 = vpack.c.b16 %v735, %v733
  %v1074 = vpack.c.b16 %v738, %v736
  %v1075 = vpack.c.b16 %v739, %v737
  %v1076 = vpack.c.b16 %v742, %v740
  %v1077 = vpack.c.b16 %v743, %v741
  %v1078 = vpack.c.b16 %v746, %v744
  %v1079 = vpack.c.b16 %v747, %v745
  %v1080 = vpack.c.b16 %v750, %v748
  %v1081 = vpack.c.b16 %v751, %v749
  %v1082 = vpack.c.b16 %v754, %v752
  %v1083 = vpack.c.b16 %v755, %v753
  %v1084 = vpack.c.b16 %v758, %v756
  %v1085 = vpack.c.b16 %v759, %v757
  %v1086 = vpack.c.b16 %v762, %v760
  %v1087 = vpack.c.b16 %v763, %v761
  %v1088 = vpack.c.b16 %v766, %v764
  %v1089 = vpack.c.b16 %v767, %v765
  %v1090 = vpack.c.b16 %v770, %v768
  %v1091 = vpack.c.b16 %v771, %v769
  %v1092 = vpack.c.b16 %v774, %v772
  %v1093 = vpack.c.b16 %v775, %v773
  %v1094 = vpack.c.b16 %v778, %v776
  %v1095 = vpack.c.b16 %v779, %v777
  %v1096 = vpack.c.b16 %v782, %v780
  %v1097 = vpack.c.b16 %v783, %v781
  %v1098 = vpack.c.b16 %v786, %v784
  %v1099 = vpack.c.b16 %v787, %v785
  %v1100 = vpack.c.b16 %v790, %v788
  %v1101 = vpack.c.b16 %v791, %v789
  %v1102 = vpack.c.b16 %v794, %v792
  %v1103 = vpack.c.b16 %v795, %v793
  %v1104 = vpack.c.b16 %v798, %v796
  %v1105 = vpack.c.b16 %v799, %v797
  %v1106 = vpack.c.b16 %v802, %v800
  %v1107 = vpack.c.b16 %v803, %v801
  %v1108 = vpack.c.b16 %v806, %v804
  %v1109 = vpack.c.b16 %v807, %v805
  %v1110 = vpack.c.b16 %v810, %v808
  %v1111 = vpack.c.b16 %v811, %v809
  %v1112 = vpack.c.b16 %v814, %v812
  %v1113 = vpack.c.b16 %v815, %v813
  %v1114 = vpack.c.b16 %v818, %v816
  %v1115 = vpack.c.b16 %v819, %v817
  %v1116 = vpack.c.b16 %v822, %v820
  %v1117 = vpack.c.b16 %v823, %v821
  %v1118 = vpack.c.b16 %v826, %v824
  %v1119 = vpack.c.b16 %v827, %v825
  %v1120 = vpack.c.b16 %v830, %v828
  %v1121 = vpack.c.b16 %v831, %v829
  %v1122 = vpack.c.b16 %v834, %v832
  %v1123 = vpack.c.b16 %v835, %v833
  %v1124 = vpack.c.b16 %v838, %v836
  %v1125 = vpack.c.b16 %v839, %v837
  %v1126 = vpack.c.b16 %v842, %v840
  %v1127 = vpack.c.b16 %v843, %v841
  %v1128 = vpack.c.b16 %v846, %v844
  %v1129 = vpack.c.b16 %v847, %v845
  %v1130 = vpack.c.b16 %v850, %v848
  %v1131 = vpack.c.b16 %v851, %v849
  %v1132 = vpack.c.b16 %v854, %v852
  %v1133 = vpack.c.b16 %v855, %v853
  %v1134 = vpack.c.b16 %v858, %v856
  %v1135 = vpack.c.b16 %v859, %v857
  %v1136 = vpack.c.b16 %v862, %v860
  %v1137 = vpack.c.b16 %v863, %v861
  %v1138 = vpack.c.b16 %v866, %v864
  %v1139 = vpack.c.b16 %v867, %v865
  %v1140 = vpack.c.b16 %v870, %v868
  %v1141 = vpack.c.b16 %v871, %v869
  %v1142 = vpack.c.b16 %v874, %v872
  %v1143 = vpack.c.b16 %v875, %v873
  %v1144 = vpack.c.b16 %v878, %v876
  %v1145 = vpack.c.b16 %v879, %v877
  %v1146 = vpack.c.b16 %v882, %v880
  %v1147 = vpack.c.b16 %v883, %v881
  %v1148 = vpack.c.b16 %v886, %v884
  %v1149 = vpack.c.b16 %v887, %v885
  %v1150 = vpack.c.b16 %v890, %v888
  %v1151 = vpack.c.b16 %v891, %v889
  %v1152 = vpack.c.b16 %v894, %v892
  %v1153 = vpack.c.b16 %v895, %v893
  %v1154 = vpack.c.b16 %v898, %v896
  %v1155 = vpack.c.b16 %v899, %v897
  %v1156 = vpack.c.b16 %v902, %v900
  %v1157 = vpack.c.b16 %v903, %v901
  %v1158 = vpack.c.b16 %v906, %v904
  %v1159 = vpack.c.b16 %v907, %v905
  %v1160 = vpack.c.b16 %v910, %v908
  %v1161 = vpack.c.b16 %v911, %v909
  %v1162 = vpack.c.b16 %v914, %v912
  %v1163 = vpack.c.b16 %v915, %v913
  %v1164 = vpack.c.b16 %v918, %v916
  %v1165 = vpack.c.b16 %v919, %v917
  %v1166 = vpack.c.b16 %v922, %v920
  %v1167 = vpack.c.b16 %v923, %v921
  %v1168 = vpack.c.b16 %v926, %v924
  %v1169 = vpack.c.b16 %v927, %v925
  %v1170 = vpack.c.b16 %v930, %v928
  %v1171 = vpack.c.b16 %v931, %v929
  %v1172 = vpack.c.b16 %v934, %v932
  %v1173 = vpack.c.b16 %v935, %v933
  %v1174 = vpack.c.b16 %v938, %v936
  %v1175 = vpack.c.b16 %v939, %v937
  %v1176 = vpack.c.b16 %v942, %v940
  %v1177 = vpack.c.b16 %v943, %v941
  %v1178 = vpack.c.b16 %v946, %v944
  %v1179 = vpack.c.b16 %v947, %v945
  %v1180 = vpack.c.b16 %v950, %v948
  %v1181 = vpack.c.b16 %v951, %v949
  %v1182 = vpack.c.b16 %v954, %v952
  %v1183 = vpack.c.b16 %v955, %v953
  %v1184 = vpack.c.b16 %v958, %v956
  %v1185 = vpack.c.b16 %v959, %v957
  %v1186 = vpack.c.b16 %v962, %v960
  %v1187 = vpack.c.b16 %v963, %v961
  %v1188 = vpack.c.b16 %v966, %v964
  %v1189 = vpack.c.b16 %v967, %v965
  %v1190 = vpack.c.b16 %v970, %v968
  %v1191 = vpack.c.b16 %v971, %v969
  %v1192 = vpack.c.b16 %v974, %v972
  %v1193 = vpack.c.b16 %v975, %v973
  %v1194 = vpack.c.b16 %v978, %v976
  %v1195 = vpack.c.b16 %v979, %v977
  %vm1412 = vcmask 523264
  %v1414 = vsel %vm1412, %v318, 0
  %1416 = vmatprep.subr.bf16.mxu0 %v995
  %1417 = vmatpush1.bf16.msra.mxu0 %v994
  %1418 = vmatprep.subr.bf16.mxu0 %v993
  %1419 = vmatpush1.bf16.msra.mxu0 %v992
  %1420 = vmatprep.subr.bf16.mxu0 %v991
  %1421 = vmatpush1.bf16.msra.mxu0 %v990
  %1422 = vmatprep.subr.bf16.mxu0 %v989
  %1423 = vmatpush1.bf16.msra.mxu0 %v988
  %1424 = vmatprep.subr.bf16.mxu0 %v987
  %1425 = vmatpush1.bf16.msra.mxu0 %v986
  %1426 = vmatprep.subr.bf16.mxu0 %v985
  %1427 = vmatpush1.bf16.msra.mxu0 %v984
  %1428 = vmatprep.subr.bf16.mxu0 %v983
  %1429 = vmatpush1.bf16.msra.mxu0 %v982
  %1430 = vmatprep.subr.bf16.mxu0 %v981
  %1431 = vmatpush1.bf16.msra.mxu0 %v980
  %1432 = vmatprep.subr.bf16.mxu0 %v1011
  %1433 = vmatpush2.bf16.msra.mxu0 %v1010
  %1434 = vmatprep.subr.bf16.mxu0 %v1009
  %1435 = vmatpush2.bf16.msra.mxu0 %v1008
  %1436 = vmatprep.subr.bf16.mxu0 %v1007
  %1437 = vmatpush2.bf16.msra.mxu0 %v1006
  %1438 = vmatprep.subr.bf16.mxu0 %v1005
  %1439 = vmatpush2.bf16.msra.mxu0 %v1004
  %1440 = vmatprep.subr.bf16.mxu0 %v1003
  %1441 = vmatpush2.bf16.msra.mxu0 %v1002
  %1442 = vmatprep.subr.bf16.mxu0 %v1001
  %1443 = vmatpush2.bf16.msra.mxu0 %v1000
  %1444 = vmatprep.subr.bf16.mxu0 %v999
  %1445 = vmatpush2.bf16.msra.mxu0 %v998
  %1446 = vmatprep.subr.bf16.mxu0 %v997
  %1447 = vmatpush2.bf16.msra.mxu0 %v996
  %1448 = vmatprep.mubr.bf16.mxu0 %v306
  %1449 = vmatmul.mubr.bf16.gmra.mxu0 %v305
  %v1450 = vpop.f32.mrf.mxu0
  %v1451 = vadd.f32 %v256, %v1450
  %v1452 = vpop.f32.mrf.mxu0
  %v1453 = vadd.f32 %v260, %v1452
  %v1454 = vpop.f32.mrf.mxu0
  %v1455 = vadd.f32 %v256, %v1454
  %v1456 = vpop.f32.mrf.mxu0
  %v1457 = vadd.f32 %v260, %v1456
  %1458 = vdwg.mxu0
  %1459 = vmatprep.subr.bf16.mxu0 %v1027
  %1460 = vmatpush1.bf16.msra.mxu0 %v1026
  %1461 = vmatprep.subr.bf16.mxu0 %v1025
  %1462 = vmatpush1.bf16.msra.mxu0 %v1024
  %1463 = vmatprep.subr.bf16.mxu0 %v1023
  %1464 = vmatpush1.bf16.msra.mxu0 %v1022
  %1465 = vmatprep.subr.bf16.mxu0 %v1021
  %1466 = vmatpush1.bf16.msra.mxu0 %v1020
  %1467 = vmatprep.subr.bf16.mxu0 %v1019
  %1468 = vmatpush1.bf16.msra.mxu0 %v1018
  %1469 = vmatprep.subr.bf16.mxu0 %v1017
  %1470 = vmatpush1.bf16.msra.mxu0 %v1016
  %1471 = vmatprep.subr.bf16.mxu0 %v1015
  %1472 = vmatpush1.bf16.msra.mxu0 %v1014
  %1473 = vmatprep.subr.bf16.mxu0 %v1013
  %1474 = vmatpush1.bf16.msra.mxu0 %v1012
  %1475 = vmatprep.subr.bf16.mxu0 %v1043
  %1476 = vmatpush2.bf16.msra.mxu0 %v1042
  %1477 = vmatprep.subr.bf16.mxu0 %v1041
  %1478 = vmatpush2.bf16.msra.mxu0 %v1040
  %1479 = vmatprep.subr.bf16.mxu0 %v1039
  %1480 = vmatpush2.bf16.msra.mxu0 %v1038
  %1481 = vmatprep.subr.bf16.mxu0 %v1037
  %1482 = vmatpush2.bf16.msra.mxu0 %v1036
  %1483 = vmatprep.subr.bf16.mxu0 %v1035
  %1484 = vmatpush2.bf16.msra.mxu0 %v1034
  %1485 = vmatprep.subr.bf16.mxu0 %v1033
  %1486 = vmatpush2.bf16.msra.mxu0 %v1032
  %1487 = vmatprep.subr.bf16.mxu0 %v1031
  %1488 = vmatpush2.bf16.msra.mxu0 %v1030
  %1489 = vmatprep.subr.bf16.mxu0 %v1029
  %1490 = vmatpush2.bf16.msra.mxu0 %v1028
  %1491 = vmatprep.mubr.bf16.mxu0 %v308
  %1492 = vmatmul.mubr.bf16.gmra.mxu0 %v307
  %v1493 = vpop.f32.mrf.mxu0
  %v1494 = vadd.f32 %v1451, %v1493
  %v1495 = vpop.f32.mrf.mxu0
  %v1496 = vadd.f32 %v1453, %v1495
  %v1497 = vpop.f32.mrf.mxu0
  %v1498 = vadd.f32 %v1455, %v1497
  %v1499 = vpop.f32.mrf.mxu0
  %v1500 = vadd.f32 %v1457, %v1499
  %1501 = vdwg.mxu0
  %1502 = vmatprep.subr.bf16.mxu0 %v1059
  %1503 = vmatpush1.bf16.msra.mxu0 %v1058
  %1504 = vmatprep.subr.bf16.mxu0 %v1057
  %1505 = vmatpush1.bf16.msra.mxu0 %v1056
  %1506 = vmatprep.subr.bf16.mxu0 %v1055
  %1507 = vmatpush1.bf16.msra.mxu0 %v1054
  %1508 = vmatprep.subr.bf16.mxu0 %v1053
  %1509 = vmatpush1.bf16.msra.mxu0 %v1052
  %1510 = vmatprep.subr.bf16.mxu0 %v1051
  %1511 = vmatpush1.bf16.msra.mxu0 %v1050
  %1512 = vmatprep.subr.bf16.mxu0 %v1049
  %1513 = vmatpush1.bf16.msra.mxu0 %v1048
  %1514 = vmatprep.subr.bf16.mxu0 %v1047
  %1515 = vmatpush1.bf16.msra.mxu0 %v1046
  %1516 = vmatprep.subr.bf16.mxu0 %v1045
  %1517 = vmatpush1.bf16.msra.mxu0 %v1044
  %1518 = vmatprep.subr.bf16.mxu0 %v1075
  %1519 = vmatpush2.bf16.msra.mxu0 %v1074
  %1520 = vmatprep.subr.bf16.mxu0 %v1073
  %1521 = vmatpush2.bf16.msra.mxu0 %v1072
  %1522 = vmatprep.subr.bf16.mxu0 %v1071
  %1523 = vmatpush2.bf16.msra.mxu0 %v1070
  %1524 = vmatprep.subr.bf16.mxu0 %v1069
  %1525 = vmatpush2.bf16.msra.mxu0 %v1068
  %1526 = vmatprep.subr.bf16.mxu0 %v1067
  %1527 = vmatpush2.bf16.msra.mxu0 %v1066
  %1528 = vmatprep.subr.bf16.mxu0 %v1065
  %1529 = vmatpush2.bf16.msra.mxu0 %v1064
  %1530 = vmatprep.subr.bf16.mxu0 %v1063
  %1531 = vmatpush2.bf16.msra.mxu0 %v1062
  %1532 = vmatprep.subr.bf16.mxu0 %v1061
  %1533 = vmatpush2.bf16.msra.mxu0 %v1060
  %1534 = vmatprep.mubr.bf16.mxu0 %v310
  %1535 = vmatmul.mubr.bf16.gmra.mxu0 %v309
  %v1536 = vpop.f32.mrf.mxu0
  %v1537 = vadd.f32 %v1494, %v1536
  %v1538 = vpop.f32.mrf.mxu0
  %v1539 = vadd.f32 %v1496, %v1538
  %v1540 = vpop.f32.mrf.mxu0
  %v1541 = vadd.f32 %v1498, %v1540
  %v1542 = vpop.f32.mrf.mxu0
  %v1543 = vadd.f32 %v1500, %v1542
  %1544 = vdwg.mxu0
  %1545 = vmatprep.subr.bf16.mxu0 %v1091
  %1546 = vmatpush1.bf16.msra.mxu0 %v1090
  %1547 = vmatprep.subr.bf16.mxu0 %v1089
  %1548 = vmatpush1.bf16.msra.mxu0 %v1088
  %1549 = vmatprep.subr.bf16.mxu0 %v1087
  %1550 = vmatpush1.bf16.msra.mxu0 %v1086
  %1551 = vmatprep.subr.bf16.mxu0 %v1085
  %1552 = vmatpush1.bf16.msra.mxu0 %v1084
  %1553 = vmatprep.subr.bf16.mxu0 %v1083
  %1554 = vmatpush1.bf16.msra.mxu0 %v1082
  %1555 = vmatprep.subr.bf16.mxu0 %v1081
  %1556 = vmatpush1.bf16.msra.mxu0 %v1080
  %1557 = vmatprep.subr.bf16.mxu0 %v1079
  %1558 = vmatpush1.bf16.msra.mxu0 %v1078
  %1559 = vmatprep.subr.bf16.mxu0 %v1077
  %1560 = vmatpush1.bf16.msra.mxu0 %v1076
  %1561 = vmatprep.subr.bf16.mxu0 %v1107
  %1562 = vmatpush2.bf16.msra.mxu0 %v1106
  %1563 = vmatprep.subr.bf16.mxu0 %v1105
  %1564 = vmatpush2.bf16.msra.mxu0 %v1104
  %1565 = vmatprep.subr.bf16.mxu0 %v1103
  %1566 = vmatpush2.bf16.msra.mxu0 %v1102
  %1567 = vmatprep.subr.bf16.mxu0 %v1101
  %1568 = vmatpush2.bf16.msra.mxu0 %v1100
  %1569 = vmatprep.subr.bf16.mxu0 %v1099
  %1570 = vmatpush2.bf16.msra.mxu0 %v1098
  %1571 = vmatprep.subr.bf16.mxu0 %v1097
  %1572 = vmatpush2.bf16.msra.mxu0 %v1096
  %1573 = vmatprep.subr.bf16.mxu0 %v1095
  %1574 = vmatpush2.bf16.msra.mxu0 %v1094
  %1575 = vmatprep.subr.bf16.mxu0 %v1093
  %1576 = vmatpush2.bf16.msra.mxu0 %v1092
  %1577 = vmatprep.mubr.bf16.mxu0 %v312
  %1578 = vmatmul.mubr.bf16.gmra.mxu0 %v311
  %v1579 = vpop.f32.mrf.mxu0
  %v1580 = vadd.f32 %v1537, %v1579
  %v1581 = vpop.f32.mrf.mxu0
  %v1582 = vadd.f32 %v1539, %v1581
  %v1583 = vpop.f32.mrf.mxu0
  %v1584 = vadd.f32 %v1541, %v1583
  %v1585 = vpop.f32.mrf.mxu0
  %v1586 = vadd.f32 %v1543, %v1585
  %1587 = vdwg.mxu0
  %1588 = vmatprep.subr.bf16.mxu0 %v1123
  %1589 = vmatpush1.bf16.msra.mxu0 %v1122
  %1590 = vmatprep.subr.bf16.mxu0 %v1121
  %1591 = vmatpush1.bf16.msra.mxu0 %v1120
  %1592 = vmatprep.subr.bf16.mxu0 %v1119
  %1593 = vmatpush1.bf16.msra.mxu0 %v1118
  %1594 = vmatprep.subr.bf16.mxu0 %v1117
  %1595 = vmatpush1.bf16.msra.mxu0 %v1116
  %1596 = vmatprep.subr.bf16.mxu0 %v1115
  %1597 = vmatpush1.bf16.msra.mxu0 %v1114
  %1598 = vmatprep.subr.bf16.mxu0 %v1113
  %1599 = vmatpush1.bf16.msra.mxu0 %v1112
  %1600 = vmatprep.subr.bf16.mxu0 %v1111
  %1601 = vmatpush1.bf16.msra.mxu0 %v1110
  %1602 = vmatprep.subr.bf16.mxu0 %v1109
  %1603 = vmatpush1.bf16.msra.mxu0 %v1108
  %1604 = vmatprep.subr.bf16.mxu0 %v1139
  %1605 = vmatpush2.bf16.msra.mxu0 %v1138
  %1606 = vmatprep.subr.bf16.mxu0 %v1137
  %1607 = vmatpush2.bf16.msra.mxu0 %v1136
  %1608 = vmatprep.subr.bf16.mxu0 %v1135
  %1609 = vmatpush2.bf16.msra.mxu0 %v1134
  %1610 = vmatprep.subr.bf16.mxu0 %v1133
  %1611 = vmatpush2.bf16.msra.mxu0 %v1132
  %1612 = vmatprep.subr.bf16.mxu0 %v1131
  %1613 = vmatpush2.bf16.msra.mxu0 %v1130
  %1614 = vmatprep.subr.bf16.mxu0 %v1129
  %1615 = vmatpush2.bf16.msra.mxu0 %v1128
  %1616 = vmatprep.subr.bf16.mxu0 %v1127
  %1617 = vmatpush2.bf16.msra.mxu0 %v1126
  %1618 = vmatprep.subr.bf16.mxu0 %v1125
  %1619 = vmatpush2.bf16.msra.mxu0 %v1124
  %1620 = vmatprep.mubr.bf16.mxu0 %v314
  %1621 = vmatmul.mubr.bf16.gmra.mxu0 %v313
  %v1622 = vpop.f32.mrf.mxu0
  %v1623 = vadd.f32 %v1580, %v1622
  %v1624 = vpop.f32.mrf.mxu0
  %v1625 = vadd.f32 %v1582, %v1624
  %v1626 = vpop.f32.mrf.mxu0
  %v1627 = vadd.f32 %v1584, %v1626
  %v1628 = vpop.f32.mrf.mxu0
  %v1629 = vadd.f32 %v1586, %v1628
  %1630 = vdwg.mxu0
  %1631 = vmatprep.subr.bf16.mxu0 %v1155
  %1632 = vmatpush1.bf16.msra.mxu0 %v1154
  %1633 = vmatprep.subr.bf16.mxu0 %v1153
  %1634 = vmatpush1.bf16.msra.mxu0 %v1152
  %1635 = vmatprep.subr.bf16.mxu0 %v1151
  %1636 = vmatpush1.bf16.msra.mxu0 %v1150
  %1637 = vmatprep.subr.bf16.mxu0 %v1149
  %1638 = vmatpush1.bf16.msra.mxu0 %v1148
  %1639 = vmatprep.subr.bf16.mxu0 %v1147
  %1640 = vmatpush1.bf16.msra.mxu0 %v1146
  %1641 = vmatprep.subr.bf16.mxu0 %v1145
  %1642 = vmatpush1.bf16.msra.mxu0 %v1144
  %1643 = vmatprep.subr.bf16.mxu0 %v1143
  %1644 = vmatpush1.bf16.msra.mxu0 %v1142
  %1645 = vmatprep.subr.bf16.mxu0 %v1141
  %1646 = vmatpush1.bf16.msra.mxu0 %v1140
  %1647 = vmatprep.subr.bf16.mxu0 %v1171
  %1648 = vmatpush2.bf16.msra.mxu0 %v1170
  %1649 = vmatprep.subr.bf16.mxu0 %v1169
  %1650 = vmatpush2.bf16.msra.mxu0 %v1168
  %1651 = vmatprep.subr.bf16.mxu0 %v1167
  %1652 = vmatpush2.bf16.msra.mxu0 %v1166
  %1653 = vmatprep.subr.bf16.mxu0 %v1165
  %1654 = vmatpush2.bf16.msra.mxu0 %v1164
  %1655 = vmatprep.subr.bf16.mxu0 %v1163
  %1656 = vmatpush2.bf16.msra.mxu0 %v1162
  %1657 = vmatprep.subr.bf16.mxu0 %v1161
  %1658 = vmatpush2.bf16.msra.mxu0 %v1160
  %1659 = vmatprep.subr.bf16.mxu0 %v1159
  %1660 = vmatpush2.bf16.msra.mxu0 %v1158
  %1661 = vmatprep.subr.bf16.mxu0 %v1157
  %1662 = vmatpush2.bf16.msra.mxu0 %v1156
  %1663 = vmatprep.mubr.bf16.mxu0 %v316
  %1664 = vmatmul.mubr.bf16.gmra.mxu0 %v315
  %v1665 = vpop.f32.mrf.mxu0
  %v1666 = vadd.f32 %v1623, %v1665
  %v1667 = vpop.f32.mrf.mxu0
  %v1668 = vadd.f32 %v1625, %v1667
  %v1669 = vpop.f32.mrf.mxu0
  %v1670 = vadd.f32 %v1627, %v1669
  %v1671 = vpop.f32.mrf.mxu0
  %v1672 = vadd.f32 %v1629, %v1671
  %1673 = vdwg.mxu0
  %1674 = vmatprep.subr.bf16.mxu0 %v1187
  %1675 = vmatpush1.bf16.msra.mxu0 %v1186
  %1676 = vmatprep.subr.bf16.mxu0 %v1185
  %1677 = vmatpush1.bf16.msra.mxu0 %v1184
  %1678 = vmatprep.subr.bf16.mxu0 %v1183
  %1679 = vmatpush1.bf16.msra.mxu0 %v1182
  %1680 = vmatprep.subr.bf16.mxu0 %v1181
  %1681 = vmatpush1.bf16.msra.mxu0 %v1180
  %1682 = vmatprep.subr.bf16.mxu0 %v1179
  %1683 = vmatpush1.bf16.msra.mxu0 %v1178
  %1684 = vmatprep.subr.bf16.mxu0 %v1177
  %1685 = vmatpush1.bf16.msra.mxu0 %v1176
  %1686 = vmatprep.subr.bf16.mxu0 %v1175
  %1687 = vmatpush1.bf16.msra.mxu0 %v1174
  %1688 = vmatprep.subr.bf16.mxu0 %v1173
  %1689 = vmatpush1.bf16.msra.mxu0 %v1172
  %1690 = vmatprep.subr.bf16.mxu0 0
  %1691 = vmatpush2.bf16.msra.mxu0 0
  %1692 = vmatprep.subr.bf16.mxu0 0
  %1693 = vmatpush2.bf16.msra.mxu0 0
  %1694 = vmatprep.subr.bf16.mxu0 0
  %1695 = vmatpush2.bf16.msra.mxu0 0
  %1696 = vmatprep.subr.bf16.mxu0 0
  %1697 = vmatpush2.bf16.msra.mxu0 0
  %1698 = vmatprep.subr.bf16.mxu0 %v1195
  %1699 = vmatpush2.bf16.msra.mxu0 %v1194
  %1700 = vmatprep.subr.bf16.mxu0 %v1193
  %1701 = vmatpush2.bf16.msra.mxu0 %v1192
  %1702 = vmatprep.subr.bf16.mxu0 %v1191
  %1703 = vmatpush2.bf16.msra.mxu0 %v1190
  %1704 = vmatprep.subr.bf16.mxu0 %v1189
  %1705 = vmatpush2.bf16.msra.mxu0 %v1188
  %1706 = vmatprep.mubr.bf16.mxu0 %v1414
  %1707 = vmatmul.mubr.bf16.gmra.mxu0 %v317
  %v1708 = vpop.f32.mrf.mxu0
  %v1709 = vadd.f32 %v1666, %v1708
  %v1710 = vpop.f32.mrf.mxu0
  %v1711 = vadd.f32 %v1668, %v1710
  %v1712 = vpop.f32.mrf.mxu0
  %v1713 = vadd.f32 %v1670, %v1712
  %v1714 = vpop.f32.mrf.mxu0
  %v1715 = vadd.f32 %v1672, %v1714
  %1716 = vdwg.mxu0
  %v1717 = vld [vmem:[%s3] sm:$0x3]
  %v1719 = vlaneseq
  %v1720 = vshrl.u32 %v1719, 7
  %v1721 = vsub.s32 0, %v1720
  %v1722 = vrot.slane %v1717, %v1721
  %v1723 = vlaneseq
  %v1724 = vshrl.u32 %v1723, 7
  %v1725 = vsub.s32 1, %v1724
  %v1726 = vrot.slane %v1717, %v1725
  %v1729 = vmul.f32 %v1709, %v1722
  %v1730 = vmul.f32 %v1711, %v1726
  %v1731 = vmul.f32 %v1713, %v1722
  %v1732 = vmul.f32 %v1715, %v1726
  %v1733 = vld [vmem:[%s4] sm:$0xff]
  %v1734 = vld [vmem:[%s4 + $0x8] sm:$0xff]
  %v1735 = vunpack.c.l.bf16 %v1733
  %v1736 = vunpack.c.h.bf16 %v1733
  %v1737 = vunpack.c.l.bf16 %v1734
  %v1738 = vunpack.c.h.bf16 %v1734
  %v1739 = vadd.f32 %v1729, %v1735
  %v1740 = vadd.f32 %v1730, %v1736
  %v1741 = vadd.f32 %v1731, %v1737
  %v1742 = vadd.f32 %v1732, %v1738
  %vm1743 = vcmp.ge.f32.partialorder %v1739, 0.0
  %vm1744 = vcmp.ge.f32.partialorder %v1740, 0.0
  %vm1745 = vcmp.ge.f32.partialorder %v1741, 0.0
  %vm1746 = vcmp.ge.f32.partialorder %v1742, 0.0
  %v1747 = vmul.f32 %v1739, 0.2
  %v1748 = vmul.f32 %v1740, 0.2
  %v1749 = vmul.f32 %v1741, 0.2
  %v1750 = vmul.f32 %v1742, 0.2
  %v1751 = vsel %vm1743, %v1739, %v1747
  %v1752 = vsel %vm1744, %v1740, %v1748
  %v1753 = vsel %vm1745, %v1741, %v1749
  %v1754 = vsel %vm1746, %v1742, %v1750
  %v1755 = vpack.c.bf16 %v1753, %v1751
  %v1756 = vpack.c.bf16 %v1754, %v1752
  %v1759 = vunpack.c.l.b16 %v1755
  %v1760 = vunpack.c.l.b16 %v1756
  %v1761 = vunpack.c.h.b16 %v1755
  %v1762 = vunpack.c.h.b16 %v1756
  %v1763 = vpack.c.b16 %v1760, %v1759
  %v1764 = vpack.c.b16 %v1762, %v1761
  %vm1767 = vcmask 1043456
  %vm1768 = vcmask 523268
  %vm1769 = vmor %vm1768, %vm1767
  %1770 = vst.msk [vmem:[%s5] sm:$0xff] %vm1769, %v1763
  %1771 = vst.msk [vmem:[%s5 + $0x8] sm:$0xff] %vm1769, %v1764
  // Predicated region
  $region22: #{ifnet_forward.59} parent=0 // pred_check
    _
  $region23: #{ifnet_forward.59} parent=0 // pred_check_branch
    %1773 = sbr.rel (0) target = $region25
  $region24: #{ifnet_forward.59} parent=0 // pred_region
    _
  $region25: #{ifnet_forward.59} parent=0 // pred_fallthru
    _
  // Predicated region
  $region26: #{ifnet_forward.59} parent=0 // pred_check
    _
  $region27: #{ifnet_forward.59} parent=0 // pred_check_branch
    %1775 = sbr.rel (0) target = $region29
  $region28: #{ifnet_forward.59} parent=0 // pred_region
    _
  $region29: #{ifnet_forward.59} parent=0 // pred_fallthru
    _

// kernel: ifnet_forward.71
$region0: #{ifnet_forward.71}
  #allocation0 [shape = 'u32[]', space=smem, size = 0x4, offset = 0x4, fixed_abs, tag = 'smem constant byte address 0x4 - core index']
  #allocation1 [shape = 'u32[144,128]{1,0:T(1,128)}', space=vmem, size = 0x12000, scoped, tag = 'internal scratch']
  %s0 = inlined_call_operand.vmem [shape: bf16[32,108], index: 0, kind: input, shape index: {}]
  %s1 = inlined_call_operand.vmem [shape: bf16[108,64], index: 1, kind: input, shape index: {}]
  %s2 = inlined_call_operand.vmem [shape: f32[1,64], index: 2, kind: input, shape index: {}]
  %s3 = inlined_call_operand.vmem [shape: bf16[32,64], index: 3, kind: output, shape index: {}]
  %s4 = sld [smem:[#allocation0]]
  $region22: #{ifnet_forward.71} parent=0
    _
  %s6 = ssub.s32 1, %s4
  %s7 = scalar_select 0, %s6, %s4
  // Predicated region
  $region2: #{ifnet_forward.71} parent=0 // pred_check
    _
  $region3: #{ifnet_forward.71} parent=0 // pred_check_branch
    %9 = sbr.rel (0) target = $region5
  $region4: #{ifnet_forward.71} parent=0 // pred_region
    _
  $region5: #{ifnet_forward.71} parent=0 // pred_fallthru
    _
  // Predicated region
  $region6: #{ifnet_forward.71} parent=0 // pred_check
    _
  $region7: #{ifnet_forward.71} parent=0 // pred_check_branch
    %11 = sbr.rel (0) target = $region9
  $region8: #{ifnet_forward.71} parent=0 // pred_region
    _
  $region9: #{ifnet_forward.71} parent=0 // pred_fallthru
    _
  // Predicated region
  $region10: #{ifnet_forward.71} parent=0 // pred_check
    _
  $region11: #{ifnet_forward.71} parent=0 // pred_check_branch
    %13 = sbr.rel (0) target = $region13
  $region12: #{ifnet_forward.71} parent=0 // pred_region
    _
  $region13: #{ifnet_forward.71} parent=0 // pred_fallthru
    _
  %v15 = vld [vmem:[%s0] sm:$0xf]
  %v16 = vld [vmem:[%s0 + $0x4] sm:$0xf]
  %v17 = vld [vmem:[%s0 + $0x8] sm:$0xf]
  %v18 = vld [vmem:[%s0 + $0xc] sm:$0xf]
  %v19 = vld [vmem:[%s1] sm:$0xf]
  %v20 = vld [vmem:[%s1 + $0x4] sm:$0xf]
  %v21 = vld [vmem:[%s1 + $0x8] sm:$0xf]
  %v22 = vld [vmem:[%s1 + $0xc] sm:$0xf]
  %v23 = vld [vmem:[%s1 + $0x10] sm:$0xf]
  %v24 = vld [vmem:[%s1 + $0x14] sm:$0xf]
  %v25 = vld [vmem:[%s1 + $0x18] sm:$0xf]
  %v26 = vld [vmem:[%s1 + $0x1c] sm:$0xf]
  %v27 = vld [vmem:[%s1 + $0x20] sm:$0xf]
  %v28 = vld [vmem:[%s1 + $0x24] sm:$0xf]
  %v29 = vld [vmem:[%s1 + $0x28] sm:$0xf]
  %v30 = vld [vmem:[%s1 + $0x2c] sm:$0xf]
  %v31 = vld [vmem:[%s1 + $0x30] sm:$0xf]
  %v32 = vld [vmem:[%s1 + $0x34] sm:$0x3]
  %v33 = vld [vmem:[%s2] sm:$0x1]
  %v35 = vlaneseq
  %v36 = vshrl.u32 %v35, 7
  %v37 = vsub.s32 0, %v36
  %v38 = vrot.slane %v33, %v37
  %v44 = vunpack.c.l.b16 %v15
  %v45 = vunpack.c.l.b16 %v16
  %v46 = vunpack.c.l.b16 %v17
  %v47 = vunpack.c.l.b16 %v18
  %v48 = vpack.c.b16 %v45, %v44
  %v49 = vpack.c.b16 %v47, %v46
  %v64 = vunpack.c.l.b16 %v19
  %v65 = vunpack.c.l.b16 %v20
  %v66 = vunpack.c.l.b16 %v21
  %v67 = vunpack.c.l.b16 %v22
  %v68 = vunpack.c.l.b16 %v23
  %v69 = vunpack.c.l.b16 %v24
  %v70 = vunpack.c.l.b16 %v25
  %v71 = vunpack.c.l.b16 %v26
  %v72 = vunpack.c.l.b16 %v27
  %v73 = vunpack.c.l.b16 %v28
  %v74 = vunpack.c.l.b16 %v29
  %v75 = vunpack.c.l.b16 %v30
  %v76 = vunpack.c.l.b16 %v31
  %v77 = vunpack.c.l.b16 %v32
  %v78 = vpack.c.b16 %v65, %v64
  %v79 = vpack.c.b16 %v67, %v66
  %v80 = vpack.c.b16 %v69, %v68
  %v81 = vpack.c.b16 %v71, %v70
  %v82 = vpack.c.b16 %v73, %v72
  %v83 = vpack.c.b16 %v75, %v74
  %v84 = vpack.c.b16 %v77, %v76
  %vm91 = vcmask 883712
  %v93 = vsel %vm91, %v48, 0
  %v96 = vsel %vm91, %v49, 0
  %vm98 = vcmask 1045504
  %v100 = vsel %vm98, %v84, 0
  %102 = vmatprep.subr.bf16.mxu0 0
  %103 = vmatpush1.bf16.msra.mxu0 0
  %104 = vmatprep.subr.bf16.mxu0 0
  %105 = vmatpush1.bf16.msra.mxu0 %v100
  %106 = vmatprep.subr.bf16.mxu0 0
  %107 = vmatpush1.bf16.msra.mxu0 %v83
  %108 = vmatprep.subr.bf16.mxu0 0
  %109 = vmatpush1.bf16.msra.mxu0 %v82
  %110 = vmatprep.subr.bf16.mxu0 0
  %111 = vmatpush1.bf16.msra.mxu0 %v81
  %112 = vmatprep.subr.bf16.mxu0 0
  %113 = vmatpush1.bf16.msra.mxu0 %v80
  %114 = vmatprep.subr.bf16.mxu0 0
  %115 = vmatpush1.bf16.msra.mxu0 %v79
  %116 = vmatprep.subr.bf16.mxu0 0
  %117 = vmatpush1.bf16.msra.mxu0 %v78
  %118 = vmatprep.subr.bf16.mxu0 0
  %119 = vmatpush2.bf16.msra.mxu0 0
  %120 = vmatprep.subr.bf16.mxu0 0
  %121 = vmatpush2.bf16.msra.mxu0 0
  %122 = vmatprep.subr.bf16.mxu0 0
  %123 = vmatpush2.bf16.msra.mxu0 0
  %124 = vmatprep.subr.bf16.mxu0 0
  %125 = vmatpush2.bf16.msra.mxu0 0
  %126 = vmatprep.subr.bf16.mxu0 0
  %127 = vmatpush2.bf16.msra.mxu0 0
  %128 = vmatprep.subr.bf16.mxu0 0
  %129 = vmatpush2.bf16.msra.mxu0 0
  %130 = vmatprep.subr.bf16.mxu0 0
  %131 = vmatpush2.bf16.msra.mxu0 0
  %132 = vmatprep.subr.bf16.mxu0 0
  %133 = vmatpush2.bf16.msra.mxu0 0
  %134 = vmatprep.mubr.bf16.mxu0 0
  %135 = vmatmul.mubr.bf16.gmra.mxu0 %v93
  %v136 = vpop.f32.mrf.mxu0
  %v137 = vadd.f32 %v38, %v136
  %v138 = vpop.f32.mrf.mxu0
  %v139 = vpop.f32.mrf.mxu0
  %v140 = vadd.f32 %v38, %v139
  %v141 = vpop.f32.mrf.mxu0
  %142 = vmatprep.mubr.bf16.mxu0 0
  %143 = vmatmul.mubr.bf16.gmra.mxu0 %v96
  %v144 = vpop.f32.mrf.mxu0
  %v145 = vadd.f32 %v38, %v144
  %v146 = vpop.f32.mrf.mxu0
  %v147 = vpop.f32.mrf.mxu0
  %v148 = vadd.f32 %v38, %v147
  %v149 = vpop.f32.mrf.mxu0
  %150 = vdwg.mxu0
  %vm151 = vcmp.ge.f32.partialorder %v137, 0.0
  %vm152 = vcmp.ge.f32.partialorder %v140, 0.0
  %vm153 = vcmp.ge.f32.partialorder %v145, 0.0
  %vm154 = vcmp.ge.f32.partialorder %v148, 0.0
  %v155 = vmul.f32 %v137, 0.2
  %v156 = vmul.f32 %v140, 0.2
  %v157 = vmul.f32 %v145, 0.2
  %v158 = vmul.f32 %v148, 0.2
  %v159 = vsel %vm151, %v137, %v155
  %v160 = vsel %vm152, %v140, %v156
  %v161 = vsel %vm153, %v145, %v157
  %v162 = vsel %vm154, %v148, %v158
  %v163 = vpack.c.bf16 %v160, %v159
  %v164 = vpack.c.bf16 %v162, %v161
  %v167 = vunpack.c.l.b16 %v163
  %v168 = vunpack.c.h.b16 %v163
  %v169 = vunpack.c.l.b16 %v164
  %v170 = vunpack.c.h.b16 %v164
  %v171 = vpack.c.b16 %v167, %v167
  %v172 = vpack.c.b16 %v168, %v168
  %v173 = vpack.c.b16 %v169, %v169
  %v174 = vpack.c.b16 %v170, %v170
  %vm179 = vcmask 519168
  %180 = vst.msk [vmem:[%s3] sm:$0xf] %vm179, %v171
  %181 = vst.msk [vmem:[%s3 + $0x4] sm:$0xf] %vm179, %v172
  %182 = vst.msk [vmem:[%s3 + $0x8] sm:$0xf] %vm179, %v173
  %183 = vst.msk [vmem:[%s3 + $0xc] sm:$0xf] %vm179, %v174
  // Predicated region
  $region14: #{ifnet_forward.71} parent=0 // pred_check
    _
  $region15: #{ifnet_forward.71} parent=0 // pred_check_branch
    %185 = sbr.rel (0) target = $region17
  $region16: #{ifnet_forward.71} parent=0 // pred_region
    _
  $region17: #{ifnet_forward.71} parent=0 // pred_fallthru
    _
  // Predicated region
  $region18: #{ifnet_forward.71} parent=0 // pred_check
    _
  $region19: #{ifnet_forward.71} parent=0 // pred_check_branch
    %187 = sbr.rel (0) target = $region21
  $region20: #{ifnet_forward.71} parent=0 // pred_region
    _
  $region21: #{ifnet_forward.71} parent=0 // pred_fallthru
    _

// kernel: ifnet_forward.72
$region0: #{ifnet_forward.72}
  #allocation0 [shape = 'u32[]', space=smem, size = 0x4, offset = 0x4, fixed_abs, tag = 'smem constant byte address 0x4 - core index']
  #allocation1 [shape = 'u32[144,128]{1,0:T(1,128)}', space=vmem, size = 0x12000, scoped, tag = 'internal scratch']
  %s0 = inlined_call_operand.vmem [shape: bf16[16,576], index: 0, kind: input, shape index: {}]
  %s1 = inlined_call_operand.vmem [shape: bf16[576,128], index: 1, kind: input, shape index: {}]
  %s2 = inlined_call_operand.vmem [shape: f32[1,128], index: 2, kind: input, shape index: {}]
  %s3 = inlined_call_operand.vmem [shape: bf16[16,128], index: 3, kind: output, shape index: {}]
  %s4 = sld [smem:[#allocation0]]
  $region22: #{ifnet_forward.72} parent=0
    _
  %s6 = ssub.s32 1, %s4
  %s7 = scalar_select 0, %s6, %s4
  // Predicated region
  $region2: #{ifnet_forward.72} parent=0 // pred_check
    _
  $region3: #{ifnet_forward.72} parent=0 // pred_check_branch
    %9 = sbr.rel (0) target = $region5
  $region4: #{ifnet_forward.72} parent=0 // pred_region
    _
  $region5: #{ifnet_forward.72} parent=0 // pred_fallthru
    _
  // Predicated region
  $region6: #{ifnet_forward.72} parent=0 // pred_check
    _
  $region7: #{ifnet_forward.72} parent=0 // pred_check_branch
    %11 = sbr.rel (0) target = $region9
  $region8: #{ifnet_forward.72} parent=0 // pred_region
    _
  $region9: #{ifnet_forward.72} parent=0 // pred_fallthru
    _
  // Predicated region
  $region10: #{ifnet_forward.72} parent=0 // pred_check
    _
  $region11: #{ifnet_forward.72} parent=0 // pred_check_branch
    %13 = sbr.rel (0) target = $region13
  $region12: #{ifnet_forward.72} parent=0 // pred_region
    _
  $region13: #{ifnet_forward.72} parent=0 // pred_fallthru
    _
  %v15 = vld [vmem:[%s0] sm:$0xff]
  %v16 = vld [vmem:[%s0 + $0x8] sm:$0xff]
  %v17 = vld [vmem:[%s0 + $0x10] sm:$0xf]
  %v18 = vld [vmem:[%s0 + $0x14] sm:$0xff]
  %v19 = vld [vmem:[%s0 + $0x1c] sm:$0xff]
  %v20 = vld [vmem:[%s0 + $0x24] sm:$0xf]
  %v21 = vld [vmem:[%s1] sm:$0xf]
  %v22 = vld [vmem:[%s1 + $0x4] sm:$0xf]
  %v23 = vld [vmem:[%s1 + $0x8] sm:$0xf]
  %v24 = vld [vmem:[%s1 + $0xc] sm:$0xf]
  %v25 = vld [vmem:[%s1 + $0x10] sm:$0xf]
  %v26 = vld [vmem:[%s1 + $0x14] sm:$0xf]
  %v27 = vld [vmem:[%s1 + $0x18] sm:$0xf]
  %v28 = vld [vmem:[%s1 + $0x1c] sm:$0xf]
  %v29 = vld [vmem:[%s1 + $0x20] sm:$0xf]
  %v30 = vld [vmem:[%s1 + $0x24] sm:$0xf]
  %v31 = vld [vmem:[%s1 + $0x28] sm:$0xf]
  %v32 = vld [vmem:[%s1 + $0x2c] sm:$0xf]
  %v33 = vld [vmem:[%s1 + $0x30] sm:$0xf]
  %v34 = vld [vmem:[%s1 + $0x34] sm:$0xf]
  %v35 = vld [vmem:[%s1 + $0x38] sm:$0xf]
  %v36 = vld [vmem:[%s1 + $0x3c] sm:$0xf]
  %v37 = vld [vmem:[%s1 + $0x40] sm:$0xf]
  %v38 = vld [vmem:[%s1 + $0x44] sm:$0xf]
  %v39 = vld [vmem:[%s1 + $0x48] sm:$0xf]
  %v40 = vld [vmem:[%s1 + $0x4c] sm:$0xf]
  %v41 = vld [vmem:[%s1 + $0x50] sm:$0xf]
  %v42 = vld [vmem:[%s1 + $0x54] sm:$0xf]
  %v43 = vld [vmem:[%s1 + $0x58] sm:$0xf]
  %v44 = vld [vmem:[%s1 + $0x5c] sm:$0xf]
  %v45 = vld [vmem:[%s1 + $0x60] sm:$0xf]
  %v46 = vld [vmem:[%s1 + $0x64] sm:$0xf]
  %v47 = vld [vmem:[%s1 + $0x68] sm:$0xf]
  %v48 = vld [vmem:[%s1 + $0x6c] sm:$0xf]
  %v49 = vld [vmem:[%s1 + $0x70] sm:$0xf]
  %v50 = vld [vmem:[%s1 + $0x74] sm:$0xf]
  %v51 = vld [vmem:[%s1 + $0x78] sm:$0xf]
  %v52 = vld [vmem:[%s1 + $0x7c] sm:$0xf]
  %v53 = vld [vmem:[%s1 + $0x80] sm:$0xf]
  %v54 = vld [vmem:[%s1 + $0x84] sm:$0xf]
  %v55 = vld [vmem:[%s1 + $0x88] sm:$0xf]
  %v56 = vld [vmem:[%s1 + $0x8c] sm:$0xf]
  %v57 = vld [vmem:[%s1 + $0x90] sm:$0xf]
  %v58 = vld [vmem:[%s1 + $0x94] sm:$0xf]
  %v59 = vld [vmem:[%s1 + $0x98] sm:$0xf]
  %v60 = vld [vmem:[%s1 + $0x9c] sm:$0xf]
  %v61 = vld [vmem:[%s1 + $0xa0] sm:$0xf]
  %v62 = vld [vmem:[%s1 + $0xa4] sm:$0xf]
  %v63 = vld [vmem:[%s1 + $0xa8] sm:$0xf]
  %v64 = vld [vmem:[%s1 + $0xac] sm:$0xf]
  %v65 = vld [vmem:[%s1 + $0xb0] sm:$0xf]
  %v66 = vld [vmem:[%s1 + $0xb4] sm:$0xf]
  %v67 = vld [vmem:[%s1 + $0xb8] sm:$0xf]
  %v68 = vld [vmem:[%s1 + $0xbc] sm:$0xf]
  %v69 = vld [vmem:[%s1 + $0xc0] sm:$0xf]
  %v70 = vld [vmem:[%s1 + $0xc4] sm:$0xf]
  %v71 = vld [vmem:[%s1 + $0xc8] sm:$0xf]
  %v72 = vld [vmem:[%s1 + $0xcc] sm:$0xf]
  %v73 = vld [vmem:[%s1 + $0xd0] sm:$0xf]
  %v74 = vld [vmem:[%s1 + $0xd4] sm:$0xf]
  %v75 = vld [vmem:[%s1 + $0xd8] sm:$0xf]
  %v76 = vld [vmem:[%s1 + $0xdc] sm:$0xf]
  %v77 = vld [vmem:[%s1 + $0xe0] sm:$0xf]
  %v78 = vld [vmem:[%s1 + $0xe4] sm:$0xf]
  %v79 = vld [vmem:[%s1 + $0xe8] sm:$0xf]
  %v80 = vld [vmem:[%s1 + $0xec] sm:$0xf]
  %v81 = vld [vmem:[%s1 + $0xf0] sm:$0xf]
  %v82 = vld [vmem:[%s1 + $0xf4] sm:$0xf]
  %v83 = vld [vmem:[%s1 + $0xf8] sm:$0xf]
  %v84 = vld [vmem:[%s1 + $0xfc] sm:$0xf]
  %v85 = vld [vmem:[%s1 + $0x100] sm:$0xf]
  %v86 = vld [vmem:[%s1 + $0x104] sm:$0xf]
  %v87 = vld [vmem:[%s1 + $0x108] sm:$0xf]
  %v88 = vld [vmem:[%s1 + $0x10c] sm:$0xf]
  %v89 = vld [vmem:[%s1 + $0x110] sm:$0xf]
  %v90 = vld [vmem:[%s1 + $0x114] sm:$0xf]
  %v91 = vld [vmem:[%s1 + $0x118] sm:$0xf]
  %v92 = vld [vmem:[%s1 + $0x11c] sm:$0xf]
  %v93 = vld [vmem:[%s2] sm:$0x1]
  %v95 = vlaneseq
  %v96 = vshrl.u32 %v95, 7
  %v97 = vsub.s32 0, %v96
  %v98 = vrot.slane %v93, %v97
  %v106 = vunpack.c.l.b16 %v15
  %v107 = vunpack.c.h.b16 %v15
  %v108 = vunpack.c.l.b16 %v16
  %v109 = vunpack.c.h.b16 %v16
  %v110 = vunpack.c.l.b16 %v17
  %v111 = vunpack.c.l.b16 %v18
  %v112 = vunpack.c.h.b16 %v18
  %v113 = vunpack.c.l.b16 %v19
  %v114 = vunpack.c.h.b16 %v19
  %v115 = vunpack.c.l.b16 %v20
  %v116 = vpack.c.b16 %v111, %v106
  %v117 = vpack.c.b16 %v112, %v107
  %v118 = vpack.c.b16 %v113, %v108
  %v119 = vpack.c.b16 %v114, %v109
  %v120 = vpack.c.b16 %v115, %v110
  %v197 = vunpack.c.l.b16 %v21
  %v198 = vunpack.c.l.b16 %v22
  %v199 = vunpack.c.l.b16 %v23
  %v200 = vunpack.c.l.b16 %v24
  %v201 = vunpack.c.l.b16 %v25
  %v202 = vunpack.c.l.b16 %v26
  %v203 = vunpack.c.l.b16 %v27
  %v204 = vunpack.c.l.b16 %v28
  %v205 = vunpack.c.l.b16 %v29
  %v206 = vunpack.c.l.b16 %v30
  %v207 = vunpack.c.l.b16 %v31
  %v208 = vunpack.c.l.b16 %v32
  %v209 = vunpack.c.l.b16 %v33
  %v210 = vunpack.c.l.b16 %v34
  %v211 = vunpack.c.l.b16 %v35
  %v212 = vunpack.c.l.b16 %v36
  %v213 = vunpack.c.l.b16 %v37
  %v214 = vunpack.c.l.b16 %v38
  %v215 = vunpack.c.l.b16 %v39
  %v216 = vunpack.c.l.b16 %v40
  %v217 = vunpack.c.l.b16 %v41
  %v218 = vunpack.c.l.b16 %v42
  %v219 = vunpack.c.l.b16 %v43
  %v220 = vunpack.c.l.b16 %v44
  %v221 = vunpack.c.l.b16 %v45
  %v222 = vunpack.c.l.b16 %v46
  %v223 = vunpack.c.l.b16 %v47
  %v224 = vunpack.c.l.b16 %v48
  %v225 = vunpack.c.l.b16 %v49
  %v226 = vunpack.c.l.b16 %v50
  %v227 = vunpack.c.l.b16 %v51
  %v228 = vunpack.c.l.b16 %v52
  %v229 = vunpack.c.l.b16 %v53
  %v230 = vunpack.c.l.b16 %v54
  %v231 = vunpack.c.l.b16 %v55
  %v232 = vunpack.c.l.b16 %v56
  %v233 = vunpack.c.l.b16 %v57
  %v234 = vunpack.c.l.b16 %v58
  %v235 = vunpack.c.l.b16 %v59
  %v236 = vunpack.c.l.b16 %v60
  %v237 = vunpack.c.l.b16 %v61
  %v238 = vunpack.c.l.b16 %v62
  %v239 = vunpack.c.l.b16 %v63
  %v240 = vunpack.c.l.b16 %v64
  %v241 = vunpack.c.l.b16 %v65
  %v242 = vunpack.c.l.b16 %v66
  %v243 = vunpack.c.l.b16 %v67
  %v244 = vunpack.c.l.b16 %v68
  %v245 = vunpack.c.l.b16 %v69
  %v246 = vunpack.c.l.b16 %v70
  %v247 = vunpack.c.l.b16 %v71
  %v248 = vunpack.c.l.b16 %v72
  %v249 = vunpack.c.l.b16 %v73
  %v250 = vunpack.c.l.b16 %v74
  %v251 = vunpack.c.l.b16 %v75
  %v252 = vunpack.c.l.b16 %v76
  %v253 = vunpack.c.l.b16 %v77
  %v254 = vunpack.c.l.b16 %v78
  %v255 = vunpack.c.l.b16 %v79
  %v256 = vunpack.c.l.b16 %v80
  %v257 = vunpack.c.l.b16 %v81
  %v258 = vunpack.c.l.b16 %v82
  %v259 = vunpack.c.l.b16 %v83
  %v260 = vunpack.c.l.b16 %v84
  %v261 = vunpack.c.l.b16 %v85
  %v262 = vunpack.c.l.b16 %v86
  %v263 = vunpack.c.l.b16 %v87
  %v264 = vunpack.c.l.b16 %v88
  %v265 = vunpack.c.l.b16 %v89
  %v266 = vunpack.c.l.b16 %v90
  %v267 = vunpack.c.l.b16 %v91
  %v268 = vunpack.c.l.b16 %v92
  %v269 = vpack.c.b16 %v198, %v197
  %v270 = vpack.c.b16 %v200, %v199
  %v271 = vpack.c.b16 %v202, %v201
  %v272 = vpack.c.b16 %v204, %v203
  %v273 = vpack.c.b16 %v206, %v205
  %v274 = vpack.c.b16 %v208, %v207
  %v275 = vpack.c.b16 %v210, %v209
  %v276 = vpack.c.b16 %v212, %v211
  %v277 = vpack.c.b16 %v214, %v213
  %v278 = vpack.c.b16 %v216, %v215
  %v279 = vpack.c.b16 %v218, %v217
  %v280 = vpack.c.b16 %v220, %v219
  %v281 = vpack.c.b16 %v222, %v221
  %v282 = vpack.c.b16 %v224, %v223
  %v283 = vpack.c.b16 %v226, %v225
  %v284 = vpack.c.b16 %v228, %v227
  %v285 = vpack.c.b16 %v230, %v229
  %v286 = vpack.c.b16 %v232, %v231
  %v287 = vpack.c.b16 %v234, %v233
  %v288 = vpack.c.b16 %v236, %v235
  %v289 = vpack.c.b16 %v238, %v237
  %v290 = vpack.c.b16 %v240, %v239
  %v291 = vpack.c.b16 %v242, %v241
  %v292 = vpack.c.b16 %v244, %v243
  %v293 = vpack.c.b16 %v246, %v245
  %v294 = vpack.c.b16 %v248, %v247
  %v295 = vpack.c.b16 %v250, %v249
  %v296 = vpack.c.b16 %v252, %v251
  %v297 = vpack.c.b16 %v254, %v253
  %v298 = vpack.c.b16 %v256, %v255
  %v299 = vpack.c.b16 %v258, %v257
  %v300 = vpack.c.b16 %v260, %v259
  %v301 = vpack.c.b16 %v262, %v261
  %v302 = vpack.c.b16 %v264, %v263
  %v303 = vpack.c.b16 %v266, %v265
  %v304 = vpack.c.b16 %v268, %v267
  %vm341 = vcmask 523264
  %v343 = vsel %vm341, %v120, 0
  %345 = vmatprep.subr.bf16.mxu0 0
  %346 = vmatpush1.bf16.msra.mxu0 %v276
  %347 = vmatprep.subr.bf16.mxu0 0
  %348 = vmatpush1.bf16.msra.mxu0 %v275
  %349 = vmatprep.subr.bf16.mxu0 0
  %350 = vmatpush1.bf16.msra.mxu0 %v274
  %351 = vmatprep.subr.bf16.mxu0 0
  %352 = vmatpush1.bf16.msra.mxu0 %v273
  %353 = vmatprep.subr.bf16.mxu0 0
  %354 = vmatpush1.bf16.msra.mxu0 %v272
  %355 = vmatprep.subr.bf16.mxu0 0
  %356 = vmatpush1.bf16.msra.mxu0 %v271
  %357 = vmatprep.subr.bf16.mxu0 0
  %358 = vmatpush1.bf16.msra.mxu0 %v270
  %359 = vmatprep.subr.bf16.mxu0 0
  %360 = vmatpush1.bf16.msra.mxu0 %v269
  %361 = vmatprep.subr.bf16.mxu0 0
  %362 = vmatpush2.bf16.msra.mxu0 %v284
  %363 = vmatprep.subr.bf16.mxu0 0
  %364 = vmatpush2.bf16.msra.mxu0 %v283
  %365 = vmatprep.subr.bf16.mxu0 0
  %366 = vmatpush2.bf16.msra.mxu0 %v282
  %367 = vmatprep.subr.bf16.mxu0 0
  %368 = vmatpush2.bf16.msra.mxu0 %v281
  %369 = vmatprep.subr.bf16.mxu0 0
  %370 = vmatpush2.bf16.msra.mxu0 %v280
  %371 = vmatprep.subr.bf16.mxu0 0
  %372 = vmatpush2.bf16.msra.mxu0 %v279
  %373 = vmatprep.subr.bf16.mxu0 0
  %374 = vmatpush2.bf16.msra.mxu0 %v278
  %375 = vmatprep.subr.bf16.mxu0 0
  %376 = vmatpush2.bf16.msra.mxu0 %v277
  %377 = vmatprep.mubr.bf16.mxu0 %v117
  %378 = vmatmul.mubr.bf16.gmra.mxu0 %v116
  %v379 = vpop.f32.mrf.mxu0
  %v380 = vadd.f32 %v98, %v379
  %v381 = vpop.f32.mrf.mxu0
  %v382 = vpop.f32.mrf.mxu0
  %v383 = vadd.f32 %v98, %v382
  %v384 = vpop.f32.mrf.mxu0
  %385 = vdwg.mxu0
  %386 = vmatprep.subr.bf16.mxu0 0
  %387 = vmatpush1.bf16.msra.mxu0 %v292
  %388 = vmatprep.subr.bf16.mxu0 0
  %389 = vmatpush1.bf16.msra.mxu0 %v291
  %390 = vmatprep.subr.bf16.mxu0 0
  %391 = vmatpush1.bf16.msra.mxu0 %v290
  %392 = vmatprep.subr.bf16.mxu0 0
  %393 = vmatpush1.bf16.msra.mxu0 %v289
  %394 = vmatprep.subr.bf16.mxu0 0
  %395 = vmatpush1.bf16.msra.mxu0 %v288
  %396 = vmatprep.subr.bf16.mxu0 0
  %397 = vmatpush1.bf16.msra.mxu0 %v287
  %398 = vmatprep.subr.bf16.mxu0 0
  %399 = vmatpush1.bf16.msra.mxu0 %v286
  %400 = vmatprep.subr.bf16.mxu0 0
  %401 = vmatpush1.bf16.msra.mxu0 %v285
  %402 = vmatprep.subr.bf16.mxu0 0
  %403 = vmatpush2.bf16.msra.mxu0 %v300
  %404 = vmatprep.subr.bf16.mxu0 0
  %405 = vmatpush2.bf16.msra.mxu0 %v299
  %406 = vmatprep.subr.bf16.mxu0 0
  %407 = vmatpush2.bf16.msra.mxu0 %v298
  %408 = vmatprep.subr.bf16.mxu0 0
  %409 = vmatpush2.bf16.msra.mxu0 %v297
  %410 = vmatprep.subr.bf16.mxu0 0
  %411 = vmatpush2.bf16.msra.mxu0 %v296
  %412 = vmatprep.subr.bf16.mxu0 0
  %413 = vmatpush2.bf16.msra.mxu0 %v295
  %414 = vmatprep.subr.bf16.mxu0 0
  %415 = vmatpush2.bf16.msra.mxu0 %v294
  %416 = vmatprep.subr.bf16.mxu0 0
  %417 = vmatpush2.bf16.msra.mxu0 %v293
  %418 = vmatprep.mubr.bf16.mxu0 %v119
  %419 = vmatmul.mubr.bf16.gmra.mxu0 %v118
  %v420 = vpop.f32.mrf.mxu0
  %v421 = vadd.f32 %v380, %v420
  %v422 = vpop.f32.mrf.mxu0
  %v423 = vpop.f32.mrf.mxu0
  %v424 = vadd.f32 %v383, %v423
  %v425 = vpop.f32.mrf.mxu0
  %426 = vdwg.mxu0
  %427 = vmatprep.subr.bf16.mxu0 0
  %428 = vmatpush1.bf16.msra.mxu0 0
  %429 = vmatprep.subr.bf16.mxu0 0
  %430 = vmatpush1.bf16.msra.mxu0 0
  %431 = vmatprep.subr.bf16.mxu0 0
  %432 = vmatpush1.bf16.msra.mxu0 0
  %433 = vmatprep.subr.bf16.mxu0 0
  %434 = vmatpush1.bf16.msra.mxu0 0
  %435 = vmatprep.subr.bf16.mxu0 0
  %436 = vmatpush1.bf16.msra.mxu0 %v304
  %437 = vmatprep.subr.bf16.mxu0 0
  %438 = vmatpush1.bf16.msra.mxu0 %v303
  %439 = vmatprep.subr.bf16.mxu0 0
  %440 = vmatpush1.bf16.msra.mxu0 %v302
  %441 = vmatprep.subr.bf16.mxu0 0
  %442 = vmatpush1.bf16.msra.mxu0 %v301
  %443 = vmatprep.subr.bf16.mxu0 0
  %444 = vmatpush2.bf16.msra.mxu0 0
  %445 = vmatprep.subr.bf16.mxu0 0
  %446 = vmatpush2.bf16.msra.mxu0 0
  %447 = vmatprep.subr.bf16.mxu0 0
  %448 = vmatpush2.bf16.msra.mxu0 0
  %449 = vmatprep.subr.bf16.mxu0 0
  %450 = vmatpush2.bf16.msra.mxu0 0
  %451 = vmatprep.subr.bf16.mxu0 0
  %452 = vmatpush2.bf16.msra.mxu0 0
  %453 = vmatprep.subr.bf16.mxu0 0
  %454 = vmatpush2.bf16.msra.mxu0 0
  %455 = vmatprep.subr.bf16.mxu0 0
  %456 = vmatpush2.bf16.msra.mxu0 0
  %457 = vmatprep.subr.bf16.mxu0 0
  %458 = vmatpush2.bf16.msra.mxu0 0
  %459 = vmatprep.mubr.bf16.mxu0 0
  %460 = vmatmul.mubr.bf16.gmra.mxu0 %v343
  %v461 = vpop.f32.mrf.mxu0
  %v462 = vadd.f32 %v421, %v461
  %v463 = vpop.f32.mrf.mxu0
  %v464 = vpop.f32.mrf.mxu0
  %v465 = vadd.f32 %v424, %v464
  %v466 = vpop.f32.mrf.mxu0
  %467 = vdwg.mxu0
  %vm468 = vcmp.ge.f32.partialorder %v462, 0.0
  %vm469 = vcmp.ge.f32.partialorder %v465, 0.0
  %v470 = vmul.f32 %v462, 0.2
  %v471 = vmul.f32 %v465, 0.2
  %v472 = vsel %vm468, %v462, %v470
  %v473 = vsel %vm469, %v465, %v471
  %v474 = vpack.c.bf16 %v473, %v472
  %v476 = vunpack.c.l.b16 %v474
  %v477 = vunpack.c.h.b16 %v474
  %v478 = vpack.c.b16 %v476, %v476
  %v479 = vpack.c.b16 %v477, %v477
  %482 = vst [vmem:[%s3] sm:$0xf] %v478
  %483 = vst [vmem:[%s3 + $0x4] sm:$0xf] %v479
  // Predicated region
  $region14: #{ifnet_forward.72} parent=0 // pred_check
    _
  $region15: #{ifnet_forward.72} parent=0 // pred_check_branch
    %485 = sbr.rel (0) target = $region17
  $region16: #{ifnet_forward.72} parent=0 // pred_region
    _
  $region17: #{ifnet_forward.72} parent=0 // pred_fallthru
    _
  // Predicated region
  $region18: #{ifnet_forward.72} parent=0 // pred_check
    _
  $region19: #{ifnet_forward.72} parent=0 // pred_check_branch
    %487 = sbr.rel (0) target = $region21
  $region20: #{ifnet_forward.72} parent=0 // pred_region
    _
  $region21: #{ifnet_forward.72} parent=0 // pred_fallthru
    _

// kernel: ifnet_forward.81
$region0: #{ifnet_forward.81}
  #allocation0 [shape = 'u32[]', space=smem, size = 0x4, offset = 0x4, fixed_abs, tag = 'smem constant byte address 0x4 - core index']
  #allocation1 [shape = 'u32[144,128]{1,0:T(1,128)}', space=vmem, size = 0x12000, scoped, tag = 'internal scratch']
  %s0 = inlined_call_operand.vmem [shape: bf16[16,512], index: 0, kind: input, shape index: {}]
  %s1 = inlined_call_operand.vmem [shape: bf16[512,24], index: 1, kind: input, shape index: {}]
  %s2 = inlined_call_operand.vmem [shape: f32[1,24], index: 2, kind: input, shape index: {}]
  %s3 = inlined_call_operand.vmem [shape: f32[16,24], index: 3, kind: output, shape index: {}]
  %s4 = sld [smem:[#allocation0]]
  $region22: #{ifnet_forward.81} parent=0
    _
  %s6 = ssub.s32 1, %s4
  %s7 = scalar_select 0, %s6, %s4
  // Predicated region
  $region2: #{ifnet_forward.81} parent=0 // pred_check
    _
  $region3: #{ifnet_forward.81} parent=0 // pred_check_branch
    %9 = sbr.rel (0) target = $region5
  $region4: #{ifnet_forward.81} parent=0 // pred_region
    _
  $region5: #{ifnet_forward.81} parent=0 // pred_fallthru
    _
  // Predicated region
  $region6: #{ifnet_forward.81} parent=0 // pred_check
    _
  $region7: #{ifnet_forward.81} parent=0 // pred_check_branch
    %11 = sbr.rel (0) target = $region9
  $region8: #{ifnet_forward.81} parent=0 // pred_region
    _
  $region9: #{ifnet_forward.81} parent=0 // pred_fallthru
    _
  // Predicated region
  $region10: #{ifnet_forward.81} parent=0 // pred_check
    _
  $region11: #{ifnet_forward.81} parent=0 // pred_check_branch
    %13 = sbr.rel (0) target = $region13
  $region12: #{ifnet_forward.81} parent=0 // pred_region
    _
  $region13: #{ifnet_forward.81} parent=0 // pred_fallthru
    _
  %v15 = vld [vmem:[%s0] sm:$0xff]
  %v16 = vld [vmem:[%s0 + $0x8] sm:$0xff]
  %v17 = vld [vmem:[%s0 + $0x10] sm:$0xff]
  %v18 = vld [vmem:[%s0 + $0x18] sm:$0xff]
  %v19 = vld [vmem:[%s1] sm:$0xf]
  %v20 = vld [vmem:[%s1 + $0x4] sm:$0xf]
  %v21 = vld [vmem:[%s1 + $0x8] sm:$0xf]
  %v22 = vld [vmem:[%s1 + $0xc] sm:$0xf]
  %v23 = vld [vmem:[%s1 + $0x10] sm:$0xf]
  %v24 = vld [vmem:[%s1 + $0x14] sm:$0xf]
  %v25 = vld [vmem:[%s1 + $0x18] sm:$0xf]
  %v26 = vld [vmem:[%s1 + $0x1c] sm:$0xf]
  %v27 = vld [vmem:[%s1 + $0x20] sm:$0xf]
  %v28 = vld [vmem:[%s1 + $0x24] sm:$0xf]
  %v29 = vld [vmem:[%s1 + $0x28] sm:$0xf]
  %v30 = vld [vmem:[%s1 + $0x2c] sm:$0xf]
  %v31 = vld [vmem:[%s1 + $0x30] sm:$0xf]
  %v32 = vld [vmem:[%s1 + $0x34] sm:$0xf]
  %v33 = vld [vmem:[%s1 + $0x38] sm:$0xf]
  %v34 = vld [vmem:[%s1 + $0x3c] sm:$0xf]
  %v35 = vld [vmem:[%s1 + $0x40] sm:$0xf]
  %v36 = vld [vmem:[%s1 + $0x44] sm:$0xf]
  %v37 = vld [vmem:[%s1 + $0x48] sm:$0xf]
  %v38 = vld [vmem:[%s1 + $0x4c] sm:$0xf]
  %v39 = vld [vmem:[%s1 + $0x50] sm:$0xf]
  %v40 = vld [vmem:[%s1 + $0x54] sm:$0xf]
  %v41 = vld [vmem:[%s1 + $0x58] sm:$0xf]
  %v42 = vld [vmem:[%s1 + $0x5c] sm:$0xf]
  %v43 = vld [vmem:[%s1 + $0x60] sm:$0xf]
  %v44 = vld [vmem:[%s1 + $0x64] sm:$0xf]
  %v45 = vld [vmem:[%s1 + $0x68] sm:$0xf]
  %v46 = vld [vmem:[%s1 + $0x6c] sm:$0xf]
  %v47 = vld [vmem:[%s1 + $0x70] sm:$0xf]
  %v48 = vld [vmem:[%s1 + $0x74] sm:$0xf]
  %v49 = vld [vmem:[%s1 + $0x78] sm:$0xf]
  %v50 = vld [vmem:[%s1 + $0x7c] sm:$0xf]
  %v51 = vld [vmem:[%s1 + $0x80] sm:$0xf]
  %v52 = vld [vmem:[%s1 + $0x84] sm:$0xf]
  %v53 = vld [vmem:[%s1 + $0x88] sm:$0xf]
  %v54 = vld [vmem:[%s1 + $0x8c] sm:$0xf]
  %v55 = vld [vmem:[%s1 + $0x90] sm:$0xf]
  %v56 = vld [vmem:[%s1 + $0x94] sm:$0xf]
  %v57 = vld [vmem:[%s1 + $0x98] sm:$0xf]
  %v58 = vld [vmem:[%s1 + $0x9c] sm:$0xf]
  %v59 = vld [vmem:[%s1 + $0xa0] sm:$0xf]
  %v60 = vld [vmem:[%s1 + $0xa4] sm:$0xf]
  %v61 = vld [vmem:[%s1 + $0xa8] sm:$0xf]
  %v62 = vld [vmem:[%s1 + $0xac] sm:$0xf]
  %v63 = vld [vmem:[%s1 + $0xb0] sm:$0xf]
  %v64 = vld [vmem:[%s1 + $0xb4] sm:$0xf]
  %v65 = vld [vmem:[%s1 + $0xb8] sm:$0xf]
  %v66 = vld [vmem:[%s1 + $0xbc] sm:$0xf]
  %v67 = vld [vmem:[%s1 + $0xc0] sm:$0xf]
  %v68 = vld [vmem:[%s1 + $0xc4] sm:$0xf]
  %v69 = vld [vmem:[%s1 + $0xc8] sm:$0xf]
  %v70 = vld [vmem:[%s1 + $0xcc] sm:$0xf]
  %v71 = vld [vmem:[%s1 + $0xd0] sm:$0xf]
  %v72 = vld [vmem:[%s1 + $0xd4] sm:$0xf]
  %v73 = vld [vmem:[%s1 + $0xd8] sm:$0xf]
  %v74 = vld [vmem:[%s1 + $0xdc] sm:$0xf]
  %v75 = vld [vmem:[%s1 + $0xe0] sm:$0xf]
  %v76 = vld [vmem:[%s1 + $0xe4] sm:$0xf]
  %v77 = vld [vmem:[%s1 + $0xe8] sm:$0xf]
  %v78 = vld [vmem:[%s1 + $0xec] sm:$0xf]
  %v79 = vld [vmem:[%s1 + $0xf0] sm:$0xf]
  %v80 = vld [vmem:[%s1 + $0xf4] sm:$0xf]
  %v81 = vld [vmem:[%s1 + $0xf8] sm:$0xf]
  %v82 = vld [vmem:[%s1 + $0xfc] sm:$0xf]
  %v83 = vld [vmem:[%s2] sm:$0x1]
  %v85 = vlaneseq
  %v86 = vshrl.u32 %v85, 7
  %v87 = vsub.s32 0, %v86
  %v88 = vrot.slane %v83, %v87
  %v94 = vunpack.c.l.b16 %v15
  %v95 = vunpack.c.h.b16 %v15
  %v96 = vunpack.c.l.b16 %v16
  %v97 = vunpack.c.h.b16 %v16
  %v98 = vunpack.c.l.b16 %v17
  %v99 = vunpack.c.h.b16 %v17
  %v100 = vunpack.c.l.b16 %v18
  %v101 = vunpack.c.h.b16 %v18
  %v102 = vpack.c.b16 %v98, %v94
  %v103 = vpack.c.b16 %v99, %v95
  %v104 = vpack.c.b16 %v100, %v96
  %v105 = vpack.c.b16 %v101, %v97
  %v174 = vunpack.c.l.b16 %v19
  %v175 = vunpack.c.l.b16 %v20
  %v176 = vunpack.c.l.b16 %v21
  %v177 = vunpack.c.l.b16 %v22
  %v178 = vunpack.c.l.b16 %v23
  %v179 = vunpack.c.l.b16 %v24
  %v180 = vunpack.c.l.b16 %v25
  %v181 = vunpack.c.l.b16 %v26
  %v182 = vunpack.c.l.b16 %v27
  %v183 = vunpack.c.l.b16 %v28
  %v184 = vunpack.c.l.b16 %v29
  %v185 = vunpack.c.l.b16 %v30
  %v186 = vunpack.c.l.b16 %v31
  %v187 = vunpack.c.l.b16 %v32
  %v188 = vunpack.c.l.b16 %v33
  %v189 = vunpack.c.l.b16 %v34
  %v190 = vunpack.c.l.b16 %v35
  %v191 = vunpack.c.l.b16 %v36
  %v192 = vunpack.c.l.b16 %v37
  %v193 = vunpack.c.l.b16 %v38
  %v194 = vunpack.c.l.b16 %v39
  %v195 = vunpack.c.l.b16 %v40
  %v196 = vunpack.c.l.b16 %v41
  %v197 = vunpack.c.l.b16 %v42
  %v198 = vunpack.c.l.b16 %v43
  %v199 = vunpack.c.l.b16 %v44
  %v200 = vunpack.c.l.b16 %v45
  %v201 = vunpack.c.l.b16 %v46
  %v202 = vunpack.c.l.b16 %v47
  %v203 = vunpack.c.l.b16 %v48
  %v204 = vunpack.c.l.b16 %v49
  %v205 = vunpack.c.l.b16 %v50
  %v206 = vunpack.c.l.b16 %v51
  %v207 = vunpack.c.l.b16 %v52
  %v208 = vunpack.c.l.b16 %v53
  %v209 = vunpack.c.l.b16 %v54
  %v210 = vunpack.c.l.b16 %v55
  %v211 = vunpack.c.l.b16 %v56
  %v212 = vunpack.c.l.b16 %v57
  %v213 = vunpack.c.l.b16 %v58
  %v214 = vunpack.c.l.b16 %v59
  %v215 = vunpack.c.l.b16 %v60
  %v216 = vunpack.c.l.b16 %v61
  %v217 = vunpack.c.l.b16 %v62
  %v218 = vunpack.c.l.b16 %v63
  %v219 = vunpack.c.l.b16 %v64
  %v220 = vunpack.c.l.b16 %v65
  %v221 = vunpack.c.l.b16 %v66
  %v222 = vunpack.c.l.b16 %v67
  %v223 = vunpack.c.l.b16 %v68
  %v224 = vunpack.c.l.b16 %v69
  %v225 = vunpack.c.l.b16 %v70
  %v226 = vunpack.c.l.b16 %v71
  %v227 = vunpack.c.l.b16 %v72
  %v228 = vunpack.c.l.b16 %v73
  %v229 = vunpack.c.l.b16 %v74
  %v230 = vunpack.c.l.b16 %v75
  %v231 = vunpack.c.l.b16 %v76
  %v232 = vunpack.c.l.b16 %v77
  %v233 = vunpack.c.l.b16 %v78
  %v234 = vunpack.c.l.b16 %v79
  %v235 = vunpack.c.l.b16 %v80
  %v236 = vunpack.c.l.b16 %v81
  %v237 = vunpack.c.l.b16 %v82
  %v238 = vpack.c.b16 %v175, %v174
  %v239 = vpack.c.b16 %v177, %v176
  %v240 = vpack.c.b16 %v179, %v178
  %v241 = vpack.c.b16 %v181, %v180
  %v242 = vpack.c.b16 %v183, %v182
  %v243 = vpack.c.b16 %v185, %v184
  %v244 = vpack.c.b16 %v187, %v186
  %v245 = vpack.c.b16 %v189, %v188
  %v246 = vpack.c.b16 %v191, %v190
  %v247 = vpack.c.b16 %v193, %v192
  %v248 = vpack.c.b16 %v195, %v194
  %v249 = vpack.c.b16 %v197, %v196
  %v250 = vpack.c.b16 %v199, %v198
  %v251 = vpack.c.b16 %v201, %v200
  %v252 = vpack.c.b16 %v203, %v202
  %v253 = vpack.c.b16 %v205, %v204
  %v254 = vpack.c.b16 %v207, %v206
  %v255 = vpack.c.b16 %v209, %v208
  %v256 = vpack.c.b16 %v211, %v210
  %v257 = vpack.c.b16 %v213, %v212
  %v258 = vpack.c.b16 %v215, %v214
  %v259 = vpack.c.b16 %v217, %v216
  %v260 = vpack.c.b16 %v219, %v218
  %v261 = vpack.c.b16 %v221, %v220
  %v262 = vpack.c.b16 %v223, %v222
  %v263 = vpack.c.b16 %v225, %v224
  %v264 = vpack.c.b16 %v227, %v226
  %v265 = vpack.c.b16 %v229, %v228
  %v266 = vpack.c.b16 %v231, %v230
  %v267 = vpack.c.b16 %v233, %v232
  %v268 = vpack.c.b16 %v235, %v234
  %v269 = vpack.c.b16 %v237, %v236
  %302 = vmatprep.subr.bf16.mxu0 0
  %303 = vmatpush1.bf16.msra.mxu0 %v245
  %304 = vmatprep.subr.bf16.mxu0 0
  %305 = vmatpush1.bf16.msra.mxu0 %v244
  %306 = vmatprep.subr.bf16.mxu0 0
  %307 = vmatpush1.bf16.msra.mxu0 %v243
  %308 = vmatprep.subr.bf16.mxu0 0
  %309 = vmatpush1.bf16.msra.mxu0 %v242
  %310 = vmatprep.subr.bf16.mxu0 0
  %311 = vmatpush1.bf16.msra.mxu0 %v241
  %312 = vmatprep.subr.bf16.mxu0 0
  %313 = vmatpush1.bf16.msra.mxu0 %v240
  %314 = vmatprep.subr.bf16.mxu0 0
  %315 = vmatpush1.bf16.msra.mxu0 %v239
  %316 = vmatprep.subr.bf16.mxu0 0
  %317 = vmatpush1.bf16.msra.mxu0 %v238
  %318 = vmatprep.subr.bf16.mxu0 0
  %319 = vmatpush2.bf16.msra.mxu0 %v253
  %320 = vmatprep.subr.bf16.mxu0 0
  %321 = vmatpush2.bf16.msra.mxu0 %v252
  %322 = vmatprep.subr.bf16.mxu0 0
  %323 = vmatpush2.bf16.msra.mxu0 %v251
  %324 = vmatprep.subr.bf16.mxu0 0
  %325 = vmatpush2.bf16.msra.mxu0 %v250
  %326 = vmatprep.subr.bf16.mxu0 0
  %327 = vmatpush2.bf16.msra.mxu0 %v249
  %328 = vmatprep.subr.bf16.mxu0 0
  %329 = vmatpush2.bf16.msra.mxu0 %v248
  %330 = vmatprep.subr.bf16.mxu0 0
  %331 = vmatpush2.bf16.msra.mxu0 %v247
  %332 = vmatprep.subr.bf16.mxu0 0
  %333 = vmatpush2.bf16.msra.mxu0 %v246
  %334 = vmatprep.mubr.bf16.mxu0 %v103
  %335 = vmatmul.mubr.bf16.gmra.mxu0 %v102
  %v336 = vpop.f32.mrf.mxu0
  %v337 = vadd.f32 %v88, %v336
  %v338 = vpop.f32.mrf.mxu0
  %v339 = vpop.f32.mrf.mxu0
  %v340 = vadd.f32 %v88, %v339
  %v341 = vpop.f32.mrf.mxu0
  %342 = vdwg.mxu0
  %343 = vmatprep.subr.bf16.mxu0 0
  %344 = vmatpush1.bf16.msra.mxu0 %v261
  %345 = vmatprep.subr.bf16.mxu0 0
  %346 = vmatpush1.bf16.msra.mxu0 %v260
  %347 = vmatprep.subr.bf16.mxu0 0
  %348 = vmatpush1.bf16.msra.mxu0 %v259
  %349 = vmatprep.subr.bf16.mxu0 0
  %350 = vmatpush1.bf16.msra.mxu0 %v258
  %351 = vmatprep.subr.bf16.mxu0 0
  %352 = vmatpush1.bf16.msra.mxu0 %v257
  %353 = vmatprep.subr.bf16.mxu0 0
  %354 = vmatpush1.bf16.msra.mxu0 %v256
  %355 = vmatprep.subr.bf16.mxu0 0
  %356 = vmatpush1.bf16.msra.mxu0 %v255
  %357 = vmatprep.subr.bf16.mxu0 0
  %358 = vmatpush1.bf16.msra.mxu0 %v254
  %359 = vmatprep.subr.bf16.mxu0 0
  %360 = vmatpush2.bf16.msra.mxu0 %v269
  %361 = vmatprep.subr.bf16.mxu0 0
  %362 = vmatpush2.bf16.msra.mxu0 %v268
  %363 = vmatprep.subr.bf16.mxu0 0
  %364 = vmatpush2.bf16.msra.mxu0 %v267
  %365 = vmatprep.subr.bf16.mxu0 0
  %366 = vmatpush2.bf16.msra.mxu0 %v266
  %367 = vmatprep.subr.bf16.mxu0 0
  %368 = vmatpush2.bf16.msra.mxu0 %v265
  %369 = vmatprep.subr.bf16.mxu0 0
  %370 = vmatpush2.bf16.msra.mxu0 %v264
  %371 = vmatprep.subr.bf16.mxu0 0
  %372 = vmatpush2.bf16.msra.mxu0 %v263
  %373 = vmatprep.subr.bf16.mxu0 0
  %374 = vmatpush2.bf16.msra.mxu0 %v262
  %375 = vmatprep.mubr.bf16.mxu0 %v105
  %376 = vmatmul.mubr.bf16.gmra.mxu0 %v104
  %v377 = vpop.f32.mrf.mxu0
  %v378 = vadd.f32 %v337, %v377
  %v379 = vpop.f32.mrf.mxu0
  %v380 = vpop.f32.mrf.mxu0
  %v381 = vadd.f32 %v340, %v380
  %v382 = vpop.f32.mrf.mxu0
  %383 = vdwg.mxu0
  %vm384 = vcmask 195584
  %385 = vst.msk [vmem:[%s3] sm:$0xff] %vm384, %v378
  %386 = vst.msk [vmem:[%s3 + $0x8] sm:$0xff] %vm384, %v381
  // Predicated region
  $region14: #{ifnet_forward.81} parent=0 // pred_check
    _
  $region15: #{ifnet_forward.81} parent=0 // pred_check_branch
    %388 = sbr.rel (0) target = $region17
  $region16: #{ifnet_forward.81} parent=0 // pred_region
    _
  $region17: #{ifnet_forward.81} parent=0 // pred_fallthru
    _
  // Predicated region
  $region18: #{ifnet_forward.81} parent=0 // pred_check
    _
  $region19: #{ifnet_forward.81} parent=0 // pred_check_branch
    %390 = sbr.rel (0) target = $region21
  $region20: #{ifnet_forward.81} parent=0 // pred_region
    _
  $region21: #{ifnet_forward.81} parent=0 // pred_fallthru
    _

// kernel: ifnet_forward.73
$region0: #{ifnet_forward.73}
  #allocation0 [shape = 'u32[]', space=smem, size = 0x4, offset = 0x4, fixed_abs, tag = 'smem constant byte address 0x4 - core index']
  #allocation1 [shape = 'u32[144,128]{1,0:T(1,128)}', space=vmem, size = 0x12000, scoped, tag = 'internal scratch']
  %s0 = inlined_call_operand.vmem [shape: bf16[16,1152], index: 0, kind: input, shape index: {}]
  %s1 = inlined_call_operand.vmem [shape: bf16[1152,128], index: 1, kind: input, shape index: {}]
  %s2 = inlined_call_operand.vmem [shape: f32[1,128], index: 2, kind: input, shape index: {}]
  %s3 = inlined_call_operand.vmem [shape: f32[1,128], index: 3, kind: input, shape index: {}]
  %s4 = inlined_call_operand.vmem [shape: bf16[16,128], index: 4, kind: input, shape index: {}]
  %s5 = inlined_call_operand.vmem [shape: bf16[16,128], index: 5, kind: output, shape index: {}]
  %s6 = sld [smem:[#allocation0]]
  $region30: #{ifnet_forward.73} parent=0
    _
  %s8 = ssub.s32 1, %s6
  %s9 = scalar_select 0, %s8, %s6
  // Predicated region
  $region2: #{ifnet_forward.73} parent=0 // pred_check
    _
  $region3: #{ifnet_forward.73} parent=0 // pred_check_branch
    %11 = sbr.rel (0) target = $region5
  $region4: #{ifnet_forward.73} parent=0 // pred_region
    _
  $region5: #{ifnet_forward.73} parent=0 // pred_fallthru
    _
  // Predicated region
  $region6: #{ifnet_forward.73} parent=0 // pred_check
    _
  $region7: #{ifnet_forward.73} parent=0 // pred_check_branch
    %13 = sbr.rel (0) target = $region9
  $region8: #{ifnet_forward.73} parent=0 // pred_region
    _
  $region9: #{ifnet_forward.73} parent=0 // pred_fallthru
    _
  // Predicated region
  $region10: #{ifnet_forward.73} parent=0 // pred_check
    _
  $region11: #{ifnet_forward.73} parent=0 // pred_check_branch
    %15 = sbr.rel (0) target = $region13
  $region12: #{ifnet_forward.73} parent=0 // pred_region
    _
  $region13: #{ifnet_forward.73} parent=0 // pred_fallthru
    _
  // Predicated region
  $region14: #{ifnet_forward.73} parent=0 // pred_check
    _
  $region15: #{ifnet_forward.73} parent=0 // pred_check_branch
    %17 = sbr.rel (0) target = $region17
  $region16: #{ifnet_forward.73} parent=0 // pred_region
    _
  $region17: #{ifnet_forward.73} parent=0 // pred_fallthru
    _
  // Predicated region
  $region18: #{ifnet_forward.73} parent=0 // pred_check
    _
  $region19: #{ifnet_forward.73} parent=0 // pred_check_branch
    %19 = sbr.rel (0) target = $region21
  $region20: #{ifnet_forward.73} parent=0 // pred_region
    _
  $region21: #{ifnet_forward.73} parent=0 // pred_fallthru
    _
  %v21 = vld [vmem:[%s0] sm:$0xff]
  %v22 = vld [vmem:[%s0 + $0x8] sm:$0xff]
  %v23 = vld [vmem:[%s0 + $0x10] sm:$0xff]
  %v24 = vld [vmem:[%s0 + $0x18] sm:$0xff]
  %v25 = vld [vmem:[%s0 + $0x20] sm:$0xf]
  %v26 = vld [vmem:[%s0 + $0x24] sm:$0xff]
  %v27 = vld [vmem:[%s0 + $0x2c] sm:$0xff]
  %v28 = vld [vmem:[%s0 + $0x34] sm:$0xff]
  %v29 = vld [vmem:[%s0 + $0x3c] sm:$0xff]
  %v30 = vld [vmem:[%s0 + $0x44] sm:$0xf]
  %v31 = vld [vmem:[%s1] sm:$0xf]
  %v32 = vld [vmem:[%s1 + $0x4] sm:$0xf]
  %v33 = vld [vmem:[%s1 + $0x8] sm:$0xf]
  %v34 = vld [vmem:[%s1 + $0xc] sm:$0xf]
  %v35 = vld [vmem:[%s1 + $0x10] sm:$0xf]
  %v36 = vld [vmem:[%s1 + $0x14] sm:$0xf]
  %v37 = vld [vmem:[%s1 + $0x18] sm:$0xf]
  %v38 = vld [vmem:[%s1 + $0x1c] sm:$0xf]
  %v39 = vld [vmem:[%s1 + $0x20] sm:$0xf]
  %v40 = vld [vmem:[%s1 + $0x24] sm:$0xf]
  %v41 = vld [vmem:[%s1 + $0x28] sm:$0xf]
  %v42 = vld [vmem:[%s1 + $0x2c] sm:$0xf]
  %v43 = vld [vmem:[%s1 + $0x30] sm:$0xf]
  %v44 = vld [vmem:[%s1 + $0x34] sm:$0xf]
  %v45 = vld [vmem:[%s1 + $0x38] sm:$0xf]
  %v46 = vld [vmem:[%s1 + $0x3c] sm:$0xf]
  %v47 = vld [vmem:[%s1 + $0x40] sm:$0xf]
  %v48 = vld [vmem:[%s1 + $0x44] sm:$0xf]
  %v49 = vld [vmem:[%s1 + $0x48] sm:$0xf]
  %v50 = vld [vmem:[%s1 + $0x4c] sm:$0xf]
  %v51 = vld [vmem:[%s1 + $0x50] sm:$0xf]
  %v52 = vld [vmem:[%s1 + $0x54] sm:$0xf]
  %v53 = vld [vmem:[%s1 + $0x58] sm:$0xf]
  %v54 = vld [vmem:[%s1 + $0x5c] sm:$0xf]
  %v55 = vld [vmem:[%s1 + $0x60] sm:$0xf]
  %v56 = vld [vmem:[%s1 + $0x64] sm:$0xf]
  %v57 = vld [vmem:[%s1 + $0x68] sm:$0xf]
  %v58 = vld [vmem:[%s1 + $0x6c] sm:$0xf]
  %v59 = vld [vmem:[%s1 + $0x70] sm:$0xf]
  %v60 = vld [vmem:[%s1 + $0x74] sm:$0xf]
  %v61 = vld [vmem:[%s1 + $0x78] sm:$0xf]
  %v62 = vld [vmem:[%s1 + $0x7c] sm:$0xf]
  %v63 = vld [vmem:[%s1 + $0x80] sm:$0xf]
  %v64 = vld [vmem:[%s1 + $0x84] sm:$0xf]
  %v65 = vld [vmem:[%s1 + $0x88] sm:$0xf]
  %v66 = vld [vmem:[%s1 + $0x8c] sm:$0xf]
  %v67 = vld [vmem:[%s1 + $0x90] sm:$0xf]
  %v68 = vld [vmem:[%s1 + $0x94] sm:$0xf]
  %v69 = vld [vmem:[%s1 + $0x98] sm:$0xf]
  %v70 = vld [vmem:[%s1 + $0x9c] sm:$0xf]
  %v71 = vld [vmem:[%s1 + $0xa0] sm:$0xf]
  %v72 = vld [vmem:[%s1 + $0xa4] sm:$0xf]
  %v73 = vld [vmem:[%s1 + $0xa8] sm:$0xf]
  %v74 = vld [vmem:[%s1 + $0xac] sm:$0xf]
  %v75 = vld [vmem:[%s1 + $0xb0] sm:$0xf]
  %v76 = vld [vmem:[%s1 + $0xb4] sm:$0xf]
  %v77 = vld [vmem:[%s1 + $0xb8] sm:$0xf]
  %v78 = vld [vmem:[%s1 + $0xbc] sm:$0xf]
  %v79 = vld [vmem:[%s1 + $0xc0] sm:$0xf]
  %v80 = vld [vmem:[%s1 + $0xc4] sm:$0xf]
  %v81 = vld [vmem:[%s1 + $0xc8] sm:$0xf]
  %v82 = vld [vmem:[%s1 + $0xcc] sm:$0xf]
  %v83 = vld [vmem:[%s1 + $0xd0] sm:$0xf]
  %v84 = vld [vmem:[%s1 + $0xd4] sm:$0xf]
  %v85 = vld [vmem:[%s1 + $0xd8] sm:$0xf]
  %v86 = vld [vmem:[%s1 + $0xdc] sm:$0xf]
  %v87 = vld [vmem:[%s1 + $0xe0] sm:$0xf]
  %v88 = vld [vmem:[%s1 + $0xe4] sm:$0xf]
  %v89 = vld [vmem:[%s1 + $0xe8] sm:$0xf]
  %v90 = vld [vmem:[%s1 + $0xec] sm:$0xf]
  %v91 = vld [vmem:[%s1 + $0xf0] sm:$0xf]
  %v92 = vld [vmem:[%s1 + $0xf4] sm:$0xf]
  %v93 = vld [vmem:[%s1 + $0xf8] sm:$0xf]
  %v94 = vld [vmem:[%s1 + $0xfc] sm:$0xf]
  %v95 = vld [vmem:[%s1 + $0x100] sm:$0xf]
  %v96 = vld [vmem:[%s1 + $0x104] sm:$0xf]
  %v97 = vld [vmem:[%s1 + $0x108] sm:$0xf]
  %v98 = vld [vmem:[%s1 + $0x10c] sm:$0xf]
  %v99 = vld [vmem:[%s1 + $0x110] sm:$0xf]
  %v100 = vld [vmem:[%s1 + $0x114] sm:$0xf]
  %v101 = vld [vmem:[%s1 + $0x118] sm:$0xf]
  %v102 = vld [vmem:[%s1 + $0x11c] sm:$0xf]
  %v103 = vld [vmem:[%s1 + $0x120] sm:$0xf]
  %v104 = vld [vmem:[%s1 + $0x124] sm:$0xf]
  %v105 = vld [vmem:[%s1 + $0x128] sm:$0xf]
  %v106 = vld [vmem:[%s1 + $0x12c] sm:$0xf]
  %v107 = vld [vmem:[%s1 + $0x130] sm:$0xf]
  %v108 = vld [vmem:[%s1 + $0x134] sm:$0xf]
  %v109 = vld [vmem:[%s1 + $0x138] sm:$0xf]
  %v110 = vld [vmem:[%s1 + $0x13c] sm:$0xf]
  %v111 = vld [vmem:[%s1 + $0x140] sm:$0xf]
  %v112 = vld [vmem:[%s1 + $0x144] sm:$0xf]
  %v113 = vld [vmem:[%s1 + $0x148] sm:$0xf]
  %v114 = vld [vmem:[%s1 + $0x14c] sm:$0xf]
  %v115 = vld [vmem:[%s1 + $0x150] sm:$0xf]
  %v116 = vld [vmem:[%s1 + $0x154] sm:$0xf]
  %v117 = vld [vmem:[%s1 + $0x158] sm:$0xf]
  %v118 = vld [vmem:[%s1 + $0x15c] sm:$0xf]
  %v119 = vld [vmem:[%s1 + $0x160] sm:$0xf]
  %v120 = vld [vmem:[%s1 + $0x164] sm:$0xf]
  %v121 = vld [vmem:[%s1 + $0x168] sm:$0xf]
  %v122 = vld [vmem:[%s1 + $0x16c] sm:$0xf]
  %v123 = vld [vmem:[%s1 + $0x170] sm:$0xf]
  %v124 = vld [vmem:[%s1 + $0x174] sm:$0xf]
  %v125 = vld [vmem:[%s1 + $0x178] sm:$0xf]
  %v126 = vld [vmem:[%s1 + $0x17c] sm:$0xf]
  %v127 = vld [vmem:[%s1 + $0x180] sm:$0xf]
  %v128 = vld [vmem:[%s1 + $0x184] sm:$0xf]
  %v129 = vld [vmem:[%s1 + $0x188] sm:$0xf]
  %v130 = vld [vmem:[%s1 + $0x18c] sm:$0xf]
  %v131 = vld [vmem:[%s1 + $0x190] sm:$0xf]
  %v132 = vld [vmem:[%s1 + $0x194] sm:$0xf]
  %v133 = vld [vmem:[%s1 + $0x198] sm:$0xf]
  %v134 = vld [vmem:[%s1 + $0x19c] sm:$0xf]
  %v135 = vld [vmem:[%s1 + $0x1a0] sm:$0xf]
  %v136 = vld [vmem:[%s1 + $0x1a4] sm:$0xf]
  %v137 = vld [vmem:[%s1 + $0x1a8] sm:$0xf]
  %v138 = vld [vmem:[%s1 + $0x1ac] sm:$0xf]
  %v139 = vld [vmem:[%s1 + $0x1b0] sm:$0xf]
  %v140 = vld [vmem:[%s1 + $0x1b4] sm:$0xf]
  %v141 = vld [vmem:[%s1 + $0x1b8] sm:$0xf]
  %v142 = vld [vmem:[%s1 + $0x1bc] sm:$0xf]
  %v143 = vld [vmem:[%s1 + $0x1c0] sm:$0xf]
  %v144 = vld [vmem:[%s1 + $0x1c4] sm:$0xf]
  %v145 = vld [vmem:[%s1 + $0x1c8] sm:$0xf]
  %v146 = vld [vmem:[%s1 + $0x1cc] sm:$0xf]
  %v147 = vld [vmem:[%s1 + $0x1d0] sm:$0xf]
  %v148 = vld [vmem:[%s1 + $0x1d4] sm:$0xf]
  %v149 = vld [vmem:[%s1 + $0x1d8] sm:$0xf]
  %v150 = vld [vmem:[%s1 + $0x1dc] sm:$0xf]
  %v151 = vld [vmem:[%s1 + $0x1e0] sm:$0xf]
  %v152 = vld [vmem:[%s1 + $0x1e4] sm:$0xf]
  %v153 = vld [vmem:[%s1 + $0x1e8] sm:$0xf]
  %v154 = vld [vmem:[%s1 + $0x1ec] sm:$0xf]
  %v155 = vld [vmem:[%s1 + $0x1f0] sm:$0xf]
  %v156 = vld [vmem:[%s1 + $0x1f4] sm:$0xf]
  %v157 = vld [vmem:[%s1 + $0x1f8] sm:$0xf]
  %v158 = vld [vmem:[%s1 + $0x1fc] sm:$0xf]
  %v159 = vld [vmem:[%s1 + $0x200] sm:$0xf]
  %v160 = vld [vmem:[%s1 + $0x204] sm:$0xf]
  %v161 = vld [vmem:[%s1 + $0x208] sm:$0xf]
  %v162 = vld [vmem:[%s1 + $0x20c] sm:$0xf]
  %v163 = vld [vmem:[%s1 + $0x210] sm:$0xf]
  %v164 = vld [vmem:[%s1 + $0x214] sm:$0xf]
  %v165 = vld [vmem:[%s1 + $0x218] sm:$0xf]
  %v166 = vld [vmem:[%s1 + $0x21c] sm:$0xf]
  %v167 = vld [vmem:[%s1 + $0x220] sm:$0xf]
  %v168 = vld [vmem:[%s1 + $0x224] sm:$0xf]
  %v169 = vld [vmem:[%s1 + $0x228] sm:$0xf]
  %v170 = vld [vmem:[%s1 + $0x22c] sm:$0xf]
  %v171 = vld [vmem:[%s1 + $0x230] sm:$0xf]
  %v172 = vld [vmem:[%s1 + $0x234] sm:$0xf]
  %v173 = vld [vmem:[%s1 + $0x238] sm:$0xf]
  %v174 = vld [vmem:[%s1 + $0x23c] sm:$0xf]
  %v175 = vld [vmem:[%s2] sm:$0x1]
  %v177 = vlaneseq
  %v178 = vshrl.u32 %v177, 7
  %v179 = vsub.s32 0, %v178
  %v180 = vrot.slane %v175, %v179
  %v192 = vunpack.c.l.b16 %v21
  %v193 = vunpack.c.h.b16 %v21
  %v194 = vunpack.c.l.b16 %v22
  %v195 = vunpack.c.h.b16 %v22
  %v196 = vunpack.c.l.b16 %v23
  %v197 = vunpack.c.h.b16 %v23
  %v198 = vunpack.c.l.b16 %v24
  %v199 = vunpack.c.h.b16 %v24
  %v200 = vunpack.c.l.b16 %v25
  %v201 = vunpack.c.l.b16 %v26
  %v202 = vunpack.c.h.b16 %v26
  %v203 = vunpack.c.l.b16 %v27
  %v204 = vunpack.c.h.b16 %v27
  %v205 = vunpack.c.l.b16 %v28
  %v206 = vunpack.c.h.b16 %v28
  %v207 = vunpack.c.l.b16 %v29
  %v208 = vunpack.c.h.b16 %v29
  %v209 = vunpack.c.l.b16 %v30
  %v210 = vpack.c.b16 %v201, %v192
  %v211 = vpack.c.b16 %v202, %v193
  %v212 = vpack.c.b16 %v203, %v194
  %v213 = vpack.c.b16 %v204, %v195
  %v214 = vpack.c.b16 %v205, %v196
  %v215 = vpack.c.b16 %v206, %v197
  %v216 = vpack.c.b16 %v207, %v198
  %v217 = vpack.c.b16 %v208, %v199
  %v218 = vpack.c.b16 %v209, %v200
  %v372 = vunpack.c.l.b16 %v31
  %v373 = vunpack.c.l.b16 %v32
  %v374 = vunpack.c.l.b16 %v33
  %v375 = vunpack.c.l.b16 %v34
  %v376 = vunpack.c.l.b16 %v35
  %v377 = vunpack.c.l.b16 %v36
  %v378 = vunpack.c.l.b16 %v37
  %v379 = vunpack.c.l.b16 %v38
  %v380 = vunpack.c.l.b16 %v39
  %v381 = vunpack.c.l.b16 %v40
  %v382 = vunpack.c.l.b16 %v41
  %v383 = vunpack.c.l.b16 %v42
  %v384 = vunpack.c.l.b16 %v43
  %v385 = vunpack.c.l.b16 %v44
  %v386 = vunpack.c.l.b16 %v45
  %v387 = vunpack.c.l.b16 %v46
  %v388 = vunpack.c.l.b16 %v47
  %v389 = vunpack.c.l.b16 %v48
  %v390 = vunpack.c.l.b16 %v49
  %v391 = vunpack.c.l.b16 %v50
  %v392 = vunpack.c.l.b16 %v51
  %v393 = vunpack.c.l.b16 %v52
  %v394 = vunpack.c.l.b16 %v53
  %v395 = vunpack.c.l.b16 %v54
  %v396 = vunpack.c.l.b16 %v55
  %v397 = vunpack.c.l.b16 %v56
  %v398 = vunpack.c.l.b16 %v57
  %v399 = vunpack.c.l.b16 %v58
  %v400 = vunpack.c.l.b16 %v59
  %v401 = vunpack.c.l.b16 %v60
  %v402 = vunpack.c.l.b16 %v61
  %v403 = vunpack.c.l.b16 %v62
  %v404 = vunpack.c.l.b16 %v63
  %v405 = vunpack.c.l.b16 %v64
  %v406 = vunpack.c.l.b16 %v65
  %v407 = vunpack.c.l.b16 %v66
  %v408 = vunpack.c.l.b16 %v67
  %v409 = vunpack.c.l.b16 %v68
  %v410 = vunpack.c.l.b16 %v69
  %v411 = vunpack.c.l.b16 %v70
  %v412 = vunpack.c.l.b16 %v71
  %v413 = vunpack.c.l.b16 %v72
  %v414 = vunpack.c.l.b16 %v73
  %v415 = vunpack.c.l.b16 %v74
  %v416 = vunpack.c.l.b16 %v75
  %v417 = vunpack.c.l.b16 %v76
  %v418 = vunpack.c.l.b16 %v77
  %v419 = vunpack.c.l.b16 %v78
  %v420 = vunpack.c.l.b16 %v79
  %v421 = vunpack.c.l.b16 %v80
  %v422 = vunpack.c.l.b16 %v81
  %v423 = vunpack.c.l.b16 %v82
  %v424 = vunpack.c.l.b16 %v83
  %v425 = vunpack.c.l.b16 %v84
  %v426 = vunpack.c.l.b16 %v85
  %v427 = vunpack.c.l.b16 %v86
  %v428 = vunpack.c.l.b16 %v87
  %v429 = vunpack.c.l.b16 %v88
  %v430 = vunpack.c.l.b16 %v89
  %v431 = vunpack.c.l.b16 %v90
  %v432 = vunpack.c.l.b16 %v91
  %v433 = vunpack.c.l.b16 %v92
  %v434 = vunpack.c.l.b16 %v93
  %v435 = vunpack.c.l.b16 %v94
  %v436 = vunpack.c.l.b16 %v95
  %v437 = vunpack.c.l.b16 %v96
  %v438 = vunpack.c.l.b16 %v97
  %v439 = vunpack.c.l.b16 %v98
  %v440 = vunpack.c.l.b16 %v99
  %v441 = vunpack.c.l.b16 %v100
  %v442 = vunpack.c.l.b16 %v101
  %v443 = vunpack.c.l.b16 %v102
  %v444 = vunpack.c.l.b16 %v103
  %v445 = vunpack.c.l.b16 %v104
  %v446 = vunpack.c.l.b16 %v105
  %v447 = vunpack.c.l.b16 %v106
  %v448 = vunpack.c.l.b16 %v107
  %v449 = vunpack.c.l.b16 %v108
  %v450 = vunpack.c.l.b16 %v109
  %v451 = vunpack.c.l.b16 %v110
  %v452 = vunpack.c.l.b16 %v111
  %v453 = vunpack.c.l.b16 %v112
  %v454 = vunpack.c.l.b16 %v113
  %v455 = vunpack.c.l.b16 %v114
  %v456 = vunpack.c.l.b16 %v115
  %v457 = vunpack.c.l.b16 %v116
  %v458 = vunpack.c.l.b16 %v117
  %v459 = vunpack.c.l.b16 %v118
  %v460 = vunpack.c.l.b16 %v119
  %v461 = vunpack.c.l.b16 %v120
  %v462 = vunpack.c.l.b16 %v121
  %v463 = vunpack.c.l.b16 %v122
  %v464 = vunpack.c.l.b16 %v123
  %v465 = vunpack.c.l.b16 %v124
  %v466 = vunpack.c.l.b16 %v125
  %v467 = vunpack.c.l.b16 %v126
  %v468 = vunpack.c.l.b16 %v127
  %v469 = vunpack.c.l.b16 %v128
  %v470 = vunpack.c.l.b16 %v129
  %v471 = vunpack.c.l.b16 %v130
  %v472 = vunpack.c.l.b16 %v131
  %v473 = vunpack.c.l.b16 %v132
  %v474 = vunpack.c.l.b16 %v133
  %v475 = vunpack.c.l.b16 %v134
  %v476 = vunpack.c.l.b16 %v135
  %v477 = vunpack.c.l.b16 %v136
  %v478 = vunpack.c.l.b16 %v137
  %v479 = vunpack.c.l.b16 %v138
  %v480 = vunpack.c.l.b16 %v139
  %v481 = vunpack.c.l.b16 %v140
  %v482 = vunpack.c.l.b16 %v141
  %v483 = vunpack.c.l.b16 %v142
  %v484 = vunpack.c.l.b16 %v143
  %v485 = vunpack.c.l.b16 %v144
  %v486 = vunpack.c.l.b16 %v145
  %v487 = vunpack.c.l.b16 %v146
  %v488 = vunpack.c.l.b16 %v147
  %v489 = vunpack.c.l.b16 %v148
  %v490 = vunpack.c.l.b16 %v149
  %v491 = vunpack.c.l.b16 %v150
  %v492 = vunpack.c.l.b16 %v151
  %v493 = vunpack.c.l.b16 %v152
  %v494 = vunpack.c.l.b16 %v153
  %v495 = vunpack.c.l.b16 %v154
  %v496 = vunpack.c.l.b16 %v155
  %v497 = vunpack.c.l.b16 %v156
  %v498 = vunpack.c.l.b16 %v157
  %v499 = vunpack.c.l.b16 %v158
  %v500 = vunpack.c.l.b16 %v159
  %v501 = vunpack.c.l.b16 %v160
  %v502 = vunpack.c.l.b16 %v161
  %v503 = vunpack.c.l.b16 %v162
  %v504 = vunpack.c.l.b16 %v163
  %v505 = vunpack.c.l.b16 %v164
  %v506 = vunpack.c.l.b16 %v165
  %v507 = vunpack.c.l.b16 %v166
  %v508 = vunpack.c.l.b16 %v167
  %v509 = vunpack.c.l.b16 %v168
  %v510 = vunpack.c.l.b16 %v169
  %v511 = vunpack.c.l.b16 %v170
  %v512 = vunpack.c.l.b16 %v171
  %v513 = vunpack.c.l.b16 %v172
  %v514 = vunpack.c.l.b16 %v173
  %v515 = vunpack.c.l.b16 %v174
  %v516 = vpack.c.b16 %v373, %v372
  %v517 = vpack.c.b16 %v375, %v374
  %v518 = vpack.c.b16 %v377, %v376
  %v519 = vpack.c.b16 %v379, %v378
  %v520 = vpack.c.b16 %v381, %v380
  %v521 = vpack.c.b16 %v383, %v382
  %v522 = vpack.c.b16 %v385, %v384
  %v523 = vpack.c.b16 %v387, %v386
  %v524 = vpack.c.b16 %v389, %v388
  %v525 = vpack.c.b16 %v391, %v390
  %v526 = vpack.c.b16 %v393, %v392
  %v527 = vpack.c.b16 %v395, %v394
  %v528 = vpack.c.b16 %v397, %v396
  %v529 = vpack.c.b16 %v399, %v398
  %v530 = vpack.c.b16 %v401, %v400
  %v531 = vpack.c.b16 %v403, %v402
  %v532 = vpack.c.b16 %v405, %v404
  %v533 = vpack.c.b16 %v407, %v406
  %v534 = vpack.c.b16 %v409, %v408
  %v535 = vpack.c.b16 %v411, %v410
  %v536 = vpack.c.b16 %v413, %v412
  %v537 = vpack.c.b16 %v415, %v414
  %v538 = vpack.c.b16 %v417, %v416
  %v539 = vpack.c.b16 %v419, %v418
  %v540 = vpack.c.b16 %v421, %v420
  %v541 = vpack.c.b16 %v423, %v422
  %v542 = vpack.c.b16 %v425, %v424
  %v543 = vpack.c.b16 %v427, %v426
  %v544 = vpack.c.b16 %v429, %v428
  %v545 = vpack.c.b16 %v431, %v430
  %v546 = vpack.c.b16 %v433, %v432
  %v547 = vpack.c.b16 %v435, %v434
  %v548 = vpack.c.b16 %v437, %v436
  %v549 = vpack.c.b16 %v439, %v438
  %v550 = vpack.c.b16 %v441, %v440
  %v551 = vpack.c.b16 %v443, %v442
  %v552 = vpack.c.b16 %v445, %v444
  %v553 = vpack.c.b16 %v447, %v446
  %v554 = vpack.c.b16 %v449, %v448
  %v555 = vpack.c.b16 %v451, %v450
  %v556 = vpack.c.b16 %v453, %v452
  %v557 = vpack.c.b16 %v455, %v454
  %v558 = vpack.c.b16 %v457, %v456
  %v559 = vpack.c.b16 %v459, %v458
  %v560 = vpack.c.b16 %v461, %v460
  %v561 = vpack.c.b16 %v463, %v462
  %v562 = vpack.c.b16 %v465, %v464
  %v563 = vpack.c.b16 %v467, %v466
  %v564 = vpack.c.b16 %v469, %v468
  %v565 = vpack.c.b16 %v471, %v470
  %v566 = vpack.c.b16 %v473, %v472
  %v567 = vpack.c.b16 %v475, %v474
  %v568 = vpack.c.b16 %v477, %v476
  %v569 = vpack.c.b16 %v479, %v478
  %v570 = vpack.c.b16 %v481, %v480
  %v571 = vpack.c.b16 %v483, %v482
  %v572 = vpack.c.b16 %v485, %v484
  %v573 = vpack.c.b16 %v487, %v486
  %v574 = vpack.c.b16 %v489, %v488
  %v575 = vpack.c.b16 %v491, %v490
  %v576 = vpack.c.b16 %v493, %v492
  %v577 = vpack.c.b16 %v495, %v494
  %v578 = vpack.c.b16 %v497, %v496
  %v579 = vpack.c.b16 %v499, %v498
  %v580 = vpack.c.b16 %v501, %v500
  %v581 = vpack.c.b16 %v503, %v502
  %v582 = vpack.c.b16 %v505, %v504
  %v583 = vpack.c.b16 %v507, %v506
  %v584 = vpack.c.b16 %v509, %v508
  %v585 = vpack.c.b16 %v511, %v510
  %v586 = vpack.c.b16 %v513, %v512
  %v587 = vpack.c.b16 %v515, %v514
  %660 = vmatprep.subr.bf16.mxu0 0
  %661 = vmatpush1.bf16.msra.mxu0 %v523
  %662 = vmatprep.subr.bf16.mxu0 0
  %663 = vmatpush1.bf16.msra.mxu0 %v522
  %664 = vmatprep.subr.bf16.mxu0 0
  %665 = vmatpush1.bf16.msra.mxu0 %v521
  %666 = vmatprep.subr.bf16.mxu0 0
  %667 = vmatpush1.bf16.msra.mxu0 %v520
  %668 = vmatprep.subr.bf16.mxu0 0
  %669 = vmatpush1.bf16.msra.mxu0 %v519
  %670 = vmatprep.subr.bf16.mxu0 0
  %671 = vmatpush1.bf16.msra.mxu0 %v518
  %672 = vmatprep.subr.bf16.mxu0 0
  %673 = vmatpush1.bf16.msra.mxu0 %v517
  %674 = vmatprep.subr.bf16.mxu0 0
  %675 = vmatpush1.bf16.msra.mxu0 %v516
  %676 = vmatprep.subr.bf16.mxu0 0
  %677 = vmatpush2.bf16.msra.mxu0 %v531
  %678 = vmatprep.subr.bf16.mxu0 0
  %679 = vmatpush2.bf16.msra.mxu0 %v530
  %680 = vmatprep.subr.bf16.mxu0 0
  %681 = vmatpush2.bf16.msra.mxu0 %v529
  %682 = vmatprep.subr.bf16.mxu0 0
  %683 = vmatpush2.bf16.msra.mxu0 %v528
  %684 = vmatprep.subr.bf16.mxu0 0
  %685 = vmatpush2.bf16.msra.mxu0 %v527
  %686 = vmatprep.subr.bf16.mxu0 0
  %687 = vmatpush2.bf16.msra.mxu0 %v526
  %688 = vmatprep.subr.bf16.mxu0 0
  %689 = vmatpush2.bf16.msra.mxu0 %v525
  %690 = vmatprep.subr.bf16.mxu0 0
  %691 = vmatpush2.bf16.msra.mxu0 %v524
  %692 = vmatprep.mubr.bf16.mxu0 %v211
  %693 = vmatmul.mubr.bf16.gmra.mxu0 %v210
  %v694 = vpop.f32.mrf.mxu0
  %v695 = vadd.f32 %v180, %v694
  %v696 = vpop.f32.mrf.mxu0
  %v697 = vpop.f32.mrf.mxu0
  %v698 = vadd.f32 %v180, %v697
  %v699 = vpop.f32.mrf.mxu0
  %700 = vdwg.mxu0
  %701 = vmatprep.subr.bf16.mxu0 0
  %702 = vmatpush1.bf16.msra.mxu0 %v539
  %703 = vmatprep.subr.bf16.mxu0 0
  %704 = vmatpush1.bf16.msra.mxu0 %v538
  %705 = vmatprep.subr.bf16.mxu0 0
  %706 = vmatpush1.bf16.msra.mxu0 %v537
  %707 = vmatprep.subr.bf16.mxu0 0
  %708 = vmatpush1.bf16.msra.mxu0 %v536
  %709 = vmatprep.subr.bf16.mxu0 0
  %710 = vmatpush1.bf16.msra.mxu0 %v535
  %711 = vmatprep.subr.bf16.mxu0 0
  %712 = vmatpush1.bf16.msra.mxu0 %v534
  %713 = vmatprep.subr.bf16.mxu0 0
  %714 = vmatpush1.bf16.msra.mxu0 %v533
  %715 = vmatprep.subr.bf16.mxu0 0
  %716 = vmatpush1.bf16.msra.mxu0 %v532
  %717 = vmatprep.subr.bf16.mxu0 0
  %718 = vmatpush2.bf16.msra.mxu0 %v547
  %719 = vmatprep.subr.bf16.mxu0 0
  %720 = vmatpush2.bf16.msra.mxu0 %v546
  %721 = vmatprep.subr.bf16.mxu0 0
  %722 = vmatpush2.bf16.msra.mxu0 %v545
  %723 = vmatprep.subr.bf16.mxu0 0
  %724 = vmatpush2.bf16.msra.mxu0 %v544
  %725 = vmatprep.subr.bf16.mxu0 0
  %726 = vmatpush2.bf16.msra.mxu0 %v543
  %727 = vmatprep.subr.bf16.mxu0 0
  %728 = vmatpush2.bf16.msra.mxu0 %v542
  %729 = vmatprep.subr.bf16.mxu0 0
  %730 = vmatpush2.bf16.msra.mxu0 %v541
  %731 = vmatprep.subr.bf16.mxu0 0
  %732 = vmatpush2.bf16.msra.mxu0 %v540
  %733 = vmatprep.mubr.bf16.mxu0 %v213
  %734 = vmatmul.mubr.bf16.gmra.mxu0 %v212
  %v735 = vpop.f32.mrf.mxu0
  %v736 = vadd.f32 %v695, %v735
  %v737 = vpop.f32.mrf.mxu0
  %v738 = vpop.f32.mrf.mxu0
  %v739 = vadd.f32 %v698, %v738
  %v740 = vpop.f32.mrf.mxu0
  %741 = vdwg.mxu0
  %742 = vmatprep.subr.bf16.mxu0 0
  %743 = vmatpush1.bf16.msra.mxu0 %v555
  %744 = vmatprep.subr.bf16.mxu0 0
  %745 = vmatpush1.bf16.msra.mxu0 %v554
  %746 = vmatprep.subr.bf16.mxu0 0
  %747 = vmatpush1.bf16.msra.mxu0 %v553
  %748 = vmatprep.subr.bf16.mxu0 0
  %749 = vmatpush1.bf16.msra.mxu0 %v552
  %750 = vmatprep.subr.bf16.mxu0 0
  %751 = vmatpush1.bf16.msra.mxu0 %v551
  %752 = vmatprep.subr.bf16.mxu0 0
  %753 = vmatpush1.bf16.msra.mxu0 %v550
  %754 = vmatprep.subr.bf16.mxu0 0
  %755 = vmatpush1.bf16.msra.mxu0 %v549
  %756 = vmatprep.subr.bf16.mxu0 0
  %757 = vmatpush1.bf16.msra.mxu0 %v548
  %758 = vmatprep.subr.bf16.mxu0 0
  %759 = vmatpush2.bf16.msra.mxu0 %v563
  %760 = vmatprep.subr.bf16.mxu0 0
  %761 = vmatpush2.bf16.msra.mxu0 %v562
  %762 = vmatprep.subr.bf16.mxu0 0
  %763 = vmatpush2.bf16.msra.mxu0 %v561
  %764 = vmatprep.subr.bf16.mxu0 0
  %765 = vmatpush2.bf16.msra.mxu0 %v560
  %766 = vmatprep.subr.bf16.mxu0 0
  %767 = vmatpush2.bf16.msra.mxu0 %v559
  %768 = vmatprep.subr.bf16.mxu0 0
  %769 = vmatpush2.bf16.msra.mxu0 %v558
  %770 = vmatprep.subr.bf16.mxu0 0
  %771 = vmatpush2.bf16.msra.mxu0 %v557
  %772 = vmatprep.subr.bf16.mxu0 0
  %773 = vmatpush2.bf16.msra.mxu0 %v556
  %774 = vmatprep.mubr.bf16.mxu0 %v215
  %775 = vmatmul.mubr.bf16.gmra.mxu0 %v214
  %v776 = vpop.f32.mrf.mxu0
  %v777 = vadd.f32 %v736, %v776
  %v778 = vpop.f32.mrf.mxu0
  %v779 = vpop.f32.mrf.mxu0
  %v780 = vadd.f32 %v739, %v779
  %v781 = vpop.f32.mrf.mxu0
  %782 = vdwg.mxu0
  %783 = vmatprep.subr.bf16.mxu0 0
  %784 = vmatpush1.bf16.msra.mxu0 %v571
  %785 = vmatprep.subr.bf16.mxu0 0
  %786 = vmatpush1.bf16.msra.mxu0 %v570
  %787 = vmatprep.subr.bf16.mxu0 0
  %788 = vmatpush1.bf16.msra.mxu0 %v569
  %789 = vmatprep.subr.bf16.mxu0 0
  %790 = vmatpush1.bf16.msra.mxu0 %v568
  %791 = vmatprep.subr.bf16.mxu0 0
  %792 = vmatpush1.bf16.msra.mxu0 %v567
  %793 = vmatprep.subr.bf16.mxu0 0
  %794 = vmatpush1.bf16.msra.mxu0 %v566
  %795 = vmatprep.subr.bf16.mxu0 0
  %796 = vmatpush1.bf16.msra.mxu0 %v565
  %797 = vmatprep.subr.bf16.mxu0 0
  %798 = vmatpush1.bf16.msra.mxu0 %v564
  %799 = vmatprep.subr.bf16.mxu0 0
  %800 = vmatpush2.bf16.msra.mxu0 %v579
  %801 = vmatprep.subr.bf16.mxu0 0
  %802 = vmatpush2.bf16.msra.mxu0 %v578
  %803 = vmatprep.subr.bf16.mxu0 0
  %804 = vmatpush2.bf16.msra.mxu0 %v577
  %805 = vmatprep.subr.bf16.mxu0 0
  %806 = vmatpush2.bf16.msra.mxu0 %v576
  %807 = vmatprep.subr.bf16.mxu0 0
  %808 = vmatpush2.bf16.msra.mxu0 %v575
  %809 = vmatprep.subr.bf16.mxu0 0
  %810 = vmatpush2.bf16.msra.mxu0 %v574
  %811 = vmatprep.subr.bf16.mxu0 0
  %812 = vmatpush2.bf16.msra.mxu0 %v573
  %813 = vmatprep.subr.bf16.mxu0 0
  %814 = vmatpush2.bf16.msra.mxu0 %v572
  %815 = vmatprep.mubr.bf16.mxu0 %v217
  %816 = vmatmul.mubr.bf16.gmra.mxu0 %v216
  %v817 = vpop.f32.mrf.mxu0
  %v818 = vadd.f32 %v777, %v817
  %v819 = vpop.f32.mrf.mxu0
  %v820 = vpop.f32.mrf.mxu0
  %v821 = vadd.f32 %v780, %v820
  %v822 = vpop.f32.mrf.mxu0
  %823 = vdwg.mxu0
  %824 = vmatprep.subr.bf16.mxu0 0
  %825 = vmatpush1.bf16.msra.mxu0 %v587
  %826 = vmatprep.subr.bf16.mxu0 0
  %827 = vmatpush1.bf16.msra.mxu0 %v586
  %828 = vmatprep.subr.bf16.mxu0 0
  %829 = vmatpush1.bf16.msra.mxu0 %v585
  %830 = vmatprep.subr.bf16.mxu0 0
  %831 = vmatpush1.bf16.msra.mxu0 %v584
  %832 = vmatprep.subr.bf16.mxu0 0
  %833 = vmatpush1.bf16.msra.mxu0 %v583
  %834 = vmatprep.subr.bf16.mxu0 0
  %835 = vmatpush1.bf16.msra.mxu0 %v582
  %836 = vmatprep.subr.bf16.mxu0 0
  %837 = vmatpush1.bf16.msra.mxu0 %v581
  %838 = vmatprep.subr.bf16.mxu0 0
  %839 = vmatpush1.bf16.msra.mxu0 %v580
  %840 = vmatprep.subr.bf16.mxu0 0
  %841 = vmatpush2.bf16.msra.mxu0 0
  %842 = vmatprep.subr.bf16.mxu0 0
  %843 = vmatpush2.bf16.msra.mxu0 0
  %844 = vmatprep.subr.bf16.mxu0 0
  %845 = vmatpush2.bf16.msra.mxu0 0
  %846 = vmatprep.subr.bf16.mxu0 0
  %847 = vmatpush2.bf16.msra.mxu0 0
  %848 = vmatprep.subr.bf16.mxu0 0
  %849 = vmatpush2.bf16.msra.mxu0 0
  %850 = vmatprep.subr.bf16.mxu0 0
  %851 = vmatpush2.bf16.msra.mxu0 0
  %852 = vmatprep.subr.bf16.mxu0 0
  %853 = vmatpush2.bf16.msra.mxu0 0
  %854 = vmatprep.subr.bf16.mxu0 0
  %855 = vmatpush2.bf16.msra.mxu0 0
  %856 = vmatprep.mubr.bf16.mxu0 0
  %857 = vmatmul.mubr.bf16.gmra.mxu0 %v218
  %v858 = vpop.f32.mrf.mxu0
  %v859 = vadd.f32 %v818, %v858
  %v860 = vpop.f32.mrf.mxu0
  %v861 = vpop.f32.mrf.mxu0
  %v862 = vadd.f32 %v821, %v861
  %v863 = vpop.f32.mrf.mxu0
  %864 = vdwg.mxu0
  %v865 = vld [vmem:[%s3] sm:$0x1]
  %v867 = vlaneseq
  %v868 = vshrl.u32 %v867, 7
  %v869 = vsub.s32 0, %v868
  %v870 = vrot.slane %v865, %v869
  %v872 = vmul.f32 %v859, %v870
  %v873 = vmul.f32 %v862, %v870
  %v874 = vld [vmem:[%s4] sm:$0xf]
  %v875 = vld [vmem:[%s4 + $0x4] sm:$0xf]
  %v876 = vunpack.c.l.bf16 %v874
  %v877 = vunpack.c.l.bf16 %v875
  %v878 = vadd.f32 %v872, %v876
  %v879 = vadd.f32 %v873, %v877
  %vm880 = vcmp.ge.f32.partialorder %v878, 0.0
  %vm881 = vcmp.ge.f32.partialorder %v879, 0.0
  %v882 = vmul.f32 %v878, 0.2
  %v883 = vmul.f32 %v879, 0.2
  %v884 = vsel %vm880, %v878, %v882
  %v885 = vsel %vm881, %v879, %v883
  %v886 = vpack.c.bf16 %v885, %v884
  %v888 = vunpack.c.l.b16 %v886
  %v889 = vunpack.c.h.b16 %v886
  %v890 = vpack.c.b16 %v888, %v888
  %v891 = vpack.c.b16 %v889, %v889
  %894 = vst [vmem:[%s5] sm:$0xf] %v890
  %895 = vst [vmem:[%s5 + $0x4] sm:$0xf] %v891
  // Predicated region
  $region22: #{ifnet_forward.73} parent=0 // pred_check
    _
  $region23: #{ifnet_forward.73} parent=0 // pred_check_branch
    %897 = sbr.rel (0) target = $region25
  $region24: #{ifnet_forward.73} parent=0 // pred_region
    _
  $region25: #{ifnet_forward.73} parent=0 // pred_fallthru
    _
  // Predicated region
  $region26: #{ifnet_forward.73} parent=0 // pred_check
    _
  $region27: #{ifnet_forward.73} parent=0 // pred_check_branch
    %899 = sbr.rel (0) target = $region29
  $region28: #{ifnet_forward.73} parent=0 // pred_region
    _
  $region29: #{ifnet_forward.73} parent=0 // pred_fallthru
    _

// kernel: ifnet_forward.85
$region0: #{ifnet_forward.85}
  #allocation0 [shape = 'u32[]', space=smem, size = 0x4, offset = 0x4, fixed_abs, tag = 'smem constant byte address 0x4 - core index']
  #allocation1 [shape = 'u32[144,128]{1,0:T(1,128)}', space=vmem, size = 0x12000, scoped, tag = 'internal scratch']
  %s0 = inlined_call_operand.vmem [shape: bf16[128,108], index: 0, kind: input, shape index: {}]
  %s1 = inlined_call_operand.vmem [shape: bf16[108,48], index: 1, kind: input, shape index: {}]
  %s2 = inlined_call_operand.vmem [shape: f32[1,48], index: 2, kind: input, shape index: {}]
  %s3 = inlined_call_operand.vmem [shape: bf16[128,48], index: 3, kind: output, shape index: {}]
  %s4 = sld [smem:[#allocation0]]
  $region22: #{ifnet_forward.85} parent=0
    _
  %s6 = ssub.s32 1, %s4
  %s7 = scalar_select 0, %s6, %s4
  // Predicated region
  $region2: #{ifnet_forward.85} parent=0 // pred_check
    _
  $region3: #{ifnet_forward.85} parent=0 // pred_check_branch
    %9 = sbr.rel (0) target = $region5
  $region4: #{ifnet_forward.85} parent=0 // pred_region
    _
  $region5: #{ifnet_forward.85} parent=0 // pred_fallthru
    _
  // Predicated region
  $region6: #{ifnet_forward.85} parent=0 // pred_check
    _
  $region7: #{ifnet_forward.85} parent=0 // pred_check_branch
    %11 = sbr.rel (0) target = $region9
  $region8: #{ifnet_forward.85} parent=0 // pred_region
    _
  $region9: #{ifnet_forward.85} parent=0 // pred_fallthru
    _
  // Predicated region
  $region10: #{ifnet_forward.85} parent=0 // pred_check
    _
  $region11: #{ifnet_forward.85} parent=0 // pred_check_branch
    %13 = sbr.rel (0) target = $region13
  $region12: #{ifnet_forward.85} parent=0 // pred_region
    _
  $region13: #{ifnet_forward.85} parent=0 // pred_fallthru
    _
  %v15 = vld [vmem:[%s0] sm:$0xf]
  %v16 = vld [vmem:[%s0 + $0x4] sm:$0xf]
  %v17 = vld [vmem:[%s0 + $0x8] sm:$0xf]
  %v18 = vld [vmem:[%s0 + $0xc] sm:$0xf]
  %v19 = vld [vmem:[%s0 + $0x10] sm:$0xf]
  %v20 = vld [vmem:[%s0 + $0x14] sm:$0xf]
  %v21 = vld [vmem:[%s0 + $0x18] sm:$0xf]
  %v22 = vld [vmem:[%s0 + $0x1c] sm:$0xf]
  %v23 = vld [vmem:[%s0 + $0x20] sm:$0xf]
  %v24 = vld [vmem:[%s0 + $0x24] sm:$0xf]
  %v25 = vld [vmem:[%s0 + $0x28] sm:$0xf]
  %v26 = vld [vmem:[%s0 + $0x2c] sm:$0xf]
  %v27 = vld [vmem:[%s0 + $0x30] sm:$0xf]
  %v28 = vld [vmem:[%s0 + $0x34] sm:$0xf]
  %v29 = vld [vmem:[%s0 + $0x38] sm:$0xf]
  %v30 = vld [vmem:[%s0 + $0x3c] sm:$0xf]
  %v31 = vld [vmem:[%s1] sm:$0xf]
  %v32 = vld [vmem:[%s1 + $0x4] sm:$0xf]
  %v33 = vld [vmem:[%s1 + $0x8] sm:$0xf]
  %v34 = vld [vmem:[%s1 + $0xc] sm:$0xf]
  %v35 = vld [vmem:[%s1 + $0x10] sm:$0xf]
  %v36 = vld [vmem:[%s1 + $0x14] sm:$0xf]
  %v37 = vld [vmem:[%s1 + $0x18] sm:$0xf]
  %v38 = vld [vmem:[%s1 + $0x1c] sm:$0xf]
  %v39 = vld [vmem:[%s1 + $0x20] sm:$0xf]
  %v40 = vld [vmem:[%s1 + $0x24] sm:$0xf]
  %v41 = vld [vmem:[%s1 + $0x28] sm:$0xf]
  %v42 = vld [vmem:[%s1 + $0x2c] sm:$0xf]
  %v43 = vld [vmem:[%s1 + $0x30] sm:$0xf]
  %v44 = vld [vmem:[%s1 + $0x34] sm:$0x3]
  %v45 = vld [vmem:[%s2] sm:$0x1]
  %v47 = vlaneseq
  %v48 = vshrl.u32 %v47, 7
  %v49 = vsub.s32 0, %v48
  %v50 = vrot.slane %v45, %v49
  %v68 = vunpack.c.l.b16 %v15
  %v69 = vunpack.c.l.b16 %v16
  %v70 = vunpack.c.l.b16 %v17
  %v71 = vunpack.c.l.b16 %v18
  %v72 = vunpack.c.l.b16 %v19
  %v73 = vunpack.c.l.b16 %v20
  %v74 = vunpack.c.l.b16 %v21
  %v75 = vunpack.c.l.b16 %v22
  %v76 = vunpack.c.l.b16 %v23
  %v77 = vunpack.c.l.b16 %v24
  %v78 = vunpack.c.l.b16 %v25
  %v79 = vunpack.c.l.b16 %v26
  %v80 = vunpack.c.l.b16 %v27
  %v81 = vunpack.c.l.b16 %v28
  %v82 = vunpack.c.l.b16 %v29
  %v83 = vunpack.c.l.b16 %v30
  %v84 = vpack.c.b16 %v69, %v68
  %v85 = vpack.c.b16 %v71, %v70
  %v86 = vpack.c.b16 %v73, %v72
  %v87 = vpack.c.b16 %v75, %v74
  %v88 = vpack.c.b16 %v77, %v76
  %v89 = vpack.c.b16 %v79, %v78
  %v90 = vpack.c.b16 %v81, %v80
  %v91 = vpack.c.b16 %v83, %v82
  %v106 = vunpack.c.l.b16 %v31
  %v107 = vunpack.c.l.b16 %v32
  %v108 = vunpack.c.l.b16 %v33
  %v109 = vunpack.c.l.b16 %v34
  %v110 = vunpack.c.l.b16 %v35
  %v111 = vunpack.c.l.b16 %v36
  %v112 = vunpack.c.l.b16 %v37
  %v113 = vunpack.c.l.b16 %v38
  %v114 = vunpack.c.l.b16 %v39
  %v115 = vunpack.c.l.b16 %v40
  %v116 = vunpack.c.l.b16 %v41
  %v117 = vunpack.c.l.b16 %v42
  %v118 = vunpack.c.l.b16 %v43
  %v119 = vunpack.c.l.b16 %v44
  %v120 = vpack.c.b16 %v107, %v106
  %v121 = vpack.c.b16 %v109, %v108
  %v122 = vpack.c.b16 %v111, %v110
  %v123 = vpack.c.b16 %v113, %v112
  %v124 = vpack.c.b16 %v115, %v114
  %v125 = vpack.c.b16 %v117, %v116
  %v126 = vpack.c.b16 %v119, %v118
  %vm133 = vcmask 883712
  %v135 = vsel %vm133, %v84, 0
  %v138 = vsel %vm133, %v85, 0
  %v141 = vsel %vm133, %v86, 0
  %v144 = vsel %vm133, %v87, 0
  %v147 = vsel %vm133, %v88, 0
  %v150 = vsel %vm133, %v89, 0
  %v153 = vsel %vm133, %v90, 0
  %v156 = vsel %vm133, %v91, 0
  %vm158 = vcmask 1045504
  %v160 = vsel %vm158, %v126, 0
  %162 = vmatprep.subr.bf16.mxu0 0
  %163 = vmatpush1.bf16.msra.mxu0 0
  %164 = vmatprep.subr.bf16.mxu0 0
  %165 = vmatpush1.bf16.msra.mxu0 %v160
  %166 = vmatprep.subr.bf16.mxu0 0
  %167 = vmatpush1.bf16.msra.mxu0 %v125
  %168 = vmatprep.subr.bf16.mxu0 0
  %169 = vmatpush1.bf16.msra.mxu0 %v124
  %170 = vmatprep.subr.bf16.mxu0 0
  %171 = vmatpush1.bf16.msra.mxu0 %v123
  %172 = vmatprep.subr.bf16.mxu0 0
  %173 = vmatpush1.bf16.msra.mxu0 %v122
  %174 = vmatprep.subr.bf16.mxu0 0
  %175 = vmatpush1.bf16.msra.mxu0 %v121
  %176 = vmatprep.subr.bf16.mxu0 0
  %177 = vmatpush1.bf16.msra.mxu0 %v120
  %178 = vmatprep.subr.bf16.mxu0 0
  %179 = vmatpush2.bf16.msra.mxu0 0
  %180 = vmatprep.subr.bf16.mxu0 0
  %181 = vmatpush2.bf16.msra.mxu0 0
  %182 = vmatprep.subr.bf16.mxu0 0
  %183 = vmatpush2.bf16.msra.mxu0 0
  %184 = vmatprep.subr.bf16.mxu0 0
  %185 = vmatpush2.bf16.msra.mxu0 0
  %186 = vmatprep.subr.bf16.mxu0 0
  %187 = vmatpush2.bf16.msra.mxu0 0
  %188 = vmatprep.subr.bf16.mxu0 0
  %189 = vmatpush2.bf16.msra.mxu0 0
  %190 = vmatprep.subr.bf16.mxu0 0
  %191 = vmatpush2.bf16.msra.mxu0 0
  %192 = vmatprep.subr.bf16.mxu0 0
  %193 = vmatpush2.bf16.msra.mxu0 0
  %194 = vmatprep.mubr.bf16.mxu0 0
  %195 = vmatmul.mubr.bf16.gmra.mxu0 %v135
  %v196 = vpop.f32.mrf.mxu0
  %v197 = vadd.f32 %v50, %v196
  %v198 = vpop.f32.mrf.mxu0
  %v199 = vpop.f32.mrf.mxu0
  %v200 = vadd.f32 %v50, %v199
  %v201 = vpop.f32.mrf.mxu0
  %202 = vmatprep.mubr.bf16.mxu0 0
  %203 = vmatmul.mubr.bf16.gmra.mxu0 %v138
  %v204 = vpop.f32.mrf.mxu0
  %v205 = vadd.f32 %v50, %v204
  %v206 = vpop.f32.mrf.mxu0
  %v207 = vpop.f32.mrf.mxu0
  %v208 = vadd.f32 %v50, %v207
  %v209 = vpop.f32.mrf.mxu0
  %210 = vmatprep.mubr.bf16.mxu0 0
  %211 = vmatmul.mubr.bf16.gmra.mxu0 %v141
  %v212 = vpop.f32.mrf.mxu0
  %v213 = vadd.f32 %v50, %v212
  %v214 = vpop.f32.mrf.mxu0
  %v215 = vpop.f32.mrf.mxu0
  %v216 = vadd.f32 %v50, %v215
  %v217 = vpop.f32.mrf.mxu0
  %218 = vmatprep.mubr.bf16.mxu0 0
  %219 = vmatmul.mubr.bf16.gmra.mxu0 %v144
  %v220 = vpop.f32.mrf.mxu0
  %v221 = vadd.f32 %v50, %v220
  %v222 = vpop.f32.mrf.mxu0
  %v223 = vpop.f32.mrf.mxu0
  %v224 = vadd.f32 %v50, %v223
  %v225 = vpop.f32.mrf.mxu0
  %226 = vmatprep.mubr.bf16.mxu0 0
  %227 = vmatmul.mubr.bf16.gmra.mxu0 %v147
  %v228 = vpop.f32.mrf.mxu0
  %v229 = vadd.f32 %v50, %v228
  %v230 = vpop.f32.mrf.mxu0
  %v231 = vpop.f32.mrf.mxu0
  %v232 = vadd.f32 %v50, %v231
  %v233 = vpop.f32.mrf.mxu0
  %234 = vmatprep.mubr.bf16.mxu0 0
  %235 = vmatmul.mubr.bf16.gmra.mxu0 %v150
  %v236 = vpop.f32.mrf.mxu0
  %v237 = vadd.f32 %v50, %v236
  %v238 = vpop.f32.mrf.mxu0
  %v239 = vpop.f32.mrf.mxu0
  %v240 = vadd.f32 %v50, %v239
  %v241 = vpop.f32.mrf.mxu0
  %242 = vmatprep.mubr.bf16.mxu0 0
  %243 = vmatmul.mubr.bf16.gmra.mxu0 %v153
  %v244 = vpop.f32.mrf.mxu0
  %v245 = vadd.f32 %v50, %v244
  %v246 = vpop.f32.mrf.mxu0
  %v247 = vpop.f32.mrf.mxu0
  %v248 = vadd.f32 %v50, %v247
  %v249 = vpop.f32.mrf.mxu0
  %250 = vmatprep.mubr.bf16.mxu0 0
  %251 = vmatmul.mubr.bf16.gmra.mxu0 %v156
  %v252 = vpop.f32.mrf.mxu0
  %v253 = vadd.f32 %v50, %v252
  %v254 = vpop.f32.mrf.mxu0
  %v255 = vpop.f32.mrf.mxu0
  %v256 = vadd.f32 %v50, %v255
  %v257 = vpop.f32.mrf.mxu0
  %258 = vdwg.mxu0
  %vm259 = vcmp.ge.f32.partialorder %v197, 0.0
  %vm260 = vcmp.ge.f32.partialorder %v200, 0.0
  %vm261 = vcmp.ge.f32.partialorder %v205, 0.0
  %vm262 = vcmp.ge.f32.partialorder %v208, 0.0
  %vm263 = vcmp.ge.f32.partialorder %v213, 0.0
  %vm264 = vcmp.ge.f32.partialorder %v216, 0.0
  %vm265 = vcmp.ge.f32.partialorder %v221, 0.0
  %vm266 = vcmp.ge.f32.partialorder %v224, 0.0
  %vm267 = vcmp.ge.f32.partialorder %v229, 0.0
  %vm268 = vcmp.ge.f32.partialorder %v232, 0.0
  %vm269 = vcmp.ge.f32.partialorder %v237, 0.0
  %vm270 = vcmp.ge.f32.partialorder %v240, 0.0
  %vm271 = vcmp.ge.f32.partialorder %v245, 0.0
  %vm272 = vcmp.ge.f32.partialorder %v248, 0.0
  %vm273 = vcmp.ge.f32.partialorder %v253, 0.0
  %vm274 = vcmp.ge.f32.partialorder %v256, 0.0
  %v275 = vmul.f32 %v197, 0.2
  %v276 = vmul.f32 %v200, 0.2
  %v277 = vmul.f32 %v205, 0.2
  %v278 = vmul.f32 %v208, 0.2
  %v279 = vmul.f32 %v213, 0.2
  %v280 = vmul.f32 %v216, 0.2
  %v281 = vmul.f32 %v221, 0.2
  %v282 = vmul.f32 %v224, 0.2
  %v283 = vmul.f32 %v229, 0.2
  %v284 = vmul.f32 %v232, 0.2
  %v285 = vmul.f32 %v237, 0.2
  %v286 = vmul.f32 %v240, 0.2
  %v287 = vmul.f32 %v245, 0.2
  %v288 = vmul.f32 %v248, 0.2
  %v289 = vmul.f32 %v253, 0.2
  %v290 = vmul.f32 %v256, 0.2
  %v291 = vsel %vm259, %v197, %v275
  %v292 = vsel %vm260, %v200, %v276
  %v293 = vsel %vm261, %v205, %v277
  %v294 = vsel %vm262, %v208, %v278
  %v295 = vsel %vm263, %v213, %v279
  %v296 = vsel %vm264, %v216, %v280
  %v297 = vsel %vm265, %v221, %v281
  %v298 = vsel %vm266, %v224, %v282
  %v299 = vsel %vm267, %v229, %v283
  %v300 = vsel %vm268, %v232, %v284
  %v301 = vsel %vm269, %v237, %v285
  %v302 = vsel %vm270, %v240, %v286
  %v303 = vsel %vm271, %v245, %v287
  %v304 = vsel %vm272, %v248, %v288
  %v305 = vsel %vm273, %v253, %v289
  %v306 = vsel %vm274, %v256, %v290
  %v307 = vpack.c.bf16 %v292, %v291
  %v308 = vpack.c.bf16 %v294, %v293
  %v309 = vpack.c.bf16 %v296, %v295
  %v310 = vpack.c.bf16 %v298, %v297
  %v311 = vpack.c.bf16 %v300, %v299
  %v312 = vpack.c.bf16 %v302, %v301
  %v313 = vpack.c.bf16 %v304, %v303
  %v314 = vpack.c.bf16 %v306, %v305
  %v323 = vunpack.c.l.b16 %v307
  %v324 = vunpack.c.h.b16 %v307
  %v325 = vunpack.c.l.b16 %v308
  %v326 = vunpack.c.h.b16 %v308
  %v327 = vunpack.c.l.b16 %v309
  %v328 = vunpack.c.h.b16 %v309
  %v329 = vunpack.c.l.b16 %v310
  %v330 = vunpack.c.h.b16 %v310
  %v331 = vunpack.c.l.b16 %v311
  %v332 = vunpack.c.h.b16 %v311
  %v333 = vunpack.c.l.b16 %v312
  %v334 = vunpack.c.h.b16 %v312
  %v335 = vunpack.c.l.b16 %v313
  %v336 = vunpack.c.h.b16 %v313
  %v337 = vunpack.c.l.b16 %v314
  %v338 = vunpack.c.h.b16 %v314
  %v339 = vpack.c.b16 %v323, %v323
  %v340 = vpack.c.b16 %v324, %v324
  %v341 = vpack.c.b16 %v325, %v325
  %v342 = vpack.c.b16 %v326, %v326
  %v343 = vpack.c.b16 %v327, %v327
  %v344 = vpack.c.b16 %v328, %v328
  %v345 = vpack.c.b16 %v329, %v329
  %v346 = vpack.c.b16 %v330, %v330
  %v347 = vpack.c.b16 %v331, %v331
  %v348 = vpack.c.b16 %v332, %v332
  %v349 = vpack.c.b16 %v333, %v333
  %v350 = vpack.c.b16 %v334, %v334
  %v351 = vpack.c.b16 %v335, %v335
  %v352 = vpack.c.b16 %v336, %v336
  %v353 = vpack.c.b16 %v337, %v337
  %v354 = vpack.c.b16 %v338, %v338
  %vm371 = vcmask 388096
  %372 = vst.msk [vmem:[%s3] sm:$0xf] %vm371, %v339
  %373 = vst.msk [vmem:[%s3 + $0x4] sm:$0xf] %vm371, %v340
  %374 = vst.msk [vmem:[%s3 + $0x8] sm:$0xf] %vm371, %v341
  %375 = vst.msk [vmem:[%s3 + $0xc] sm:$0xf] %vm371, %v342
  %376 = vst.msk [vmem:[%s3 + $0x10] sm:$0xf] %vm371, %v343
  %377 = vst.msk [vmem:[%s3 + $0x14] sm:$0xf] %vm371, %v344
  %378 = vst.msk [vmem:[%s3 + $0x18] sm:$0xf] %vm371, %v345
  %379 = vst.msk [vmem:[%s3 + $0x1c] sm:$0xf] %vm371, %v346
  %380 = vst.msk [vmem:[%s3 + $0x20] sm:$0xf] %vm371, %v347
  %381 = vst.msk [vmem:[%s3 + $0x24] sm:$0xf] %vm371, %v348
  %382 = vst.msk [vmem:[%s3 + $0x28] sm:$0xf] %vm371, %v349
  %383 = vst.msk [vmem:[%s3 + $0x2c] sm:$0xf] %vm371, %v350
  %384 = vst.msk [vmem:[%s3 + $0x30] sm:$0xf] %vm371, %v351
  %385 = vst.msk [vmem:[%s3 + $0x34] sm:$0xf] %vm371, %v352
  %386 = vst.msk [vmem:[%s3 + $0x38] sm:$0xf] %vm371, %v353
  %387 = vst.msk [vmem:[%s3 + $0x3c] sm:$0xf] %vm371, %v354
  // Predicated region
  $region14: #{ifnet_forward.85} parent=0 // pred_check
    _
  $region15: #{ifnet_forward.85} parent=0 // pred_check_branch
    %389 = sbr.rel (0) target = $region17
  $region16: #{ifnet_forward.85} parent=0 // pred_region
    _
  $region17: #{ifnet_forward.85} parent=0 // pred_fallthru
    _
  // Predicated region
  $region18: #{ifnet_forward.85} parent=0 // pred_check
    _
  $region19: #{ifnet_forward.85} parent=0 // pred_check_branch
    %391 = sbr.rel (0) target = $region21
  $region20: #{ifnet_forward.85} parent=0 // pred_region
    _
  $region21: #{ifnet_forward.85} parent=0 // pred_fallthru
    _

// kernel: ifnet_forward.86
$region0: #{ifnet_forward.86}
  #allocation0 [shape = 'u32[]', space=smem, size = 0x4, offset = 0x4, fixed_abs, tag = 'smem constant byte address 0x4 - core index']
  #allocation1 [shape = 'u32[144,128]{1,0:T(1,128)}', space=vmem, size = 0x12000, scoped, tag = 'internal scratch']
  %s0 = inlined_call_operand.vmem [shape: bf16[32,432], index: 0, kind: input, shape index: {}]
  %s1 = inlined_call_operand.vmem [shape: bf16[432,96], index: 1, kind: input, shape index: {}]
  %s2 = inlined_call_operand.vmem [shape: f32[1,96], index: 2, kind: input, shape index: {}]
  %s3 = inlined_call_operand.vmem [shape: bf16[32,96], index: 3, kind: output, shape index: {}]
  %s4 = sld [smem:[#allocation0]]
  $region22: #{ifnet_forward.86} parent=0
    _
  %s6 = ssub.s32 1, %s4
  %s7 = scalar_select 0, %s6, %s4
  // Predicated region
  $region2: #{ifnet_forward.86} parent=0 // pred_check
    _
  $region3: #{ifnet_forward.86} parent=0 // pred_check_branch
    %9 = sbr.rel (0) target = $region5
  $region4: #{ifnet_forward.86} parent=0 // pred_region
    _
  $region5: #{ifnet_forward.86} parent=0 // pred_fallthru
    _
  // Predicated region
  $region6: #{ifnet_forward.86} parent=0 // pred_check
    _
  $region7: #{ifnet_forward.86} parent=0 // pred_check_branch
    %11 = sbr.rel (0) target = $region9
  $region8: #{ifnet_forward.86} parent=0 // pred_region
    _
  $region9: #{ifnet_forward.86} parent=0 // pred_fallthru
    _
  // Predicated region
  $region10: #{ifnet_forward.86} parent=0 // pred_check
    _
  $region11: #{ifnet_forward.86} parent=0 // pred_check_branch
    %13 = sbr.rel (0) target = $region13
  $region12: #{ifnet_forward.86} parent=0 // pred_region
    _
  $region13: #{ifnet_forward.86} parent=0 // pred_fallthru
    _
  %v15 = vld [vmem:[%s0] sm:$0xff]
  %v16 = vld [vmem:[%s0 + $0x8] sm:$0xff]
  %v17 = vld [vmem:[%s0 + $0x10] sm:$0xff]
  %v18 = vld [vmem:[%s0 + $0x18] sm:$0xff]
  %v19 = vld [vmem:[%s0 + $0x20] sm:$0xff]
  %v20 = vld [vmem:[%s0 + $0x28] sm:$0xff]
  %v21 = vld [vmem:[%s0 + $0x30] sm:$0xff]
  %v22 = vld [vmem:[%s0 + $0x38] sm:$0xff]
  %v23 = vld [vmem:[%s1] sm:$0xf]
  %v24 = vld [vmem:[%s1 + $0x4] sm:$0xf]
  %v25 = vld [vmem:[%s1 + $0x8] sm:$0xf]
  %v26 = vld [vmem:[%s1 + $0xc] sm:$0xf]
  %v27 = vld [vmem:[%s1 + $0x10] sm:$0xf]
  %v28 = vld [vmem:[%s1 + $0x14] sm:$0xf]
  %v29 = vld [vmem:[%s1 + $0x18] sm:$0xf]
  %v30 = vld [vmem:[%s1 + $0x1c] sm:$0xf]
  %v31 = vld [vmem:[%s1 + $0x20] sm:$0xf]
  %v32 = vld [vmem:[%s1 + $0x24] sm:$0xf]
  %v33 = vld [vmem:[%s1 + $0x28] sm:$0xf]
  %v34 = vld [vmem:[%s1 + $0x2c] sm:$0xf]
  %v35 = vld [vmem:[%s1 + $0x30] sm:$0xf]
  %v36 = vld [vmem:[%s1 + $0x34] sm:$0xf]
  %v37 = vld [vmem:[%s1 + $0x38] sm:$0xf]
  %v38 = vld [vmem:[%s1 + $0x3c] sm:$0xf]
  %v39 = vld [vmem:[%s1 + $0x40] sm:$0xf]
  %v40 = vld [vmem:[%s1 + $0x44] sm:$0xf]
  %v41 = vld [vmem:[%s1 + $0x48] sm:$0xf]
  %v42 = vld [vmem:[%s1 + $0x4c] sm:$0xf]
  %v43 = vld [vmem:[%s1 + $0x50] sm:$0xf]
  %v44 = vld [vmem:[%s1 + $0x54] sm:$0xf]
  %v45 = vld [vmem:[%s1 + $0x58] sm:$0xf]
  %v46 = vld [vmem:[%s1 + $0x5c] sm:$0xf]
  %v47 = vld [vmem:[%s1 + $0x60] sm:$0xf]
  %v48 = vld [vmem:[%s1 + $0x64] sm:$0xf]
  %v49 = vld [vmem:[%s1 + $0x68] sm:$0xf]
  %v50 = vld [vmem:[%s1 + $0x6c] sm:$0xf]
  %v51 = vld [vmem:[%s1 + $0x70] sm:$0xf]
  %v52 = vld [vmem:[%s1 + $0x74] sm:$0xf]
  %v53 = vld [vmem:[%s1 + $0x78] sm:$0xf]
  %v54 = vld [vmem:[%s1 + $0x7c] sm:$0xf]
  %v55 = vld [vmem:[%s1 + $0x80] sm:$0xf]
  %v56 = vld [vmem:[%s1 + $0x84] sm:$0xf]
  %v57 = vld [vmem:[%s1 + $0x88] sm:$0xf]
  %v58 = vld [vmem:[%s1 + $0x8c] sm:$0xf]
  %v59 = vld [vmem:[%s1 + $0x90] sm:$0xf]
  %v60 = vld [vmem:[%s1 + $0x94] sm:$0xf]
  %v61 = vld [vmem:[%s1 + $0x98] sm:$0xf]
  %v62 = vld [vmem:[%s1 + $0x9c] sm:$0xf]
  %v63 = vld [vmem:[%s1 + $0xa0] sm:$0xf]
  %v64 = vld [vmem:[%s1 + $0xa4] sm:$0xf]
  %v65 = vld [vmem:[%s1 + $0xa8] sm:$0xf]
  %v66 = vld [vmem:[%s1 + $0xac] sm:$0xf]
  %v67 = vld [vmem:[%s1 + $0xb0] sm:$0xf]
  %v68 = vld [vmem:[%s1 + $0xb4] sm:$0xf]
  %v69 = vld [vmem:[%s1 + $0xb8] sm:$0xf]
  %v70 = vld [vmem:[%s1 + $0xbc] sm:$0xf]
  %v71 = vld [vmem:[%s1 + $0xc0] sm:$0xf]
  %v72 = vld [vmem:[%s1 + $0xc4] sm:$0xf]
  %v73 = vld [vmem:[%s1 + $0xc8] sm:$0xf]
  %v74 = vld [vmem:[%s1 + $0xcc] sm:$0xf]
  %v75 = vld [vmem:[%s1 + $0xd0] sm:$0xf]
  %v76 = vld [vmem:[%s1 + $0xd4] sm:$0xf]
  %v77 = vld [vmem:[%s2] sm:$0x1]
  %v79 = vlaneseq
  %v80 = vshrl.u32 %v79, 7
  %v81 = vsub.s32 0, %v80
  %v82 = vrot.slane %v77, %v81
  %v92 = vunpack.c.l.b16 %v15
  %v93 = vunpack.c.h.b16 %v15
  %v94 = vunpack.c.l.b16 %v16
  %v95 = vunpack.c.h.b16 %v16
  %v96 = vunpack.c.l.b16 %v17
  %v97 = vunpack.c.h.b16 %v17
  %v98 = vunpack.c.l.b16 %v18
  %v99 = vunpack.c.h.b16 %v18
  %v100 = vunpack.c.l.b16 %v19
  %v101 = vunpack.c.h.b16 %v19
  %v102 = vunpack.c.l.b16 %v20
  %v103 = vunpack.c.h.b16 %v20
  %v104 = vunpack.c.l.b16 %v21
  %v105 = vunpack.c.h.b16 %v21
  %v106 = vunpack.c.l.b16 %v22
  %v107 = vunpack.c.h.b16 %v22
  %v108 = vpack.c.b16 %v96, %v92
  %v109 = vpack.c.b16 %v97, %v93
  %v110 = vpack.c.b16 %v98, %v94
  %v111 = vpack.c.b16 %v99, %v95
  %v112 = vpack.c.b16 %v104, %v100
  %v113 = vpack.c.b16 %v105, %v101
  %v114 = vpack.c.b16 %v106, %v102
  %v115 = vpack.c.b16 %v107, %v103
  %v176 = vunpack.c.l.b16 %v23
  %v177 = vunpack.c.l.b16 %v24
  %v178 = vunpack.c.l.b16 %v25
  %v179 = vunpack.c.l.b16 %v26
  %v180 = vunpack.c.l.b16 %v27
  %v181 = vunpack.c.l.b16 %v28
  %v182 = vunpack.c.l.b16 %v29
  %v183 = vunpack.c.l.b16 %v30
  %v184 = vunpack.c.l.b16 %v31
  %v185 = vunpack.c.l.b16 %v32
  %v186 = vunpack.c.l.b16 %v33
  %v187 = vunpack.c.l.b16 %v34
  %v188 = vunpack.c.l.b16 %v35
  %v189 = vunpack.c.l.b16 %v36
  %v190 = vunpack.c.l.b16 %v37
  %v191 = vunpack.c.l.b16 %v38
  %v192 = vunpack.c.l.b16 %v39
  %v193 = vunpack.c.l.b16 %v40
  %v194 = vunpack.c.l.b16 %v41
  %v195 = vunpack.c.l.b16 %v42
  %v196 = vunpack.c.l.b16 %v43
  %v197 = vunpack.c.l.b16 %v44
  %v198 = vunpack.c.l.b16 %v45
  %v199 = vunpack.c.l.b16 %v46
  %v200 = vunpack.c.l.b16 %v47
  %v201 = vunpack.c.l.b16 %v48
  %v202 = vunpack.c.l.b16 %v49
  %v203 = vunpack.c.l.b16 %v50
  %v204 = vunpack.c.l.b16 %v51
  %v205 = vunpack.c.l.b16 %v52
  %v206 = vunpack.c.l.b16 %v53
  %v207 = vunpack.c.l.b16 %v54
  %v208 = vunpack.c.l.b16 %v55
  %v209 = vunpack.c.l.b16 %v56
  %v210 = vunpack.c.l.b16 %v57
  %v211 = vunpack.c.l.b16 %v58
  %v212 = vunpack.c.l.b16 %v59
  %v213 = vunpack.c.l.b16 %v60
  %v214 = vunpack.c.l.b16 %v61
  %v215 = vunpack.c.l.b16 %v62
  %v216 = vunpack.c.l.b16 %v63
  %v217 = vunpack.c.l.b16 %v64
  %v218 = vunpack.c.l.b16 %v65
  %v219 = vunpack.c.l.b16 %v66
  %v220 = vunpack.c.l.b16 %v67
  %v221 = vunpack.c.l.b16 %v68
  %v222 = vunpack.c.l.b16 %v69
  %v223 = vunpack.c.l.b16 %v70
  %v224 = vunpack.c.l.b16 %v71
  %v225 = vunpack.c.l.b16 %v72
  %v226 = vunpack.c.l.b16 %v73
  %v227 = vunpack.c.l.b16 %v74
  %v228 = vunpack.c.l.b16 %v75
  %v229 = vunpack.c.l.b16 %v76
  %v230 = vpack.c.b16 %v177, %v176
  %v231 = vpack.c.b16 %v179, %v178
  %v232 = vpack.c.b16 %v181, %v180
  %v233 = vpack.c.b16 %v183, %v182
  %v234 = vpack.c.b16 %v185, %v184
  %v235 = vpack.c.b16 %v187, %v186
  %v236 = vpack.c.b16 %v189, %v188
  %v237 = vpack.c.b16 %v191, %v190
  %v238 = vpack.c.b16 %v193, %v192
  %v239 = vpack.c.b16 %v195, %v194
  %v240 = vpack.c.b16 %v197, %v196
  %v241 = vpack.c.b16 %v199, %v198
  %v242 = vpack.c.b16 %v201, %v200
  %v243 = vpack.c.b16 %v203, %v202
  %v244 = vpack.c.b16 %v205, %v204
  %v245 = vpack.c.b16 %v207, %v206
  %v246 = vpack.c.b16 %v209, %v208
  %v247 = vpack.c.b16 %v211, %v210
  %v248 = vpack.c.b16 %v213, %v212
  %v249 = vpack.c.b16 %v215, %v214
  %v250 = vpack.c.b16 %v217, %v216
  %v251 = vpack.c.b16 %v219, %v218
  %v252 = vpack.c.b16 %v221, %v220
  %v253 = vpack.c.b16 %v223, %v222
  %v254 = vpack.c.b16 %v225, %v224
  %v255 = vpack.c.b16 %v227, %v226
  %v256 = vpack.c.b16 %v229, %v228
  %vm284 = vcmask 392192
  %v286 = vsel %vm284, %v111, 0
  %v289 = vsel %vm284, %v115, 0
  %291 = vmatprep.subr.bf16.mxu0 0
  %292 = vmatpush1.bf16.msra.mxu0 %v237
  %293 = vmatprep.subr.bf16.mxu0 0
  %294 = vmatpush1.bf16.msra.mxu0 %v236
  %295 = vmatprep.subr.bf16.mxu0 0
  %296 = vmatpush1.bf16.msra.mxu0 %v235
  %297 = vmatprep.subr.bf16.mxu0 0
  %298 = vmatpush1.bf16.msra.mxu0 %v234
  %299 = vmatprep.subr.bf16.mxu0 0
  %300 = vmatpush1.bf16.msra.mxu0 %v233
  %301 = vmatprep.subr.bf16.mxu0 0
  %302 = vmatpush1.bf16.msra.mxu0 %v232
  %303 = vmatprep.subr.bf16.mxu0 0
  %304 = vmatpush1.bf16.msra.mxu0 %v231
  %305 = vmatprep.subr.bf16.mxu0 0
  %306 = vmatpush1.bf16.msra.mxu0 %v230
  %307 = vmatprep.subr.bf16.mxu0 0
  %308 = vmatpush2.bf16.msra.mxu0 %v245
  %309 = vmatprep.subr.bf16.mxu0 0
  %310 = vmatpush2.bf16.msra.mxu0 %v244
  %311 = vmatprep.subr.bf16.mxu0 0
  %312 = vmatpush2.bf16.msra.mxu0 %v243
  %313 = vmatprep.subr.bf16.mxu0 0
  %314 = vmatpush2.bf16.msra.mxu0 %v242
  %315 = vmatprep.subr.bf16.mxu0 0
  %316 = vmatpush2.bf16.msra.mxu0 %v241
  %317 = vmatprep.subr.bf16.mxu0 0
  %318 = vmatpush2.bf16.msra.mxu0 %v240
  %319 = vmatprep.subr.bf16.mxu0 0
  %320 = vmatpush2.bf16.msra.mxu0 %v239
  %321 = vmatprep.subr.bf16.mxu0 0
  %322 = vmatpush2.bf16.msra.mxu0 %v238
  %323 = vmatprep.mubr.bf16.mxu0 %v109
  %324 = vmatmul.mubr.bf16.gmra.mxu0 %v108
  %v325 = vpop.f32.mrf.mxu0
  %v326 = vadd.f32 %v82, %v325
  %v327 = vpop.f32.mrf.mxu0
  %v328 = vpop.f32.mrf.mxu0
  %v329 = vadd.f32 %v82, %v328
  %v330 = vpop.f32.mrf.mxu0
  %331 = vmatprep.mubr.bf16.mxu0 %v113
  %332 = vmatmul.mubr.bf16.gmra.mxu0 %v112
  %v333 = vpop.f32.mrf.mxu0
  %v334 = vadd.f32 %v82, %v333
  %v335 = vpop.f32.mrf.mxu0
  %v336 = vpop.f32.mrf.mxu0
  %v337 = vadd.f32 %v82, %v336
  %v338 = vpop.f32.mrf.mxu0
  %339 = vdwg.mxu0
  %340 = vmatprep.subr.bf16.mxu0 0
  %341 = vmatpush1.bf16.msra.mxu0 %v253
  %342 = vmatprep.subr.bf16.mxu0 0
  %343 = vmatpush1.bf16.msra.mxu0 %v252
  %344 = vmatprep.subr.bf16.mxu0 0
  %345 = vmatpush1.bf16.msra.mxu0 %v251
  %346 = vmatprep.subr.bf16.mxu0 0
  %347 = vmatpush1.bf16.msra.mxu0 %v250
  %348 = vmatprep.subr.bf16.mxu0 0
  %349 = vmatpush1.bf16.msra.mxu0 %v249
  %350 = vmatprep.subr.bf16.mxu0 0
  %351 = vmatpush1.bf16.msra.mxu0 %v248
  %352 = vmatprep.subr.bf16.mxu0 0
  %353 = vmatpush1.bf16.msra.mxu0 %v247
  %354 = vmatprep.subr.bf16.mxu0 0
  %355 = vmatpush1.bf16.msra.mxu0 %v246
  %356 = vmatprep.subr.bf16.mxu0 0
  %357 = vmatpush2.bf16.msra.mxu0 0
  %358 = vmatprep.subr.bf16.mxu0 0
  %359 = vmatpush2.bf16.msra.mxu0 0
  %360 = vmatprep.subr.bf16.mxu0 0
  %361 = vmatpush2.bf16.msra.mxu0 0
  %362 = vmatprep.subr.bf16.mxu0 0
  %363 = vmatpush2.bf16.msra.mxu0 0
  %364 = vmatprep.subr.bf16.mxu0 0
  %365 = vmatpush2.bf16.msra.mxu0 0
  %366 = vmatprep.subr.bf16.mxu0 0
  %367 = vmatpush2.bf16.msra.mxu0 %v256
  %368 = vmatprep.subr.bf16.mxu0 0
  %369 = vmatpush2.bf16.msra.mxu0 %v255
  %370 = vmatprep.subr.bf16.mxu0 0
  %371 = vmatpush2.bf16.msra.mxu0 %v254
  %372 = vmatprep.mubr.bf16.mxu0 %v286
  %373 = vmatmul.mubr.bf16.gmra.mxu0 %v110
  %v374 = vpop.f32.mrf.mxu0
  %v375 = vadd.f32 %v326, %v374
  %v376 = vpop.f32.mrf.mxu0
  %v377 = vpop.f32.mrf.mxu0
  %v378 = vadd.f32 %v329, %v377
  %v379 = vpop.f32.mrf.mxu0
  %380 = vmatprep.mubr.bf16.mxu0 %v289
  %381 = vmatmul.mubr.bf16.gmra.mxu0 %v114
  %v382 = vpop.f32.mrf.mxu0
  %v383 = vadd.f32 %v334, %v382
  %v384 = vpop.f32.mrf.mxu0
  %v385 = vpop.f32.mrf.mxu0
  %v386 = vadd.f32 %v337, %v385
  %v387 = vpop.f32.mrf.mxu0
  %388 = vdwg.mxu0
  %vm389 = vcmp.ge.f32.partialorder %v375, 0.0
  %vm390 = vcmp.ge.f32.partialorder %v378, 0.0
  %vm391 = vcmp.ge.f32.partialorder %v383, 0.0
  %vm392 = vcmp.ge.f32.partialorder %v386, 0.0
  %v393 = vmul.f32 %v375, 0.2
  %v394 = vmul.f32 %v378, 0.2
  %v395 = vmul.f32 %v383, 0.2
  %v396 = vmul.f32 %v386, 0.2
  %v397 = vsel %vm389, %v375, %v393
  %v398 = vsel %vm390, %v378, %v394
  %v399 = vsel %vm391, %v383, %v395
  %v400 = vsel %vm392, %v386, %v396
  %v401 = vpack.c.bf16 %v398, %v397
  %v402 = vpack.c.bf16 %v400, %v399
  %v405 = vunpack.c.l.b16 %v401
  %v406 = vunpack.c.h.b16 %v401
  %v407 = vunpack.c.l.b16 %v402
  %v408 = vunpack.c.h.b16 %v402
  %v409 = vpack.c.b16 %v405, %v405
  %v410 = vpack.c.b16 %v406, %v406
  %v411 = vpack.c.b16 %v407, %v407
  %v412 = vpack.c.b16 %v408, %v408
  %vm417 = vcmask 781312
  %418 = vst.msk [vmem:[%s3] sm:$0xf] %vm417, %v409
  %419 = vst.msk [vmem:[%s3 + $0x4] sm:$0xf] %vm417, %v410
  %420 = vst.msk [vmem:[%s3 + $0x8] sm:$0xf] %vm417, %v411
  %421 = vst.msk [vmem:[%s3 + $0xc] sm:$0xf] %vm417, %v412
  // Predicated region
  $region14: #{ifnet_forward.86} parent=0 // pred_check
    _
  $region15: #{ifnet_forward.86} parent=0 // pred_check_branch
    %423 = sbr.rel (0) target = $region17
  $region16: #{ifnet_forward.86} parent=0 // pred_region
    _
  $region17: #{ifnet_forward.86} parent=0 // pred_fallthru
    _
  // Predicated region
  $region18: #{ifnet_forward.86} parent=0 // pred_check
    _
  $region19: #{ifnet_forward.86} parent=0 // pred_check_branch
    %425 = sbr.rel (0) target = $region21
  $region20: #{ifnet_forward.86} parent=0 // pred_region
    _
  $region21: #{ifnet_forward.86} parent=0 // pred_fallthru
    _

// kernel: ifnet_forward.87
$region0: #{ifnet_forward.87}
  #allocation0 [shape = 'u32[]', space=smem, size = 0x4, offset = 0x4, fixed_abs, tag = 'smem constant byte address 0x4 - core index']
  #allocation1 [shape = 'u32[144,128]{1,0:T(1,128)}', space=vmem, size = 0x12000, scoped, tag = 'internal scratch']
  %s0 = inlined_call_operand.vmem [shape: bf16[32,864], index: 0, kind: input, shape index: {}]
  %s1 = inlined_call_operand.vmem [shape: bf16[864,96], index: 1, kind: input, shape index: {}]
  %s2 = inlined_call_operand.vmem [shape: f32[1,96], index: 2, kind: input, shape index: {}]
  %s3 = inlined_call_operand.vmem [shape: f32[1,96], index: 3, kind: input, shape index: {}]
  %s4 = inlined_call_operand.vmem [shape: bf16[32,96], index: 4, kind: input, shape index: {}]
  %s5 = inlined_call_operand.vmem [shape: bf16[32,96], index: 5, kind: output, shape index: {}]
  %s6 = sld [smem:[#allocation0]]
  $region30: #{ifnet_forward.87} parent=0
    _
  %s8 = ssub.s32 1, %s6
  %s9 = scalar_select 0, %s8, %s6
  // Predicated region
  $region2: #{ifnet_forward.87} parent=0 // pred_check
    _
  $region3: #{ifnet_forward.87} parent=0 // pred_check_branch
    %11 = sbr.rel (0) target = $region5
  $region4: #{ifnet_forward.87} parent=0 // pred_region
    _
  $region5: #{ifnet_forward.87} parent=0 // pred_fallthru
    _
  // Predicated region
  $region6: #{ifnet_forward.87} parent=0 // pred_check
    _
  $region7: #{ifnet_forward.87} parent=0 // pred_check_branch
    %13 = sbr.rel (0) target = $region9
  $region8: #{ifnet_forward.87} parent=0 // pred_region
    _
  $region9: #{ifnet_forward.87} parent=0 // pred_fallthru
    _
  // Predicated region
  $region10: #{ifnet_forward.87} parent=0 // pred_check
    _
  $region11: #{ifnet_forward.87} parent=0 // pred_check_branch
    %15 = sbr.rel (0) target = $region13
  $region12: #{ifnet_forward.87} parent=0 // pred_region
    _
  $region13: #{ifnet_forward.87} parent=0 // pred_fallthru
    _
  // Predicated region
  $region14: #{ifnet_forward.87} parent=0 // pred_check
    _
  $region15: #{ifnet_forward.87} parent=0 // pred_check_branch
    %17 = sbr.rel (0) target = $region17
  $region16: #{ifnet_forward.87} parent=0 // pred_region
    _
  $region17: #{ifnet_forward.87} parent=0 // pred_fallthru
    _
  // Predicated region
  $region18: #{ifnet_forward.87} parent=0 // pred_check
    _
  $region19: #{ifnet_forward.87} parent=0 // pred_check_branch
    %19 = sbr.rel (0) target = $region21
  $region20: #{ifnet_forward.87} parent=0 // pred_region
    _
  $region21: #{ifnet_forward.87} parent=0 // pred_fallthru
    _
  %v21 = vld [vmem:[%s0] sm:$0xff]
  %v22 = vld [vmem:[%s0 + $0x8] sm:$0xff]
  %v23 = vld [vmem:[%s0 + $0x10] sm:$0xff]
  %v24 = vld [vmem:[%s0 + $0x18] sm:$0xf]
  %v25 = vld [vmem:[%s0 + $0x1c] sm:$0xff]
  %v26 = vld [vmem:[%s0 + $0x24] sm:$0xff]
  %v27 = vld [vmem:[%s0 + $0x2c] sm:$0xff]
  %v28 = vld [vmem:[%s0 + $0x34] sm:$0xf]
  %v29 = vld [vmem:[%s0 + $0x38] sm:$0xff]
  %v30 = vld [vmem:[%s0 + $0x40] sm:$0xff]
  %v31 = vld [vmem:[%s0 + $0x48] sm:$0xff]
  %v32 = vld [vmem:[%s0 + $0x50] sm:$0xf]
  %v33 = vld [vmem:[%s0 + $0x54] sm:$0xff]
  %v34 = vld [vmem:[%s0 + $0x5c] sm:$0xff]
  %v35 = vld [vmem:[%s0 + $0x64] sm:$0xff]
  %v36 = vld [vmem:[%s0 + $0x6c] sm:$0xf]
  %v37 = vld [vmem:[%s1] sm:$0xf]
  %v38 = vld [vmem:[%s1 + $0x4] sm:$0xf]
  %v39 = vld [vmem:[%s1 + $0x8] sm:$0xf]
  %v40 = vld [vmem:[%s1 + $0xc] sm:$0xf]
  %v41 = vld [vmem:[%s1 + $0x10] sm:$0xf]
  %v42 = vld [vmem:[%s1 + $0x14] sm:$0xf]
  %v43 = vld [vmem:[%s1 + $0x18] sm:$0xf]
  %v44 = vld [vmem:[%s1 + $0x1c] sm:$0xf]
  %v45 = vld [vmem:[%s1 + $0x20] sm:$0xf]
  %v46 = vld [vmem:[%s1 + $0x24] sm:$0xf]
  %v47 = vld [vmem:[%s1 + $0x28] sm:$0xf]
  %v48 = vld [vmem:[%s1 + $0x2c] sm:$0xf]
  %v49 = vld [vmem:[%s1 + $0x30] sm:$0xf]
  %v50 = vld [vmem:[%s1 + $0x34] sm:$0xf]
  %v51 = vld [vmem:[%s1 + $0x38] sm:$0xf]
  %v52 = vld [vmem:[%s1 + $0x3c] sm:$0xf]
  %v53 = vld [vmem:[%s1 + $0x40] sm:$0xf]
  %v54 = vld [vmem:[%s1 + $0x44] sm:$0xf]
  %v55 = vld [vmem:[%s1 + $0x48] sm:$0xf]
  %v56 = vld [vmem:[%s1 + $0x4c] sm:$0xf]
  %v57 = vld [vmem:[%s1 + $0x50] sm:$0xf]
  %v58 = vld [vmem:[%s1 + $0x54] sm:$0xf]
  %v59 = vld [vmem:[%s1 + $0x58] sm:$0xf]
  %v60 = vld [vmem:[%s1 + $0x5c] sm:$0xf]
  %v61 = vld [vmem:[%s1 + $0x60] sm:$0xf]
  %v62 = vld [vmem:[%s1 + $0x64] sm:$0xf]
  %v63 = vld [vmem:[%s1 + $0x68] sm:$0xf]
  %v64 = vld [vmem:[%s1 + $0x6c] sm:$0xf]
  %v65 = vld [vmem:[%s1 + $0x70] sm:$0xf]
  %v66 = vld [vmem:[%s1 + $0x74] sm:$0xf]
  %v67 = vld [vmem:[%s1 + $0x78] sm:$0xf]
  %v68 = vld [vmem:[%s1 + $0x7c] sm:$0xf]
  %v69 = vld [vmem:[%s1 + $0x80] sm:$0xf]
  %v70 = vld [vmem:[%s1 + $0x84] sm:$0xf]
  %v71 = vld [vmem:[%s1 + $0x88] sm:$0xf]
  %v72 = vld [vmem:[%s1 + $0x8c] sm:$0xf]
  %v73 = vld [vmem:[%s1 + $0x90] sm:$0xf]
  %v74 = vld [vmem:[%s1 + $0x94] sm:$0xf]
  %v75 = vld [vmem:[%s1 + $0x98] sm:$0xf]
  %v76 = vld [vmem:[%s1 + $0x9c] sm:$0xf]
  %v77 = vld [vmem:[%s1 + $0xa0] sm:$0xf]
  %v78 = vld [vmem:[%s1 + $0xa4] sm:$0xf]
  %v79 = vld [vmem:[%s1 + $0xa8] sm:$0xf]
  %v80 = vld [vmem:[%s1 + $0xac] sm:$0xf]
  %v81 = vld [vmem:[%s1 + $0xb0] sm:$0xf]
  %v82 = vld [vmem:[%s1 + $0xb4] sm:$0xf]
  %v83 = vld [vmem:[%s1 + $0xb8] sm:$0xf]
  %v84 = vld [vmem:[%s1 + $0xbc] sm:$0xf]
  %v85 = vld [vmem:[%s1 + $0xc0] sm:$0xf]
  %v86 = vld [vmem:[%s1 + $0xc4] sm:$0xf]
  %v87 = vld [vmem:[%s1 + $0xc8] sm:$0xf]
  %v88 = vld [vmem:[%s1 + $0xcc] sm:$0xf]
  %v89 = vld [vmem:[%s1 + $0xd0] sm:$0xf]
  %v90 = vld [vmem:[%s1 + $0xd4] sm:$0xf]
  %v91 = vld [vmem:[%s1 + $0xd8] sm:$0xf]
  %v92 = vld [vmem:[%s1 + $0xdc] sm:$0xf]
  %v93 = vld [vmem:[%s1 + $0xe0] sm:$0xf]
  %v94 = vld [vmem:[%s1 + $0xe4] sm:$0xf]
  %v95 = vld [vmem:[%s1 + $0xe8] sm:$0xf]
  %v96 = vld [vmem:[%s1 + $0xec] sm:$0xf]
  %v97 = vld [vmem:[%s1 + $0xf0] sm:$0xf]
  %v98 = vld [vmem:[%s1 + $0xf4] sm:$0xf]
  %v99 = vld [vmem:[%s1 + $0xf8] sm:$0xf]
  %v100 = vld [vmem:[%s1 + $0xfc] sm:$0xf]
  %v101 = vld [vmem:[%s1 + $0x100] sm:$0xf]
  %v102 = vld [vmem:[%s1 + $0x104] sm:$0xf]
  %v103 = vld [vmem:[%s1 + $0x108] sm:$0xf]
  %v104 = vld [vmem:[%s1 + $0x10c] sm:$0xf]
  %v105 = vld [vmem:[%s1 + $0x110] sm:$0xf]
  %v106 = vld [vmem:[%s1 + $0x114] sm:$0xf]
  %v107 = vld [vmem:[%s1 + $0x118] sm:$0xf]
  %v108 = vld [vmem:[%s1 + $0x11c] sm:$0xf]
  %v109 = vld [vmem:[%s1 + $0x120] sm:$0xf]
  %v110 = vld [vmem:[%s1 + $0x124] sm:$0xf]
  %v111 = vld [vmem:[%s1 + $0x128] sm:$0xf]
  %v112 = vld [vmem:[%s1 + $0x12c] sm:$0xf]
  %v113 = vld [vmem:[%s1 + $0x130] sm:$0xf]
  %v114 = vld [vmem:[%s1 + $0x134] sm:$0xf]
  %v115 = vld [vmem:[%s1 + $0x138] sm:$0xf]
  %v116 = vld [vmem:[%s1 + $0x13c] sm:$0xf]
  %v117 = vld [vmem:[%s1 + $0x140] sm:$0xf]
  %v118 = vld [vmem:[%s1 + $0x144] sm:$0xf]
  %v119 = vld [vmem:[%s1 + $0x148] sm:$0xf]
  %v120 = vld [vmem:[%s1 + $0x14c] sm:$0xf]
  %v121 = vld [vmem:[%s1 + $0x150] sm:$0xf]
  %v122 = vld [vmem:[%s1 + $0x154] sm:$0xf]
  %v123 = vld [vmem:[%s1 + $0x158] sm:$0xf]
  %v124 = vld [vmem:[%s1 + $0x15c] sm:$0xf]
  %v125 = vld [vmem:[%s1 + $0x160] sm:$0xf]
  %v126 = vld [vmem:[%s1 + $0x164] sm:$0xf]
  %v127 = vld [vmem:[%s1 + $0x168] sm:$0xf]
  %v128 = vld [vmem:[%s1 + $0x16c] sm:$0xf]
  %v129 = vld [vmem:[%s1 + $0x170] sm:$0xf]
  %v130 = vld [vmem:[%s1 + $0x174] sm:$0xf]
  %v131 = vld [vmem:[%s1 + $0x178] sm:$0xf]
  %v132 = vld [vmem:[%s1 + $0x17c] sm:$0xf]
  %v133 = vld [vmem:[%s1 + $0x180] sm:$0xf]
  %v134 = vld [vmem:[%s1 + $0x184] sm:$0xf]
  %v135 = vld [vmem:[%s1 + $0x188] sm:$0xf]
  %v136 = vld [vmem:[%s1 + $0x18c] sm:$0xf]
  %v137 = vld [vmem:[%s1 + $0x190] sm:$0xf]
  %v138 = vld [vmem:[%s1 + $0x194] sm:$0xf]
  %v139 = vld [vmem:[%s1 + $0x198] sm:$0xf]
  %v140 = vld [vmem:[%s1 + $0x19c] sm:$0xf]
  %v141 = vld [vmem:[%s1 + $0x1a0] sm:$0xf]
  %v142 = vld [vmem:[%s1 + $0x1a4] sm:$0xf]
  %v143 = vld [vmem:[%s1 + $0x1a8] sm:$0xf]
  %v144 = vld [vmem:[%s1 + $0x1ac] sm:$0xf]
  %v145 = vld [vmem:[%s2] sm:$0x1]
  %v147 = vlaneseq
  %v148 = vshrl.u32 %v147, 7
  %v149 = vsub.s32 0, %v148
  %v150 = vrot.slane %v145, %v149
  %v168 = vunpack.c.l.b16 %v21
  %v169 = vunpack.c.h.b16 %v21
  %v170 = vunpack.c.l.b16 %v22
  %v171 = vunpack.c.h.b16 %v22
  %v172 = vunpack.c.l.b16 %v23
  %v173 = vunpack.c.h.b16 %v23
  %v174 = vunpack.c.l.b16 %v24
  %v175 = vunpack.c.l.b16 %v25
  %v176 = vunpack.c.h.b16 %v25
  %v177 = vunpack.c.l.b16 %v26
  %v178 = vunpack.c.h.b16 %v26
  %v179 = vunpack.c.l.b16 %v27
  %v180 = vunpack.c.h.b16 %v27
  %v181 = vunpack.c.l.b16 %v28
  %v182 = vunpack.c.l.b16 %v29
  %v183 = vunpack.c.h.b16 %v29
  %v184 = vunpack.c.l.b16 %v30
  %v185 = vunpack.c.h.b16 %v30
  %v186 = vunpack.c.l.b16 %v31
  %v187 = vunpack.c.h.b16 %v31
  %v188 = vunpack.c.l.b16 %v32
  %v189 = vunpack.c.l.b16 %v33
  %v190 = vunpack.c.h.b16 %v33
  %v191 = vunpack.c.l.b16 %v34
  %v192 = vunpack.c.h.b16 %v34
  %v193 = vunpack.c.l.b16 %v35
  %v194 = vunpack.c.h.b16 %v35
  %v195 = vunpack.c.l.b16 %v36
  %v196 = vpack.c.b16 %v175, %v168
  %v197 = vpack.c.b16 %v176, %v169
  %v198 = vpack.c.b16 %v177, %v170
  %v199 = vpack.c.b16 %v178, %v171
  %v200 = vpack.c.b16 %v179, %v172
  %v201 = vpack.c.b16 %v180, %v173
  %v202 = vpack.c.b16 %v181, %v174
  %v203 = vpack.c.b16 %v189, %v182
  %v204 = vpack.c.b16 %v190, %v183
  %v205 = vpack.c.b16 %v191, %v184
  %v206 = vpack.c.b16 %v192, %v185
  %v207 = vpack.c.b16 %v193, %v186
  %v208 = vpack.c.b16 %v194, %v187
  %v209 = vpack.c.b16 %v195, %v188
  %v330 = vunpack.c.l.b16 %v37
  %v331 = vunpack.c.l.b16 %v38
  %v332 = vunpack.c.l.b16 %v39
  %v333 = vunpack.c.l.b16 %v40
  %v334 = vunpack.c.l.b16 %v41
  %v335 = vunpack.c.l.b16 %v42
  %v336 = vunpack.c.l.b16 %v43
  %v337 = vunpack.c.l.b16 %v44
  %v338 = vunpack.c.l.b16 %v45
  %v339 = vunpack.c.l.b16 %v46
  %v340 = vunpack.c.l.b16 %v47
  %v341 = vunpack.c.l.b16 %v48
  %v342 = vunpack.c.l.b16 %v49
  %v343 = vunpack.c.l.b16 %v50
  %v344 = vunpack.c.l.b16 %v51
  %v345 = vunpack.c.l.b16 %v52
  %v346 = vunpack.c.l.b16 %v53
  %v347 = vunpack.c.l.b16 %v54
  %v348 = vunpack.c.l.b16 %v55
  %v349 = vunpack.c.l.b16 %v56
  %v350 = vunpack.c.l.b16 %v57
  %v351 = vunpack.c.l.b16 %v58
  %v352 = vunpack.c.l.b16 %v59
  %v353 = vunpack.c.l.b16 %v60
  %v354 = vunpack.c.l.b16 %v61
  %v355 = vunpack.c.l.b16 %v62
  %v356 = vunpack.c.l.b16 %v63
  %v357 = vunpack.c.l.b16 %v64
  %v358 = vunpack.c.l.b16 %v65
  %v359 = vunpack.c.l.b16 %v66
  %v360 = vunpack.c.l.b16 %v67
  %v361 = vunpack.c.l.b16 %v68
  %v362 = vunpack.c.l.b16 %v69
  %v363 = vunpack.c.l.b16 %v70
  %v364 = vunpack.c.l.b16 %v71
  %v365 = vunpack.c.l.b16 %v72
  %v366 = vunpack.c.l.b16 %v73
  %v367 = vunpack.c.l.b16 %v74
  %v368 = vunpack.c.l.b16 %v75
  %v369 = vunpack.c.l.b16 %v76
  %v370 = vunpack.c.l.b16 %v77
  %v371 = vunpack.c.l.b16 %v78
  %v372 = vunpack.c.l.b16 %v79
  %v373 = vunpack.c.l.b16 %v80
  %v374 = vunpack.c.l.b16 %v81
  %v375 = vunpack.c.l.b16 %v82
  %v376 = vunpack.c.l.b16 %v83
  %v377 = vunpack.c.l.b16 %v84
  %v378 = vunpack.c.l.b16 %v85
  %v379 = vunpack.c.l.b16 %v86
  %v380 = vunpack.c.l.b16 %v87
  %v381 = vunpack.c.l.b16 %v88
  %v382 = vunpack.c.l.b16 %v89
  %v383 = vunpack.c.l.b16 %v90
  %v384 = vunpack.c.l.b16 %v91
  %v385 = vunpack.c.l.b16 %v92
  %v386 = vunpack.c.l.b16 %v93
  %v387 = vunpack.c.l.b16 %v94
  %v388 = vunpack.c.l.b16 %v95
  %v389 = vunpack.c.l.b16 %v96
  %v390 = vunpack.c.l.b16 %v97
  %v391 = vunpack.c.l.b16 %v98
  %v392 = vunpack.c.l.b16 %v99
  %v393 = vunpack.c.l.b16 %v100
  %v394 = vunpack.c.l.b16 %v101
  %v395 = vunpack.c.l.b16 %v102
  %v396 = vunpack.c.l.b16 %v103
  %v397 = vunpack.c.l.b16 %v104
  %v398 = vunpack.c.l.b16 %v105
  %v399 = vunpack.c.l.b16 %v106
  %v400 = vunpack.c.l.b16 %v107
  %v401 = vunpack.c.l.b16 %v108
  %v402 = vunpack.c.l.b16 %v109
  %v403 = vunpack.c.l.b16 %v110
  %v404 = vunpack.c.l.b16 %v111
  %v405 = vunpack.c.l.b16 %v112
  %v406 = vunpack.c.l.b16 %v113
  %v407 = vunpack.c.l.b16 %v114
  %v408 = vunpack.c.l.b16 %v115
  %v409 = vunpack.c.l.b16 %v116
  %v410 = vunpack.c.l.b16 %v117
  %v411 = vunpack.c.l.b16 %v118
  %v412 = vunpack.c.l.b16 %v119
  %v413 = vunpack.c.l.b16 %v120
  %v414 = vunpack.c.l.b16 %v121
  %v415 = vunpack.c.l.b16 %v122
  %v416 = vunpack.c.l.b16 %v123
  %v417 = vunpack.c.l.b16 %v124
  %v418 = vunpack.c.l.b16 %v125
  %v419 = vunpack.c.l.b16 %v126
  %v420 = vunpack.c.l.b16 %v127
  %v421 = vunpack.c.l.b16 %v128
  %v422 = vunpack.c.l.b16 %v129
  %v423 = vunpack.c.l.b16 %v130
  %v424 = vunpack.c.l.b16 %v131
  %v425 = vunpack.c.l.b16 %v132
  %v426 = vunpack.c.l.b16 %v133
  %v427 = vunpack.c.l.b16 %v134
  %v428 = vunpack.c.l.b16 %v135
  %v429 = vunpack.c.l.b16 %v136
  %v430 = vunpack.c.l.b16 %v137
  %v431 = vunpack.c.l.b16 %v138
  %v432 = vunpack.c.l.b16 %v139
  %v433 = vunpack.c.l.b16 %v140
  %v434 = vunpack.c.l.b16 %v141
  %v435 = vunpack.c.l.b16 %v142
  %v436 = vunpack.c.l.b16 %v143
  %v437 = vunpack.c.l.b16 %v144
  %v438 = vpack.c.b16 %v331, %v330
  %v439 = vpack.c.b16 %v333, %v332
  %v440 = vpack.c.b16 %v335, %v334
  %v441 = vpack.c.b16 %v337, %v336
  %v442 = vpack.c.b16 %v339, %v338
  %v443 = vpack.c.b16 %v341, %v340
  %v444 = vpack.c.b16 %v343, %v342
  %v445 = vpack.c.b16 %v345, %v344
  %v446 = vpack.c.b16 %v347, %v346
  %v447 = vpack.c.b16 %v349, %v348
  %v448 = vpack.c.b16 %v351, %v350
  %v449 = vpack.c.b16 %v353, %v352
  %v450 = vpack.c.b16 %v355, %v354
  %v451 = vpack.c.b16 %v357, %v356
  %v452 = vpack.c.b16 %v359, %v358
  %v453 = vpack.c.b16 %v361, %v360
  %v454 = vpack.c.b16 %v363, %v362
  %v455 = vpack.c.b16 %v365, %v364
  %v456 = vpack.c.b16 %v367, %v366
  %v457 = vpack.c.b16 %v369, %v368
  %v458 = vpack.c.b16 %v371, %v370
  %v459 = vpack.c.b16 %v373, %v372
  %v460 = vpack.c.b16 %v375, %v374
  %v461 = vpack.c.b16 %v377, %v376
  %v462 = vpack.c.b16 %v379, %v378
  %v463 = vpack.c.b16 %v381, %v380
  %v464 = vpack.c.b16 %v383, %v382
  %v465 = vpack.c.b16 %v385, %v384
  %v466 = vpack.c.b16 %v387, %v386
  %v467 = vpack.c.b16 %v389, %v388
  %v468 = vpack.c.b16 %v391, %v390
  %v469 = vpack.c.b16 %v393, %v392
  %v470 = vpack.c.b16 %v395, %v394
  %v471 = vpack.c.b16 %v397, %v396
  %v472 = vpack.c.b16 %v399, %v398
  %v473 = vpack.c.b16 %v401, %v400
  %v474 = vpack.c.b16 %v403, %v402
  %v475 = vpack.c.b16 %v405, %v404
  %v476 = vpack.c.b16 %v407, %v406
  %v477 = vpack.c.b16 %v409, %v408
  %v478 = vpack.c.b16 %v411, %v410
  %v479 = vpack.c.b16 %v413, %v412
  %v480 = vpack.c.b16 %v415, %v414
  %v481 = vpack.c.b16 %v417, %v416
  %v482 = vpack.c.b16 %v419, %v418
  %v483 = vpack.c.b16 %v421, %v420
  %v484 = vpack.c.b16 %v423, %v422
  %v485 = vpack.c.b16 %v425, %v424
  %v486 = vpack.c.b16 %v427, %v426
  %v487 = vpack.c.b16 %v429, %v428
  %v488 = vpack.c.b16 %v431, %v430
  %v489 = vpack.c.b16 %v433, %v432
  %v490 = vpack.c.b16 %v435, %v434
  %v491 = vpack.c.b16 %v437, %v436
  %vm546 = vcmask 785408
  %v548 = vsel %vm546, %v202, 0
  %v551 = vsel %vm546, %v209, 0
  %553 = vmatprep.subr.bf16.mxu0 0
  %554 = vmatpush1.bf16.msra.mxu0 %v445
  %555 = vmatprep.subr.bf16.mxu0 0
  %556 = vmatpush1.bf16.msra.mxu0 %v444
  %557 = vmatprep.subr.bf16.mxu0 0
  %558 = vmatpush1.bf16.msra.mxu0 %v443
  %559 = vmatprep.subr.bf16.mxu0 0
  %560 = vmatpush1.bf16.msra.mxu0 %v442
  %561 = vmatprep.subr.bf16.mxu0 0
  %562 = vmatpush1.bf16.msra.mxu0 %v441
  %563 = vmatprep.subr.bf16.mxu0 0
  %564 = vmatpush1.bf16.msra.mxu0 %v440
  %565 = vmatprep.subr.bf16.mxu0 0
  %566 = vmatpush1.bf16.msra.mxu0 %v439
  %567 = vmatprep.subr.bf16.mxu0 0
  %568 = vmatpush1.bf16.msra.mxu0 %v438
  %569 = vmatprep.subr.bf16.mxu0 0
  %570 = vmatpush2.bf16.msra.mxu0 %v453
  %571 = vmatprep.subr.bf16.mxu0 0
  %572 = vmatpush2.bf16.msra.mxu0 %v452
  %573 = vmatprep.subr.bf16.mxu0 0
  %574 = vmatpush2.bf16.msra.mxu0 %v451
  %575 = vmatprep.subr.bf16.mxu0 0
  %576 = vmatpush2.bf16.msra.mxu0 %v450
  %577 = vmatprep.subr.bf16.mxu0 0
  %578 = vmatpush2.bf16.msra.mxu0 %v449
  %579 = vmatprep.subr.bf16.mxu0 0
  %580 = vmatpush2.bf16.msra.mxu0 %v448
  %581 = vmatprep.subr.bf16.mxu0 0
  %582 = vmatpush2.bf16.msra.mxu0 %v447
  %583 = vmatprep.subr.bf16.mxu0 0
  %584 = vmatpush2.bf16.msra.mxu0 %v446
  %585 = vmatprep.mubr.bf16.mxu0 %v197
  %586 = vmatmul.mubr.bf16.gmra.mxu0 %v196
  %v587 = vpop.f32.mrf.mxu0
  %v588 = vadd.f32 %v150, %v587
  %v589 = vpop.f32.mrf.mxu0
  %v590 = vpop.f32.mrf.mxu0
  %v591 = vadd.f32 %v150, %v590
  %v592 = vpop.f32.mrf.mxu0
  %593 = vmatprep.mubr.bf16.mxu0 %v204
  %594 = vmatmul.mubr.bf16.gmra.mxu0 %v203
  %v595 = vpop.f32.mrf.mxu0
  %v596 = vadd.f32 %v150, %v595
  %v597 = vpop.f32.mrf.mxu0
  %v598 = vpop.f32.mrf.mxu0
  %v599 = vadd.f32 %v150, %v598
  %v600 = vpop.f32.mrf.mxu0
  %601 = vdwg.mxu0
  %602 = vmatprep.subr.bf16.mxu0 0
  %603 = vmatpush1.bf16.msra.mxu0 %v461
  %604 = vmatprep.subr.bf16.mxu0 0
  %605 = vmatpush1.bf16.msra.mxu0 %v460
  %606 = vmatprep.subr.bf16.mxu0 0
  %607 = vmatpush1.bf16.msra.mxu0 %v459
  %608 = vmatprep.subr.bf16.mxu0 0
  %609 = vmatpush1.bf16.msra.mxu0 %v458
  %610 = vmatprep.subr.bf16.mxu0 0
  %611 = vmatpush1.bf16.msra.mxu0 %v457
  %612 = vmatprep.subr.bf16.mxu0 0
  %613 = vmatpush1.bf16.msra.mxu0 %v456
  %614 = vmatprep.subr.bf16.mxu0 0
  %615 = vmatpush1.bf16.msra.mxu0 %v455
  %616 = vmatprep.subr.bf16.mxu0 0
  %617 = vmatpush1.bf16.msra.mxu0 %v454
  %618 = vmatprep.subr.bf16.mxu0 0
  %619 = vmatpush2.bf16.msra.mxu0 %v469
  %620 = vmatprep.subr.bf16.mxu0 0
  %621 = vmatpush2.bf16.msra.mxu0 %v468
  %622 = vmatprep.subr.bf16.mxu0 0
  %623 = vmatpush2.bf16.msra.mxu0 %v467
  %624 = vmatprep.subr.bf16.mxu0 0
  %625 = vmatpush2.bf16.msra.mxu0 %v466
  %626 = vmatprep.subr.bf16.mxu0 0
  %627 = vmatpush2.bf16.msra.mxu0 %v465
  %628 = vmatprep.subr.bf16.mxu0 0
  %629 = vmatpush2.bf16.msra.mxu0 %v464
  %630 = vmatprep.subr.bf16.mxu0 0
  %631 = vmatpush2.bf16.msra.mxu0 %v463
  %632 = vmatprep.subr.bf16.mxu0 0
  %633 = vmatpush2.bf16.msra.mxu0 %v462
  %634 = vmatprep.mubr.bf16.mxu0 %v199
  %635 = vmatmul.mubr.bf16.gmra.mxu0 %v198
  %v636 = vpop.f32.mrf.mxu0
  %v637 = vadd.f32 %v588, %v636
  %v638 = vpop.f32.mrf.mxu0
  %v639 = vpop.f32.mrf.mxu0
  %v640 = vadd.f32 %v591, %v639
  %v641 = vpop.f32.mrf.mxu0
  %642 = vmatprep.mubr.bf16.mxu0 %v206
  %643 = vmatmul.mubr.bf16.gmra.mxu0 %v205
  %v644 = vpop.f32.mrf.mxu0
  %v645 = vadd.f32 %v596, %v644
  %v646 = vpop.f32.mrf.mxu0
  %v647 = vpop.f32.mrf.mxu0
  %v648 = vadd.f32 %v599, %v647
  %v649 = vpop.f32.mrf.mxu0
  %650 = vdwg.mxu0
  %651 = vmatprep.subr.bf16.mxu0 0
  %652 = vmatpush1.bf16.msra.mxu0 %v477
  %653 = vmatprep.subr.bf16.mxu0 0
  %654 = vmatpush1.bf16.msra.mxu0 %v476
  %655 = vmatprep.subr.bf16.mxu0 0
  %656 = vmatpush1.bf16.msra.mxu0 %v475
  %657 = vmatprep.subr.bf16.mxu0 0
  %658 = vmatpush1.bf16.msra.mxu0 %v474
  %659 = vmatprep.subr.bf16.mxu0 0
  %660 = vmatpush1.bf16.msra.mxu0 %v473
  %661 = vmatprep.subr.bf16.mxu0 0
  %662 = vmatpush1.bf16.msra.mxu0 %v472
  %663 = vmatprep.subr.bf16.mxu0 0
  %664 = vmatpush1.bf16.msra.mxu0 %v471
  %665 = vmatprep.subr.bf16.mxu0 0
  %666 = vmatpush1.bf16.msra.mxu0 %v470
  %667 = vmatprep.subr.bf16.mxu0 0
  %668 = vmatpush2.bf16.msra.mxu0 %v485
  %669 = vmatprep.subr.bf16.mxu0 0
  %670 = vmatpush2.bf16.msra.mxu0 %v484
  %671 = vmatprep.subr.bf16.mxu0 0
  %672 = vmatpush2.bf16.msra.mxu0 %v483
  %673 = vmatprep.subr.bf16.mxu0 0
  %674 = vmatpush2.bf16.msra.mxu0 %v482
  %675 = vmatprep.subr.bf16.mxu0 0
  %676 = vmatpush2.bf16.msra.mxu0 %v481
  %677 = vmatprep.subr.bf16.mxu0 0
  %678 = vmatpush2.bf16.msra.mxu0 %v480
  %679 = vmatprep.subr.bf16.mxu0 0
  %680 = vmatpush2.bf16.msra.mxu0 %v479
  %681 = vmatprep.subr.bf16.mxu0 0
  %682 = vmatpush2.bf16.msra.mxu0 %v478
  %683 = vmatprep.mubr.bf16.mxu0 %v201
  %684 = vmatmul.mubr.bf16.gmra.mxu0 %v200
  %v685 = vpop.f32.mrf.mxu0
  %v686 = vadd.f32 %v637, %v685
  %v687 = vpop.f32.mrf.mxu0
  %v688 = vpop.f32.mrf.mxu0
  %v689 = vadd.f32 %v640, %v688
  %v690 = vpop.f32.mrf.mxu0
  %691 = vmatprep.mubr.bf16.mxu0 %v208
  %692 = vmatmul.mubr.bf16.gmra.mxu0 %v207
  %v693 = vpop.f32.mrf.mxu0
  %v694 = vadd.f32 %v645, %v693
  %v695 = vpop.f32.mrf.mxu0
  %v696 = vpop.f32.mrf.mxu0
  %v697 = vadd.f32 %v648, %v696
  %v698 = vpop.f32.mrf.mxu0
  %699 = vdwg.mxu0
  %700 = vmatprep.subr.bf16.mxu0 0
  %701 = vmatpush1.bf16.msra.mxu0 0
  %702 = vmatprep.subr.bf16.mxu0 0
  %703 = vmatpush1.bf16.msra.mxu0 0
  %704 = vmatprep.subr.bf16.mxu0 0
  %705 = vmatpush1.bf16.msra.mxu0 %v491
  %706 = vmatprep.subr.bf16.mxu0 0
  %707 = vmatpush1.bf16.msra.mxu0 %v490
  %708 = vmatprep.subr.bf16.mxu0 0
  %709 = vmatpush1.bf16.msra.mxu0 %v489
  %710 = vmatprep.subr.bf16.mxu0 0
  %711 = vmatpush1.bf16.msra.mxu0 %v488
  %712 = vmatprep.subr.bf16.mxu0 0
  %713 = vmatpush1.bf16.msra.mxu0 %v487
  %714 = vmatprep.subr.bf16.mxu0 0
  %715 = vmatpush1.bf16.msra.mxu0 %v486
  %716 = vmatprep.subr.bf16.mxu0 0
  %717 = vmatpush2.bf16.msra.mxu0 0
  %718 = vmatprep.subr.bf16.mxu0 0
  %719 = vmatpush2.bf16.msra.mxu0 0
  %720 = vmatprep.subr.bf16.mxu0 0
  %721 = vmatpush2.bf16.msra.mxu0 0
  %722 = vmatprep.subr.bf16.mxu0 0
  %723 = vmatpush2.bf16.msra.mxu0 0
  %724 = vmatprep.subr.bf16.mxu0 0
  %725 = vmatpush2.bf16.msra.mxu0 0
  %726 = vmatprep.subr.bf16.mxu0 0
  %727 = vmatpush2.bf16.msra.mxu0 0
  %728 = vmatprep.subr.bf16.mxu0 0
  %729 = vmatpush2.bf16.msra.mxu0 0
  %730 = vmatprep.subr.bf16.mxu0 0
  %731 = vmatpush2.bf16.msra.mxu0 0
  %732 = vmatprep.mubr.bf16.mxu0 0
  %733 = vmatmul.mubr.bf16.gmra.mxu0 %v548
  %v734 = vpop.f32.mrf.mxu0
  %v735 = vadd.f32 %v686, %v734
  %v736 = vpop.f32.mrf.mxu0
  %v737 = vpop.f32.mrf.mxu0
  %v738 = vadd.f32 %v689, %v737
  %v739 = vpop.f32.mrf.mxu0
  %740 = vmatprep.mubr.bf16.mxu0 0
  %741 = vmatmul.mubr.bf16.gmra.mxu0 %v551
  %v742 = vpop.f32.mrf.mxu0
  %v743 = vadd.f32 %v694, %v742
  %v744 = vpop.f32.mrf.mxu0
  %v745 = vpop.f32.mrf.mxu0
  %v746 = vadd.f32 %v697, %v745
  %v747 = vpop.f32.mrf.mxu0
  %748 = vdwg.mxu0
  %v749 = vld [vmem:[%s3] sm:$0x1]
  %v751 = vlaneseq
  %v752 = vshrl.u32 %v751, 7
  %v753 = vsub.s32 0, %v752
  %v754 = vrot.slane %v749, %v753
  %v756 = vmul.f32 %v735, %v754
  %v757 = vmul.f32 %v738, %v754
  %v758 = vmul.f32 %v743, %v754
  %v759 = vmul.f32 %v746, %v754
  %v760 = vld [vmem:[%s4] sm:$0xf]
  %v761 = vld [vmem:[%s4 + $0x4] sm:$0xf]
  %v762 = vld [vmem:[%s4 + $0x8] sm:$0xf]
  %v763 = vld [vmem:[%s4 + $0xc] sm:$0xf]
  %v764 = vunpack.c.l.bf16 %v760
  %v765 = vunpack.c.l.bf16 %v761
  %v766 = vunpack.c.l.bf16 %v762
  %v767 = vunpack.c.l.bf16 %v763
  %v768 = vadd.f32 %v756, %v764
  %v769 = vadd.f32 %v757, %v765
  %v770 = vadd.f32 %v758, %v766
  %v771 = vadd.f32 %v759, %v767
  %vm772 = vcmp.ge.f32.partialorder %v768, 0.0
  %vm773 = vcmp.ge.f32.partialorder %v769, 0.0
  %vm774 = vcmp.ge.f32.partialorder %v770, 0.0
  %vm775 = vcmp.ge.f32.partialorder %v771, 0.0
  %v776 = vmul.f32 %v768, 0.2
  %v777 = vmul.f32 %v769, 0.2
  %v778 = vmul.f32 %v770, 0.2
  %v779 = vmul.f32 %v771, 0.2
  %v780 = vsel %vm772, %v768, %v776
  %v781 = vsel %vm773, %v769, %v777
  %v782 = vsel %vm774, %v770, %v778
  %v783 = vsel %vm775, %v771, %v779
  %v784 = vpack.c.bf16 %v781, %v780
  %v785 = vpack.c.bf16 %v783, %v782
  %v788 = vunpack.c.l.b16 %v784
  %v789 = vunpack.c.h.b16 %v784
  %v790 = vunpack.c.l.b16 %v785
  %v791 = vunpack.c.h.b16 %v785
  %v792 = vpack.c.b16 %v788, %v788
  %v793 = vpack.c.b16 %v789, %v789
  %v794 = vpack.c.b16 %v790, %v790
  %v795 = vpack.c.b16 %v791, %v791
  %vm800 = vcmask 781312
  %801 = vst.msk [vmem:[%s5] sm:$0xf] %vm800, %v792
  %802 = vst.msk [vmem:[%s5 + $0x4] sm:$0xf] %vm800, %v793
  %803 = vst.msk [vmem:[%s5 + $0x8] sm:$0xf] %vm800, %v794
  %804 = vst.msk [vmem:[%s5 + $0xc] sm:$0xf] %vm800, %v795
  // Predicated region
  $region22: #{ifnet_forward.87} parent=0 // pred_check
    _
  $region23: #{ifnet_forward.87} parent=0 // pred_check_branch
    %806 = sbr.rel (0) target = $region25
  $region24: #{ifnet_forward.87} parent=0 // pred_region
    _
  $region25: #{ifnet_forward.87} parent=0 // pred_fallthru
    _
  // Predicated region
  $region26: #{ifnet_forward.87} parent=0 // pred_check
    _
  $region27: #{ifnet_forward.87} parent=0 // pred_check_branch
    %808 = sbr.rel (0) target = $region29
  $region28: #{ifnet_forward.87} parent=0 // pred_region
    _
  $region29: #{ifnet_forward.87} parent=0 // pred_fallthru
    _

// kernel: ifnet_forward.95
$region0: #{ifnet_forward.95}
  #allocation0 [shape = 'u32[]', space=smem, size = 0x4, offset = 0x4, fixed_abs, tag = 'smem constant byte address 0x4 - core index']
  #allocation1 [shape = 'u32[144,128]{1,0:T(1,128)}', space=vmem, size = 0x12000, scoped, tag = 'internal scratch']
  %s0 = inlined_call_operand.vmem [shape: bf16[32,384], index: 0, kind: input, shape index: {}]
  %s1 = inlined_call_operand.vmem [shape: bf16[384,24], index: 1, kind: input, shape index: {}]
  %s2 = inlined_call_operand.vmem [shape: f32[1,24], index: 2, kind: input, shape index: {}]
  %s3 = inlined_call_operand.vmem [shape: f32[32,24], index: 3, kind: output, shape index: {}]
  %s4 = sld [smem:[#allocation0]]
  $region22: #{ifnet_forward.95} parent=0
    _
  %s6 = ssub.s32 1, %s4
  %s7 = scalar_select 0, %s6, %s4
  // Predicated region
  $region2: #{ifnet_forward.95} parent=0 // pred_check
    _
  $region3: #{ifnet_forward.95} parent=0 // pred_check_branch
    %9 = sbr.rel (0) target = $region5
  $region4: #{ifnet_forward.95} parent=0 // pred_region
    _
  $region5: #{ifnet_forward.95} parent=0 // pred_fallthru
    _
  // Predicated region
  $region6: #{ifnet_forward.95} parent=0 // pred_check
    _
  $region7: #{ifnet_forward.95} parent=0 // pred_check_branch
    %11 = sbr.rel (0) target = $region9
  $region8: #{ifnet_forward.95} parent=0 // pred_region
    _
  $region9: #{ifnet_forward.95} parent=0 // pred_fallthru
    _
  // Predicated region
  $region10: #{ifnet_forward.95} parent=0 // pred_check
    _
  $region11: #{ifnet_forward.95} parent=0 // pred_check_branch
    %13 = sbr.rel (0) target = $region13
  $region12: #{ifnet_forward.95} parent=0 // pred_region
    _
  $region13: #{ifnet_forward.95} parent=0 // pred_fallthru
    _
  %v15 = vld [vmem:[%s0] sm:$0xff]
  %v16 = vld [vmem:[%s0 + $0x8] sm:$0xf]
  %v17 = vld [vmem:[%s0 + $0xc] sm:$0xff]
  %v18 = vld [vmem:[%s0 + $0x14] sm:$0xf]
  %v19 = vld [vmem:[%s0 + $0x18] sm:$0xff]
  %v20 = vld [vmem:[%s0 + $0x20] sm:$0xf]
  %v21 = vld [vmem:[%s0 + $0x24] sm:$0xff]
  %v22 = vld [vmem:[%s0 + $0x2c] sm:$0xf]
  %v23 = vld [vmem:[%s1] sm:$0xf]
  %v24 = vld [vmem:[%s1 + $0x4] sm:$0xf]
  %v25 = vld [vmem:[%s1 + $0x8] sm:$0xf]
  %v26 = vld [vmem:[%s1 + $0xc] sm:$0xf]
  %v27 = vld [vmem:[%s1 + $0x10] sm:$0xf]
  %v28 = vld [vmem:[%s1 + $0x14] sm:$0xf]
  %v29 = vld [vmem:[%s1 + $0x18] sm:$0xf]
  %v30 = vld [vmem:[%s1 + $0x1c] sm:$0xf]
  %v31 = vld [vmem:[%s1 + $0x20] sm:$0xf]
  %v32 = vld [vmem:[%s1 + $0x24] sm:$0xf]
  %v33 = vld [vmem:[%s1 + $0x28] sm:$0xf]
  %v34 = vld [vmem:[%s1 + $0x2c] sm:$0xf]
  %v35 = vld [vmem:[%s1 + $0x30] sm:$0xf]
  %v36 = vld [vmem:[%s1 + $0x34] sm:$0xf]
  %v37 = vld [vmem:[%s1 + $0x38] sm:$0xf]
  %v38 = vld [vmem:[%s1 + $0x3c] sm:$0xf]
  %v39 = vld [vmem:[%s1 + $0x40] sm:$0xf]
  %v40 = vld [vmem:[%s1 + $0x44] sm:$0xf]
  %v41 = vld [vmem:[%s1 + $0x48] sm:$0xf]
  %v42 = vld [vmem:[%s1 + $0x4c] sm:$0xf]
  %v43 = vld [vmem:[%s1 + $0x50] sm:$0xf]
  %v44 = vld [vmem:[%s1 + $0x54] sm:$0xf]
  %v45 = vld [vmem:[%s1 + $0x58] sm:$0xf]
  %v46 = vld [vmem:[%s1 + $0x5c] sm:$0xf]
  %v47 = vld [vmem:[%s1 + $0x60] sm:$0xf]
  %v48 = vld [vmem:[%s1 + $0x64] sm:$0xf]
  %v49 = vld [vmem:[%s1 + $0x68] sm:$0xf]
  %v50 = vld [vmem:[%s1 + $0x6c] sm:$0xf]
  %v51 = vld [vmem:[%s1 + $0x70] sm:$0xf]
  %v52 = vld [vmem:[%s1 + $0x74] sm:$0xf]
  %v53 = vld [vmem:[%s1 + $0x78] sm:$0xf]
  %v54 = vld [vmem:[%s1 + $0x7c] sm:$0xf]
  %v55 = vld [vmem:[%s1 + $0x80] sm:$0xf]
  %v56 = vld [vmem:[%s1 + $0x84] sm:$0xf]
  %v57 = vld [vmem:[%s1 + $0x88] sm:$0xf]
  %v58 = vld [vmem:[%s1 + $0x8c] sm:$0xf]
  %v59 = vld [vmem:[%s1 + $0x90] sm:$0xf]
  %v60 = vld [vmem:[%s1 + $0x94] sm:$0xf]
  %v61 = vld [vmem:[%s1 + $0x98] sm:$0xf]
  %v62 = vld [vmem:[%s1 + $0x9c] sm:$0xf]
  %v63 = vld [vmem:[%s1 + $0xa0] sm:$0xf]
  %v64 = vld [vmem:[%s1 + $0xa4] sm:$0xf]
  %v65 = vld [vmem:[%s1 + $0xa8] sm:$0xf]
  %v66 = vld [vmem:[%s1 + $0xac] sm:$0xf]
  %v67 = vld [vmem:[%s1 + $0xb0] sm:$0xf]
  %v68 = vld [vmem:[%s1 + $0xb4] sm:$0xf]
  %v69 = vld [vmem:[%s1 + $0xb8] sm:$0xf]
  %v70 = vld [vmem:[%s1 + $0xbc] sm:$0xf]
  %v71 = vld [vmem:[%s2] sm:$0x1]
  %v73 = vlaneseq
  %v74 = vshrl.u32 %v73, 7
  %v75 = vsub.s32 0, %v74
  %v76 = vrot.slane %v71, %v75
  %v86 = vunpack.c.l.b16 %v15
  %v87 = vunpack.c.h.b16 %v15
  %v88 = vunpack.c.l.b16 %v16
  %v89 = vunpack.c.l.b16 %v17
  %v90 = vunpack.c.h.b16 %v17
  %v91 = vunpack.c.l.b16 %v18
  %v92 = vunpack.c.l.b16 %v19
  %v93 = vunpack.c.h.b16 %v19
  %v94 = vunpack.c.l.b16 %v20
  %v95 = vunpack.c.l.b16 %v21
  %v96 = vunpack.c.h.b16 %v21
  %v97 = vunpack.c.l.b16 %v22
  %v98 = vpack.c.b16 %v89, %v86
  %v99 = vpack.c.b16 %v90, %v87
  %v100 = vpack.c.b16 %v91, %v88
  %v101 = vpack.c.b16 %v95, %v92
  %v102 = vpack.c.b16 %v96, %v93
  %v103 = vpack.c.b16 %v97, %v94
  %v158 = vunpack.c.l.b16 %v23
  %v159 = vunpack.c.l.b16 %v24
  %v160 = vunpack.c.l.b16 %v25
  %v161 = vunpack.c.l.b16 %v26
  %v162 = vunpack.c.l.b16 %v27
  %v163 = vunpack.c.l.b16 %v28
  %v164 = vunpack.c.l.b16 %v29
  %v165 = vunpack.c.l.b16 %v30
  %v166 = vunpack.c.l.b16 %v31
  %v167 = vunpack.c.l.b16 %v32
  %v168 = vunpack.c.l.b16 %v33
  %v169 = vunpack.c.l.b16 %v34
  %v170 = vunpack.c.l.b16 %v35
  %v171 = vunpack.c.l.b16 %v36
  %v172 = vunpack.c.l.b16 %v37
  %v173 = vunpack.c.l.b16 %v38
  %v174 = vunpack.c.l.b16 %v39
  %v175 = vunpack.c.l.b16 %v40
  %v176 = vunpack.c.l.b16 %v41
  %v177 = vunpack.c.l.b16 %v42
  %v178 = vunpack.c.l.b16 %v43
  %v179 = vunpack.c.l.b16 %v44
  %v180 = vunpack.c.l.b16 %v45
  %v181 = vunpack.c.l.b16 %v46
  %v182 = vunpack.c.l.b16 %v47
  %v183 = vunpack.c.l.b16 %v48
  %v184 = vunpack.c.l.b16 %v49
  %v185 = vunpack.c.l.b16 %v50
  %v186 = vunpack.c.l.b16 %v51
  %v187 = vunpack.c.l.b16 %v52
  %v188 = vunpack.c.l.b16 %v53
  %v189 = vunpack.c.l.b16 %v54
  %v190 = vunpack.c.l.b16 %v55
  %v191 = vunpack.c.l.b16 %v56
  %v192 = vunpack.c.l.b16 %v57
  %v193 = vunpack.c.l.b16 %v58
  %v194 = vunpack.c.l.b16 %v59
  %v195 = vunpack.c.l.b16 %v60
  %v196 = vunpack.c.l.b16 %v61
  %v197 = vunpack.c.l.b16 %v62
  %v198 = vunpack.c.l.b16 %v63
  %v199 = vunpack.c.l.b16 %v64
  %v200 = vunpack.c.l.b16 %v65
  %v201 = vunpack.c.l.b16 %v66
  %v202 = vunpack.c.l.b16 %v67
  %v203 = vunpack.c.l.b16 %v68
  %v204 = vunpack.c.l.b16 %v69
  %v205 = vunpack.c.l.b16 %v70
  %v206 = vpack.c.b16 %v159, %v158
  %v207 = vpack.c.b16 %v161, %v160
  %v208 = vpack.c.b16 %v163, %v162
  %v209 = vpack.c.b16 %v165, %v164
  %v210 = vpack.c.b16 %v167, %v166
  %v211 = vpack.c.b16 %v169, %v168
  %v212 = vpack.c.b16 %v171, %v170
  %v213 = vpack.c.b16 %v173, %v172
  %v214 = vpack.c.b16 %v175, %v174
  %v215 = vpack.c.b16 %v177, %v176
  %v216 = vpack.c.b16 %v179, %v178
  %v217 = vpack.c.b16 %v181, %v180
  %v218 = vpack.c.b16 %v183, %v182
  %v219 = vpack.c.b16 %v185, %v184
  %v220 = vpack.c.b16 %v187, %v186
  %v221 = vpack.c.b16 %v189, %v188
  %v222 = vpack.c.b16 %v191, %v190
  %v223 = vpack.c.b16 %v193, %v192
  %v224 = vpack.c.b16 %v195, %v194
  %v225 = vpack.c.b16 %v197, %v196
  %v226 = vpack.c.b16 %v199, %v198
  %v227 = vpack.c.b16 %v201, %v200
  %v228 = vpack.c.b16 %v203, %v202
  %v229 = vpack.c.b16 %v205, %v204
  %254 = vmatprep.subr.bf16.mxu0 0
  %255 = vmatpush1.bf16.msra.mxu0 %v213
  %256 = vmatprep.subr.bf16.mxu0 0
  %257 = vmatpush1.bf16.msra.mxu0 %v212
  %258 = vmatprep.subr.bf16.mxu0 0
  %259 = vmatpush1.bf16.msra.mxu0 %v211
  %260 = vmatprep.subr.bf16.mxu0 0
  %261 = vmatpush1.bf16.msra.mxu0 %v210
  %262 = vmatprep.subr.bf16.mxu0 0
  %263 = vmatpush1.bf16.msra.mxu0 %v209
  %264 = vmatprep.subr.bf16.mxu0 0
  %265 = vmatpush1.bf16.msra.mxu0 %v208
  %266 = vmatprep.subr.bf16.mxu0 0
  %267 = vmatpush1.bf16.msra.mxu0 %v207
  %268 = vmatprep.subr.bf16.mxu0 0
  %269 = vmatpush1.bf16.msra.mxu0 %v206
  %270 = vmatprep.subr.bf16.mxu0 0
  %271 = vmatpush2.bf16.msra.mxu0 %v221
  %272 = vmatprep.subr.bf16.mxu0 0
  %273 = vmatpush2.bf16.msra.mxu0 %v220
  %274 = vmatprep.subr.bf16.mxu0 0
  %275 = vmatpush2.bf16.msra.mxu0 %v219
  %276 = vmatprep.subr.bf16.mxu0 0
  %277 = vmatpush2.bf16.msra.mxu0 %v218
  %278 = vmatprep.subr.bf16.mxu0 0
  %279 = vmatpush2.bf16.msra.mxu0 %v217
  %280 = vmatprep.subr.bf16.mxu0 0
  %281 = vmatpush2.bf16.msra.mxu0 %v216
  %282 = vmatprep.subr.bf16.mxu0 0
  %283 = vmatpush2.bf16.msra.mxu0 %v215
  %284 = vmatprep.subr.bf16.mxu0 0
  %285 = vmatpush2.bf16.msra.mxu0 %v214
  %286 = vmatprep.mubr.bf16.mxu0 %v99
  %287 = vmatmul.mubr.bf16.gmra.mxu0 %v98
  %v288 = vpop.f32.mrf.mxu0
  %v289 = vadd.f32 %v76, %v288
  %v290 = vpop.f32.mrf.mxu0
  %v291 = vpop.f32.mrf.mxu0
  %v292 = vadd.f32 %v76, %v291
  %v293 = vpop.f32.mrf.mxu0
  %294 = vmatprep.mubr.bf16.mxu0 %v102
  %295 = vmatmul.mubr.bf16.gmra.mxu0 %v101
  %v296 = vpop.f32.mrf.mxu0
  %v297 = vadd.f32 %v76, %v296
  %v298 = vpop.f32.mrf.mxu0
  %v299 = vpop.f32.mrf.mxu0
  %v300 = vadd.f32 %v76, %v299
  %v301 = vpop.f32.mrf.mxu0
  %302 = vdwg.mxu0
  %303 = vmatprep.subr.bf16.mxu0 0
  %304 = vmatpush1.bf16.msra.mxu0 %v229
  %305 = vmatprep.subr.bf16.mxu0 0
  %306 = vmatpush1.bf16.msra.mxu0 %v228
  %307 = vmatprep.subr.bf16.mxu0 0
  %308 = vmatpush1.bf16.msra.mxu0 %v227
  %309 = vmatprep.subr.bf16.mxu0 0
  %310 = vmatpush1.bf16.msra.mxu0 %v226
  %311 = vmatprep.subr.bf16.mxu0 0
  %312 = vmatpush1.bf16.msra.mxu0 %v225
  %313 = vmatprep.subr.bf16.mxu0 0
  %314 = vmatpush1.bf16.msra.mxu0 %v224
  %315 = vmatprep.subr.bf16.mxu0 0
  %316 = vmatpush1.bf16.msra.mxu0 %v223
  %317 = vmatprep.subr.bf16.mxu0 0
  %318 = vmatpush1.bf16.msra.mxu0 %v222
  %319 = vmatprep.subr.bf16.mxu0 0
  %320 = vmatpush2.bf16.msra.mxu0 0
  %321 = vmatprep.subr.bf16.mxu0 0
  %322 = vmatpush2.bf16.msra.mxu0 0
  %323 = vmatprep.subr.bf16.mxu0 0
  %324 = vmatpush2.bf16.msra.mxu0 0
  %325 = vmatprep.subr.bf16.mxu0 0
  %326 = vmatpush2.bf16.msra.mxu0 0
  %327 = vmatprep.subr.bf16.mxu0 0
  %328 = vmatpush2.bf16.msra.mxu0 0
  %329 = vmatprep.subr.bf16.mxu0 0
  %330 = vmatpush2.bf16.msra.mxu0 0
  %331 = vmatprep.subr.bf16.mxu0 0
  %332 = vmatpush2.bf16.msra.mxu0 0
  %333 = vmatprep.subr.bf16.mxu0 0
  %334 = vmatpush2.bf16.msra.mxu0 0
  %335 = vmatprep.mubr.bf16.mxu0 0
  %336 = vmatmul.mubr.bf16.gmra.mxu0 %v100
  %v337 = vpop.f32.mrf.mxu0
  %v338 = vadd.f32 %v289, %v337
  %v339 = vpop.f32.mrf.mxu0
  %v340 = vpop.f32.mrf.mxu0
  %v341 = vadd.f32 %v292, %v340
  %v342 = vpop.f32.mrf.mxu0
  %343 = vmatprep.mubr.bf16.mxu0 0
  %344 = vmatmul.mubr.bf16.gmra.mxu0 %v103
  %v345 = vpop.f32.mrf.mxu0
  %v346 = vadd.f32 %v297, %v345
  %v347 = vpop.f32.mrf.mxu0
  %v348 = vpop.f32.mrf.mxu0
  %v349 = vadd.f32 %v300, %v348
  %v350 = vpop.f32.mrf.mxu0
  %351 = vdwg.mxu0
  %vm352 = vcmask 195584
  %353 = vst.msk [vmem:[%s3] sm:$0xff] %vm352, %v338
  %354 = vst.msk [vmem:[%s3 + $0x8] sm:$0xff] %vm352, %v341
  %355 = vst.msk [vmem:[%s3 + $0x10] sm:$0xff] %vm352, %v346
  %356 = vst.msk [vmem:[%s3 + $0x18] sm:$0xff] %vm352, %v349
  // Predicated region
  $region14: #{ifnet_forward.95} parent=0 // pred_check
    _
  $region15: #{ifnet_forward.95} parent=0 // pred_check_branch
    %358 = sbr.rel (0) target = $region17
  $region16: #{ifnet_forward.95} parent=0 // pred_region
    _
  $region17: #{ifnet_forward.95} parent=0 // pred_fallthru
    _
  // Predicated region
  $region18: #{ifnet_forward.95} parent=0 // pred_check
    _
  $region19: #{ifnet_forward.95} parent=0 // pred_check_branch
    %360 = sbr.rel (0) target = $region21
  $region20: #{ifnet_forward.95} parent=0 // pred_region
    _
  $region21: #{ifnet_forward.95} parent=0 // pred_fallthru
    _

// kernel: ifnet_forward.99
$region0: #{ifnet_forward.99}
  #allocation0 [shape = 'u32[]', space=smem, size = 0x4, offset = 0x4, fixed_abs, tag = 'smem constant byte address 0x4 - core index']
  #allocation1 [shape = 'u32[144,128]{1,0:T(1,128)}', space=vmem, size = 0x12000, scoped, tag = 'internal scratch']
  %s0 = inlined_call_operand.vmem [shape: bf16[512,108], index: 0, kind: input, shape index: {}]
  %s1 = inlined_call_operand.vmem [shape: bf16[108,32], index: 1, kind: input, shape index: {}]
  %s2 = inlined_call_operand.vmem [shape: f32[1,32], index: 2, kind: input, shape index: {}]
  %s3 = inlined_call_operand.vmem [shape: bf16[512,32], index: 3, kind: output, shape index: {}]
  %s4 = sld [smem:[#allocation0]]
  $region22: #{ifnet_forward.99} parent=0
    _
  %s6 = ssub.s32 1, %s4
  %s7 = scalar_select 0, %s6, %s4
  // Predicated region
  $region2: #{ifnet_forward.99} parent=0 // pred_check
    _
  $region3: #{ifnet_forward.99} parent=0 // pred_check_branch
    %9 = sbr.rel (0) target = $region5
  $region4: #{ifnet_forward.99} parent=0 // pred_region
    _
  $region5: #{ifnet_forward.99} parent=0 // pred_fallthru
    _
  // Predicated region
  $region6: #{ifnet_forward.99} parent=0 // pred_check
    _
  $region7: #{ifnet_forward.99} parent=0 // pred_check_branch
    %11 = sbr.rel (0) target = $region9
  $region8: #{ifnet_forward.99} parent=0 // pred_region
    _
  $region9: #{ifnet_forward.99} parent=0 // pred_fallthru
    _
  // Predicated region
  $region10: #{ifnet_forward.99} parent=0 // pred_check
    _
  $region11: #{ifnet_forward.99} parent=0 // pred_check_branch
    %13 = sbr.rel (0) target = $region13
  $region12: #{ifnet_forward.99} parent=0 // pred_region
    _
  $region13: #{ifnet_forward.99} parent=0 // pred_fallthru
    _
  %v15 = vld [vmem:[%s0] sm:$0xf]
  %v16 = vld [vmem:[%s0 + $0x4] sm:$0xf]
  %v17 = vld [vmem:[%s0 + $0x8] sm:$0xf]
  %v18 = vld [vmem:[%s0 + $0xc] sm:$0xf]
  %v19 = vld [vmem:[%s0 + $0x10] sm:$0xf]
  %v20 = vld [vmem:[%s0 + $0x14] sm:$0xf]
  %v21 = vld [vmem:[%s0 + $0x18] sm:$0xf]
  %v22 = vld [vmem:[%s0 + $0x1c] sm:$0xf]
  %v23 = vld [vmem:[%s0 + $0x20] sm:$0xf]
  %v24 = vld [vmem:[%s0 + $0x24] sm:$0xf]
  %v25 = vld [vmem:[%s0 + $0x28] sm:$0xf]
  %v26 = vld [vmem:[%s0 + $0x2c] sm:$0xf]
  %v27 = vld [vmem:[%s0 + $0x30] sm:$0xf]
  %v28 = vld [vmem:[%s0 + $0x34] sm:$0xf]
  %v29 = vld [vmem:[%s0 + $0x38] sm:$0xf]
  %v30 = vld [vmem:[%s0 + $0x3c] sm:$0xf]
  %v31 = vld [vmem:[%s0 + $0x40] sm:$0xf]
  %v32 = vld [vmem:[%s0 + $0x44] sm:$0xf]
  %v33 = vld [vmem:[%s0 + $0x48] sm:$0xf]
  %v34 = vld [vmem:[%s0 + $0x4c] sm:$0xf]
  %v35 = vld [vmem:[%s0 + $0x50] sm:$0xf]
  %v36 = vld [vmem:[%s0 + $0x54] sm:$0xf]
  %v37 = vld [vmem:[%s0 + $0x58] sm:$0xf]
  %v38 = vld [vmem:[%s0 + $0x5c] sm:$0xf]
  %v39 = vld [vmem:[%s0 + $0x60] sm:$0xf]
  %v40 = vld [vmem:[%s0 + $0x64] sm:$0xf]
  %v41 = vld [vmem:[%s0 + $0x68] sm:$0xf]
  %v42 = vld [vmem:[%s0 + $0x6c] sm:$0xf]
  %v43 = vld [vmem:[%s0 + $0x70] sm:$0xf]
  %v44 = vld [vmem:[%s0 + $0x74] sm:$0xf]
  %v45 = vld [vmem:[%s0 + $0x78] sm:$0xf]
  %v46 = vld [vmem:[%s0 + $0x7c] sm:$0xf]
  %v47 = vld [vmem:[%s0 + $0x80] sm:$0xf]
  %v48 = vld [vmem:[%s0 + $0x84] sm:$0xf]
  %v49 = vld [vmem:[%s0 + $0x88] sm:$0xf]
  %v50 = vld [vmem:[%s0 + $0x8c] sm:$0xf]
  %v51 = vld [vmem:[%s0 + $0x90] sm:$0xf]
  %v52 = vld [vmem:[%s0 + $0x94] sm:$0xf]
  %v53 = vld [vmem:[%s0 + $0x98] sm:$0xf]
  %v54 = vld [vmem:[%s0 + $0x9c] sm:$0xf]
  %v55 = vld [vmem:[%s0 + $0xa0] sm:$0xf]
  %v56 = vld [vmem:[%s0 + $0xa4] sm:$0xf]
  %v57 = vld [vmem:[%s0 + $0xa8] sm:$0xf]
  %v58 = vld [vmem:[%s0 + $0xac] sm:$0xf]
  %v59 = vld [vmem:[%s0 + $0xb0] sm:$0xf]
  %v60 = vld [vmem:[%s0 + $0xb4] sm:$0xf]
  %v61 = vld [vmem:[%s0 + $0xb8] sm:$0xf]
  %v62 = vld [vmem:[%s0 + $0xbc] sm:$0xf]
  %v63 = vld [vmem:[%s0 + $0xc0] sm:$0xf]
  %v64 = vld [vmem:[%s0 + $0xc4] sm:$0xf]
  %v65 = vld [vmem:[%s0 + $0xc8] sm:$0xf]
  %v66 = vld [vmem:[%s0 + $0xcc] sm:$0xf]
  %v67 = vld [vmem:[%s0 + $0xd0] sm:$0xf]
  %v68 = vld [vmem:[%s0 + $0xd4] sm:$0xf]
  %v69 = vld [vmem:[%s0 + $0xd8] sm:$0xf]
  %v70 = vld [vmem:[%s0 + $0xdc] sm:$0xf]
  %v71 = vld [vmem:[%s0 + $0xe0] sm:$0xf]
  %v72 = vld [vmem:[%s0 + $0xe4] sm:$0xf]
  %v73 = vld [vmem:[%s0 + $0xe8] sm:$0xf]
  %v74 = vld [vmem:[%s0 + $0xec] sm:$0xf]
  %v75 = vld [vmem:[%s0 + $0xf0] sm:$0xf]
  %v76 = vld [vmem:[%s0 + $0xf4] sm:$0xf]
  %v77 = vld [vmem:[%s0 + $0xf8] sm:$0xf]
  %v78 = vld [vmem:[%s0 + $0xfc] sm:$0xf]
  %v79 = vld [vmem:[%s1] sm:$0xf]
  %v80 = vld [vmem:[%s1 + $0x4] sm:$0xf]
  %v81 = vld [vmem:[%s1 + $0x8] sm:$0xf]
  %v82 = vld [vmem:[%s1 + $0xc] sm:$0xf]
  %v83 = vld [vmem:[%s1 + $0x10] sm:$0xf]
  %v84 = vld [vmem:[%s1 + $0x14] sm:$0xf]
  %v85 = vld [vmem:[%s1 + $0x18] sm:$0xf]
  %v86 = vld [vmem:[%s1 + $0x1c] sm:$0xf]
  %v87 = vld [vmem:[%s1 + $0x20] sm:$0xf]
  %v88 = vld [vmem:[%s1 + $0x24] sm:$0xf]
  %v89 = vld [vmem:[%s1 + $0x28] sm:$0xf]
  %v90 = vld [vmem:[%s1 + $0x2c] sm:$0xf]
  %v91 = vld [vmem:[%s1 + $0x30] sm:$0xf]
  %v92 = vld [vmem:[%s1 + $0x34] sm:$0x3]
  %v93 = vld [vmem:[%s2] sm:$0x1]
  %v95 = vlaneseq
  %v96 = vshrl.u32 %v95, 7
  %v97 = vsub.s32 0, %v96
  %v98 = vrot.slane %v93, %v97
  %v164 = vunpack.c.l.b16 %v15
  %v165 = vunpack.c.l.b16 %v16
  %v166 = vunpack.c.l.b16 %v17
  %v167 = vunpack.c.l.b16 %v18
  %v168 = vunpack.c.l.b16 %v19
  %v169 = vunpack.c.l.b16 %v20
  %v170 = vunpack.c.l.b16 %v21
  %v171 = vunpack.c.l.b16 %v22
  %v172 = vunpack.c.l.b16 %v23
  %v173 = vunpack.c.l.b16 %v24
  %v174 = vunpack.c.l.b16 %v25
  %v175 = vunpack.c.l.b16 %v26
  %v176 = vunpack.c.l.b16 %v27
  %v177 = vunpack.c.l.b16 %v28
  %v178 = vunpack.c.l.b16 %v29
  %v179 = vunpack.c.l.b16 %v30
  %v180 = vunpack.c.l.b16 %v31
  %v181 = vunpack.c.l.b16 %v32
  %v182 = vunpack.c.l.b16 %v33
  %v183 = vunpack.c.l.b16 %v34
  %v184 = vunpack.c.l.b16 %v35
  %v185 = vunpack.c.l.b16 %v36
  %v186 = vunpack.c.l.b16 %v37
  %v187 = vunpack.c.l.b16 %v38
  %v188 = vunpack.c.l.b16 %v39
  %v189 = vunpack.c.l.b16 %v40
  %v190 = vunpack.c.l.b16 %v41
  %v191 = vunpack.c.l.b16 %v42
  %v192 = vunpack.c.l.b16 %v43
  %v193 = vunpack.c.l.b16 %v44
  %v194 = vunpack.c.l.b16 %v45
  %v195 = vunpack.c.l.b16 %v46
  %v196 = vunpack.c.l.b16 %v47
  %v197 = vunpack.c.l.b16 %v48
  %v198 = vunpack.c.l.b16 %v49
  %v199 = vunpack.c.l.b16 %v50
  %v200 = vunpack.c.l.b16 %v51
  %v201 = vunpack.c.l.b16 %v52
  %v202 = vunpack.c.l.b16 %v53
  %v203 = vunpack.c.l.b16 %v54
  %v204 = vunpack.c.l.b16 %v55
  %v205 = vunpack.c.l.b16 %v56
  %v206 = vunpack.c.l.b16 %v57
  %v207 = vunpack.c.l.b16 %v58
  %v208 = vunpack.c.l.b16 %v59
  %v209 = vunpack.c.l.b16 %v60
  %v210 = vunpack.c.l.b16 %v61
  %v211 = vunpack.c.l.b16 %v62
  %v212 = vunpack.c.l.b16 %v63
  %v213 = vunpack.c.l.b16 %v64
  %v214 = vunpack.c.l.b16 %v65
  %v215 = vunpack.c.l.b16 %v66
  %v216 = vunpack.c.l.b16 %v67
  %v217 = vunpack.c.l.b16 %v68
  %v218 = vunpack.c.l.b16 %v69
  %v219 = vunpack.c.l.b16 %v70
  %v220 = vunpack.c.l.b16 %v71
  %v221 = vunpack.c.l.b16 %v72
  %v222 = vunpack.c.l.b16 %v73
  %v223 = vunpack.c.l.b16 %v74
  %v224 = vunpack.c.l.b16 %v75
  %v225 = vunpack.c.l.b16 %v76
  %v226 = vunpack.c.l.b16 %v77
  %v227 = vunpack.c.l.b16 %v78
  %v228 = vpack.c.b16 %v165, %v164
  %v229 = vpack.c.b16 %v167, %v166
  %v230 = vpack.c.b16 %v169, %v168
  %v231 = vpack.c.b16 %v171, %v170
  %v232 = vpack.c.b16 %v173, %v172
  %v233 = vpack.c.b16 %v175, %v174
  %v234 = vpack.c.b16 %v177, %v176
  %v235 = vpack.c.b16 %v179, %v178
  %v236 = vpack.c.b16 %v181, %v180
  %v237 = vpack.c.b16 %v183, %v182
  %v238 = vpack.c.b16 %v185, %v184
  %v239 = vpack.c.b16 %v187, %v186
  %v240 = vpack.c.b16 %v189, %v188
  %v241 = vpack.c.b16 %v191, %v190
  %v242 = vpack.c.b16 %v193, %v192
  %v243 = vpack.c.b16 %v195, %v194
  %v244 = vpack.c.b16 %v197, %v196
  %v245 = vpack.c.b16 %v199, %v198
  %v246 = vpack.c.b16 %v201, %v200
  %v247 = vpack.c.b16 %v203, %v202
  %v248 = vpack.c.b16 %v205, %v204
  %v249 = vpack.c.b16 %v207, %v206
  %v250 = vpack.c.b16 %v209, %v208
  %v251 = vpack.c.b16 %v211, %v210
  %v252 = vpack.c.b16 %v213, %v212
  %v253 = vpack.c.b16 %v215, %v214
  %v254 = vpack.c.b16 %v217, %v216
  %v255 = vpack.c.b16 %v219, %v218
  %v256 = vpack.c.b16 %v221, %v220
  %v257 = vpack.c.b16 %v223, %v222
  %v258 = vpack.c.b16 %v225, %v224
  %v259 = vpack.c.b16 %v227, %v226
  %v274 = vunpack.c.l.b16 %v79
  %v275 = vunpack.c.l.b16 %v80
  %v276 = vunpack.c.l.b16 %v81
  %v277 = vunpack.c.l.b16 %v82
  %v278 = vunpack.c.l.b16 %v83
  %v279 = vunpack.c.l.b16 %v84
  %v280 = vunpack.c.l.b16 %v85
  %v281 = vunpack.c.l.b16 %v86
  %v282 = vunpack.c.l.b16 %v87
  %v283 = vunpack.c.l.b16 %v88
  %v284 = vunpack.c.l.b16 %v89
  %v285 = vunpack.c.l.b16 %v90
  %v286 = vunpack.c.l.b16 %v91
  %v287 = vunpack.c.l.b16 %v92
  %v288 = vpack.c.b16 %v275, %v274
  %v289 = vpack.c.b16 %v277, %v276
  %v290 = vpack.c.b16 %v279, %v278
  %v291 = vpack.c.b16 %v281, %v280
  %v292 = vpack.c.b16 %v283, %v282
  %v293 = vpack.c.b16 %v285, %v284
  %v294 = vpack.c.b16 %v287, %v286
  %vm301 = vcmask 883712
  %v303 = vsel %vm301, %v228, 0
  %v306 = vsel %vm301, %v229, 0
  %v309 = vsel %vm301, %v230, 0
  %v312 = vsel %vm301, %v231, 0
  %v315 = vsel %vm301, %v232, 0
  %v318 = vsel %vm301, %v233, 0
  %v321 = vsel %vm301, %v234, 0
  %v324 = vsel %vm301, %v235, 0
  %v327 = vsel %vm301, %v236, 0
  %v330 = vsel %vm301, %v237, 0
  %v333 = vsel %vm301, %v238, 0
  %v336 = vsel %vm301, %v239, 0
  %v339 = vsel %vm301, %v240, 0
  %v342 = vsel %vm301, %v241, 0
  %v345 = vsel %vm301, %v242, 0
  %v348 = vsel %vm301, %v243, 0
  %v351 = vsel %vm301, %v244, 0
  %v354 = vsel %vm301, %v245, 0
  %v357 = vsel %vm301, %v246, 0
  %v360 = vsel %vm301, %v247, 0
  %v363 = vsel %vm301, %v248, 0
  %v366 = vsel %vm301, %v249, 0
  %v369 = vsel %vm301, %v250, 0
  %v372 = vsel %vm301, %v251, 0
  %v375 = vsel %vm301, %v252, 0
  %v378 = vsel %vm301, %v253, 0
  %v381 = vsel %vm301, %v254, 0
  %v384 = vsel %vm301, %v255, 0
  %v387 = vsel %vm301, %v256, 0
  %v390 = vsel %vm301, %v257, 0
  %v393 = vsel %vm301, %v258, 0
  %v396 = vsel %vm301, %v259, 0
  %vm398 = vcmask 1045504
  %v400 = vsel %vm398, %v294, 0
  %402 = vmatprep.subr.bf16.mxu0 0
  %403 = vmatpush1.bf16.msra.mxu0 0
  %404 = vmatprep.subr.bf16.mxu0 0
  %405 = vmatpush1.bf16.msra.mxu0 %v400
  %406 = vmatprep.subr.bf16.mxu0 0
  %407 = vmatpush1.bf16.msra.mxu0 %v293
  %408 = vmatprep.subr.bf16.mxu0 0
  %409 = vmatpush1.bf16.msra.mxu0 %v292
  %410 = vmatprep.subr.bf16.mxu0 0
  %411 = vmatpush1.bf16.msra.mxu0 %v291
  %412 = vmatprep.subr.bf16.mxu0 0
  %413 = vmatpush1.bf16.msra.mxu0 %v290
  %414 = vmatprep.subr.bf16.mxu0 0
  %415 = vmatpush1.bf16.msra.mxu0 %v289
  %416 = vmatprep.subr.bf16.mxu0 0
  %417 = vmatpush1.bf16.msra.mxu0 %v288
  %418 = vmatprep.subr.bf16.mxu0 0
  %419 = vmatpush2.bf16.msra.mxu0 0
  %420 = vmatprep.subr.bf16.mxu0 0
  %421 = vmatpush2.bf16.msra.mxu0 0
  %422 = vmatprep.subr.bf16.mxu0 0
  %423 = vmatpush2.bf16.msra.mxu0 0
  %424 = vmatprep.subr.bf16.mxu0 0
  %425 = vmatpush2.bf16.msra.mxu0 0
  %426 = vmatprep.subr.bf16.mxu0 0
  %427 = vmatpush2.bf16.msra.mxu0 0
  %428 = vmatprep.subr.bf16.mxu0 0
  %429 = vmatpush2.bf16.msra.mxu0 0
  %430 = vmatprep.subr.bf16.mxu0 0
  %431 = vmatpush2.bf16.msra.mxu0 0
  %432 = vmatprep.subr.bf16.mxu0 0
  %433 = vmatpush2.bf16.msra.mxu0 0
  %434 = vmatprep.mubr.bf16.mxu0 0
  %435 = vmatmul.mubr.bf16.gmra.mxu0 %v303
  %v436 = vpop.f32.mrf.mxu0
  %v437 = vadd.f32 %v98, %v436
  %v438 = vpop.f32.mrf.mxu0
  %v439 = vpop.f32.mrf.mxu0
  %v440 = vadd.f32 %v98, %v439
  %v441 = vpop.f32.mrf.mxu0
  %442 = vmatprep.mubr.bf16.mxu0 0
  %443 = vmatmul.mubr.bf16.gmra.mxu0 %v306
  %v444 = vpop.f32.mrf.mxu0
  %v445 = vadd.f32 %v98, %v444
  %v446 = vpop.f32.mrf.mxu0
  %v447 = vpop.f32.mrf.mxu0
  %v448 = vadd.f32 %v98, %v447
  %v449 = vpop.f32.mrf.mxu0
  %450 = vmatprep.mubr.bf16.mxu0 0
  %451 = vmatmul.mubr.bf16.gmra.mxu0 %v309
  %v452 = vpop.f32.mrf.mxu0
  %v453 = vadd.f32 %v98, %v452
  %v454 = vpop.f32.mrf.mxu0
  %v455 = vpop.f32.mrf.mxu0
  %v456 = vadd.f32 %v98, %v455
  %v457 = vpop.f32.mrf.mxu0
  %458 = vmatprep.mubr.bf16.mxu0 0
  %459 = vmatmul.mubr.bf16.gmra.mxu0 %v312
  %v460 = vpop.f32.mrf.mxu0
  %v461 = vadd.f32 %v98, %v460
  %v462 = vpop.f32.mrf.mxu0
  %v463 = vpop.f32.mrf.mxu0
  %v464 = vadd.f32 %v98, %v463
  %v465 = vpop.f32.mrf.mxu0
  %466 = vmatprep.mubr.bf16.mxu0 0
  %467 = vmatmul.mubr.bf16.gmra.mxu0 %v315
  %v468 = vpop.f32.mrf.mxu0
  %v469 = vadd.f32 %v98, %v468
  %v470 = vpop.f32.mrf.mxu0
  %v471 = vpop.f32.mrf.mxu0
  %v472 = vadd.f32 %v98, %v471
  %v473 = vpop.f32.mrf.mxu0
  %474 = vmatprep.mubr.bf16.mxu0 0
  %475 = vmatmul.mubr.bf16.gmra.mxu0 %v318
  %v476 = vpop.f32.mrf.mxu0
  %v477 = vadd.f32 %v98, %v476
  %v478 = vpop.f32.mrf.mxu0
  %v479 = vpop.f32.mrf.mxu0
  %v480 = vadd.f32 %v98, %v479
  %v481 = vpop.f32.mrf.mxu0
  %482 = vmatprep.mubr.bf16.mxu0 0
  %483 = vmatmul.mubr.bf16.gmra.mxu0 %v321
  %v484 = vpop.f32.mrf.mxu0
  %v485 = vadd.f32 %v98, %v484
  %v486 = vpop.f32.mrf.mxu0
  %v487 = vpop.f32.mrf.mxu0
  %v488 = vadd.f32 %v98, %v487
  %v489 = vpop.f32.mrf.mxu0
  %490 = vmatprep.mubr.bf16.mxu0 0
  %491 = vmatmul.mubr.bf16.gmra.mxu0 %v324
  %v492 = vpop.f32.mrf.mxu0
  %v493 = vadd.f32 %v98, %v492
  %v494 = vpop.f32.mrf.mxu0
  %v495 = vpop.f32.mrf.mxu0
  %v496 = vadd.f32 %v98, %v495
  %v497 = vpop.f32.mrf.mxu0
  %498 = vmatprep.mubr.bf16.mxu0 0
  %499 = vmatmul.mubr.bf16.gmra.mxu0 %v327
  %v500 = vpop.f32.mrf.mxu0
  %v501 = vadd.f32 %v98, %v500
  %v502 = vpop.f32.mrf.mxu0
  %v503 = vpop.f32.mrf.mxu0
  %v504 = vadd.f32 %v98, %v503
  %v505 = vpop.f32.mrf.mxu0
  %506 = vmatprep.mubr.bf16.mxu0 0
  %507 = vmatmul.mubr.bf16.gmra.mxu0 %v330
  %v508 = vpop.f32.mrf.mxu0
  %v509 = vadd.f32 %v98, %v508
  %v510 = vpop.f32.mrf.mxu0
  %v511 = vpop.f32.mrf.mxu0
  %v512 = vadd.f32 %v98, %v511
  %v513 = vpop.f32.mrf.mxu0
  %514 = vmatprep.mubr.bf16.mxu0 0
  %515 = vmatmul.mubr.bf16.gmra.mxu0 %v333
  %v516 = vpop.f32.mrf.mxu0
  %v517 = vadd.f32 %v98, %v516
  %v518 = vpop.f32.mrf.mxu0
  %v519 = vpop.f32.mrf.mxu0
  %v520 = vadd.f32 %v98, %v519
  %v521 = vpop.f32.mrf.mxu0
  %522 = vmatprep.mubr.bf16.mxu0 0
  %523 = vmatmul.mubr.bf16.gmra.mxu0 %v336
  %v524 = vpop.f32.mrf.mxu0
  %v525 = vadd.f32 %v98, %v524
  %v526 = vpop.f32.mrf.mxu0
  %v527 = vpop.f32.mrf.mxu0
  %v528 = vadd.f32 %v98, %v527
  %v529 = vpop.f32.mrf.mxu0
  %530 = vmatprep.mubr.bf16.mxu0 0
  %531 = vmatmul.mubr.bf16.gmra.mxu0 %v339
  %v532 = vpop.f32.mrf.mxu0
  %v533 = vadd.f32 %v98, %v532
  %v534 = vpop.f32.mrf.mxu0
  %v535 = vpop.f32.mrf.mxu0
  %v536 = vadd.f32 %v98, %v535
  %v537 = vpop.f32.mrf.mxu0
  %538 = vmatprep.mubr.bf16.mxu0 0
  %539 = vmatmul.mubr.bf16.gmra.mxu0 %v342
  %v540 = vpop.f32.mrf.mxu0
  %v541 = vadd.f32 %v98, %v540
  %v542 = vpop.f32.mrf.mxu0
  %v543 = vpop.f32.mrf.mxu0
  %v544 = vadd.f32 %v98, %v543
  %v545 = vpop.f32.mrf.mxu0
  %546 = vmatprep.mubr.bf16.mxu0 0
  %547 = vmatmul.mubr.bf16.gmra.mxu0 %v345
  %v548 = vpop.f32.mrf.mxu0
  %v549 = vadd.f32 %v98, %v548
  %v550 = vpop.f32.mrf.mxu0
  %v551 = vpop.f32.mrf.mxu0
  %v552 = vadd.f32 %v98, %v551
  %v553 = vpop.f32.mrf.mxu0
  %554 = vmatprep.mubr.bf16.mxu0 0
  %555 = vmatmul.mubr.bf16.gmra.mxu0 %v348
  %v556 = vpop.f32.mrf.mxu0
  %v557 = vadd.f32 %v98, %v556
  %v558 = vpop.f32.mrf.mxu0
  %v559 = vpop.f32.mrf.mxu0
  %v560 = vadd.f32 %v98, %v559
  %v561 = vpop.f32.mrf.mxu0
  %562 = vmatprep.mubr.bf16.mxu0 0
  %563 = vmatmul.mubr.bf16.gmra.mxu0 %v351
  %v564 = vpop.f32.mrf.mxu0
  %v565 = vadd.f32 %v98, %v564
  %v566 = vpop.f32.mrf.mxu0
  %v567 = vpop.f32.mrf.mxu0
  %v568 = vadd.f32 %v98, %v567
  %v569 = vpop.f32.mrf.mxu0
  %570 = vmatprep.mubr.bf16.mxu0 0
  %571 = vmatmul.mubr.bf16.gmra.mxu0 %v354
  %v572 = vpop.f32.mrf.mxu0
  %v573 = vadd.f32 %v98, %v572
  %v574 = vpop.f32.mrf.mxu0
  %v575 = vpop.f32.mrf.mxu0
  %v576 = vadd.f32 %v98, %v575
  %v577 = vpop.f32.mrf.mxu0
  %578 = vmatprep.mubr.bf16.mxu0 0
  %579 = vmatmul.mubr.bf16.gmra.mxu0 %v357
  %v580 = vpop.f32.mrf.mxu0
  %v581 = vadd.f32 %v98, %v580
  %v582 = vpop.f32.mrf.mxu0
  %v583 = vpop.f32.mrf.mxu0
  %v584 = vadd.f32 %v98, %v583
  %v585 = vpop.f32.mrf.mxu0
  %586 = vmatprep.mubr.bf16.mxu0 0
  %587 = vmatmul.mubr.bf16.gmra.mxu0 %v360
  %v588 = vpop.f32.mrf.mxu0
  %v589 = vadd.f32 %v98, %v588
  %v590 = vpop.f32.mrf.mxu0
  %v591 = vpop.f32.mrf.mxu0
  %v592 = vadd.f32 %v98, %v591
  %v593 = vpop.f32.mrf.mxu0
  %594 = vmatprep.mubr.bf16.mxu0 0
  %595 = vmatmul.mubr.bf16.gmra.mxu0 %v363
  %v596 = vpop.f32.mrf.mxu0
  %v597 = vadd.f32 %v98, %v596
  %v598 = vpop.f32.mrf.mxu0
  %v599 = vpop.f32.mrf.mxu0
  %v600 = vadd.f32 %v98, %v599
  %v601 = vpop.f32.mrf.mxu0
  %602 = vmatprep.mubr.bf16.mxu0 0
  %603 = vmatmul.mubr.bf16.gmra.mxu0 %v366
  %v604 = vpop.f32.mrf.mxu0
  %v605 = vadd.f32 %v98, %v604
  %v606 = vpop.f32.mrf.mxu0
  %v607 = vpop.f32.mrf.mxu0
  %v608 = vadd.f32 %v98, %v607
  %v609 = vpop.f32.mrf.mxu0
  %610 = vmatprep.mubr.bf16.mxu0 0
  %611 = vmatmul.mubr.bf16.gmra.mxu0 %v369
  %v612 = vpop.f32.mrf.mxu0
  %v613 = vadd.f32 %v98, %v612
  %v614 = vpop.f32.mrf.mxu0
  %v615 = vpop.f32.mrf.mxu0
  %v616 = vadd.f32 %v98, %v615
  %v617 = vpop.f32.mrf.mxu0
  %618 = vmatprep.mubr.bf16.mxu0 0
  %619 = vmatmul.mubr.bf16.gmra.mxu0 %v372
  %v620 = vpop.f32.mrf.mxu0
  %v621 = vadd.f32 %v98, %v620
  %v622 = vpop.f32.mrf.mxu0
  %v623 = vpop.f32.mrf.mxu0
  %v624 = vadd.f32 %v98, %v623
  %v625 = vpop.f32.mrf.mxu0
  %626 = vmatprep.mubr.bf16.mxu0 0
  %627 = vmatmul.mubr.bf16.gmra.mxu0 %v375
  %v628 = vpop.f32.mrf.mxu0
  %v629 = vadd.f32 %v98, %v628
  %v630 = vpop.f32.mrf.mxu0
  %v631 = vpop.f32.mrf.mxu0
  %v632 = vadd.f32 %v98, %v631
  %v633 = vpop.f32.mrf.mxu0
  %634 = vmatprep.mubr.bf16.mxu0 0
  %635 = vmatmul.mubr.bf16.gmra.mxu0 %v378
  %v636 = vpop.f32.mrf.mxu0
  %v637 = vadd.f32 %v98, %v636
  %v638 = vpop.f32.mrf.mxu0
  %v639 = vpop.f32.mrf.mxu0
  %v640 = vadd.f32 %v98, %v639
  %v641 = vpop.f32.mrf.mxu0
  %642 = vmatprep.mubr.bf16.mxu0 0
  %643 = vmatmul.mubr.bf16.gmra.mxu0 %v381
  %v644 = vpop.f32.mrf.mxu0
  %v645 = vadd.f32 %v98, %v644
  %v646 = vpop.f32.mrf.mxu0
  %v647 = vpop.f32.mrf.mxu0
  %v648 = vadd.f32 %v98, %v647
  %v649 = vpop.f32.mrf.mxu0
  %650 = vmatprep.mubr.bf16.mxu0 0
  %651 = vmatmul.mubr.bf16.gmra.mxu0 %v384
  %v652 = vpop.f32.mrf.mxu0
  %v653 = vadd.f32 %v98, %v652
  %v654 = vpop.f32.mrf.mxu0
  %v655 = vpop.f32.mrf.mxu0
  %v656 = vadd.f32 %v98, %v655
  %v657 = vpop.f32.mrf.mxu0
  %658 = vmatprep.mubr.bf16.mxu0 0
  %659 = vmatmul.mubr.bf16.gmra.mxu0 %v387
  %v660 = vpop.f32.mrf.mxu0
  %v661 = vadd.f32 %v98, %v660
  %v662 = vpop.f32.mrf.mxu0
  %v663 = vpop.f32.mrf.mxu0
  %v664 = vadd.f32 %v98, %v663
  %v665 = vpop.f32.mrf.mxu0
  %666 = vmatprep.mubr.bf16.mxu0 0
  %667 = vmatmul.mubr.bf16.gmra.mxu0 %v390
  %v668 = vpop.f32.mrf.mxu0
  %v669 = vadd.f32 %v98, %v668
  %v670 = vpop.f32.mrf.mxu0
  %v671 = vpop.f32.mrf.mxu0
  %v672 = vadd.f32 %v98, %v671
  %v673 = vpop.f32.mrf.mxu0
  %674 = vmatprep.mubr.bf16.mxu0 0
  %675 = vmatmul.mubr.bf16.gmra.mxu0 %v393
  %v676 = vpop.f32.mrf.mxu0
  %v677 = vadd.f32 %v98, %v676
  %v678 = vpop.f32.mrf.mxu0
  %v679 = vpop.f32.mrf.mxu0
  %v680 = vadd.f32 %v98, %v679
  %v681 = vpop.f32.mrf.mxu0
  %682 = vmatprep.mubr.bf16.mxu0 0
  %683 = vmatmul.mubr.bf16.gmra.mxu0 %v396
  %v684 = vpop.f32.mrf.mxu0
  %v685 = vadd.f32 %v98, %v684
  %v686 = vpop.f32.mrf.mxu0
  %v687 = vpop.f32.mrf.mxu0
  %v688 = vadd.f32 %v98, %v687
  %v689 = vpop.f32.mrf.mxu0
  %690 = vdwg.mxu0
  %vm691 = vcmp.ge.f32.partialorder %v437, 0.0
  %vm692 = vcmp.ge.f32.partialorder %v440, 0.0
  %vm693 = vcmp.ge.f32.partialorder %v445, 0.0
  %vm694 = vcmp.ge.f32.partialorder %v448, 0.0
  %vm695 = vcmp.ge.f32.partialorder %v453, 0.0
  %vm696 = vcmp.ge.f32.partialorder %v456, 0.0
  %vm697 = vcmp.ge.f32.partialorder %v461, 0.0
  %vm698 = vcmp.ge.f32.partialorder %v464, 0.0
  %vm699 = vcmp.ge.f32.partialorder %v469, 0.0
  %vm700 = vcmp.ge.f32.partialorder %v472, 0.0
  %vm701 = vcmp.ge.f32.partialorder %v477, 0.0
  %vm702 = vcmp.ge.f32.partialorder %v480, 0.0
  %vm703 = vcmp.ge.f32.partialorder %v485, 0.0
  %vm704 = vcmp.ge.f32.partialorder %v488, 0.0
  %vm705 = vcmp.ge.f32.partialorder %v493, 0.0
  %vm706 = vcmp.ge.f32.partialorder %v496, 0.0
  %vm707 = vcmp.ge.f32.partialorder %v501, 0.0
  %vm708 = vcmp.ge.f32.partialorder %v504, 0.0
  %vm709 = vcmp.ge.f32.partialorder %v509, 0.0
  %vm710 = vcmp.ge.f32.partialorder %v512, 0.0
  %vm711 = vcmp.ge.f32.partialorder %v517, 0.0
  %vm712 = vcmp.ge.f32.partialorder %v520, 0.0
  %vm713 = vcmp.ge.f32.partialorder %v525, 0.0
  %vm714 = vcmp.ge.f32.partialorder %v528, 0.0
  %vm715 = vcmp.ge.f32.partialorder %v533, 0.0
  %vm716 = vcmp.ge.f32.partialorder %v536, 0.0
  %vm717 = vcmp.ge.f32.partialorder %v541, 0.0
  %vm718 = vcmp.ge.f32.partialorder %v544, 0.0
  %vm719 = vcmp.ge.f32.partialorder %v549, 0.0
  %vm720 = vcmp.ge.f32.partialorder %v552, 0.0
  %vm721 = vcmp.ge.f32.partialorder %v557, 0.0
  %vm722 = vcmp.ge.f32.partialorder %v560, 0.0
  %vm723 = vcmp.ge.f32.partialorder %v565, 0.0
  %vm724 = vcmp.ge.f32.partialorder %v568, 0.0
  %vm725 = vcmp.ge.f32.partialorder %v573, 0.0
  %vm726 = vcmp.ge.f32.partialorder %v576, 0.0
  %vm727 = vcmp.ge.f32.partialorder %v581, 0.0
  %vm728 = vcmp.ge.f32.partialorder %v584, 0.0
  %vm729 = vcmp.ge.f32.partialorder %v589, 0.0
  %vm730 = vcmp.ge.f32.partialorder %v592, 0.0
  %vm731 = vcmp.ge.f32.partialorder %v597, 0.0
  %vm732 = vcmp.ge.f32.partialorder %v600, 0.0
  %vm733 = vcmp.ge.f32.partialorder %v605, 0.0
  %vm734 = vcmp.ge.f32.partialorder %v608, 0.0
  %vm735 = vcmp.ge.f32.partialorder %v613, 0.0
  %vm736 = vcmp.ge.f32.partialorder %v616, 0.0
  %vm737 = vcmp.ge.f32.partialorder %v621, 0.0
  %vm738 = vcmp.ge.f32.partialorder %v624, 0.0
  %vm739 = vcmp.ge.f32.partialorder %v629, 0.0
  %vm740 = vcmp.ge.f32.partialorder %v632, 0.0
  %vm741 = vcmp.ge.f32.partialorder %v637, 0.0
  %vm742 = vcmp.ge.f32.partialorder %v640, 0.0
  %vm743 = vcmp.ge.f32.partialorder %v645, 0.0
  %vm744 = vcmp.ge.f32.partialorder %v648, 0.0
  %vm745 = vcmp.ge.f32.partialorder %v653, 0.0
  %vm746 = vcmp.ge.f32.partialorder %v656, 0.0
  %vm747 = vcmp.ge.f32.partialorder %v661, 0.0
  %vm748 = vcmp.ge.f32.partialorder %v664, 0.0
  %vm749 = vcmp.ge.f32.partialorder %v669, 0.0
  %vm750 = vcmp.ge.f32.partialorder %v672, 0.0
  %vm751 = vcmp.ge.f32.partialorder %v677, 0.0
  %vm752 = vcmp.ge.f32.partialorder %v680, 0.0
  %vm753 = vcmp.ge.f32.partialorder %v685, 0.0
  %vm754 = vcmp.ge.f32.partialorder %v688, 0.0
  %v755 = vmul.f32 %v437, 0.2
  %v756 = vmul.f32 %v440, 0.2
  %v757 = vmul.f32 %v445, 0.2
  %v758 = vmul.f32 %v448, 0.2
  %v759 = vmul.f32 %v453, 0.2
  %v760 = vmul.f32 %v456, 0.2
  %v761 = vmul.f32 %v461, 0.2
  %v762 = vmul.f32 %v464, 0.2
  %v763 = vmul.f32 %v469, 0.2
  %v764 = vmul.f32 %v472, 0.2
  %v765 = vmul.f32 %v477, 0.2
  %v766 = vmul.f32 %v480, 0.2
  %v767 = vmul.f32 %v485, 0.2
  %v768 = vmul.f32 %v488, 0.2
  %v769 = vmul.f32 %v493, 0.2
  %v770 = vmul.f32 %v496, 0.2
  %v771 = vmul.f32 %v501, 0.2
  %v772 = vmul.f32 %v504, 0.2
  %v773 = vmul.f32 %v509, 0.2
  %v774 = vmul.f32 %v512, 0.2
  %v775 = vmul.f32 %v517, 0.2
  %v776 = vmul.f32 %v520, 0.2
  %v777 = vmul.f32 %v525, 0.2
  %v778 = vmul.f32 %v528, 0.2
  %v779 = vmul.f32 %v533, 0.2
  %v780 = vmul.f32 %v536, 0.2
  %v781 = vmul.f32 %v541, 0.2
  %v782 = vmul.f32 %v544, 0.2
  %v783 = vmul.f32 %v549, 0.2
  %v784 = vmul.f32 %v552, 0.2
  %v785 = vmul.f32 %v557, 0.2
  %v786 = vmul.f32 %v560, 0.2
  %v787 = vmul.f32 %v565, 0.2
  %v788 = vmul.f32 %v568, 0.2
  %v789 = vmul.f32 %v573, 0.2
  %v790 = vmul.f32 %v576, 0.2
  %v791 = vmul.f32 %v581, 0.2
  %v792 = vmul.f32 %v584, 0.2
  %v793 = vmul.f32 %v589, 0.2
  %v794 = vmul.f32 %v592, 0.2
  %v795 = vmul.f32 %v597, 0.2
  %v796 = vmul.f32 %v600, 0.2
  %v797 = vmul.f32 %v605, 0.2
  %v798 = vmul.f32 %v608, 0.2
  %v799 = vmul.f32 %v613, 0.2
  %v800 = vmul.f32 %v616, 0.2
  %v801 = vmul.f32 %v621, 0.2
  %v802 = vmul.f32 %v624, 0.2
  %v803 = vmul.f32 %v629, 0.2
  %v804 = vmul.f32 %v632, 0.2
  %v805 = vmul.f32 %v637, 0.2
  %v806 = vmul.f32 %v640, 0.2
  %v807 = vmul.f32 %v645, 0.2
  %v808 = vmul.f32 %v648, 0.2
  %v809 = vmul.f32 %v653, 0.2
  %v810 = vmul.f32 %v656, 0.2
  %v811 = vmul.f32 %v661, 0.2
  %v812 = vmul.f32 %v664, 0.2
  %v813 = vmul.f32 %v669, 0.2
  %v814 = vmul.f32 %v672, 0.2
  %v815 = vmul.f32 %v677, 0.2
  %v816 = vmul.f32 %v680, 0.2
  %v817 = vmul.f32 %v685, 0.2
  %v818 = vmul.f32 %v688, 0.2
  %v819 = vsel %vm691, %v437, %v755
  %v820 = vsel %vm692, %v440, %v756
  %v821 = vsel %vm693, %v445, %v757
  %v822 = vsel %vm694, %v448, %v758
  %v823 = vsel %vm695, %v453, %v759
  %v824 = vsel %vm696, %v456, %v760
  %v825 = vsel %vm697, %v461, %v761
  %v826 = vsel %vm698, %v464, %v762
  %v827 = vsel %vm699, %v469, %v763
  %v828 = vsel %vm700, %v472, %v764
  %v829 = vsel %vm701, %v477, %v765
  %v830 = vsel %vm702, %v480, %v766
  %v831 = vsel %vm703, %v485, %v767
  %v832 = vsel %vm704, %v488, %v768
  %v833 = vsel %vm705, %v493, %v769
  %v834 = vsel %vm706, %v496, %v770
  %v835 = vsel %vm707, %v501, %v771
  %v836 = vsel %vm708, %v504, %v772
  %v837 = vsel %vm709, %v509, %v773
  %v838 = vsel %vm710, %v512, %v774
  %v839 = vsel %vm711, %v517, %v775
  %v840 = vsel %vm712, %v520, %v776
  %v841 = vsel %vm713, %v525, %v777
  %v842 = vsel %vm714, %v528, %v778
  %v843 = vsel %vm715, %v533, %v779
  %v844 = vsel %vm716, %v536, %v780
  %v845 = vsel %vm717, %v541, %v781
  %v846 = vsel %vm718, %v544, %v782
  %v847 = vsel %vm719, %v549, %v783
  %v848 = vsel %vm720, %v552, %v784
  %v849 = vsel %vm721, %v557, %v785
  %v850 = vsel %vm722, %v560, %v786
  %v851 = vsel %vm723, %v565, %v787
  %v852 = vsel %vm724, %v568, %v788
  %v853 = vsel %vm725, %v573, %v789
  %v854 = vsel %vm726, %v576, %v790
  %v855 = vsel %vm727, %v581, %v791
  %v856 = vsel %vm728, %v584, %v792
  %v857 = vsel %vm729, %v589, %v793
  %v858 = vsel %vm730, %v592, %v794
  %v859 = vsel %vm731, %v597, %v795
  %v860 = vsel %vm732, %v600, %v796
  %v861 = vsel %vm733, %v605, %v797
  %v862 = vsel %vm734, %v608, %v798
  %v863 = vsel %vm735, %v613, %v799
  %v864 = vsel %vm736, %v616, %v800
  %v865 = vsel %vm737, %v621, %v801
  %v866 = vsel %vm738, %v624, %v802
  %v867 = vsel %vm739, %v629, %v803
  %v868 = vsel %vm740, %v632, %v804
  %v869 = vsel %vm741, %v637, %v805
  %v870 = vsel %vm742, %v640, %v806
  %v871 = vsel %vm743, %v645, %v807
  %v872 = vsel %vm744, %v648, %v808
  %v873 = vsel %vm745, %v653, %v809
  %v874 = vsel %vm746, %v656, %v810
  %v875 = vsel %vm747, %v661, %v811
  %v876 = vsel %vm748, %v664, %v812
  %v877 = vsel %vm749, %v669, %v813
  %v878 = vsel %vm750, %v672, %v814
  %v879 = vsel %vm751, %v677, %v815
  %v880 = vsel %vm752, %v680, %v816
  %v881 = vsel %vm753, %v685, %v817
  %v882 = vsel %vm754, %v688, %v818
  %v883 = vpack.c.bf16 %v820, %v819
  %v884 = vpack.c.bf16 %v822, %v821
  %v885 = vpack.c.bf16 %v824, %v823
  %v886 = vpack.c.bf16 %v826, %v825
  %v887 = vpack.c.bf16 %v828, %v827
  %v888 = vpack.c.bf16 %v830, %v829
  %v889 = vpack.c.bf16 %v832, %v831
  %v890 = vpack.c.bf16 %v834, %v833
  %v891 = vpack.c.bf16 %v836, %v835
  %v892 = vpack.c.bf16 %v838, %v837
  %v893 = vpack.c.bf16 %v840, %v839
  %v894 = vpack.c.bf16 %v842, %v841
  %v895 = vpack.c.bf16 %v844, %v843
  %v896 = vpack.c.bf16 %v846, %v845
  %v897 = vpack.c.bf16 %v848, %v847
  %v898 = vpack.c.bf16 %v850, %v849
  %v899 = vpack.c.bf16 %v852, %v851
  %v900 = vpack.c.bf16 %v854, %v853
  %v901 = vpack.c.bf16 %v856, %v855
  %v902 = vpack.c.bf16 %v858, %v857
  %v903 = vpack.c.bf16 %v860, %v859
  %v904 = vpack.c.bf16 %v862, %v861
  %v905 = vpack.c.bf16 %v864, %v863
  %v906 = vpack.c.bf16 %v866, %v865
  %v907 = vpack.c.bf16 %v868, %v867
  %v908 = vpack.c.bf16 %v870, %v869
  %v909 = vpack.c.bf16 %v872, %v871
  %v910 = vpack.c.bf16 %v874, %v873
  %v911 = vpack.c.bf16 %v876, %v875
  %v912 = vpack.c.bf16 %v878, %v877
  %v913 = vpack.c.bf16 %v880, %v879
  %v914 = vpack.c.bf16 %v882, %v881
  %v947 = vunpack.c.l.b16 %v883
  %v948 = vunpack.c.h.b16 %v883
  %v949 = vunpack.c.l.b16 %v884
  %v950 = vunpack.c.h.b16 %v884
  %v951 = vunpack.c.l.b16 %v885
  %v952 = vunpack.c.h.b16 %v885
  %v953 = vunpack.c.l.b16 %v886
  %v954 = vunpack.c.h.b16 %v886
  %v955 = vunpack.c.l.b16 %v887
  %v956 = vunpack.c.h.b16 %v887
  %v957 = vunpack.c.l.b16 %v888
  %v958 = vunpack.c.h.b16 %v888
  %v959 = vunpack.c.l.b16 %v889
  %v960 = vunpack.c.h.b16 %v889
  %v961 = vunpack.c.l.b16 %v890
  %v962 = vunpack.c.h.b16 %v890
  %v963 = vunpack.c.l.b16 %v891
  %v964 = vunpack.c.h.b16 %v891
  %v965 = vunpack.c.l.b16 %v892
  %v966 = vunpack.c.h.b16 %v892
  %v967 = vunpack.c.l.b16 %v893
  %v968 = vunpack.c.h.b16 %v893
  %v969 = vunpack.c.l.b16 %v894
  %v970 = vunpack.c.h.b16 %v894
  %v971 = vunpack.c.l.b16 %v895
  %v972 = vunpack.c.h.b16 %v895
  %v973 = vunpack.c.l.b16 %v896
  %v974 = vunpack.c.h.b16 %v896
  %v975 = vunpack.c.l.b16 %v897
  %v976 = vunpack.c.h.b16 %v897
  %v977 = vunpack.c.l.b16 %v898
  %v978 = vunpack.c.h.b16 %v898
  %v979 = vunpack.c.l.b16 %v899
  %v980 = vunpack.c.h.b16 %v899
  %v981 = vunpack.c.l.b16 %v900
  %v982 = vunpack.c.h.b16 %v900
  %v983 = vunpack.c.l.b16 %v901
  %v984 = vunpack.c.h.b16 %v901
  %v985 = vunpack.c.l.b16 %v902
  %v986 = vunpack.c.h.b16 %v902
  %v987 = vunpack.c.l.b16 %v903
  %v988 = vunpack.c.h.b16 %v903
  %v989 = vunpack.c.l.b16 %v904
  %v990 = vunpack.c.h.b16 %v904
  %v991 = vunpack.c.l.b16 %v905
  %v992 = vunpack.c.h.b16 %v905
  %v993 = vunpack.c.l.b16 %v906
  %v994 = vunpack.c.h.b16 %v906
  %v995 = vunpack.c.l.b16 %v907
  %v996 = vunpack.c.h.b16 %v907
  %v997 = vunpack.c.l.b16 %v908
  %v998 = vunpack.c.h.b16 %v908
  %v999 = vunpack.c.l.b16 %v909
  %v1000 = vunpack.c.h.b16 %v909
  %v1001 = vunpack.c.l.b16 %v910
  %v1002 = vunpack.c.h.b16 %v910
  %v1003 = vunpack.c.l.b16 %v911
  %v1004 = vunpack.c.h.b16 %v911
  %v1005 = vunpack.c.l.b16 %v912
  %v1006 = vunpack.c.h.b16 %v912
  %v1007 = vunpack.c.l.b16 %v913
  %v1008 = vunpack.c.h.b16 %v913
  %v1009 = vunpack.c.l.b16 %v914
  %v1010 = vunpack.c.h.b16 %v914
  %v1011 = vpack.c.b16 %v947, %v947
  %v1012 = vpack.c.b16 %v948, %v948
  %v1013 = vpack.c.b16 %v949, %v949
  %v1014 = vpack.c.b16 %v950, %v950
  %v1015 = vpack.c.b16 %v951, %v951
  %v1016 = vpack.c.b16 %v952, %v952
  %v1017 = vpack.c.b16 %v953, %v953
  %v1018 = vpack.c.b16 %v954, %v954
  %v1019 = vpack.c.b16 %v955, %v955
  %v1020 = vpack.c.b16 %v956, %v956
  %v1021 = vpack.c.b16 %v957, %v957
  %v1022 = vpack.c.b16 %v958, %v958
  %v1023 = vpack.c.b16 %v959, %v959
  %v1024 = vpack.c.b16 %v960, %v960
  %v1025 = vpack.c.b16 %v961, %v961
  %v1026 = vpack.c.b16 %v962, %v962
  %v1027 = vpack.c.b16 %v963, %v963
  %v1028 = vpack.c.b16 %v964, %v964
  %v1029 = vpack.c.b16 %v965, %v965
  %v1030 = vpack.c.b16 %v966, %v966
  %v1031 = vpack.c.b16 %v967, %v967
  %v1032 = vpack.c.b16 %v968, %v968
  %v1033 = vpack.c.b16 %v969, %v969
  %v1034 = vpack.c.b16 %v970, %v970
  %v1035 = vpack.c.b16 %v971, %v971
  %v1036 = vpack.c.b16 %v972, %v972
  %v1037 = vpack.c.b16 %v973, %v973
  %v1038 = vpack.c.b16 %v974, %v974
  %v1039 = vpack.c.b16 %v975, %v975
  %v1040 = vpack.c.b16 %v976, %v976
  %v1041 = vpack.c.b16 %v977, %v977
  %v1042 = vpack.c.b16 %v978, %v978
  %v1043 = vpack.c.b16 %v979, %v979
  %v1044 = vpack.c.b16 %v980, %v980
  %v1045 = vpack.c.b16 %v981, %v981
  %v1046 = vpack.c.b16 %v982, %v982
  %v1047 = vpack.c.b16 %v983, %v983
  %v1048 = vpack.c.b16 %v984, %v984
  %v1049 = vpack.c.b16 %v985, %v985
  %v1050 = vpack.c.b16 %v986, %v986
  %v1051 = vpack.c.b16 %v987, %v987
  %v1052 = vpack.c.b16 %v988, %v988
  %v1053 = vpack.c.b16 %v989, %v989
  %v1054 = vpack.c.b16 %v990, %v990
  %v1055 = vpack.c.b16 %v991, %v991
  %v1056 = vpack.c.b16 %v992, %v992
  %v1057 = vpack.c.b16 %v993, %v993
  %v1058 = vpack.c.b16 %v994, %v994
  %v1059 = vpack.c.b16 %v995, %v995
  %v1060 = vpack.c.b16 %v996, %v996
  %v1061 = vpack.c.b16 %v997, %v997
  %v1062 = vpack.c.b16 %v998, %v998
  %v1063 = vpack.c.b16 %v999, %v999
  %v1064 = vpack.c.b16 %v1000, %v1000
  %v1065 = vpack.c.b16 %v1001, %v1001
  %v1066 = vpack.c.b16 %v1002, %v1002
  %v1067 = vpack.c.b16 %v1003, %v1003
  %v1068 = vpack.c.b16 %v1004, %v1004
  %v1069 = vpack.c.b16 %v1005, %v1005
  %v1070 = vpack.c.b16 %v1006, %v1006
  %v1071 = vpack.c.b16 %v1007, %v1007
  %v1072 = vpack.c.b16 %v1008, %v1008
  %v1073 = vpack.c.b16 %v1009, %v1009
  %v1074 = vpack.c.b16 %v1010, %v1010
  %vm1139 = vcmask 257024
  %1140 = vst.msk [vmem:[%s3] sm:$0xf] %vm1139, %v1011
  %1141 = vst.msk [vmem:[%s3 + $0x4] sm:$0xf] %vm1139, %v1012
  %1142 = vst.msk [vmem:[%s3 + $0x8] sm:$0xf] %vm1139, %v1013
  %1143 = vst.msk [vmem:[%s3 + $0xc] sm:$0xf] %vm1139, %v1014
  %1144 = vst.msk [vmem:[%s3 + $0x10] sm:$0xf] %vm1139, %v1015
  %1145 = vst.msk [vmem:[%s3 + $0x14] sm:$0xf] %vm1139, %v1016
  %1146 = vst.msk [vmem:[%s3 + $0x18] sm:$0xf] %vm1139, %v1017
  %1147 = vst.msk [vmem:[%s3 + $0x1c] sm:$0xf] %vm1139, %v1018
  %1148 = vst.msk [vmem:[%s3 + $0x20] sm:$0xf] %vm1139, %v1019
  %1149 = vst.msk [vmem:[%s3 + $0x24] sm:$0xf] %vm1139, %v1020
  %1150 = vst.msk [vmem:[%s3 + $0x28] sm:$0xf] %vm1139, %v1021
  %1151 = vst.msk [vmem:[%s3 + $0x2c] sm:$0xf] %vm1139, %v1022
  %1152 = vst.msk [vmem:[%s3 + $0x30] sm:$0xf] %vm1139, %v1023
  %1153 = vst.msk [vmem:[%s3 + $0x34] sm:$0xf] %vm1139, %v1024
  %1154 = vst.msk [vmem:[%s3 + $0x38] sm:$0xf] %vm1139, %v1025
  %1155 = vst.msk [vmem:[%s3 + $0x3c] sm:$0xf] %vm1139, %v1026
  %1156 = vst.msk [vmem:[%s3 + $0x40] sm:$0xf] %vm1139, %v1027
  %1157 = vst.msk [vmem:[%s3 + $0x44] sm:$0xf] %vm1139, %v1028
  %1158 = vst.msk [vmem:[%s3 + $0x48] sm:$0xf] %vm1139, %v1029
  %1159 = vst.msk [vmem:[%s3 + $0x4c] sm:$0xf] %vm1139, %v1030
  %1160 = vst.msk [vmem:[%s3 + $0x50] sm:$0xf] %vm1139, %v1031
  %1161 = vst.msk [vmem:[%s3 + $0x54] sm:$0xf] %vm1139, %v1032
  %1162 = vst.msk [vmem:[%s3 + $0x58] sm:$0xf] %vm1139, %v1033
  %1163 = vst.msk [vmem:[%s3 + $0x5c] sm:$0xf] %vm1139, %v1034
  %1164 = vst.msk [vmem:[%s3 + $0x60] sm:$0xf] %vm1139, %v1035
  %1165 = vst.msk [vmem:[%s3 + $0x64] sm:$0xf] %vm1139, %v1036
  %1166 = vst.msk [vmem:[%s3 + $0x68] sm:$0xf] %vm1139, %v1037
  %1167 = vst.msk [vmem:[%s3 + $0x6c] sm:$0xf] %vm1139, %v1038
  %1168 = vst.msk [vmem:[%s3 + $0x70] sm:$0xf] %vm1139, %v1039
  %1169 = vst.msk [vmem:[%s3 + $0x74] sm:$0xf] %vm1139, %v1040
  %1170 = vst.msk [vmem:[%s3 + $0x78] sm:$0xf] %vm1139, %v1041
  %1171 = vst.msk [vmem:[%s3 + $0x7c] sm:$0xf] %vm1139, %v1042
  %1172 = vst.msk [vmem:[%s3 + $0x80] sm:$0xf] %vm1139, %v1043
  %1173 = vst.msk [vmem:[%s3 + $0x84] sm:$0xf] %vm1139, %v1044
  %1174 = vst.msk [vmem:[%s3 + $0x88] sm:$0xf] %vm1139, %v1045
  %1175 = vst.msk [vmem:[%s3 + $0x8c] sm:$0xf] %vm1139, %v1046
  %1176 = vst.msk [vmem:[%s3 + $0x90] sm:$0xf] %vm1139, %v1047
  %1177 = vst.msk [vmem:[%s3 + $0x94] sm:$0xf] %vm1139, %v1048
  %1178 = vst.msk [vmem:[%s3 + $0x98] sm:$0xf] %vm1139, %v1049
  %1179 = vst.msk [vmem:[%s3 + $0x9c] sm:$0xf] %vm1139, %v1050
  %1180 = vst.msk [vmem:[%s3 + $0xa0] sm:$0xf] %vm1139, %v1051
  %1181 = vst.msk [vmem:[%s3 + $0xa4] sm:$0xf] %vm1139, %v1052
  %1182 = vst.msk [vmem:[%s3 + $0xa8] sm:$0xf] %vm1139, %v1053
  %1183 = vst.msk [vmem:[%s3 + $0xac] sm:$0xf] %vm1139, %v1054
  %1184 = vst.msk [vmem:[%s3 + $0xb0] sm:$0xf] %vm1139, %v1055
  %1185 = vst.msk [vmem:[%s3 + $0xb4] sm:$0xf] %vm1139, %v1056
  %1186 = vst.msk [vmem:[%s3 + $0xb8] sm:$0xf] %vm1139, %v1057
  %1187 = vst.msk [vmem:[%s3 + $0xbc] sm:$0xf] %vm1139, %v1058
  %1188 = vst.msk [vmem:[%s3 + $0xc0] sm:$0xf] %vm1139, %v1059
  %1189 = vst.msk [vmem:[%s3 + $0xc4] sm:$0xf] %vm1139, %v1060
  %1190 = vst.msk [vmem:[%s3 + $0xc8] sm:$0xf] %vm1139, %v1061
  %1191 = vst.msk [vmem:[%s3 + $0xcc] sm:$0xf] %vm1139, %v1062
  %1192 = vst.msk [vmem:[%s3 + $0xd0] sm:$0xf] %vm1139, %v1063
  %1193 = vst.msk [vmem:[%s3 + $0xd4] sm:$0xf] %vm1139, %v1064
  %1194 = vst.msk [vmem:[%s3 + $0xd8] sm:$0xf] %vm1139, %v1065
  %1195 = vst.msk [vmem:[%s3 + $0xdc] sm:$0xf] %vm1139, %v1066
  %1196 = vst.msk [vmem:[%s3 + $0xe0] sm:$0xf] %vm1139, %v1067
  %1197 = vst.msk [vmem:[%s3 + $0xe4] sm:$0xf] %vm1139, %v1068
  %1198 = vst.msk [vmem:[%s3 + $0xe8] sm:$0xf] %vm1139, %v1069
  %1199 = vst.msk [vmem:[%s3 + $0xec] sm:$0xf] %vm1139, %v1070
  %1200 = vst.msk [vmem:[%s3 + $0xf0] sm:$0xf] %vm1139, %v1071
  %1201 = vst.msk [vmem:[%s3 + $0xf4] sm:$0xf] %vm1139, %v1072
  %1202 = vst.msk [vmem:[%s3 + $0xf8] sm:$0xf] %vm1139, %v1073
  %1203 = vst.msk [vmem:[%s3 + $0xfc] sm:$0xf] %vm1139, %v1074
  // Predicated region
  $region14: #{ifnet_forward.99} parent=0 // pred_check
    _
  $region15: #{ifnet_forward.99} parent=0 // pred_check_branch
    %1205 = sbr.rel (0) target = $region17
  $region16: #{ifnet_forward.99} parent=0 // pred_region
    _
  $region17: #{ifnet_forward.99} parent=0 // pred_fallthru
    _
  // Predicated region
  $region18: #{ifnet_forward.99} parent=0 // pred_check
    _
  $region19: #{ifnet_forward.99} parent=0 // pred_check_branch
    %1207 = sbr.rel (0) target = $region21
  $region20: #{ifnet_forward.99} parent=0 // pred_region
    _
  $region21: #{ifnet_forward.99} parent=0 // pred_fallthru
    _

// kernel: ifnet_forward.100
$region0: #{ifnet_forward.100}
  #allocation0 [shape = 'u32[]', space=smem, size = 0x4, offset = 0x4, fixed_abs, tag = 'smem constant byte address 0x4 - core index']
  #allocation1 [shape = 'u32[144,128]{1,0:T(1,128)}', space=vmem, size = 0x12000, scoped, tag = 'internal scratch']
  %s0 = inlined_call_operand.vmem [shape: bf16[128,288], index: 0, kind: input, shape index: {}]
  %s1 = inlined_call_operand.vmem [shape: bf16[288,64], index: 1, kind: input, shape index: {}]
  %s2 = inlined_call_operand.vmem [shape: f32[1,64], index: 2, kind: input, shape index: {}]
  %s3 = inlined_call_operand.vmem [shape: bf16[128,64], index: 3, kind: output, shape index: {}]
  %s4 = sld [smem:[#allocation0]]
  $region22: #{ifnet_forward.100} parent=0
    _
  %s6 = ssub.s32 1, %s4
  %s7 = scalar_select 0, %s6, %s4
  // Predicated region
  $region2: #{ifnet_forward.100} parent=0 // pred_check
    _
  $region3: #{ifnet_forward.100} parent=0 // pred_check_branch
    %9 = sbr.rel (0) target = $region5
  $region4: #{ifnet_forward.100} parent=0 // pred_region
    _
  $region5: #{ifnet_forward.100} parent=0 // pred_fallthru
    _
  // Predicated region
  $region6: #{ifnet_forward.100} parent=0 // pred_check
    _
  $region7: #{ifnet_forward.100} parent=0 // pred_check_branch
    %11 = sbr.rel (0) target = $region9
  $region8: #{ifnet_forward.100} parent=0 // pred_region
    _
  $region9: #{ifnet_forward.100} parent=0 // pred_fallthru
    _
  // Predicated region
  $region10: #{ifnet_forward.100} parent=0 // pred_check
    _
  $region11: #{ifnet_forward.100} parent=0 // pred_check_branch
    %13 = sbr.rel (0) target = $region13
  $region12: #{ifnet_forward.100} parent=0 // pred_region
    _
  $region13: #{ifnet_forward.100} parent=0 // pred_fallthru
    _
  %v15 = vld [vmem:[%s0] sm:$0xff]
  %v16 = vld [vmem:[%s0 + $0x8] sm:$0xf]
  %v17 = vld [vmem:[%s0 + $0xc] sm:$0xff]
  %v18 = vld [vmem:[%s0 + $0x14] sm:$0xf]
  %v19 = vld [vmem:[%s0 + $0x18] sm:$0xff]
  %v20 = vld [vmem:[%s0 + $0x20] sm:$0xf]
  %v21 = vld [vmem:[%s0 + $0x24] sm:$0xff]
  %v22 = vld [vmem:[%s0 + $0x2c] sm:$0xf]
  %v23 = vld [vmem:[%s0 + $0x30] sm:$0xff]
  %v24 = vld [vmem:[%s0 + $0x38] sm:$0xf]
  %v25 = vld [vmem:[%s0 + $0x3c] sm:$0xff]
  %v26 = vld [vmem:[%s0 + $0x44] sm:$0xf]
  %v27 = vld [vmem:[%s0 + $0x48] sm:$0xff]
  %v28 = vld [vmem:[%s0 + $0x50] sm:$0xf]
  %v29 = vld [vmem:[%s0 + $0x54] sm:$0xff]
  %v30 = vld [vmem:[%s0 + $0x5c] sm:$0xf]
  %v31 = vld [vmem:[%s0 + $0x60] sm:$0xff]
  %v32 = vld [vmem:[%s0 + $0x68] sm:$0xf]
  %v33 = vld [vmem:[%s0 + $0x6c] sm:$0xff]
  %v34 = vld [vmem:[%s0 + $0x74] sm:$0xf]
  %v35 = vld [vmem:[%s0 + $0x78] sm:$0xff]
  %v36 = vld [vmem:[%s0 + $0x80] sm:$0xf]
  %v37 = vld [vmem:[%s0 + $0x84] sm:$0xff]
  %v38 = vld [vmem:[%s0 + $0x8c] sm:$0xf]
  %v39 = vld [vmem:[%s0 + $0x90] sm:$0xff]
  %v40 = vld [vmem:[%s0 + $0x98] sm:$0xf]
  %v41 = vld [vmem:[%s0 + $0x9c] sm:$0xff]
  %v42 = vld [vmem:[%s0 + $0xa4] sm:$0xf]
  %v43 = vld [vmem:[%s0 + $0xa8] sm:$0xff]
  %v44 = vld [vmem:[%s0 + $0xb0] sm:$0xf]
  %v45 = vld [vmem:[%s0 + $0xb4] sm:$0xff]
  %v46 = vld [vmem:[%s0 + $0xbc] sm:$0xf]
  %v47 = vld [vmem:[%s1] sm:$0xf]
  %v48 = vld [vmem:[%s1 + $0x4] sm:$0xf]
  %v49 = vld [vmem:[%s1 + $0x8] sm:$0xf]
  %v50 = vld [vmem:[%s1 + $0xc] sm:$0xf]
  %v51 = vld [vmem:[%s1 + $0x10] sm:$0xf]
  %v52 = vld [vmem:[%s1 + $0x14] sm:$0xf]
  %v53 = vld [vmem:[%s1 + $0x18] sm:$0xf]
  %v54 = vld [vmem:[%s1 + $0x1c] sm:$0xf]
  %v55 = vld [vmem:[%s1 + $0x20] sm:$0xf]
  %v56 = vld [vmem:[%s1 + $0x24] sm:$0xf]
  %v57 = vld [vmem:[%s1 + $0x28] sm:$0xf]
  %v58 = vld [vmem:[%s1 + $0x2c] sm:$0xf]
  %v59 = vld [vmem:[%s1 + $0x30] sm:$0xf]
  %v60 = vld [vmem:[%s1 + $0x34] sm:$0xf]
  %v61 = vld [vmem:[%s1 + $0x38] sm:$0xf]
  %v62 = vld [vmem:[%s1 + $0x3c] sm:$0xf]
  %v63 = vld [vmem:[%s1 + $0x40] sm:$0xf]
  %v64 = vld [vmem:[%s1 + $0x44] sm:$0xf]
  %v65 = vld [vmem:[%s1 + $0x48] sm:$0xf]
  %v66 = vld [vmem:[%s1 + $0x4c] sm:$0xf]
  %v67 = vld [vmem:[%s1 + $0x50] sm:$0xf]
  %v68 = vld [vmem:[%s1 + $0x54] sm:$0xf]
  %v69 = vld [vmem:[%s1 + $0x58] sm:$0xf]
  %v70 = vld [vmem:[%s1 + $0x5c] sm:$0xf]
  %v71 = vld [vmem:[%s1 + $0x60] sm:$0xf]
  %v72 = vld [vmem:[%s1 + $0x64] sm:$0xf]
  %v73 = vld [vmem:[%s1 + $0x68] sm:$0xf]
  %v74 = vld [vmem:[%s1 + $0x6c] sm:$0xf]
  %v75 = vld [vmem:[%s1 + $0x70] sm:$0xf]
  %v76 = vld [vmem:[%s1 + $0x74] sm:$0xf]
  %v77 = vld [vmem:[%s1 + $0x78] sm:$0xf]
  %v78 = vld [vmem:[%s1 + $0x7c] sm:$0xf]
  %v79 = vld [vmem:[%s1 + $0x80] sm:$0xf]
  %v80 = vld [vmem:[%s1 + $0x84] sm:$0xf]
  %v81 = vld [vmem:[%s1 + $0x88] sm:$0xf]
  %v82 = vld [vmem:[%s1 + $0x8c] sm:$0xf]
  %v83 = vld [vmem:[%s2] sm:$0x1]
  %v85 = vlaneseq
  %v86 = vshrl.u32 %v85, 7
  %v87 = vsub.s32 0, %v86
  %v88 = vrot.slane %v83, %v87
  %v122 = vunpack.c.l.b16 %v15
  %v123 = vunpack.c.h.b16 %v15
  %v124 = vunpack.c.l.b16 %v16
  %v125 = vunpack.c.l.b16 %v17
  %v126 = vunpack.c.h.b16 %v17
  %v127 = vunpack.c.l.b16 %v18
  %v128 = vunpack.c.l.b16 %v19
  %v129 = vunpack.c.h.b16 %v19
  %v130 = vunpack.c.l.b16 %v20
  %v131 = vunpack.c.l.b16 %v21
  %v132 = vunpack.c.h.b16 %v21
  %v133 = vunpack.c.l.b16 %v22
  %v134 = vunpack.c.l.b16 %v23
  %v135 = vunpack.c.h.b16 %v23
  %v136 = vunpack.c.l.b16 %v24
  %v137 = vunpack.c.l.b16 %v25
  %v138 = vunpack.c.h.b16 %v25
  %v139 = vunpack.c.l.b16 %v26
  %v140 = vunpack.c.l.b16 %v27
  %v141 = vunpack.c.h.b16 %v27
  %v142 = vunpack.c.l.b16 %v28
  %v143 = vunpack.c.l.b16 %v29
  %v144 = vunpack.c.h.b16 %v29
  %v145 = vunpack.c.l.b16 %v30
  %v146 = vunpack.c.l.b16 %v31
  %v147 = vunpack.c.h.b16 %v31
  %v148 = vunpack.c.l.b16 %v32
  %v149 = vunpack.c.l.b16 %v33
  %v150 = vunpack.c.h.b16 %v33
  %v151 = vunpack.c.l.b16 %v34
  %v152 = vunpack.c.l.b16 %v35
  %v153 = vunpack.c.h.b16 %v35
  %v154 = vunpack.c.l.b16 %v36
  %v155 = vunpack.c.l.b16 %v37
  %v156 = vunpack.c.h.b16 %v37
  %v157 = vunpack.c.l.b16 %v38
  %v158 = vunpack.c.l.b16 %v39
  %v159 = vunpack.c.h.b16 %v39
  %v160 = vunpack.c.l.b16 %v40
  %v161 = vunpack.c.l.b16 %v41
  %v162 = vunpack.c.h.b16 %v41
  %v163 = vunpack.c.l.b16 %v42
  %v164 = vunpack.c.l.b16 %v43
  %v165 = vunpack.c.h.b16 %v43
  %v166 = vunpack.c.l.b16 %v44
  %v167 = vunpack.c.l.b16 %v45
  %v168 = vunpack.c.h.b16 %v45
  %v169 = vunpack.c.l.b16 %v46
  %v170 = vpack.c.b16 %v125, %v122
  %v171 = vpack.c.b16 %v126, %v123
  %v172 = vpack.c.b16 %v127, %v124
  %v173 = vpack.c.b16 %v131, %v128
  %v174 = vpack.c.b16 %v132, %v129
  %v175 = vpack.c.b16 %v133, %v130
  %v176 = vpack.c.b16 %v137, %v134
  %v177 = vpack.c.b16 %v138, %v135
  %v178 = vpack.c.b16 %v139, %v136
  %v179 = vpack.c.b16 %v143, %v140
  %v180 = vpack.c.b16 %v144, %v141
  %v181 = vpack.c.b16 %v145, %v142
  %v182 = vpack.c.b16 %v149, %v146
  %v183 = vpack.c.b16 %v150, %v147
  %v184 = vpack.c.b16 %v151, %v148
  %v185 = vpack.c.b16 %v155, %v152
  %v186 = vpack.c.b16 %v156, %v153
  %v187 = vpack.c.b16 %v157, %v154
  %v188 = vpack.c.b16 %v161, %v158
  %v189 = vpack.c.b16 %v162, %v159
  %v190 = vpack.c.b16 %v163, %v160
  %v191 = vpack.c.b16 %v167, %v164
  %v192 = vpack.c.b16 %v168, %v165
  %v193 = vpack.c.b16 %v169, %v166
  %v246 = vunpack.c.l.b16 %v47
  %v247 = vunpack.c.l.b16 %v48
  %v248 = vunpack.c.l.b16 %v49
  %v249 = vunpack.c.l.b16 %v50
  %v250 = vunpack.c.l.b16 %v51
  %v251 = vunpack.c.l.b16 %v52
  %v252 = vunpack.c.l.b16 %v53
  %v253 = vunpack.c.l.b16 %v54
  %v254 = vunpack.c.l.b16 %v55
  %v255 = vunpack.c.l.b16 %v56
  %v256 = vunpack.c.l.b16 %v57
  %v257 = vunpack.c.l.b16 %v58
  %v258 = vunpack.c.l.b16 %v59
  %v259 = vunpack.c.l.b16 %v60
  %v260 = vunpack.c.l.b16 %v61
  %v261 = vunpack.c.l.b16 %v62
  %v262 = vunpack.c.l.b16 %v63
  %v263 = vunpack.c.l.b16 %v64
  %v264 = vunpack.c.l.b16 %v65
  %v265 = vunpack.c.l.b16 %v66
  %v266 = vunpack.c.l.b16 %v67
  %v267 = vunpack.c.l.b16 %v68
  %v268 = vunpack.c.l.b16 %v69
  %v269 = vunpack.c.l.b16 %v70
  %v270 = vunpack.c.l.b16 %v71
  %v271 = vunpack.c.l.b16 %v72
  %v272 = vunpack.c.l.b16 %v73
  %v273 = vunpack.c.l.b16 %v74
  %v274 = vunpack.c.l.b16 %v75
  %v275 = vunpack.c.l.b16 %v76
  %v276 = vunpack.c.l.b16 %v77
  %v277 = vunpack.c.l.b16 %v78
  %v278 = vunpack.c.l.b16 %v79
  %v279 = vunpack.c.l.b16 %v80
  %v280 = vunpack.c.l.b16 %v81
  %v281 = vunpack.c.l.b16 %v82
  %v282 = vpack.c.b16 %v247, %v246
  %v283 = vpack.c.b16 %v249, %v248
  %v284 = vpack.c.b16 %v251, %v250
  %v285 = vpack.c.b16 %v253, %v252
  %v286 = vpack.c.b16 %v255, %v254
  %v287 = vpack.c.b16 %v257, %v256
  %v288 = vpack.c.b16 %v259, %v258
  %v289 = vpack.c.b16 %v261, %v260
  %v290 = vpack.c.b16 %v263, %v262
  %v291 = vpack.c.b16 %v265, %v264
  %v292 = vpack.c.b16 %v267, %v266
  %v293 = vpack.c.b16 %v269, %v268
  %v294 = vpack.c.b16 %v271, %v270
  %v295 = vpack.c.b16 %v273, %v272
  %v296 = vpack.c.b16 %v275, %v274
  %v297 = vpack.c.b16 %v277, %v276
  %v298 = vpack.c.b16 %v279, %v278
  %v299 = vpack.c.b16 %v281, %v280
  %vm318 = vcmask 261120
  %v320 = vsel %vm318, %v172, 0
  %v323 = vsel %vm318, %v175, 0
  %v326 = vsel %vm318, %v178, 0
  %v329 = vsel %vm318, %v181, 0
  %v332 = vsel %vm318, %v184, 0
  %v335 = vsel %vm318, %v187, 0
  %v338 = vsel %vm318, %v190, 0
  %v341 = vsel %vm318, %v193, 0
  %343 = vmatprep.subr.bf16.mxu0 0
  %344 = vmatpush1.bf16.msra.mxu0 %v289
  %345 = vmatprep.subr.bf16.mxu0 0
  %346 = vmatpush1.bf16.msra.mxu0 %v288
  %347 = vmatprep.subr.bf16.mxu0 0
  %348 = vmatpush1.bf16.msra.mxu0 %v287
  %349 = vmatprep.subr.bf16.mxu0 0
  %350 = vmatpush1.bf16.msra.mxu0 %v286
  %351 = vmatprep.subr.bf16.mxu0 0
  %352 = vmatpush1.bf16.msra.mxu0 %v285
  %353 = vmatprep.subr.bf16.mxu0 0
  %354 = vmatpush1.bf16.msra.mxu0 %v284
  %355 = vmatprep.subr.bf16.mxu0 0
  %356 = vmatpush1.bf16.msra.mxu0 %v283
  %357 = vmatprep.subr.bf16.mxu0 0
  %358 = vmatpush1.bf16.msra.mxu0 %v282
  %359 = vmatprep.subr.bf16.mxu0 0
  %360 = vmatpush2.bf16.msra.mxu0 %v297
  %361 = vmatprep.subr.bf16.mxu0 0
  %362 = vmatpush2.bf16.msra.mxu0 %v296
  %363 = vmatprep.subr.bf16.mxu0 0
  %364 = vmatpush2.bf16.msra.mxu0 %v295
  %365 = vmatprep.subr.bf16.mxu0 0
  %366 = vmatpush2.bf16.msra.mxu0 %v294
  %367 = vmatprep.subr.bf16.mxu0 0
  %368 = vmatpush2.bf16.msra.mxu0 %v293
  %369 = vmatprep.subr.bf16.mxu0 0
  %370 = vmatpush2.bf16.msra.mxu0 %v292
  %371 = vmatprep.subr.bf16.mxu0 0
  %372 = vmatpush2.bf16.msra.mxu0 %v291
  %373 = vmatprep.subr.bf16.mxu0 0
  %374 = vmatpush2.bf16.msra.mxu0 %v290
  %375 = vmatprep.mubr.bf16.mxu0 %v171
  %376 = vmatmul.mubr.bf16.gmra.mxu0 %v170
  %v377 = vpop.f32.mrf.mxu0
  %v378 = vadd.f32 %v88, %v377
  %v379 = vpop.f32.mrf.mxu0
  %v380 = vpop.f32.mrf.mxu0
  %v381 = vadd.f32 %v88, %v380
  %v382 = vpop.f32.mrf.mxu0
  %383 = vmatprep.mubr.bf16.mxu0 %v174
  %384 = vmatmul.mubr.bf16.gmra.mxu0 %v173
  %v385 = vpop.f32.mrf.mxu0
  %v386 = vadd.f32 %v88, %v385
  %v387 = vpop.f32.mrf.mxu0
  %v388 = vpop.f32.mrf.mxu0
  %v389 = vadd.f32 %v88, %v388
  %v390 = vpop.f32.mrf.mxu0
  %391 = vmatprep.mubr.bf16.mxu0 %v177
  %392 = vmatmul.mubr.bf16.gmra.mxu0 %v176
  %v393 = vpop.f32.mrf.mxu0
  %v394 = vadd.f32 %v88, %v393
  %v395 = vpop.f32.mrf.mxu0
  %v396 = vpop.f32.mrf.mxu0
  %v397 = vadd.f32 %v88, %v396
  %v398 = vpop.f32.mrf.mxu0
  %399 = vmatprep.mubr.bf16.mxu0 %v180
  %400 = vmatmul.mubr.bf16.gmra.mxu0 %v179
  %v401 = vpop.f32.mrf.mxu0
  %v402 = vadd.f32 %v88, %v401
  %v403 = vpop.f32.mrf.mxu0
  %v404 = vpop.f32.mrf.mxu0
  %v405 = vadd.f32 %v88, %v404
  %v406 = vpop.f32.mrf.mxu0
  %407 = vmatprep.mubr.bf16.mxu0 %v183
  %408 = vmatmul.mubr.bf16.gmra.mxu0 %v182
  %v409 = vpop.f32.mrf.mxu0
  %v410 = vadd.f32 %v88, %v409
  %v411 = vpop.f32.mrf.mxu0
  %v412 = vpop.f32.mrf.mxu0
  %v413 = vadd.f32 %v88, %v412
  %v414 = vpop.f32.mrf.mxu0
  %415 = vmatprep.mubr.bf16.mxu0 %v186
  %416 = vmatmul.mubr.bf16.gmra.mxu0 %v185
  %v417 = vpop.f32.mrf.mxu0
  %v418 = vadd.f32 %v88, %v417
  %v419 = vpop.f32.mrf.mxu0
  %v420 = vpop.f32.mrf.mxu0
  %v421 = vadd.f32 %v88, %v420
  %v422 = vpop.f32.mrf.mxu0
  %423 = vmatprep.mubr.bf16.mxu0 %v189
  %424 = vmatmul.mubr.bf16.gmra.mxu0 %v188
  %v425 = vpop.f32.mrf.mxu0
  %v426 = vadd.f32 %v88, %v425
  %v427 = vpop.f32.mrf.mxu0
  %v428 = vpop.f32.mrf.mxu0
  %v429 = vadd.f32 %v88, %v428
  %v430 = vpop.f32.mrf.mxu0
  %431 = vmatprep.mubr.bf16.mxu0 %v192
  %432 = vmatmul.mubr.bf16.gmra.mxu0 %v191
  %v433 = vpop.f32.mrf.mxu0
  %v434 = vadd.f32 %v88, %v433
  %v435 = vpop.f32.mrf.mxu0
  %v436 = vpop.f32.mrf.mxu0
  %v437 = vadd.f32 %v88, %v436
  %v438 = vpop.f32.mrf.mxu0
  %439 = vdwg.mxu0
  %440 = vmatprep.subr.bf16.mxu0 0
  %441 = vmatpush1.bf16.msra.mxu0 0
  %442 = vmatprep.subr.bf16.mxu0 0
  %443 = vmatpush1.bf16.msra.mxu0 0
  %444 = vmatprep.subr.bf16.mxu0 0
  %445 = vmatpush1.bf16.msra.mxu0 0
  %446 = vmatprep.subr.bf16.mxu0 0
  %447 = vmatpush1.bf16.msra.mxu0 0
  %448 = vmatprep.subr.bf16.mxu0 0
  %449 = vmatpush1.bf16.msra.mxu0 0
  %450 = vmatprep.subr.bf16.mxu0 0
  %451 = vmatpush1.bf16.msra.mxu0 0
  %452 = vmatprep.subr.bf16.mxu0 0
  %453 = vmatpush1.bf16.msra.mxu0 %v299
  %454 = vmatprep.subr.bf16.mxu0 0
  %455 = vmatpush1.bf16.msra.mxu0 %v298
  %456 = vmatprep.subr.bf16.mxu0 0
  %457 = vmatpush2.bf16.msra.mxu0 0
  %458 = vmatprep.subr.bf16.mxu0 0
  %459 = vmatpush2.bf16.msra.mxu0 0
  %460 = vmatprep.subr.bf16.mxu0 0
  %461 = vmatpush2.bf16.msra.mxu0 0
  %462 = vmatprep.subr.bf16.mxu0 0
  %463 = vmatpush2.bf16.msra.mxu0 0
  %464 = vmatprep.subr.bf16.mxu0 0
  %465 = vmatpush2.bf16.msra.mxu0 0
  %466 = vmatprep.subr.bf16.mxu0 0
  %467 = vmatpush2.bf16.msra.mxu0 0
  %468 = vmatprep.subr.bf16.mxu0 0
  %469 = vmatpush2.bf16.msra.mxu0 0
  %470 = vmatprep.subr.bf16.mxu0 0
  %471 = vmatpush2.bf16.msra.mxu0 0
  %472 = vmatprep.mubr.bf16.mxu0 0
  %473 = vmatmul.mubr.bf16.gmra.mxu0 %v320
  %v474 = vpop.f32.mrf.mxu0
  %v475 = vadd.f32 %v378, %v474
  %v476 = vpop.f32.mrf.mxu0
  %v477 = vpop.f32.mrf.mxu0
  %v478 = vadd.f32 %v381, %v477
  %v479 = vpop.f32.mrf.mxu0
  %480 = vmatprep.mubr.bf16.mxu0 0
  %481 = vmatmul.mubr.bf16.gmra.mxu0 %v323
  %v482 = vpop.f32.mrf.mxu0
  %v483 = vadd.f32 %v386, %v482
  %v484 = vpop.f32.mrf.mxu0
  %v485 = vpop.f32.mrf.mxu0
  %v486 = vadd.f32 %v389, %v485
  %v487 = vpop.f32.mrf.mxu0
  %488 = vmatprep.mubr.bf16.mxu0 0
  %489 = vmatmul.mubr.bf16.gmra.mxu0 %v326
  %v490 = vpop.f32.mrf.mxu0
  %v491 = vadd.f32 %v394, %v490
  %v492 = vpop.f32.mrf.mxu0
  %v493 = vpop.f32.mrf.mxu0
  %v494 = vadd.f32 %v397, %v493
  %v495 = vpop.f32.mrf.mxu0
  %496 = vmatprep.mubr.bf16.mxu0 0
  %497 = vmatmul.mubr.bf16.gmra.mxu0 %v329
  %v498 = vpop.f32.mrf.mxu0
  %v499 = vadd.f32 %v402, %v498
  %v500 = vpop.f32.mrf.mxu0
  %v501 = vpop.f32.mrf.mxu0
  %v502 = vadd.f32 %v405, %v501
  %v503 = vpop.f32.mrf.mxu0
  %504 = vmatprep.mubr.bf16.mxu0 0
  %505 = vmatmul.mubr.bf16.gmra.mxu0 %v332
  %v506 = vpop.f32.mrf.mxu0
  %v507 = vadd.f32 %v410, %v506
  %v508 = vpop.f32.mrf.mxu0
  %v509 = vpop.f32.mrf.mxu0
  %v510 = vadd.f32 %v413, %v509
  %v511 = vpop.f32.mrf.mxu0
  %512 = vmatprep.mubr.bf16.mxu0 0
  %513 = vmatmul.mubr.bf16.gmra.mxu0 %v335
  %v514 = vpop.f32.mrf.mxu0
  %v515 = vadd.f32 %v418, %v514
  %v516 = vpop.f32.mrf.mxu0
  %v517 = vpop.f32.mrf.mxu0
  %v518 = vadd.f32 %v421, %v517
  %v519 = vpop.f32.mrf.mxu0
  %520 = vmatprep.mubr.bf16.mxu0 0
  %521 = vmatmul.mubr.bf16.gmra.mxu0 %v338
  %v522 = vpop.f32.mrf.mxu0
  %v523 = vadd.f32 %v426, %v522
  %v524 = vpop.f32.mrf.mxu0
  %v525 = vpop.f32.mrf.mxu0
  %v526 = vadd.f32 %v429, %v525
  %v527 = vpop.f32.mrf.mxu0
  %528 = vmatprep.mubr.bf16.mxu0 0
  %529 = vmatmul.mubr.bf16.gmra.mxu0 %v341
  %v530 = vpop.f32.mrf.mxu0
  %v531 = vadd.f32 %v434, %v530
  %v532 = vpop.f32.mrf.mxu0
  %v533 = vpop.f32.mrf.mxu0
  %v534 = vadd.f32 %v437, %v533
  %v535 = vpop.f32.mrf.mxu0
  %536 = vdwg.mxu0
  %vm537 = vcmp.ge.f32.partialorder %v475, 0.0
  %vm538 = vcmp.ge.f32.partialorder %v478, 0.0
  %vm539 = vcmp.ge.f32.partialorder %v483, 0.0
  %vm540 = vcmp.ge.f32.partialorder %v486, 0.0
  %vm541 = vcmp.ge.f32.partialorder %v491, 0.0
  %vm542 = vcmp.ge.f32.partialorder %v494, 0.0
  %vm543 = vcmp.ge.f32.partialorder %v499, 0.0
  %vm544 = vcmp.ge.f32.partialorder %v502, 0.0
  %vm545 = vcmp.ge.f32.partialorder %v507, 0.0
  %vm546 = vcmp.ge.f32.partialorder %v510, 0.0
  %vm547 = vcmp.ge.f32.partialorder %v515, 0.0
  %vm548 = vcmp.ge.f32.partialorder %v518, 0.0
  %vm549 = vcmp.ge.f32.partialorder %v523, 0.0
  %vm550 = vcmp.ge.f32.partialorder %v526, 0.0
  %vm551 = vcmp.ge.f32.partialorder %v531, 0.0
  %vm552 = vcmp.ge.f32.partialorder %v534, 0.0
  %v553 = vmul.f32 %v475, 0.2
  %v554 = vmul.f32 %v478, 0.2
  %v555 = vmul.f32 %v483, 0.2
  %v556 = vmul.f32 %v486, 0.2
  %v557 = vmul.f32 %v491, 0.2
  %v558 = vmul.f32 %v494, 0.2
  %v559 = vmul.f32 %v499, 0.2
  %v560 = vmul.f32 %v502, 0.2
  %v561 = vmul.f32 %v507, 0.2
  %v562 = vmul.f32 %v510, 0.2
  %v563 = vmul.f32 %v515, 0.2
  %v564 = vmul.f32 %v518, 0.2
  %v565 = vmul.f32 %v523, 0.2
  %v566 = vmul.f32 %v526, 0.2
  %v567 = vmul.f32 %v531, 0.2
  %v568 = vmul.f32 %v534, 0.2
  %v569 = vsel %vm537, %v475, %v553
  %v570 = vsel %vm538, %v478, %v554
  %v571 = vsel %vm539, %v483, %v555
  %v572 = vsel %vm540, %v486, %v556
  %v573 = vsel %vm541, %v491, %v557
  %v574 = vsel %vm542, %v494, %v558
  %v575 = vsel %vm543, %v499, %v559
  %v576 = vsel %vm544, %v502, %v560
  %v577 = vsel %vm545, %v507, %v561
  %v578 = vsel %vm546, %v510, %v562
  %v579 = vsel %vm547, %v515, %v563
  %v580 = vsel %vm548, %v518, %v564
  %v581 = vsel %vm549, %v523, %v565
  %v582 = vsel %vm550, %v526, %v566
  %v583 = vsel %vm551, %v531, %v567
  %v584 = vsel %vm552, %v534, %v568
  %v585 = vpack.c.bf16 %v570, %v569
  %v586 = vpack.c.bf16 %v572, %v571
  %v587 = vpack.c.bf16 %v574, %v573
  %v588 = vpack.c.bf16 %v576, %v575
  %v589 = vpack.c.bf16 %v578, %v577
  %v590 = vpack.c.bf16 %v580, %v579
  %v591 = vpack.c.bf16 %v582, %v581
  %v592 = vpack.c.bf16 %v584, %v583
  %v601 = vunpack.c.l.b16 %v585
  %v602 = vunpack.c.h.b16 %v585
  %v603 = vunpack.c.l.b16 %v586
  %v604 = vunpack.c.h.b16 %v586
  %v605 = vunpack.c.l.b16 %v587
  %v606 = vunpack.c.h.b16 %v587
  %v607 = vunpack.c.l.b16 %v588
  %v608 = vunpack.c.h.b16 %v588
  %v609 = vunpack.c.l.b16 %v589
  %v610 = vunpack.c.h.b16 %v589
  %v611 = vunpack.c.l.b16 %v590
  %v612 = vunpack.c.h.b16 %v590
  %v613 = vunpack.c.l.b16 %v591
  %v614 = vunpack.c.h.b16 %v591
  %v615 = vunpack.c.l.b16 %v592
  %v616 = vunpack.c.h.b16 %v592
  %v617 = vpack.c.b16 %v601, %v601
  %v618 = vpack.c.b16 %v602, %v602
  %v619 = vpack.c.b16 %v603, %v603
  %v620 = vpack.c.b16 %v604, %v604
  %v621 = vpack.c.b16 %v605, %v605
  %v622 = vpack.c.b16 %v606, %v606
  %v623 = vpack.c.b16 %v607, %v607
  %v624 = vpack.c.b16 %v608, %v608
  %v625 = vpack.c.b16 %v609, %v609
  %v626 = vpack.c.b16 %v610, %v610
  %v627 = vpack.c.b16 %v611, %v611
  %v628 = vpack.c.b16 %v612, %v612
  %v629 = vpack.c.b16 %v613, %v613
  %v630 = vpack.c.b16 %v614, %v614
  %v631 = vpack.c.b16 %v615, %v615
  %v632 = vpack.c.b16 %v616, %v616
  %vm649 = vcmask 519168
  %650 = vst.msk [vmem:[%s3] sm:$0xf] %vm649, %v617
  %651 = vst.msk [vmem:[%s3 + $0x4] sm:$0xf] %vm649, %v618
  %652 = vst.msk [vmem:[%s3 + $0x8] sm:$0xf] %vm649, %v619
  %653 = vst.msk [vmem:[%s3 + $0xc] sm:$0xf] %vm649, %v620
  %654 = vst.msk [vmem:[%s3 + $0x10] sm:$0xf] %vm649, %v621
  %655 = vst.msk [vmem:[%s3 + $0x14] sm:$0xf] %vm649, %v622
  %656 = vst.msk [vmem:[%s3 + $0x18] sm:$0xf] %vm649, %v623
  %657 = vst.msk [vmem:[%s3 + $0x1c] sm:$0xf] %vm649, %v624
  %658 = vst.msk [vmem:[%s3 + $0x20] sm:$0xf] %vm649, %v625
  %659 = vst.msk [vmem:[%s3 + $0x24] sm:$0xf] %vm649, %v626
  %660 = vst.msk [vmem:[%s3 + $0x28] sm:$0xf] %vm649, %v627
  %661 = vst.msk [vmem:[%s3 + $0x2c] sm:$0xf] %vm649, %v628
  %662 = vst.msk [vmem:[%s3 + $0x30] sm:$0xf] %vm649, %v629
  %663 = vst.msk [vmem:[%s3 + $0x34] sm:$0xf] %vm649, %v630
  %664 = vst.msk [vmem:[%s3 + $0x38] sm:$0xf] %vm649, %v631
  %665 = vst.msk [vmem:[%s3 + $0x3c] sm:$0xf] %vm649, %v632
  // Predicated region
  $region14: #{ifnet_forward.100} parent=0 // pred_check
    _
  $region15: #{ifnet_forward.100} parent=0 // pred_check_branch
    %667 = sbr.rel (0) target = $region17
  $region16: #{ifnet_forward.100} parent=0 // pred_region
    _
  $region17: #{ifnet_forward.100} parent=0 // pred_fallthru
    _
  // Predicated region
  $region18: #{ifnet_forward.100} parent=0 // pred_check
    _
  $region19: #{ifnet_forward.100} parent=0 // pred_check_branch
    %669 = sbr.rel (0) target = $region21
  $region20: #{ifnet_forward.100} parent=0 // pred_region
    _
  $region21: #{ifnet_forward.100} parent=0 // pred_fallthru
    _

// kernel: ifnet_forward.101
$region0: #{ifnet_forward.101}
  #allocation0 [shape = 'u32[]', space=smem, size = 0x4, offset = 0x4, fixed_abs, tag = 'smem constant byte address 0x4 - core index']
  #allocation1 [shape = 'u32[144,128]{1,0:T(1,128)}', space=vmem, size = 0x12000, scoped, tag = 'internal scratch']
  %s0 = inlined_call_operand.vmem [shape: bf16[128,576], index: 0, kind: input, shape index: {}]
  %s1 = inlined_call_operand.vmem [shape: bf16[576,64], index: 1, kind: input, shape index: {}]
  %s2 = inlined_call_operand.vmem [shape: f32[1,64], index: 2, kind: input, shape index: {}]
  %s3 = inlined_call_operand.vmem [shape: f32[1,64], index: 3, kind: input, shape index: {}]
  %s4 = inlined_call_operand.vmem [shape: bf16[128,64], index: 4, kind: input, shape index: {}]
  %s5 = inlined_call_operand.vmem [shape: bf16[128,64], index: 5, kind: output, shape index: {}]
  %s6 = sld [smem:[#allocation0]]
  $region30: #{ifnet_forward.101} parent=0
    _
  %s8 = ssub.s32 1, %s6
  %s9 = scalar_select 0, %s8, %s6
  // Predicated region
  $region2: #{ifnet_forward.101} parent=0 // pred_check
    _
  $region3: #{ifnet_forward.101} parent=0 // pred_check_branch
    %11 = sbr.rel (0) target = $region5
  $region4: #{ifnet_forward.101} parent=0 // pred_region
    _
  $region5: #{ifnet_forward.101} parent=0 // pred_fallthru
    _
  // Predicated region
  $region6: #{ifnet_forward.101} parent=0 // pred_check
    _
  $region7: #{ifnet_forward.101} parent=0 // pred_check_branch
    %13 = sbr.rel (0) target = $region9
  $region8: #{ifnet_forward.101} parent=0 // pred_region
    _
  $region9: #{ifnet_forward.101} parent=0 // pred_fallthru
    _
  // Predicated region
  $region10: #{ifnet_forward.101} parent=0 // pred_check
    _
  $region11: #{ifnet_forward.101} parent=0 // pred_check_branch
    %15 = sbr.rel (0) target = $region13
  $region12: #{ifnet_forward.101} parent=0 // pred_region
    _
  $region13: #{ifnet_forward.101} parent=0 // pred_fallthru
    _
  // Predicated region
  $region14: #{ifnet_forward.101} parent=0 // pred_check
    _
  $region15: #{ifnet_forward.101} parent=0 // pred_check_branch
    %17 = sbr.rel (0) target = $region17
  $region16: #{ifnet_forward.101} parent=0 // pred_region
    _
  $region17: #{ifnet_forward.101} parent=0 // pred_fallthru
    _
  // Predicated region
  $region18: #{ifnet_forward.101} parent=0 // pred_check
    _
  $region19: #{ifnet_forward.101} parent=0 // pred_check_branch
    %19 = sbr.rel (0) target = $region21
  $region20: #{ifnet_forward.101} parent=0 // pred_region
    _
  $region21: #{ifnet_forward.101} parent=0 // pred_fallthru
    _
  %v21 = vld [vmem:[%s0] sm:$0xff]
  %v22 = vld [vmem:[%s0 + $0x8] sm:$0xff]
  %v23 = vld [vmem:[%s0 + $0x10] sm:$0xf]
  %v24 = vld [vmem:[%s0 + $0x14] sm:$0xff]
  %v25 = vld [vmem:[%s0 + $0x1c] sm:$0xff]
  %v26 = vld [vmem:[%s0 + $0x24] sm:$0xf]
  %v27 = vld [vmem:[%s0 + $0x28] sm:$0xff]
  %v28 = vld [vmem:[%s0 + $0x30] sm:$0xff]
  %v29 = vld [vmem:[%s0 + $0x38] sm:$0xf]
  %v30 = vld [vmem:[%s0 + $0x3c] sm:$0xff]
  %v31 = vld [vmem:[%s0 + $0x44] sm:$0xff]
  %v32 = vld [vmem:[%s0 + $0x4c] sm:$0xf]
  %v33 = vld [vmem:[%s0 + $0x50] sm:$0xff]
  %v34 = vld [vmem:[%s0 + $0x58] sm:$0xff]
  %v35 = vld [vmem:[%s0 + $0x60] sm:$0xf]
  %v36 = vld [vmem:[%s0 + $0x64] sm:$0xff]
  %v37 = vld [vmem:[%s0 + $0x6c] sm:$0xff]
  %v38 = vld [vmem:[%s0 + $0x74] sm:$0xf]
  %v39 = vld [vmem:[%s0 + $0x78] sm:$0xff]
  %v40 = vld [vmem:[%s0 + $0x80] sm:$0xff]
  %v41 = vld [vmem:[%s0 + $0x88] sm:$0xf]
  %v42 = vld [vmem:[%s0 + $0x8c] sm:$0xff]
  %v43 = vld [vmem:[%s0 + $0x94] sm:$0xff]
  %v44 = vld [vmem:[%s0 + $0x9c] sm:$0xf]
  %v45 = vld [vmem:[%s0 + $0xa0] sm:$0xff]
  %v46 = vld [vmem:[%s0 + $0xa8] sm:$0xff]
  %v47 = vld [vmem:[%s0 + $0xb0] sm:$0xf]
  %v48 = vld [vmem:[%s0 + $0xb4] sm:$0xff]
  %v49 = vld [vmem:[%s0 + $0xbc] sm:$0xff]
  %v50 = vld [vmem:[%s0 + $0xc4] sm:$0xf]
  %v51 = vld [vmem:[%s0 + $0xc8] sm:$0xff]
  %v52 = vld [vmem:[%s0 + $0xd0] sm:$0xff]
  %v53 = vld [vmem:[%s0 + $0xd8] sm:$0xf]
  %v54 = vld [vmem:[%s0 + $0xdc] sm:$0xff]
  %v55 = vld [vmem:[%s0 + $0xe4] sm:$0xff]
  %v56 = vld [vmem:[%s0 + $0xec] sm:$0xf]
  %v57 = vld [vmem:[%s0 + $0xf0] sm:$0xff]
  %v58 = vld [vmem:[%s0 + $0xf8] sm:$0xff]
  %v59 = vld [vmem:[%s0 + $0x100] sm:$0xf]
  %v60 = vld [vmem:[%s0 + $0x104] sm:$0xff]
  %v61 = vld [vmem:[%s0 + $0x10c] sm:$0xff]
  %v62 = vld [vmem:[%s0 + $0x114] sm:$0xf]
  %v63 = vld [vmem:[%s0 + $0x118] sm:$0xff]
  %v64 = vld [vmem:[%s0 + $0x120] sm:$0xff]
  %v65 = vld [vmem:[%s0 + $0x128] sm:$0xf]
  %v66 = vld [vmem:[%s0 + $0x12c] sm:$0xff]
  %v67 = vld [vmem:[%s0 + $0x134] sm:$0xff]
  %v68 = vld [vmem:[%s0 + $0x13c] sm:$0xf]
  %v69 = vld [vmem:[%s1] sm:$0xf]
  %v70 = vld [vmem:[%s1 + $0x4] sm:$0xf]
  %v71 = vld [vmem:[%s1 + $0x8] sm:$0xf]
  %v72 = vld [vmem:[%s1 + $0xc] sm:$0xf]
  %v73 = vld [vmem:[%s1 + $0x10] sm:$0xf]
  %v74 = vld [vmem:[%s1 + $0x14] sm:$0xf]
  %v75 = vld [vmem:[%s1 + $0x18] sm:$0xf]
  %v76 = vld [vmem:[%s1 + $0x1c] sm:$0xf]
  %v77 = vld [vmem:[%s1 + $0x20] sm:$0xf]
  %v78 = vld [vmem:[%s1 + $0x24] sm:$0xf]
  %v79 = vld [vmem:[%s1 + $0x28] sm:$0xf]
  %v80 = vld [vmem:[%s1 + $0x2c] sm:$0xf]
  %v81 = vld [vmem:[%s1 + $0x30] sm:$0xf]
  %v82 = vld [vmem:[%s1 + $0x34] sm:$0xf]
  %v83 = vld [vmem:[%s1 + $0x38] sm:$0xf]
  %v84 = vld [vmem:[%s1 + $0x3c] sm:$0xf]
  %v85 = vld [vmem:[%s1 + $0x40] sm:$0xf]
  %v86 = vld [vmem:[%s1 + $0x44] sm:$0xf]
  %v87 = vld [vmem:[%s1 + $0x48] sm:$0xf]
  %v88 = vld [vmem:[%s1 + $0x4c] sm:$0xf]
  %v89 = vld [vmem:[%s1 + $0x50] sm:$0xf]
  %v90 = vld [vmem:[%s1 + $0x54] sm:$0xf]
  %v91 = vld [vmem:[%s1 + $0x58] sm:$0xf]
  %v92 = vld [vmem:[%s1 + $0x5c] sm:$0xf]
  %v93 = vld [vmem:[%s1 + $0x60] sm:$0xf]
  %v94 = vld [vmem:[%s1 + $0x64] sm:$0xf]
  %v95 = vld [vmem:[%s1 + $0x68] sm:$0xf]
  %v96 = vld [vmem:[%s1 + $0x6c] sm:$0xf]
  %v97 = vld [vmem:[%s1 + $0x70] sm:$0xf]
  %v98 = vld [vmem:[%s1 + $0x74] sm:$0xf]
  %v99 = vld [vmem:[%s1 + $0x78] sm:$0xf]
  %v100 = vld [vmem:[%s1 + $0x7c] sm:$0xf]
  %v101 = vld [vmem:[%s1 + $0x80] sm:$0xf]
  %v102 = vld [vmem:[%s1 + $0x84] sm:$0xf]
  %v103 = vld [vmem:[%s1 + $0x88] sm:$0xf]
  %v104 = vld [vmem:[%s1 + $0x8c] sm:$0xf]
  %v105 = vld [vmem:[%s1 + $0x90] sm:$0xf]
  %v106 = vld [vmem:[%s1 + $0x94] sm:$0xf]
  %v107 = vld [vmem:[%s1 + $0x98] sm:$0xf]
  %v108 = vld [vmem:[%s1 + $0x9c] sm:$0xf]
  %v109 = vld [vmem:[%s1 + $0xa0] sm:$0xf]
  %v110 = vld [vmem:[%s1 + $0xa4] sm:$0xf]
  %v111 = vld [vmem:[%s1 + $0xa8] sm:$0xf]
  %v112 = vld [vmem:[%s1 + $0xac] sm:$0xf]
  %v113 = vld [vmem:[%s1 + $0xb0] sm:$0xf]
  %v114 = vld [vmem:[%s1 + $0xb4] sm:$0xf]
  %v115 = vld [vmem:[%s1 + $0xb8] sm:$0xf]
  %v116 = vld [vmem:[%s1 + $0xbc] sm:$0xf]
  %v117 = vld [vmem:[%s1 + $0xc0] sm:$0xf]
  %v118 = vld [vmem:[%s1 + $0xc4] sm:$0xf]
  %v119 = vld [vmem:[%s1 + $0xc8] sm:$0xf]
  %v120 = vld [vmem:[%s1 + $0xcc] sm:$0xf]
  %v121 = vld [vmem:[%s1 + $0xd0] sm:$0xf]
  %v122 = vld [vmem:[%s1 + $0xd4] sm:$0xf]
  %v123 = vld [vmem:[%s1 + $0xd8] sm:$0xf]
  %v124 = vld [vmem:[%s1 + $0xdc] sm:$0xf]
  %v125 = vld [vmem:[%s1 + $0xe0] sm:$0xf]
  %v126 = vld [vmem:[%s1 + $0xe4] sm:$0xf]
  %v127 = vld [vmem:[%s1 + $0xe8] sm:$0xf]
  %v128 = vld [vmem:[%s1 + $0xec] sm:$0xf]
  %v129 = vld [vmem:[%s1 + $0xf0] sm:$0xf]
  %v130 = vld [vmem:[%s1 + $0xf4] sm:$0xf]
  %v131 = vld [vmem:[%s1 + $0xf8] sm:$0xf]
  %v132 = vld [vmem:[%s1 + $0xfc] sm:$0xf]
  %v133 = vld [vmem:[%s1 + $0x100] sm:$0xf]
  %v134 = vld [vmem:[%s1 + $0x104] sm:$0xf]
  %v135 = vld [vmem:[%s1 + $0x108] sm:$0xf]
  %v136 = vld [vmem:[%s1 + $0x10c] sm:$0xf]
  %v137 = vld [vmem:[%s1 + $0x110] sm:$0xf]
  %v138 = vld [vmem:[%s1 + $0x114] sm:$0xf]
  %v139 = vld [vmem:[%s1 + $0x118] sm:$0xf]
  %v140 = vld [vmem:[%s1 + $0x11c] sm:$0xf]
  %v141 = vld [vmem:[%s2] sm:$0x1]
  %v143 = vlaneseq
  %v144 = vshrl.u32 %v143, 7
  %v145 = vsub.s32 0, %v144
  %v146 = vrot.slane %v141, %v145
  %v196 = vunpack.c.l.b16 %v21
  %v197 = vunpack.c.h.b16 %v21
  %v198 = vunpack.c.l.b16 %v22
  %v199 = vunpack.c.h.b16 %v22
  %v200 = vunpack.c.l.b16 %v23
  %v201 = vunpack.c.l.b16 %v24
  %v202 = vunpack.c.h.b16 %v24
  %v203 = vunpack.c.l.b16 %v25
  %v204 = vunpack.c.h.b16 %v25
  %v205 = vunpack.c.l.b16 %v26
  %v206 = vunpack.c.l.b16 %v27
  %v207 = vunpack.c.h.b16 %v27
  %v208 = vunpack.c.l.b16 %v28
  %v209 = vunpack.c.h.b16 %v28
  %v210 = vunpack.c.l.b16 %v29
  %v211 = vunpack.c.l.b16 %v30
  %v212 = vunpack.c.h.b16 %v30
  %v213 = vunpack.c.l.b16 %v31
  %v214 = vunpack.c.h.b16 %v31
  %v215 = vunpack.c.l.b16 %v32
  %v216 = vunpack.c.l.b16 %v33
  %v217 = vunpack.c.h.b16 %v33
  %v218 = vunpack.c.l.b16 %v34
  %v219 = vunpack.c.h.b16 %v34
  %v220 = vunpack.c.l.b16 %v35
  %v221 = vunpack.c.l.b16 %v36
  %v222 = vunpack.c.h.b16 %v36
  %v223 = vunpack.c.l.b16 %v37
  %v224 = vunpack.c.h.b16 %v37
  %v225 = vunpack.c.l.b16 %v38
  %v226 = vunpack.c.l.b16 %v39
  %v227 = vunpack.c.h.b16 %v39
  %v228 = vunpack.c.l.b16 %v40
  %v229 = vunpack.c.h.b16 %v40
  %v230 = vunpack.c.l.b16 %v41
  %v231 = vunpack.c.l.b16 %v42
  %v232 = vunpack.c.h.b16 %v42
  %v233 = vunpack.c.l.b16 %v43
  %v234 = vunpack.c.h.b16 %v43
  %v235 = vunpack.c.l.b16 %v44
  %v236 = vunpack.c.l.b16 %v45
  %v237 = vunpack.c.h.b16 %v45
  %v238 = vunpack.c.l.b16 %v46
  %v239 = vunpack.c.h.b16 %v46
  %v240 = vunpack.c.l.b16 %v47
  %v241 = vunpack.c.l.b16 %v48
  %v242 = vunpack.c.h.b16 %v48
  %v243 = vunpack.c.l.b16 %v49
  %v244 = vunpack.c.h.b16 %v49
  %v245 = vunpack.c.l.b16 %v50
  %v246 = vunpack.c.l.b16 %v51
  %v247 = vunpack.c.h.b16 %v51
  %v248 = vunpack.c.l.b16 %v52
  %v249 = vunpack.c.h.b16 %v52
  %v250 = vunpack.c.l.b16 %v53
  %v251 = vunpack.c.l.b16 %v54
  %v252 = vunpack.c.h.b16 %v54
  %v253 = vunpack.c.l.b16 %v55
  %v254 = vunpack.c.h.b16 %v55
  %v255 = vunpack.c.l.b16 %v56
  %v256 = vunpack.c.l.b16 %v57
  %v257 = vunpack.c.h.b16 %v57
  %v258 = vunpack.c.l.b16 %v58
  %v259 = vunpack.c.h.b16 %v58
  %v260 = vunpack.c.l.b16 %v59
  %v261 = vunpack.c.l.b16 %v60
  %v262 = vunpack.c.h.b16 %v60
  %v263 = vunpack.c.l.b16 %v61
  %v264 = vunpack.c.h.b16 %v61
  %v265 = vunpack.c.l.b16 %v62
  %v266 = vunpack.c.l.b16 %v63
  %v267 = vunpack.c.h.b16 %v63
  %v268 = vunpack.c.l.b16 %v64
  %v269 = vunpack.c.h.b16 %v64
  %v270 = vunpack.c.l.b16 %v65
  %v271 = vunpack.c.l.b16 %v66
  %v272 = vunpack.c.h.b16 %v66
  %v273 = vunpack.c.l.b16 %v67
  %v274 = vunpack.c.h.b16 %v67
  %v275 = vunpack.c.l.b16 %v68
  %v276 = vpack.c.b16 %v201, %v196
  %v277 = vpack.c.b16 %v202, %v197
  %v278 = vpack.c.b16 %v203, %v198
  %v279 = vpack.c.b16 %v204, %v199
  %v280 = vpack.c.b16 %v205, %v200
  %v281 = vpack.c.b16 %v211, %v206
  %v282 = vpack.c.b16 %v212, %v207
  %v283 = vpack.c.b16 %v213, %v208
  %v284 = vpack.c.b16 %v214, %v209
  %v285 = vpack.c.b16 %v215, %v210
  %v286 = vpack.c.b16 %v221, %v216
  %v287 = vpack.c.b16 %v222, %v217
  %v288 = vpack.c.b16 %v223, %v218
  %v289 = vpack.c.b16 %v224, %v219
  %v290 = vpack.c.b16 %v225, %v220
  %v291 = vpack.c.b16 %v231, %v226
  %v292 = vpack.c.b16 %v232, %v227
  %v293 = vpack.c.b16 %v233, %v228
  %v294 = vpack.c.b16 %v234, %v229
  %v295 = vpack.c.b16 %v235, %v230
  %v296 = vpack.c.b16 %v241, %v236
  %v297 = vpack.c.b16 %v242, %v237
  %v298 = vpack.c.b16 %v243, %v238
  %v299 = vpack.c.b16 %v244, %v239
  %v300 = vpack.c.b16 %v245, %v240
  %v301 = vpack.c.b16 %v251, %v246
  %v302 = vpack.c.b16 %v252, %v247
  %v303 = vpack.c.b16 %v253, %v248
  %v304 = vpack.c.b16 %v254, %v249
  %v305 = vpack.c.b16 %v255, %v250
  %v306 = vpack.c.b16 %v261, %v256
  %v307 = vpack.c.b16 %v262, %v257
  %v308 = vpack.c.b16 %v263, %v258
  %v309 = vpack.c.b16 %v264, %v259
  %v310 = vpack.c.b16 %v265, %v260
  %v311 = vpack.c.b16 %v271, %v266
  %v312 = vpack.c.b16 %v272, %v267
  %v313 = vpack.c.b16 %v273, %v268
  %v314 = vpack.c.b16 %v274, %v269
  %v315 = vpack.c.b16 %v275, %v270
  %v420 = vunpack.c.l.b16 %v69
  %v421 = vunpack.c.l.b16 %v70
  %v422 = vunpack.c.l.b16 %v71
  %v423 = vunpack.c.l.b16 %v72
  %v424 = vunpack.c.l.b16 %v73
  %v425 = vunpack.c.l.b16 %v74
  %v426 = vunpack.c.l.b16 %v75
  %v427 = vunpack.c.l.b16 %v76
  %v428 = vunpack.c.l.b16 %v77
  %v429 = vunpack.c.l.b16 %v78
  %v430 = vunpack.c.l.b16 %v79
  %v431 = vunpack.c.l.b16 %v80
  %v432 = vunpack.c.l.b16 %v81
  %v433 = vunpack.c.l.b16 %v82
  %v434 = vunpack.c.l.b16 %v83
  %v435 = vunpack.c.l.b16 %v84
  %v436 = vunpack.c.l.b16 %v85
  %v437 = vunpack.c.l.b16 %v86
  %v438 = vunpack.c.l.b16 %v87
  %v439 = vunpack.c.l.b16 %v88
  %v440 = vunpack.c.l.b16 %v89
  %v441 = vunpack.c.l.b16 %v90
  %v442 = vunpack.c.l.b16 %v91
  %v443 = vunpack.c.l.b16 %v92
  %v444 = vunpack.c.l.b16 %v93
  %v445 = vunpack.c.l.b16 %v94
  %v446 = vunpack.c.l.b16 %v95
  %v447 = vunpack.c.l.b16 %v96
  %v448 = vunpack.c.l.b16 %v97
  %v449 = vunpack.c.l.b16 %v98
  %v450 = vunpack.c.l.b16 %v99
  %v451 = vunpack.c.l.b16 %v100
  %v452 = vunpack.c.l.b16 %v101
  %v453 = vunpack.c.l.b16 %v102
  %v454 = vunpack.c.l.b16 %v103
  %v455 = vunpack.c.l.b16 %v104
  %v456 = vunpack.c.l.b16 %v105
  %v457 = vunpack.c.l.b16 %v106
  %v458 = vunpack.c.l.b16 %v107
  %v459 = vunpack.c.l.b16 %v108
  %v460 = vunpack.c.l.b16 %v109
  %v461 = vunpack.c.l.b16 %v110
  %v462 = vunpack.c.l.b16 %v111
  %v463 = vunpack.c.l.b16 %v112
  %v464 = vunpack.c.l.b16 %v113
  %v465 = vunpack.c.l.b16 %v114
  %v466 = vunpack.c.l.b16 %v115
  %v467 = vunpack.c.l.b16 %v116
  %v468 = vunpack.c.l.b16 %v117
  %v469 = vunpack.c.l.b16 %v118
  %v470 = vunpack.c.l.b16 %v119
  %v471 = vunpack.c.l.b16 %v120
  %v472 = vunpack.c.l.b16 %v121
  %v473 = vunpack.c.l.b16 %v122
  %v474 = vunpack.c.l.b16 %v123
  %v475 = vunpack.c.l.b16 %v124
  %v476 = vunpack.c.l.b16 %v125
  %v477 = vunpack.c.l.b16 %v126
  %v478 = vunpack.c.l.b16 %v127
  %v479 = vunpack.c.l.b16 %v128
  %v480 = vunpack.c.l.b16 %v129
  %v481 = vunpack.c.l.b16 %v130
  %v482 = vunpack.c.l.b16 %v131
  %v483 = vunpack.c.l.b16 %v132
  %v484 = vunpack.c.l.b16 %v133
  %v485 = vunpack.c.l.b16 %v134
  %v486 = vunpack.c.l.b16 %v135
  %v487 = vunpack.c.l.b16 %v136
  %v488 = vunpack.c.l.b16 %v137
  %v489 = vunpack.c.l.b16 %v138
  %v490 = vunpack.c.l.b16 %v139
  %v491 = vunpack.c.l.b16 %v140
  %v492 = vpack.c.b16 %v421, %v420
  %v493 = vpack.c.b16 %v423, %v422
  %v494 = vpack.c.b16 %v425, %v424
  %v495 = vpack.c.b16 %v427, %v426
  %v496 = vpack.c.b16 %v429, %v428
  %v497 = vpack.c.b16 %v431, %v430
  %v498 = vpack.c.b16 %v433, %v432
  %v499 = vpack.c.b16 %v435, %v434
  %v500 = vpack.c.b16 %v437, %v436
  %v501 = vpack.c.b16 %v439, %v438
  %v502 = vpack.c.b16 %v441, %v440
  %v503 = vpack.c.b16 %v443, %v442
  %v504 = vpack.c.b16 %v445, %v444
  %v505 = vpack.c.b16 %v447, %v446
  %v506 = vpack.c.b16 %v449, %v448
  %v507 = vpack.c.b16 %v451, %v450
  %v508 = vpack.c.b16 %v453, %v452
  %v509 = vpack.c.b16 %v455, %v454
  %v510 = vpack.c.b16 %v457, %v456
  %v511 = vpack.c.b16 %v459, %v458
  %v512 = vpack.c.b16 %v461, %v460
  %v513 = vpack.c.b16 %v463, %v462
  %v514 = vpack.c.b16 %v465, %v464
  %v515 = vpack.c.b16 %v467, %v466
  %v516 = vpack.c.b16 %v469, %v468
  %v517 = vpack.c.b16 %v471, %v470
  %v518 = vpack.c.b16 %v473, %v472
  %v519 = vpack.c.b16 %v475, %v474
  %v520 = vpack.c.b16 %v477, %v476
  %v521 = vpack.c.b16 %v479, %v478
  %v522 = vpack.c.b16 %v481, %v480
  %v523 = vpack.c.b16 %v483, %v482
  %v524 = vpack.c.b16 %v485, %v484
  %v525 = vpack.c.b16 %v487, %v486
  %v526 = vpack.c.b16 %v489, %v488
  %v527 = vpack.c.b16 %v491, %v490
  %vm564 = vcmask 523264
  %v566 = vsel %vm564, %v280, 0
  %v569 = vsel %vm564, %v285, 0
  %v572 = vsel %vm564, %v290, 0
  %v575 = vsel %vm564, %v295, 0
  %v578 = vsel %vm564, %v300, 0
  %v581 = vsel %vm564, %v305, 0
  %v584 = vsel %vm564, %v310, 0
  %v587 = vsel %vm564, %v315, 0
  %589 = vmatprep.subr.bf16.mxu0 0
  %590 = vmatpush1.bf16.msra.mxu0 %v499
  %591 = vmatprep.subr.bf16.mxu0 0
  %592 = vmatpush1.bf16.msra.mxu0 %v498
  %593 = vmatprep.subr.bf16.mxu0 0
  %594 = vmatpush1.bf16.msra.mxu0 %v497
  %595 = vmatprep.subr.bf16.mxu0 0
  %596 = vmatpush1.bf16.msra.mxu0 %v496
  %597 = vmatprep.subr.bf16.mxu0 0
  %598 = vmatpush1.bf16.msra.mxu0 %v495
  %599 = vmatprep.subr.bf16.mxu0 0
  %600 = vmatpush1.bf16.msra.mxu0 %v494
  %601 = vmatprep.subr.bf16.mxu0 0
  %602 = vmatpush1.bf16.msra.mxu0 %v493
  %603 = vmatprep.subr.bf16.mxu0 0
  %604 = vmatpush1.bf16.msra.mxu0 %v492
  %605 = vmatprep.subr.bf16.mxu0 0
  %606 = vmatpush2.bf16.msra.mxu0 %v507
  %607 = vmatprep.subr.bf16.mxu0 0
  %608 = vmatpush2.bf16.msra.mxu0 %v506
  %609 = vmatprep.subr.bf16.mxu0 0
  %610 = vmatpush2.bf16.msra.mxu0 %v505
  %611 = vmatprep.subr.bf16.mxu0 0
  %612 = vmatpush2.bf16.msra.mxu0 %v504
  %613 = vmatprep.subr.bf16.mxu0 0
  %614 = vmatpush2.bf16.msra.mxu0 %v503
  %615 = vmatprep.subr.bf16.mxu0 0
  %616 = vmatpush2.bf16.msra.mxu0 %v502
  %617 = vmatprep.subr.bf16.mxu0 0
  %618 = vmatpush2.bf16.msra.mxu0 %v501
  %619 = vmatprep.subr.bf16.mxu0 0
  %620 = vmatpush2.bf16.msra.mxu0 %v500
  %621 = vmatprep.mubr.bf16.mxu0 %v277
  %622 = vmatmul.mubr.bf16.gmra.mxu0 %v276
  %v623 = vpop.f32.mrf.mxu0
  %v624 = vadd.f32 %v146, %v623
  %v625 = vpop.f32.mrf.mxu0
  %v626 = vpop.f32.mrf.mxu0
  %v627 = vadd.f32 %v146, %v626
  %v628 = vpop.f32.mrf.mxu0
  %629 = vmatprep.mubr.bf16.mxu0 %v282
  %630 = vmatmul.mubr.bf16.gmra.mxu0 %v281
  %v631 = vpop.f32.mrf.mxu0
  %v632 = vadd.f32 %v146, %v631
  %v633 = vpop.f32.mrf.mxu0
  %v634 = vpop.f32.mrf.mxu0
  %v635 = vadd.f32 %v146, %v634
  %v636 = vpop.f32.mrf.mxu0
  %637 = vmatprep.mubr.bf16.mxu0 %v287
  %638 = vmatmul.mubr.bf16.gmra.mxu0 %v286
  %v639 = vpop.f32.mrf.mxu0
  %v640 = vadd.f32 %v146, %v639
  %v641 = vpop.f32.mrf.mxu0
  %v642 = vpop.f32.mrf.mxu0
  %v643 = vadd.f32 %v146, %v642
  %v644 = vpop.f32.mrf.mxu0
  %645 = vmatprep.mubr.bf16.mxu0 %v292
  %646 = vmatmul.mubr.bf16.gmra.mxu0 %v291
  %v647 = vpop.f32.mrf.mxu0
  %v648 = vadd.f32 %v146, %v647
  %v649 = vpop.f32.mrf.mxu0
  %v650 = vpop.f32.mrf.mxu0
  %v651 = vadd.f32 %v146, %v650
  %v652 = vpop.f32.mrf.mxu0
  %653 = vmatprep.mubr.bf16.mxu0 %v297
  %654 = vmatmul.mubr.bf16.gmra.mxu0 %v296
  %v655 = vpop.f32.mrf.mxu0
  %v656 = vadd.f32 %v146, %v655
  %v657 = vpop.f32.mrf.mxu0
  %v658 = vpop.f32.mrf.mxu0
  %v659 = vadd.f32 %v146, %v658
  %v660 = vpop.f32.mrf.mxu0
  %661 = vmatprep.mubr.bf16.mxu0 %v302
  %662 = vmatmul.mubr.bf16.gmra.mxu0 %v301
  %v663 = vpop.f32.mrf.mxu0
  %v664 = vadd.f32 %v146, %v663
  %v665 = vpop.f32.mrf.mxu0
  %v666 = vpop.f32.mrf.mxu0
  %v667 = vadd.f32 %v146, %v666
  %v668 = vpop.f32.mrf.mxu0
  %669 = vmatprep.mubr.bf16.mxu0 %v307
  %670 = vmatmul.mubr.bf16.gmra.mxu0 %v306
  %v671 = vpop.f32.mrf.mxu0
  %v672 = vadd.f32 %v146, %v671
  %v673 = vpop.f32.mrf.mxu0
  %v674 = vpop.f32.mrf.mxu0
  %v675 = vadd.f32 %v146, %v674
  %v676 = vpop.f32.mrf.mxu0
  %677 = vmatprep.mubr.bf16.mxu0 %v312
  %678 = vmatmul.mubr.bf16.gmra.mxu0 %v311
  %v679 = vpop.f32.mrf.mxu0
  %v680 = vadd.f32 %v146, %v679
  %v681 = vpop.f32.mrf.mxu0
  %v682 = vpop.f32.mrf.mxu0
  %v683 = vadd.f32 %v146, %v682
  %v684 = vpop.f32.mrf.mxu0
  %685 = vdwg.mxu0
  %686 = vmatprep.subr.bf16.mxu0 0
  %687 = vmatpush1.bf16.msra.mxu0 %v515
  %688 = vmatprep.subr.bf16.mxu0 0
  %689 = vmatpush1.bf16.msra.mxu0 %v514
  %690 = vmatprep.subr.bf16.mxu0 0
  %691 = vmatpush1.bf16.msra.mxu0 %v513
  %692 = vmatprep.subr.bf16.mxu0 0
  %693 = vmatpush1.bf16.msra.mxu0 %v512
  %694 = vmatprep.subr.bf16.mxu0 0
  %695 = vmatpush1.bf16.msra.mxu0 %v511
  %696 = vmatprep.subr.bf16.mxu0 0
  %697 = vmatpush1.bf16.msra.mxu0 %v510
  %698 = vmatprep.subr.bf16.mxu0 0
  %699 = vmatpush1.bf16.msra.mxu0 %v509
  %700 = vmatprep.subr.bf16.mxu0 0
  %701 = vmatpush1.bf16.msra.mxu0 %v508
  %702 = vmatprep.subr.bf16.mxu0 0
  %703 = vmatpush2.bf16.msra.mxu0 %v523
  %704 = vmatprep.subr.bf16.mxu0 0
  %705 = vmatpush2.bf16.msra.mxu0 %v522
  %706 = vmatprep.subr.bf16.mxu0 0
  %707 = vmatpush2.bf16.msra.mxu0 %v521
  %708 = vmatprep.subr.bf16.mxu0 0
  %709 = vmatpush2.bf16.msra.mxu0 %v520
  %710 = vmatprep.subr.bf16.mxu0 0
  %711 = vmatpush2.bf16.msra.mxu0 %v519
  %712 = vmatprep.subr.bf16.mxu0 0
  %713 = vmatpush2.bf16.msra.mxu0 %v518
  %714 = vmatprep.subr.bf16.mxu0 0
  %715 = vmatpush2.bf16.msra.mxu0 %v517
  %716 = vmatprep.subr.bf16.mxu0 0
  %717 = vmatpush2.bf16.msra.mxu0 %v516
  %718 = vmatprep.mubr.bf16.mxu0 %v279
  %719 = vmatmul.mubr.bf16.gmra.mxu0 %v278
  %v720 = vpop.f32.mrf.mxu0
  %v721 = vadd.f32 %v624, %v720
  %v722 = vpop.f32.mrf.mxu0
  %v723 = vpop.f32.mrf.mxu0
  %v724 = vadd.f32 %v627, %v723
  %v725 = vpop.f32.mrf.mxu0
  %726 = vmatprep.mubr.bf16.mxu0 %v284
  %727 = vmatmul.mubr.bf16.gmra.mxu0 %v283
  %v728 = vpop.f32.mrf.mxu0
  %v729 = vadd.f32 %v632, %v728
  %v730 = vpop.f32.mrf.mxu0
  %v731 = vpop.f32.mrf.mxu0
  %v732 = vadd.f32 %v635, %v731
  %v733 = vpop.f32.mrf.mxu0
  %734 = vmatprep.mubr.bf16.mxu0 %v289
  %735 = vmatmul.mubr.bf16.gmra.mxu0 %v288
  %v736 = vpop.f32.mrf.mxu0
  %v737 = vadd.f32 %v640, %v736
  %v738 = vpop.f32.mrf.mxu0
  %v739 = vpop.f32.mrf.mxu0
  %v740 = vadd.f32 %v643, %v739
  %v741 = vpop.f32.mrf.mxu0
  %742 = vmatprep.mubr.bf16.mxu0 %v294
  %743 = vmatmul.mubr.bf16.gmra.mxu0 %v293
  %v744 = vpop.f32.mrf.mxu0
  %v745 = vadd.f32 %v648, %v744
  %v746 = vpop.f32.mrf.mxu0
  %v747 = vpop.f32.mrf.mxu0
  %v748 = vadd.f32 %v651, %v747
  %v749 = vpop.f32.mrf.mxu0
  %750 = vmatprep.mubr.bf16.mxu0 %v299
  %751 = vmatmul.mubr.bf16.gmra.mxu0 %v298
  %v752 = vpop.f32.mrf.mxu0
  %v753 = vadd.f32 %v656, %v752
  %v754 = vpop.f32.mrf.mxu0
  %v755 = vpop.f32.mrf.mxu0
  %v756 = vadd.f32 %v659, %v755
  %v757 = vpop.f32.mrf.mxu0
  %758 = vmatprep.mubr.bf16.mxu0 %v304
  %759 = vmatmul.mubr.bf16.gmra.mxu0 %v303
  %v760 = vpop.f32.mrf.mxu0
  %v761 = vadd.f32 %v664, %v760
  %v762 = vpop.f32.mrf.mxu0
  %v763 = vpop.f32.mrf.mxu0
  %v764 = vadd.f32 %v667, %v763
  %v765 = vpop.f32.mrf.mxu0
  %766 = vmatprep.mubr.bf16.mxu0 %v309
  %767 = vmatmul.mubr.bf16.gmra.mxu0 %v308
  %v768 = vpop.f32.mrf.mxu0
  %v769 = vadd.f32 %v672, %v768
  %v770 = vpop.f32.mrf.mxu0
  %v771 = vpop.f32.mrf.mxu0
  %v772 = vadd.f32 %v675, %v771
  %v773 = vpop.f32.mrf.mxu0
  %774 = vmatprep.mubr.bf16.mxu0 %v314
  %775 = vmatmul.mubr.bf16.gmra.mxu0 %v313
  %v776 = vpop.f32.mrf.mxu0
  %v777 = vadd.f32 %v680, %v776
  %v778 = vpop.f32.mrf.mxu0
  %v779 = vpop.f32.mrf.mxu0
  %v780 = vadd.f32 %v683, %v779
  %v781 = vpop.f32.mrf.mxu0
  %782 = vdwg.mxu0
  %783 = vmatprep.subr.bf16.mxu0 0
  %784 = vmatpush1.bf16.msra.mxu0 0
  %785 = vmatprep.subr.bf16.mxu0 0
  %786 = vmatpush1.bf16.msra.mxu0 0
  %787 = vmatprep.subr.bf16.mxu0 0
  %788 = vmatpush1.bf16.msra.mxu0 0
  %789 = vmatprep.subr.bf16.mxu0 0
  %790 = vmatpush1.bf16.msra.mxu0 0
  %791 = vmatprep.subr.bf16.mxu0 0
  %792 = vmatpush1.bf16.msra.mxu0 %v527
  %793 = vmatprep.subr.bf16.mxu0 0
  %794 = vmatpush1.bf16.msra.mxu0 %v526
  %795 = vmatprep.subr.bf16.mxu0 0
  %796 = vmatpush1.bf16.msra.mxu0 %v525
  %797 = vmatprep.subr.bf16.mxu0 0
  %798 = vmatpush1.bf16.msra.mxu0 %v524
  %799 = vmatprep.subr.bf16.mxu0 0
  %800 = vmatpush2.bf16.msra.mxu0 0
  %801 = vmatprep.subr.bf16.mxu0 0
  %802 = vmatpush2.bf16.msra.mxu0 0
  %803 = vmatprep.subr.bf16.mxu0 0
  %804 = vmatpush2.bf16.msra.mxu0 0
  %805 = vmatprep.subr.bf16.mxu0 0
  %806 = vmatpush2.bf16.msra.mxu0 0
  %807 = vmatprep.subr.bf16.mxu0 0
  %808 = vmatpush2.bf16.msra.mxu0 0
  %809 = vmatprep.subr.bf16.mxu0 0
  %810 = vmatpush2.bf16.msra.mxu0 0
  %811 = vmatprep.subr.bf16.mxu0 0
  %812 = vmatpush2.bf16.msra.mxu0 0
  %813 = vmatprep.subr.bf16.mxu0 0
  %814 = vmatpush2.bf16.msra.mxu0 0
  %815 = vmatprep.mubr.bf16.mxu0 0
  %816 = vmatmul.mubr.bf16.gmra.mxu0 %v566
  %v817 = vpop.f32.mrf.mxu0
  %v818 = vadd.f32 %v721, %v817
  %v819 = vpop.f32.mrf.mxu0
  %v820 = vpop.f32.mrf.mxu0
  %v821 = vadd.f32 %v724, %v820
  %v822 = vpop.f32.mrf.mxu0
  %823 = vmatprep.mubr.bf16.mxu0 0
  %824 = vmatmul.mubr.bf16.gmra.mxu0 %v569
  %v825 = vpop.f32.mrf.mxu0
  %v826 = vadd.f32 %v729, %v825
  %v827 = vpop.f32.mrf.mxu0
  %v828 = vpop.f32.mrf.mxu0
  %v829 = vadd.f32 %v732, %v828
  %v830 = vpop.f32.mrf.mxu0
  %831 = vmatprep.mubr.bf16.mxu0 0
  %832 = vmatmul.mubr.bf16.gmra.mxu0 %v572
  %v833 = vpop.f32.mrf.mxu0
  %v834 = vadd.f32 %v737, %v833
  %v835 = vpop.f32.mrf.mxu0
  %v836 = vpop.f32.mrf.mxu0
  %v837 = vadd.f32 %v740, %v836
  %v838 = vpop.f32.mrf.mxu0
  %839 = vmatprep.mubr.bf16.mxu0 0
  %840 = vmatmul.mubr.bf16.gmra.mxu0 %v575
  %v841 = vpop.f32.mrf.mxu0
  %v842 = vadd.f32 %v745, %v841
  %v843 = vpop.f32.mrf.mxu0
  %v844 = vpop.f32.mrf.mxu0
  %v845 = vadd.f32 %v748, %v844
  %v846 = vpop.f32.mrf.mxu0
  %847 = vmatprep.mubr.bf16.mxu0 0
  %848 = vmatmul.mubr.bf16.gmra.mxu0 %v578
  %v849 = vpop.f32.mrf.mxu0
  %v850 = vadd.f32 %v753, %v849
  %v851 = vpop.f32.mrf.mxu0
  %v852 = vpop.f32.mrf.mxu0
  %v853 = vadd.f32 %v756, %v852
  %v854 = vpop.f32.mrf.mxu0
  %855 = vmatprep.mubr.bf16.mxu0 0
  %856 = vmatmul.mubr.bf16.gmra.mxu0 %v581
  %v857 = vpop.f32.mrf.mxu0
  %v858 = vadd.f32 %v761, %v857
  %v859 = vpop.f32.mrf.mxu0
  %v860 = vpop.f32.mrf.mxu0
  %v861 = vadd.f32 %v764, %v860
  %v862 = vpop.f32.mrf.mxu0
  %863 = vmatprep.mubr.bf16.mxu0 0
  %864 = vmatmul.mubr.bf16.gmra.mxu0 %v584
  %v865 = vpop.f32.mrf.mxu0
  %v866 = vadd.f32 %v769, %v865
  %v867 = vpop.f32.mrf.mxu0
  %v868 = vpop.f32.mrf.mxu0
  %v869 = vadd.f32 %v772, %v868
  %v870 = vpop.f32.mrf.mxu0
  %871 = vmatprep.mubr.bf16.mxu0 0
  %872 = vmatmul.mubr.bf16.gmra.mxu0 %v587
  %v873 = vpop.f32.mrf.mxu0
  %v874 = vadd.f32 %v777, %v873
  %v875 = vpop.f32.mrf.mxu0
  %v876 = vpop.f32.mrf.mxu0
  %v877 = vadd.f32 %v780, %v876
  %v878 = vpop.f32.mrf.mxu0
  %879 = vdwg.mxu0
  %v880 = vld [vmem:[%s3] sm:$0x1]
  %v882 = vlaneseq
  %v883 = vshrl.u32 %v882, 7
  %v884 = vsub.s32 0, %v883
  %v885 = vrot.slane %v880, %v884
  %v887 = vmul.f32 %v818, %v885
  %v888 = vmul.f32 %v821, %v885
  %v889 = vmul.f32 %v826, %v885
  %v890 = vmul.f32 %v829, %v885
  %v891 = vmul.f32 %v834, %v885
  %v892 = vmul.f32 %v837, %v885
  %v893 = vmul.f32 %v842, %v885
  %v894 = vmul.f32 %v845, %v885
  %v895 = vmul.f32 %v850, %v885
  %v896 = vmul.f32 %v853, %v885
  %v897 = vmul.f32 %v858, %v885
  %v898 = vmul.f32 %v861, %v885
  %v899 = vmul.f32 %v866, %v885
  %v900 = vmul.f32 %v869, %v885
  %v901 = vmul.f32 %v874, %v885
  %v902 = vmul.f32 %v877, %v885
  %v903 = vld [vmem:[%s4] sm:$0xf]
  %v904 = vld [vmem:[%s4 + $0x4] sm:$0xf]
  %v905 = vld [vmem:[%s4 + $0x8] sm:$0xf]
  %v906 = vld [vmem:[%s4 + $0xc] sm:$0xf]
  %v907 = vld [vmem:[%s4 + $0x10] sm:$0xf]
  %v908 = vld [vmem:[%s4 + $0x14] sm:$0xf]
  %v909 = vld [vmem:[%s4 + $0x18] sm:$0xf]
  %v910 = vld [vmem:[%s4 + $0x1c] sm:$0xf]
  %v911 = vld [vmem:[%s4 + $0x20] sm:$0xf]
  %v912 = vld [vmem:[%s4 + $0x24] sm:$0xf]
  %v913 = vld [vmem:[%s4 + $0x28] sm:$0xf]
  %v914 = vld [vmem:[%s4 + $0x2c] sm:$0xf]
  %v915 = vld [vmem:[%s4 + $0x30] sm:$0xf]
  %v916 = vld [vmem:[%s4 + $0x34] sm:$0xf]
  %v917 = vld [vmem:[%s4 + $0x38] sm:$0xf]
  %v918 = vld [vmem:[%s4 + $0x3c] sm:$0xf]
  %v919 = vunpack.c.l.bf16 %v903
  %v920 = vunpack.c.l.bf16 %v904
  %v921 = vunpack.c.l.bf16 %v905
  %v922 = vunpack.c.l.bf16 %v906
  %v923 = vunpack.c.l.bf16 %v907
  %v924 = vunpack.c.l.bf16 %v908
  %v925 = vunpack.c.l.bf16 %v909
  %v926 = vunpack.c.l.bf16 %v910
  %v927 = vunpack.c.l.bf16 %v911
  %v928 = vunpack.c.l.bf16 %v912
  %v929 = vunpack.c.l.bf16 %v913
  %v930 = vunpack.c.l.bf16 %v914
  %v931 = vunpack.c.l.bf16 %v915
  %v932 = vunpack.c.l.bf16 %v916
  %v933 = vunpack.c.l.bf16 %v917
  %v934 = vunpack.c.l.bf16 %v918
  %v935 = vadd.f32 %v887, %v919
  %v936 = vadd.f32 %v888, %v920
  %v937 = vadd.f32 %v889, %v921
  %v938 = vadd.f32 %v890, %v922
  %v939 = vadd.f32 %v891, %v923
  %v940 = vadd.f32 %v892, %v924
  %v941 = vadd.f32 %v893, %v925
  %v942 = vadd.f32 %v894, %v926
  %v943 = vadd.f32 %v895, %v927
  %v944 = vadd.f32 %v896, %v928
  %v945 = vadd.f32 %v897, %v929
  %v946 = vadd.f32 %v898, %v930
  %v947 = vadd.f32 %v899, %v931
  %v948 = vadd.f32 %v900, %v932
  %v949 = vadd.f32 %v901, %v933
  %v950 = vadd.f32 %v902, %v934
  %vm951 = vcmp.ge.f32.partialorder %v935, 0.0
  %vm952 = vcmp.ge.f32.partialorder %v936, 0.0
  %vm953 = vcmp.ge.f32.partialorder %v937, 0.0
  %vm954 = vcmp.ge.f32.partialorder %v938, 0.0
  %vm955 = vcmp.ge.f32.partialorder %v939, 0.0
  %vm956 = vcmp.ge.f32.partialorder %v940, 0.0
  %vm957 = vcmp.ge.f32.partialorder %v941, 0.0
  %vm958 = vcmp.ge.f32.partialorder %v942, 0.0
  %vm959 = vcmp.ge.f32.partialorder %v943, 0.0
  %vm960 = vcmp.ge.f32.partialorder %v944, 0.0
  %vm961 = vcmp.ge.f32.partialorder %v945, 0.0
  %vm962 = vcmp.ge.f32.partialorder %v946, 0.0
  %vm963 = vcmp.ge.f32.partialorder %v947, 0.0
  %vm964 = vcmp.ge.f32.partialorder %v948, 0.0
  %vm965 = vcmp.ge.f32.partialorder %v949, 0.0
  %vm966 = vcmp.ge.f32.partialorder %v950, 0.0
  %v967 = vmul.f32 %v935, 0.2
  %v968 = vmul.f32 %v936, 0.2
  %v969 = vmul.f32 %v937, 0.2
  %v970 = vmul.f32 %v938, 0.2
  %v971 = vmul.f32 %v939, 0.2
  %v972 = vmul.f32 %v940, 0.2
  %v973 = vmul.f32 %v941, 0.2
  %v974 = vmul.f32 %v942, 0.2
  %v975 = vmul.f32 %v943, 0.2
  %v976 = vmul.f32 %v944, 0.2
  %v977 = vmul.f32 %v945, 0.2
  %v978 = vmul.f32 %v946, 0.2
  %v979 = vmul.f32 %v947, 0.2
  %v980 = vmul.f32 %v948, 0.2
  %v981 = vmul.f32 %v949, 0.2
  %v982 = vmul.f32 %v950, 0.2
  %v983 = vsel %vm951, %v935, %v967
  %v984 = vsel %vm952, %v936, %v968
  %v985 = vsel %vm953, %v937, %v969
  %v986 = vsel %vm954, %v938, %v970
  %v987 = vsel %vm955, %v939, %v971
  %v988 = vsel %vm956, %v940, %v972
  %v989 = vsel %vm957, %v941, %v973
  %v990 = vsel %vm958, %v942, %v974
  %v991 = vsel %vm959, %v943, %v975
  %v992 = vsel %vm960, %v944, %v976
  %v993 = vsel %vm961, %v945, %v977
  %v994 = vsel %vm962, %v946, %v978
  %v995 = vsel %vm963, %v947, %v979
  %v996 = vsel %vm964, %v948, %v980
  %v997 = vsel %vm965, %v949, %v981
  %v998 = vsel %vm966, %v950, %v982
  %v999 = vpack.c.bf16 %v984, %v983
  %v1000 = vpack.c.bf16 %v986, %v985
  %v1001 = vpack.c.bf16 %v988, %v987
  %v1002 = vpack.c.bf16 %v990, %v989
  %v1003 = vpack.c.bf16 %v992, %v991
  %v1004 = vpack.c.bf16 %v994, %v993
  %v1005 = vpack.c.bf16 %v996, %v995
  %v1006 = vpack.c.bf16 %v998, %v997
  %v1015 = vunpack.c.l.b16 %v999
  %v1016 = vunpack.c.h.b16 %v999
  %v1017 = vunpack.c.l.b16 %v1000
  %v1018 = vunpack.c.h.b16 %v1000
  %v1019 = vunpack.c.l.b16 %v1001
  %v1020 = vunpack.c.h.b16 %v1001
  %v1021 = vunpack.c.l.b16 %v1002
  %v1022 = vunpack.c.h.b16 %v1002
  %v1023 = vunpack.c.l.b16 %v1003
  %v1024 = vunpack.c.h.b16 %v1003
  %v1025 = vunpack.c.l.b16 %v1004
  %v1026 = vunpack.c.h.b16 %v1004
  %v1027 = vunpack.c.l.b16 %v1005
  %v1028 = vunpack.c.h.b16 %v1005
  %v1029 = vunpack.c.l.b16 %v1006
  %v1030 = vunpack.c.h.b16 %v1006
  %v1031 = vpack.c.b16 %v1015, %v1015
  %v1032 = vpack.c.b16 %v1016, %v1016
  %v1033 = vpack.c.b16 %v1017, %v1017
  %v1034 = vpack.c.b16 %v1018, %v1018
  %v1035 = vpack.c.b16 %v1019, %v1019
  %v1036 = vpack.c.b16 %v1020, %v1020
  %v1037 = vpack.c.b16 %v1021, %v1021
  %v1038 = vpack.c.b16 %v1022, %v1022
  %v1039 = vpack.c.b16 %v1023, %v1023
  %v1040 = vpack.c.b16 %v1024, %v1024
  %v1041 = vpack.c.b16 %v1025, %v1025
  %v1042 = vpack.c.b16 %v1026, %v1026
  %v1043 = vpack.c.b16 %v1027, %v1027
  %v1044 = vpack.c.b16 %v1028, %v1028
  %v1045 = vpack.c.b16 %v1029, %v1029
  %v1046 = vpack.c.b16 %v1030, %v1030
  %vm1063 = vcmask 519168
  %1064 = vst.msk [vmem:[%s5] sm:$0xf] %vm1063, %v1031
  %1065 = vst.msk [vmem:[%s5 + $0x4] sm:$0xf] %vm1063, %v1032
  %1066 = vst.msk [vmem:[%s5 + $0x8] sm:$0xf] %vm1063, %v1033
  %1067 = vst.msk [vmem:[%s5 + $0xc] sm:$0xf] %vm1063, %v1034
  %1068 = vst.msk [vmem:[%s5 + $0x10] sm:$0xf] %vm1063, %v1035
  %1069 = vst.msk [vmem:[%s5 + $0x14] sm:$0xf] %vm1063, %v1036
  %1070 = vst.msk [vmem:[%s5 + $0x18] sm:$0xf] %vm1063, %v1037
  %1071 = vst.msk [vmem:[%s5 + $0x1c] sm:$0xf] %vm1063, %v1038
  %1072 = vst.msk [vmem:[%s5 + $0x20] sm:$0xf] %vm1063, %v1039
  %1073 = vst.msk [vmem:[%s5 + $0x24] sm:$0xf] %vm1063, %v1040
  %1074 = vst.msk [vmem:[%s5 + $0x28] sm:$0xf] %vm1063, %v1041
  %1075 = vst.msk [vmem:[%s5 + $0x2c] sm:$0xf] %vm1063, %v1042
  %1076 = vst.msk [vmem:[%s5 + $0x30] sm:$0xf] %vm1063, %v1043
  %1077 = vst.msk [vmem:[%s5 + $0x34] sm:$0xf] %vm1063, %v1044
  %1078 = vst.msk [vmem:[%s5 + $0x38] sm:$0xf] %vm1063, %v1045
  %1079 = vst.msk [vmem:[%s5 + $0x3c] sm:$0xf] %vm1063, %v1046
  // Predicated region
  $region22: #{ifnet_forward.101} parent=0 // pred_check
    _
  $region23: #{ifnet_forward.101} parent=0 // pred_check_branch
    %1081 = sbr.rel (0) target = $region25
  $region24: #{ifnet_forward.101} parent=0 // pred_region
    _
  $region25: #{ifnet_forward.101} parent=0 // pred_fallthru
    _
  // Predicated region
  $region26: #{ifnet_forward.101} parent=0 // pred_check
    _
  $region27: #{ifnet_forward.101} parent=0 // pred_check_branch
    %1083 = sbr.rel (0) target = $region29
  $region28: #{ifnet_forward.101} parent=0 // pred_region
    _
  $region29: #{ifnet_forward.101} parent=0 // pred_fallthru
    _

// kernel: ifnet_forward.109
$region0: #{ifnet_forward.109}
  #allocation0 [shape = 'u32[]', space=smem, size = 0x4, offset = 0x4, fixed_abs, tag = 'smem constant byte address 0x4 - core index']
  #allocation1 [shape = 'u32[144,128]{1,0:T(1,128)}', space=vmem, size = 0x12000, scoped, tag = 'internal scratch']
  %s0 = inlined_call_operand.vmem [shape: bf16[128,256], index: 0, kind: input, shape index: {}]
  %s1 = inlined_call_operand.vmem [shape: bf16[256,24], index: 1, kind: input, shape index: {}]
  %s2 = inlined_call_operand.vmem [shape: f32[1,24], index: 2, kind: input, shape index: {}]
  %s3 = inlined_call_operand.vmem [shape: f32[128,24], index: 3, kind: output, shape index: {}]
  %s4 = sld [smem:[#allocation0]]
  $region22: #{ifnet_forward.109} parent=0
    _
  %s6 = ssub.s32 1, %s4
  %s7 = scalar_select 0, %s6, %s4
  // Predicated region
  $region2: #{ifnet_forward.109} parent=0 // pred_check
    _
  $region3: #{ifnet_forward.109} parent=0 // pred_check_branch
    %9 = sbr.rel (0) target = $region5
  $region4: #{ifnet_forward.109} parent=0 // pred_region
    _
  $region5: #{ifnet_forward.109} parent=0 // pred_fallthru
    _
  // Predicated region
  $region6: #{ifnet_forward.109} parent=0 // pred_check
    _
  $region7: #{ifnet_forward.109} parent=0 // pred_check_branch
    %11 = sbr.rel (0) target = $region9
  $region8: #{ifnet_forward.109} parent=0 // pred_region
    _
  $region9: #{ifnet_forward.109} parent=0 // pred_fallthru
    _
  // Predicated region
  $region10: #{ifnet_forward.109} parent=0 // pred_check
    _
  $region11: #{ifnet_forward.109} parent=0 // pred_check_branch
    %13 = sbr.rel (0) target = $region13
  $region12: #{ifnet_forward.109} parent=0 // pred_region
    _
  $region13: #{ifnet_forward.109} parent=0 // pred_fallthru
    _
  %v15 = vld [vmem:[%s0] sm:$0xff]
  %v16 = vld [vmem:[%s0 + $0x8] sm:$0xff]
  %v17 = vld [vmem:[%s0 + $0x10] sm:$0xff]
  %v18 = vld [vmem:[%s0 + $0x18] sm:$0xff]
  %v19 = vld [vmem:[%s0 + $0x20] sm:$0xff]
  %v20 = vld [vmem:[%s0 + $0x28] sm:$0xff]
  %v21 = vld [vmem:[%s0 + $0x30] sm:$0xff]
  %v22 = vld [vmem:[%s0 + $0x38] sm:$0xff]
  %v23 = vld [vmem:[%s0 + $0x40] sm:$0xff]
  %v24 = vld [vmem:[%s0 + $0x48] sm:$0xff]
  %v25 = vld [vmem:[%s0 + $0x50] sm:$0xff]
  %v26 = vld [vmem:[%s0 + $0x58] sm:$0xff]
  %v27 = vld [vmem:[%s0 + $0x60] sm:$0xff]
  %v28 = vld [vmem:[%s0 + $0x68] sm:$0xff]
  %v29 = vld [vmem:[%s0 + $0x70] sm:$0xff]
  %v30 = vld [vmem:[%s0 + $0x78] sm:$0xff]
  %v31 = vld [vmem:[%s1] sm:$0xf]
  %v32 = vld [vmem:[%s1 + $0x4] sm:$0xf]
  %v33 = vld [vmem:[%s1 + $0x8] sm:$0xf]
  %v34 = vld [vmem:[%s1 + $0xc] sm:$0xf]
  %v35 = vld [vmem:[%s1 + $0x10] sm:$0xf]
  %v36 = vld [vmem:[%s1 + $0x14] sm:$0xf]
  %v37 = vld [vmem:[%s1 + $0x18] sm:$0xf]
  %v38 = vld [vmem:[%s1 + $0x1c] sm:$0xf]
  %v39 = vld [vmem:[%s1 + $0x20] sm:$0xf]
  %v40 = vld [vmem:[%s1 + $0x24] sm:$0xf]
  %v41 = vld [vmem:[%s1 + $0x28] sm:$0xf]
  %v42 = vld [vmem:[%s1 + $0x2c] sm:$0xf]
  %v43 = vld [vmem:[%s1 + $0x30] sm:$0xf]
  %v44 = vld [vmem:[%s1 + $0x34] sm:$0xf]
  %v45 = vld [vmem:[%s1 + $0x38] sm:$0xf]
  %v46 = vld [vmem:[%s1 + $0x3c] sm:$0xf]
  %v47 = vld [vmem:[%s1 + $0x40] sm:$0xf]
  %v48 = vld [vmem:[%s1 + $0x44] sm:$0xf]
  %v49 = vld [vmem:[%s1 + $0x48] sm:$0xf]
  %v50 = vld [vmem:[%s1 + $0x4c] sm:$0xf]
  %v51 = vld [vmem:[%s1 + $0x50] sm:$0xf]
  %v52 = vld [vmem:[%s1 + $0x54] sm:$0xf]
  %v53 = vld [vmem:[%s1 + $0x58] sm:$0xf]
  %v54 = vld [vmem:[%s1 + $0x5c] sm:$0xf]
  %v55 = vld [vmem:[%s1 + $0x60] sm:$0xf]
  %v56 = vld [vmem:[%s1 + $0x64] sm:$0xf]
  %v57 = vld [vmem:[%s1 + $0x68] sm:$0xf]
  %v58 = vld [vmem:[%s1 + $0x6c] sm:$0xf]
  %v59 = vld [vmem:[%s1 + $0x70] sm:$0xf]
  %v60 = vld [vmem:[%s1 + $0x74] sm:$0xf]
  %v61 = vld [vmem:[%s1 + $0x78] sm:$0xf]
  %v62 = vld [vmem:[%s1 + $0x7c] sm:$0xf]
  %v63 = vld [vmem:[%s2] sm:$0x1]
  %v65 = vlaneseq
  %v66 = vshrl.u32 %v65, 7
  %v67 = vsub.s32 0, %v66
  %v68 = vrot.slane %v63, %v67
  %v86 = vunpack.c.l.b16 %v15
  %v87 = vunpack.c.h.b16 %v15
  %v88 = vunpack.c.l.b16 %v16
  %v89 = vunpack.c.h.b16 %v16
  %v90 = vunpack.c.l.b16 %v17
  %v91 = vunpack.c.h.b16 %v17
  %v92 = vunpack.c.l.b16 %v18
  %v93 = vunpack.c.h.b16 %v18
  %v94 = vunpack.c.l.b16 %v19
  %v95 = vunpack.c.h.b16 %v19
  %v96 = vunpack.c.l.b16 %v20
  %v97 = vunpack.c.h.b16 %v20
  %v98 = vunpack.c.l.b16 %v21
  %v99 = vunpack.c.h.b16 %v21
  %v100 = vunpack.c.l.b16 %v22
  %v101 = vunpack.c.h.b16 %v22
  %v102 = vunpack.c.l.b16 %v23
  %v103 = vunpack.c.h.b16 %v23
  %v104 = vunpack.c.l.b16 %v24
  %v105 = vunpack.c.h.b16 %v24
  %v106 = vunpack.c.l.b16 %v25
  %v107 = vunpack.c.h.b16 %v25
  %v108 = vunpack.c.l.b16 %v26
  %v109 = vunpack.c.h.b16 %v26
  %v110 = vunpack.c.l.b16 %v27
  %v111 = vunpack.c.h.b16 %v27
  %v112 = vunpack.c.l.b16 %v28
  %v113 = vunpack.c.h.b16 %v28
  %v114 = vunpack.c.l.b16 %v29
  %v115 = vunpack.c.h.b16 %v29
  %v116 = vunpack.c.l.b16 %v30
  %v117 = vunpack.c.h.b16 %v30
  %v118 = vpack.c.b16 %v88, %v86
  %v119 = vpack.c.b16 %v89, %v87
  %v120 = vpack.c.b16 %v92, %v90
  %v121 = vpack.c.b16 %v93, %v91
  %v122 = vpack.c.b16 %v96, %v94
  %v123 = vpack.c.b16 %v97, %v95
  %v124 = vpack.c.b16 %v100, %v98
  %v125 = vpack.c.b16 %v101, %v99
  %v126 = vpack.c.b16 %v104, %v102
  %v127 = vpack.c.b16 %v105, %v103
  %v128 = vpack.c.b16 %v108, %v106
  %v129 = vpack.c.b16 %v109, %v107
  %v130 = vpack.c.b16 %v112, %v110
  %v131 = vpack.c.b16 %v113, %v111
  %v132 = vpack.c.b16 %v116, %v114
  %v133 = vpack.c.b16 %v117, %v115
  %v182 = vunpack.c.l.b16 %v31
  %v183 = vunpack.c.l.b16 %v32
  %v184 = vunpack.c.l.b16 %v33
  %v185 = vunpack.c.l.b16 %v34
  %v186 = vunpack.c.l.b16 %v35
  %v187 = vunpack.c.l.b16 %v36
  %v188 = vunpack.c.l.b16 %v37
  %v189 = vunpack.c.l.b16 %v38
  %v190 = vunpack.c.l.b16 %v39
  %v191 = vunpack.c.l.b16 %v40
  %v192 = vunpack.c.l.b16 %v41
  %v193 = vunpack.c.l.b16 %v42
  %v194 = vunpack.c.l.b16 %v43
  %v195 = vunpack.c.l.b16 %v44
  %v196 = vunpack.c.l.b16 %v45
  %v197 = vunpack.c.l.b16 %v46
  %v198 = vunpack.c.l.b16 %v47
  %v199 = vunpack.c.l.b16 %v48
  %v200 = vunpack.c.l.b16 %v49
  %v201 = vunpack.c.l.b16 %v50
  %v202 = vunpack.c.l.b16 %v51
  %v203 = vunpack.c.l.b16 %v52
  %v204 = vunpack.c.l.b16 %v53
  %v205 = vunpack.c.l.b16 %v54
  %v206 = vunpack.c.l.b16 %v55
  %v207 = vunpack.c.l.b16 %v56
  %v208 = vunpack.c.l.b16 %v57
  %v209 = vunpack.c.l.b16 %v58
  %v210 = vunpack.c.l.b16 %v59
  %v211 = vunpack.c.l.b16 %v60
  %v212 = vunpack.c.l.b16 %v61
  %v213 = vunpack.c.l.b16 %v62
  %v214 = vpack.c.b16 %v183, %v182
  %v215 = vpack.c.b16 %v185, %v184
  %v216 = vpack.c.b16 %v187, %v186
  %v217 = vpack.c.b16 %v189, %v188
  %v218 = vpack.c.b16 %v191, %v190
  %v219 = vpack.c.b16 %v193, %v192
  %v220 = vpack.c.b16 %v195, %v194
  %v221 = vpack.c.b16 %v197, %v196
  %v222 = vpack.c.b16 %v199, %v198
  %v223 = vpack.c.b16 %v201, %v200
  %v224 = vpack.c.b16 %v203, %v202
  %v225 = vpack.c.b16 %v205, %v204
  %v226 = vpack.c.b16 %v207, %v206
  %v227 = vpack.c.b16 %v209, %v208
  %v228 = vpack.c.b16 %v211, %v210
  %v229 = vpack.c.b16 %v213, %v212
  %246 = vmatprep.subr.bf16.mxu0 0
  %247 = vmatpush1.bf16.msra.mxu0 %v221
  %248 = vmatprep.subr.bf16.mxu0 0
  %249 = vmatpush1.bf16.msra.mxu0 %v220
  %250 = vmatprep.subr.bf16.mxu0 0
  %251 = vmatpush1.bf16.msra.mxu0 %v219
  %252 = vmatprep.subr.bf16.mxu0 0
  %253 = vmatpush1.bf16.msra.mxu0 %v218
  %254 = vmatprep.subr.bf16.mxu0 0
  %255 = vmatpush1.bf16.msra.mxu0 %v217
  %256 = vmatprep.subr.bf16.mxu0 0
  %257 = vmatpush1.bf16.msra.mxu0 %v216
  %258 = vmatprep.subr.bf16.mxu0 0
  %259 = vmatpush1.bf16.msra.mxu0 %v215
  %260 = vmatprep.subr.bf16.mxu0 0
  %261 = vmatpush1.bf16.msra.mxu0 %v214
  %262 = vmatprep.subr.bf16.mxu0 0
  %263 = vmatpush2.bf16.msra.mxu0 %v229
  %264 = vmatprep.subr.bf16.mxu0 0
  %265 = vmatpush2.bf16.msra.mxu0 %v228
  %266 = vmatprep.subr.bf16.mxu0 0
  %267 = vmatpush2.bf16.msra.mxu0 %v227
  %268 = vmatprep.subr.bf16.mxu0 0
  %269 = vmatpush2.bf16.msra.mxu0 %v226
  %270 = vmatprep.subr.bf16.mxu0 0
  %271 = vmatpush2.bf16.msra.mxu0 %v225
  %272 = vmatprep.subr.bf16.mxu0 0
  %273 = vmatpush2.bf16.msra.mxu0 %v224
  %274 = vmatprep.subr.bf16.mxu0 0
  %275 = vmatpush2.bf16.msra.mxu0 %v223
  %276 = vmatprep.subr.bf16.mxu0 0
  %277 = vmatpush2.bf16.msra.mxu0 %v222
  %278 = vmatprep.mubr.bf16.mxu0 %v119
  %279 = vmatmul.mubr.bf16.gmra.mxu0 %v118
  %v280 = vpop.f32.mrf.mxu0
  %v281 = vadd.f32 %v68, %v280
  %v282 = vpop.f32.mrf.mxu0
  %v283 = vpop.f32.mrf.mxu0
  %v284 = vadd.f32 %v68, %v283
  %v285 = vpop.f32.mrf.mxu0
  %286 = vmatprep.mubr.bf16.mxu0 %v121
  %287 = vmatmul.mubr.bf16.gmra.mxu0 %v120
  %v288 = vpop.f32.mrf.mxu0
  %v289 = vadd.f32 %v68, %v288
  %v290 = vpop.f32.mrf.mxu0
  %v291 = vpop.f32.mrf.mxu0
  %v292 = vadd.f32 %v68, %v291
  %v293 = vpop.f32.mrf.mxu0
  %294 = vmatprep.mubr.bf16.mxu0 %v123
  %295 = vmatmul.mubr.bf16.gmra.mxu0 %v122
  %v296 = vpop.f32.mrf.mxu0
  %v297 = vadd.f32 %v68, %v296
  %v298 = vpop.f32.mrf.mxu0
  %v299 = vpop.f32.mrf.mxu0
  %v300 = vadd.f32 %v68, %v299
  %v301 = vpop.f32.mrf.mxu0
  %302 = vmatprep.mubr.bf16.mxu0 %v125
  %303 = vmatmul.mubr.bf16.gmra.mxu0 %v124
  %v304 = vpop.f32.mrf.mxu0
  %v305 = vadd.f32 %v68, %v304
  %v306 = vpop.f32.mrf.mxu0
  %v307 = vpop.f32.mrf.mxu0
  %v308 = vadd.f32 %v68, %v307
  %v309 = vpop.f32.mrf.mxu0
  %310 = vmatprep.mubr.bf16.mxu0 %v127
  %311 = vmatmul.mubr.bf16.gmra.mxu0 %v126
  %v312 = vpop.f32.mrf.mxu0
  %v313 = vadd.f32 %v68, %v312
  %v314 = vpop.f32.mrf.mxu0
  %v315 = vpop.f32.mrf.mxu0
  %v316 = vadd.f32 %v68, %v315
  %v317 = vpop.f32.mrf.mxu0
  %318 = vmatprep.mubr.bf16.mxu0 %v129
  %319 = vmatmul.mubr.bf16.gmra.mxu0 %v128
  %v320 = vpop.f32.mrf.mxu0
  %v321 = vadd.f32 %v68, %v320
  %v322 = vpop.f32.mrf.mxu0
  %v323 = vpop.f32.mrf.mxu0
  %v324 = vadd.f32 %v68, %v323
  %v325 = vpop.f32.mrf.mxu0
  %326 = vmatprep.mubr.bf16.mxu0 %v131
  %327 = vmatmul.mubr.bf16.gmra.mxu0 %v130
  %v328 = vpop.f32.mrf.mxu0
  %v329 = vadd.f32 %v68, %v328
  %v330 = vpop.f32.mrf.mxu0
  %v331 = vpop.f32.mrf.mxu0
  %v332 = vadd.f32 %v68, %v331
  %v333 = vpop.f32.mrf.mxu0
  %334 = vmatprep.mubr.bf16.mxu0 %v133
  %335 = vmatmul.mubr.bf16.gmra.mxu0 %v132
  %v336 = vpop.f32.mrf.mxu0
  %v337 = vadd.f32 %v68, %v336
  %v338 = vpop.f32.mrf.mxu0
  %v339 = vpop.f32.mrf.mxu0
  %v340 = vadd.f32 %v68, %v339
  %v341 = vpop.f32.mrf.mxu0
  %342 = vdwg.mxu0
  %vm343 = vcmask 195584
  %344 = vst.msk [vmem:[%s3] sm:$0xff] %vm343, %v281
  %345 = vst.msk [vmem:[%s3 + $0x8] sm:$0xff] %vm343, %v284
  %346 = vst.msk [vmem:[%s3 + $0x10] sm:$0xff] %vm343, %v289
  %347 = vst.msk [vmem:[%s3 + $0x18] sm:$0xff] %vm343, %v292
  %348 = vst.msk [vmem:[%s3 + $0x20] sm:$0xff] %vm343, %v297
  %349 = vst.msk [vmem:[%s3 + $0x28] sm:$0xff] %vm343, %v300
  %350 = vst.msk [vmem:[%s3 + $0x30] sm:$0xff] %vm343, %v305
  %351 = vst.msk [vmem:[%s3 + $0x38] sm:$0xff] %vm343, %v308
  %352 = vst.msk [vmem:[%s3 + $0x40] sm:$0xff] %vm343, %v313
  %353 = vst.msk [vmem:[%s3 + $0x48] sm:$0xff] %vm343, %v316
  %354 = vst.msk [vmem:[%s3 + $0x50] sm:$0xff] %vm343, %v321
  %355 = vst.msk [vmem:[%s3 + $0x58] sm:$0xff] %vm343, %v324
  %356 = vst.msk [vmem:[%s3 + $0x60] sm:$0xff] %vm343, %v329
  %357 = vst.msk [vmem:[%s3 + $0x68] sm:$0xff] %vm343, %v332
  %358 = vst.msk [vmem:[%s3 + $0x70] sm:$0xff] %vm343, %v337
  %359 = vst.msk [vmem:[%s3 + $0x78] sm:$0xff] %vm343, %v340
  // Predicated region
  $region14: #{ifnet_forward.109} parent=0 // pred_check
    _
  $region15: #{ifnet_forward.109} parent=0 // pred_check_branch
    %361 = sbr.rel (0) target = $region17
  $region16: #{ifnet_forward.109} parent=0 // pred_region
    _
  $region17: #{ifnet_forward.109} parent=0 // pred_fallthru
    _
  // Predicated region
  $region18: #{ifnet_forward.109} parent=0 // pred_check
    _
  $region19: #{ifnet_forward.109} parent=0 // pred_check_branch
    %363 = sbr.rel (0) target = $region21
  $region20: #{ifnet_forward.109} parent=0 // pred_region
    _
  $region21: #{ifnet_forward.109} parent=0 // pred_fallthru
    _

// kernel: ifnet_forward.113
$region0: #{ifnet_forward.113}
  #allocation0 [shape = 'u32[]', space=smem, size = 0x4, offset = 0x4, fixed_abs, tag = 'smem constant byte address 0x4 - core index']
  #allocation1 [shape = 'u32[144,128]{1,0:T(1,128)}', space=vmem, size = 0x12000, scoped, tag = 'internal scratch']
  %s0 = inlined_call_operand.vmem [shape: f32[3,2048], index: 0, kind: input, shape index: {}]
  %s1 = inlined_call_operand.vmem [shape: f32[3,2048], index: 1, kind: input, shape index: {}]
  %s2 = inlined_call_operand.vmem [shape: f32[1,2048], index: 2, kind: input, shape index: {}]
  %s3 = inlined_call_operand.vmem [shape: f32[3,2048], index: 3, kind: output, shape index: {}]
  %s4 = sld [smem:[#allocation0]]
  $region22: #{ifnet_forward.113} parent=0
    _
  %s6 = ssub.s32 1, %s4
  %s7 = scalar_select 0, %s6, %s4
  // Predicated region
  $region2: #{ifnet_forward.113} parent=0 // pred_check
    _
  $region3: #{ifnet_forward.113} parent=0 // pred_check_branch
    %9 = sbr.rel (0) target = $region5
  $region4: #{ifnet_forward.113} parent=0 // pred_region
    _
  $region5: #{ifnet_forward.113} parent=0 // pred_fallthru
    _
  // Predicated region
  $region6: #{ifnet_forward.113} parent=0 // pred_check
    _
  $region7: #{ifnet_forward.113} parent=0 // pred_check_branch
    %11 = sbr.rel (0) target = $region9
  $region8: #{ifnet_forward.113} parent=0 // pred_region
    _
  $region9: #{ifnet_forward.113} parent=0 // pred_fallthru
    _
  // Predicated region
  $region10: #{ifnet_forward.113} parent=0 // pred_check
    _
  $region11: #{ifnet_forward.113} parent=0 // pred_check_branch
    %13 = sbr.rel (0) target = $region13
  $region12: #{ifnet_forward.113} parent=0 // pred_region
    _
  $region13: #{ifnet_forward.113} parent=0 // pred_fallthru
    _
  %v14 = vld [vmem:[%s2] sm:$0xff]
  %v15 = vld [vmem:[%s2 + $0x8] sm:$0xff]
  %v16 = vxor.u32 %v14, 2147483648
  %v17 = vxor.u32 %v15, 2147483648
  %v18 = vmul.f32 %v16, 1.442695
  %v19 = vpow.pop %v18
  %v20 = vmul.f32 %v17, 1.442695
  %v21 = vpow.pop %v20
  %v22 = vadd.f32 %v19, 1.0
  %v23 = vadd.f32 %v21, 1.0
  %v24 = vrcp.pop %v22
  %v25 = vmul.f32 1.0, %v24
  %v26 = vrcp.pop %v23
  %v27 = vmul.f32 1.0, %v26
  %v28 = vld [vmem:[%s0] sm:$0x77]
  %v29 = vld [vmem:[%s0 + $0x8] sm:$0x77]
  %v30 = vld [vmem:[%s0 + $0x10] sm:$0x77]
  %v31 = vld [vmem:[%s0 + $0x18] sm:$0x77]
  %v32 = vld [vmem:[%s0 + $0x20] sm:$0x77]
  %v33 = vld [vmem:[%s0 + $0x28] sm:$0x77]
  %v34 = vld [vmem:[%s0 + $0x30] sm:$0x77]
  %v35 = vld [vmem:[%s0 + $0x38] sm:$0x77]
  %v38 = vlaneseq
  %v39 = vshrl.u32 %v38, 7
  %v40 = vsub.s32 0, %v39
  %v41 = vrot.slane %v25, %v40
  %v42 = vlaneseq
  %v43 = vshrl.u32 %v42, 7
  %v44 = vsub.s32 1, %v43
  %v45 = vrot.slane %v25, %v44
  %v46 = vlaneseq
  %v47 = vshrl.u32 %v46, 7
  %v48 = vsub.s32 2, %v47
  %v49 = vrot.slane %v25, %v48
  %v50 = vlaneseq
  %v51 = vshrl.u32 %v50, 7
  %v52 = vsub.s32 3, %v51
  %v53 = vrot.slane %v25, %v52
  %v54 = vlaneseq
  %v55 = vshrl.u32 %v54, 7
  %v56 = vsub.s32 4, %v55
  %v57 = vrot.slane %v25, %v56
  %v58 = vlaneseq
  %v59 = vshrl.u32 %v58, 7
  %v60 = vsub.s32 5, %v59
  %v61 = vrot.slane %v25, %v60
  %v62 = vlaneseq
  %v63 = vshrl.u32 %v62, 7
  %v64 = vsub.s32 6, %v63
  %v65 = vrot.slane %v25, %v64
  %v66 = vlaneseq
  %v67 = vshrl.u32 %v66, 7
  %v68 = vsub.s32 7, %v67
  %v69 = vrot.slane %v25, %v68
  %v70 = vlaneseq
  %v71 = vshrl.u32 %v70, 7
  %v72 = vsub.s32 0, %v71
  %v73 = vrot.slane %v27, %v72
  %v74 = vlaneseq
  %v75 = vshrl.u32 %v74, 7
  %v76 = vsub.s32 1, %v75
  %v77 = vrot.slane %v27, %v76
  %v78 = vlaneseq
  %v79 = vshrl.u32 %v78, 7
  %v80 = vsub.s32 2, %v79
  %v81 = vrot.slane %v27, %v80
  %v82 = vlaneseq
  %v83 = vshrl.u32 %v82, 7
  %v84 = vsub.s32 3, %v83
  %v85 = vrot.slane %v27, %v84
  %v86 = vlaneseq
  %v87 = vshrl.u32 %v86, 7
  %v88 = vsub.s32 4, %v87
  %v89 = vrot.slane %v27, %v88
  %v90 = vlaneseq
  %v91 = vshrl.u32 %v90, 7
  %v92 = vsub.s32 5, %v91
  %v93 = vrot.slane %v27, %v92
  %v94 = vlaneseq
  %v95 = vshrl.u32 %v94, 7
  %v96 = vsub.s32 6, %v95
  %v97 = vrot.slane %v27, %v96
  %v98 = vlaneseq
  %v99 = vshrl.u32 %v98, 7
  %v100 = vsub.s32 7, %v99
  %v101 = vrot.slane %v27, %v100
  %v102 = vcombine.low %v41, %v45
  %v103 = vcombine.low %v49, %v53
  %v104 = vcombine.low %v57, %v61
  %v105 = vcombine.low %v65, %v69
  %v106 = vcombine.low %v73, %v77
  %v107 = vcombine.low %v81, %v85
  %v108 = vcombine.low %v89, %v93
  %v109 = vcombine.low %v97, %v101
  %v118 = vmul.f32 %v28, %v102
  %v119 = vmul.f32 %v29, %v103
  %v120 = vmul.f32 %v30, %v104
  %v121 = vmul.f32 %v31, %v105
  %v122 = vmul.f32 %v32, %v106
  %v123 = vmul.f32 %v33, %v107
  %v124 = vmul.f32 %v34, %v108
  %v125 = vmul.f32 %v35, %v109
  %v126 = vld [vmem:[%s1] sm:$0x77]
  %v127 = vld [vmem:[%s1 + $0x8] sm:$0x77]
  %v128 = vld [vmem:[%s1 + $0x10] sm:$0x77]
  %v129 = vld [vmem:[%s1 + $0x18] sm:$0x77]
  %v130 = vld [vmem:[%s1 + $0x20] sm:$0x77]
  %v131 = vld [vmem:[%s1 + $0x28] sm:$0x77]
  %v132 = vld [vmem:[%s1 + $0x30] sm:$0x77]
  %v133 = vld [vmem:[%s1 + $0x38] sm:$0x77]
  %v134 = vsub.f32 1.0, %v25
  %v135 = vsub.f32 1.0, %v27
  %v138 = vlaneseq
  %v139 = vshrl.u32 %v138, 7
  %v140 = vsub.s32 0, %v139
  %v141 = vrot.slane %v134, %v140
  %v142 = vlaneseq
  %v143 = vshrl.u32 %v142, 7
  %v144 = vsub.s32 1, %v143
  %v145 = vrot.slane %v134, %v144
  %v146 = vlaneseq
  %v147 = vshrl.u32 %v146, 7
  %v148 = vsub.s32 2, %v147
  %v149 = vrot.slane %v134, %v148
  %v150 = vlaneseq
  %v151 = vshrl.u32 %v150, 7
  %v152 = vsub.s32 3, %v151
  %v153 = vrot.slane %v134, %v152
  %v154 = vlaneseq
  %v155 = vshrl.u32 %v154, 7
  %v156 = vsub.s32 4, %v155
  %v157 = vrot.slane %v134, %v156
  %v158 = vlaneseq
  %v159 = vshrl.u32 %v158, 7
  %v160 = vsub.s32 5, %v159
  %v161 = vrot.slane %v134, %v160
  %v162 = vlaneseq
  %v163 = vshrl.u32 %v162, 7
  %v164 = vsub.s32 6, %v163
  %v165 = vrot.slane %v134, %v164
  %v166 = vlaneseq
  %v167 = vshrl.u32 %v166, 7
  %v168 = vsub.s32 7, %v167
  %v169 = vrot.slane %v134, %v168
  %v170 = vlaneseq
  %v171 = vshrl.u32 %v170, 7
  %v172 = vsub.s32 0, %v171
  %v173 = vrot.slane %v135, %v172
  %v174 = vlaneseq
  %v175 = vshrl.u32 %v174, 7
  %v176 = vsub.s32 1, %v175
  %v177 = vrot.slane %v135, %v176
  %v178 = vlaneseq
  %v179 = vshrl.u32 %v178, 7
  %v180 = vsub.s32 2, %v179
  %v181 = vrot.slane %v135, %v180
  %v182 = vlaneseq
  %v183 = vshrl.u32 %v182, 7
  %v184 = vsub.s32 3, %v183
  %v185 = vrot.slane %v135, %v184
  %v186 = vlaneseq
  %v187 = vshrl.u32 %v186, 7
  %v188 = vsub.s32 4, %v187
  %v189 = vrot.slane %v135, %v188
  %v190 = vlaneseq
  %v191 = vshrl.u32 %v190, 7
  %v192 = vsub.s32 5, %v191
  %v193 = vrot.slane %v135, %v192
  %v194 = vlaneseq
  %v195 = vshrl.u32 %v194, 7
  %v196 = vsub.s32 6, %v195
  %v197 = vrot.slane %v135, %v196
  %v198 = vlaneseq
  %v199 = vshrl.u32 %v198, 7
  %v200 = vsub.s32 7, %v199
  %v201 = vrot.slane %v135, %v200
  %v202 = vcombine.low %v141, %v145
  %v203 = vcombine.low %v149, %v153
  %v204 = vcombine.low %v157, %v161
  %v205 = vcombine.low %v165, %v169
  %v206 = vcombine.low %v173, %v177
  %v207 = vcombine.low %v181, %v185
  %v208 = vcombine.low %v189, %v193
  %v209 = vcombine.low %v197, %v201
  %v218 = vmul.f32 %v126, %v202
  %v219 = vmul.f32 %v127, %v203
  %v220 = vmul.f32 %v128, %v204
  %v221 = vmul.f32 %v129, %v205
  %v222 = vmul.f32 %v130, %v206
  %v223 = vmul.f32 %v131, %v207
  %v224 = vmul.f32 %v132, %v208
  %v225 = vmul.f32 %v133, %v209
  %v226 = vadd.f32 %v118, %v218
  %v227 = vadd.f32 %v119, %v219
  %v228 = vadd.f32 %v120, %v220
  %v229 = vadd.f32 %v121, %v221
  %v230 = vadd.f32 %v122, %v222
  %v231 = vadd.f32 %v123, %v223
  %v232 = vadd.f32 %v124, %v224
  %v233 = vadd.f32 %v125, %v225
  %234 = vst [vmem:[%s3] sm:$0x77] %v226
  %235 = vst [vmem:[%s3 + $0x8] sm:$0x77] %v227
  %236 = vst [vmem:[%s3 + $0x10] sm:$0x77] %v228
  %237 = vst [vmem:[%s3 + $0x18] sm:$0x77] %v229
  %238 = vst [vmem:[%s3 + $0x20] sm:$0x77] %v230
  %239 = vst [vmem:[%s3 + $0x28] sm:$0x77] %v231
  %240 = vst [vmem:[%s3 + $0x30] sm:$0x77] %v232
  %241 = vst [vmem:[%s3 + $0x38] sm:$0x77] %v233
  // Predicated region
  $region14: #{ifnet_forward.113} parent=0 // pred_check
    _
  $region15: #{ifnet_forward.113} parent=0 // pred_check_branch
    %243 = sbr.rel (0) target = $region17
  $region16: #{ifnet_forward.113} parent=0 // pred_region
    _
  $region17: #{ifnet_forward.113} parent=0 // pred_fallthru
    _
  // Predicated region
  $region18: #{ifnet_forward.113} parent=0 // pred_check
    _
  $region19: #{ifnet_forward.113} parent=0 // pred_check_branch
    %245 = sbr.rel (0) target = $region21
  $region20: #{ifnet_forward.113} parent=0 // pred_region
    _
  $region21: #{ifnet_forward.113} parent=0 // pred_fallthru
    _

</llo_original>
